<compile_context>
chip_gen: v5e
topology: v5e:2x2
jax: 0.10.0
libtpu: 0.0.40
codegen_flags: <defaults>
</compile_context>

<pallas_src>
import functools
import math

import numpy as np
import jax
import jax.numpy as jnp
from jax.experimental import pallas as pl
from jax.experimental.pallas import tpu as pltpu

BN_EPS = 1e-5


# ---------------------------------------------------------------------------
# Kernel 1: CQT-like projection + |.|^2 + dB-normalisation + batch-norm
# ---------------------------------------------------------------------------

def _cqt_db_kernel(frames_ref, basis_ref, o_ref, *,
                   n_batch, n_frames, n_bins, n_bins_pad):
    fr = frames_ref[...]                                     # (N*T, n_fft)
    # One MXU pass: [cos | sin] basis fused into a single lane-dense RHS.
    y = jnp.dot(fr, basis_ref[...], preferred_element_type=jnp.float32)
    real = y[:, :n_bins_pad]
    imag = y[:, n_bins_pad:]
    power = real * real + imag * imag                        # |CQT|^2
    log_power = 10.0 * jnp.log10(power + 1e-10)              # (N*T, P)

    # Lane mask for the zero-padded bins (they must not pollute min/max/BN).
    mask2 = jax.lax.broadcasted_iota(jnp.int32, (1, n_bins_pad), 1) < n_bins
    mask3 = mask2.reshape(1, 1, n_bins_pad)

    # Per-sample dB normalisation (min / max over freq and time), vectorised.
    lp3 = log_power.reshape(n_batch, n_frames, n_bins_pad)
    mn = jnp.min(jnp.where(mask3, lp3, 1e30), axis=2, keepdims=True)
    mn = jnp.min(mn, axis=1, keepdims=True)                  # (N,1,1)
    off = lp3 - mn
    mx = jnp.max(jnp.where(mask3, off, -1e30), axis=2, keepdims=True)
    mx = jnp.max(mx, axis=1, keepdims=True)                  # (N,1,1)
    xn = (off / mx).reshape(n_batch * n_frames, n_bins_pad)  # exact divide

    # Fresh nn.BatchNorm2d(1) in training mode: biased batch statistics over
    # the real bins only, gamma=1, beta=0.
    cnt = float(n_batch * n_frames * n_bins)
    mean = jnp.sum(jnp.where(mask2, xn, 0.0)) / cnt
    var = jnp.sum(jnp.where(mask2, (xn - mean) ** 2, 0.0)) / cnt
    out = (xn - mean) * jax.lax.rsqrt(var + BN_EPS)
    o_ref[...] = jnp.where(mask2, out, 0.0)                  # pad lanes -> 0


def cqt_db_norm(frames, basis, n_batch, n_frames, n_bins, n_bins_pad):
    nt = frames.shape[0]
    return pl.pallas_call(
        functools.partial(_cqt_db_kernel, n_batch=n_batch, n_frames=n_frames,
                          n_bins=n_bins, n_bins_pad=n_bins_pad),
        out_shape=jax.ShapeDtypeStruct((nt, n_bins_pad), jnp.float32),
    )(frames, basis)


# ---------------------------------------------------------------------------
# Kernel 2: contour_1 + contour_2 + note_1 (both convs) + onset_1 + onset_2,
#           all fused per sample; every intermediate stays in VMEM.
#
# Intermediate layout: rows = output freq, cols = time*channels (ch minor).
# ---------------------------------------------------------------------------

def _fused_amt_kernel(xc_ref, xo_ref,
                      w1_ref, b1_ref, w2t_ref,
                      seln_ref, wn1_ref, bn1_ref, wn2t_ref,
                      selo_ref, wo1_ref, bo1_ref, wo2c_ref,
                      ssum_ref, wo2n_ref, scal_ref,
                      contour_ref, note_ref, onset_ref,
                      y1pad_ref, cpad_ref, npad_ref, opad_ref, spad_ref,
                      *, H, W, NH, C1, KH1, OH, Cn, Co):
    KIN1 = W * NH
    KINO = (W + 4) * NH
    WC1 = W * C1
    WCn = W * Cn
    WCo = W * Co

    # Zero the padded scratches (interiors are fully overwritten below, halos
    # must be zero).  Whole-scratch memset is ~10 vregs - cheap and safe under
    # "parallel" grid semantics.
    y1pad_ref[...] = jnp.zeros_like(y1pad_ref)
    cpad_ref[...] = jnp.zeros_like(cpad_ref)
    npad_ref[...] = jnp.zeros_like(npad_ref)
    opad_ref[...] = jnp.zeros_like(opad_ref)
    spad_ref[...] = jnp.zeros_like(spad_ref)

    S = ssum_ref[...]                                        # (W*8, W) ch-sum

    # ---- contour_1: Conv(nh->8,(39,3),'same') + folded BN + ReLU ----------
    # Sliding-K matmuls over the 39 freq taps (time padding folded into w1m).
    xc = xc_ref[0]                                           # (H+KH1-1, W*NH)
    acc1 = jnp.zeros((H, WC1), jnp.float32)
    for kh in range(KH1):
        acc1 = acc1 + jnp.dot(xc[kh:kh + H, :],
                              w1_ref[kh * KIN1:(kh + 1) * KIN1, :],
                              preferred_element_type=jnp.float32)
    y1 = jnp.maximum(acc1 + b1_ref[...], 0.0)                # (H, W*C1)

    # ---- contour_2: Conv(8->1,(5,5),'same') + Sigmoid (tap MACs) ----------
    y1pad_ref[2:2 + H, 2 * C1:2 * C1 + WC1] = y1             # bulk interior
    acc2 = jnp.zeros((H, WC1), jnp.float32)
    for kh in range(5):
        for kw in range(5):
            t = kh * 5 + kw
            acc2 = acc2 + (y1pad_ref[kh:kh + H, kw * C1:kw * C1 + WC1]
                           * w2t_ref[t:t + 1, :])
    contour = jax.nn.sigmoid(
        jnp.dot(acc2, S, preferred_element_type=jnp.float32) + scal_ref[0])
    contour_ref[0] = contour                                 # (H, W)

    # ---- note_1a: Conv2dSame(1->Cn,(7,7),stride(3,1)) + bias + ReLU -------
    # Stride-3 row selection done with constant selection matmuls.
    cpad_ref[2:2 + H, 3:3 + W] = contour                     # pads (2,2)/(3,3)
    cpadv = cpad_ref[...]                                    # (H+4, 16)
    accn = jnp.zeros((OH, WCn), jnp.float32)
    for kh in range(7):
        rows = jnp.dot(seln_ref[kh * OH:(kh + 1) * OH, :], cpadv,
                       preferred_element_type=jnp.float32)   # (OH, 16)
        accn = accn + jnp.dot(rows, wn1_ref[kh * 16:(kh + 1) * 16, :],
                              preferred_element_type=jnp.float32)
    yn1 = jnp.maximum(accn + bn1_ref[...], 0.0)              # (OH, W*Cn)

    # ---- note_1b: Conv(Cn->1,(3,7),'same') + Sigmoid ----------------------
    npad_ref[1:1 + OH, 3 * Cn:3 * Cn + WCn] = yn1
    accn2 = jnp.zeros((OH, WCn), jnp.float32)
    for kh in range(3):
        for kw in range(7):
            t = kh * 7 + kw
            accn2 = accn2 + (npad_ref[kh:kh + OH, kw * Cn:kw * Cn + WCn]
                             * wn2t_ref[t:t + 1, :])
    notes_pre = jax.nn.sigmoid(
        jnp.dot(accn2, S, preferred_element_type=jnp.float32) + scal_ref[1])
    note_ref[0] = notes_pre                                  # (OH, W)

    # ---- onset_1: Conv2dSame(nh->Co,(5,5),stride(3,1)) + folded BN + ReLU -
    xo = xo_ref[0]                                           # (H+2, (W+4)*NH)
    acco = jnp.zeros((OH, WCo), jnp.float32)
    for kh in range(5):
        rows = jnp.dot(selo_ref[kh * OH:(kh + 1) * OH, :], xo,
                       preferred_element_type=jnp.float32)   # (OH, (W+4)*NH)
        acco = acco + jnp.dot(rows, wo1_ref[kh * KINO:(kh + 1) * KINO, :],
                              preferred_element_type=jnp.float32)
    yo1 = jnp.maximum(acco + bo1_ref[...], 0.0)              # (OH, W*Co)

    # ---- onset_2: Conv(Co+1->1,(3,3),'same') + Sigmoid --------------------
    # concat([notes, onset1]) split into an onset-channel part and a notes
    # part (scalar taps from SMEM) - no in-kernel concat.
    opad_ref[1:1 + OH, Co:Co + WCo] = yo1
    spad_ref[1:1 + OH, 1:1 + W] = notes_pre
    accc = jnp.zeros((OH, WCo), jnp.float32)
    accs = jnp.zeros((OH, W), jnp.float32)
    for kh in range(3):
        for kw in range(3):
            t = kh * 3 + kw
            accc = accc + (opad_ref[kh:kh + OH, kw * Co:kw * Co + WCo]
                           * wo2c_ref[t:t + 1, :])
            accs = accs + spad_ref[kh:kh + OH, kw:kw + W] * wo2n_ref[t]
    onset = jax.nn.sigmoid(
        jnp.dot(accc, S, preferred_element_type=jnp.float32)
        + accs + scal_ref[2])
    onset_ref[0] = onset                                     # (OH, W)


def amt_head_block(xc, xo, w1m, b1v, w2t, seln, wn1m, bn1v, wn2t,
                   selo, wo1m, bo1v, wo2c, ssum, wo2n, scal,
                   H, W, NH, C1, KH1, OH, Cn, Co):
    N = xc.shape[0]
    kern = functools.partial(_fused_amt_kernel, H=H, W=W, NH=NH, C1=C1,
                             KH1=KH1, OH=OH, Cn=Cn, Co=Co)
    return pl.pallas_call(
        kern,
        out_shape=(jax.ShapeDtypeStruct((N, H, W), jnp.float32),
                   jax.ShapeDtypeStruct((N, OH, W), jnp.float32),
                   jax.ShapeDtypeStruct((N, OH, W), jnp.float32)),
        grid=(N,),
        in_specs=[
            pl.BlockSpec((1,) + xc.shape[1:], lambda n: (n, 0, 0)),
            pl.BlockSpec((1,) + xo.shape[1:], lambda n: (n, 0, 0)),
            pl.BlockSpec(w1m.shape, lambda n: (0, 0)),
            pl.BlockSpec(b1v.shape, lambda n: (0, 0)),
            pl.BlockSpec(w2t.shape, lambda n: (0, 0)),
            pl.BlockSpec(seln.shape, lambda n: (0, 0)),
            pl.BlockSpec(wn1m.shape, lambda n: (0, 0)),
            pl.BlockSpec(bn1v.shape, lambda n: (0, 0)),
            pl.BlockSpec(wn2t.shape, lambda n: (0, 0)),
            pl.BlockSpec(selo.shape, lambda n: (0, 0)),
            pl.BlockSpec(wo1m.shape, lambda n: (0, 0)),
            pl.BlockSpec(bo1v.shape, lambda n: (0, 0)),
            pl.BlockSpec(wo2c.shape, lambda n: (0, 0)),
            pl.BlockSpec(ssum.shape, lambda n: (0, 0)),
            pl.BlockSpec(memory_space=pltpu.MemorySpace.SMEM),   # wo2n taps
            pl.BlockSpec(memory_space=pltpu.MemorySpace.SMEM),   # scalar biases
        ],
        out_specs=(pl.BlockSpec((1, H, W), lambda n: (n, 0, 0)),
                   pl.BlockSpec((1, OH, W), lambda n: (n, 0, 0)),
                   pl.BlockSpec((1, OH, W), lambda n: (n, 0, 0))),
        scratch_shapes=[
            pltpu.VMEM((H + 4, (W + 4) * C1), jnp.float32),   # contour_2 pad
            pltpu.VMEM((H + 4, 16), jnp.float32),             # note_1a pad
            pltpu.VMEM((OH + 2, (W + 6) * Cn), jnp.float32),  # note_1b pad
            pltpu.VMEM((OH + 2, (W + 2) * Co), jnp.float32),  # onset_2 pad
            pltpu.VMEM((OH + 2, W + 2), jnp.float32),         # notes pad
        ],
        compiler_params=pltpu.CompilerParams(
            dimension_semantics=("parallel",)),
    )(xc, xo, w1m, b1v, w2t, seln, wn1m, bn1v, wn2t,
      selo, wo1m, bo1v, wo2c, ssum, wo2n, scal)


# ------------------------------ weight packing ------------------------------

def time_mix_mat(KW, T, Tp, off):
    """E[kw, t_pad, t] = 1 iff t_pad == t + kw - off (folds time padding)."""
    e = np.zeros((KW, Tp, T), np.float32)
    for kw in range(KW):
        for t in range(T):
            tp = t + kw - off
            if 0 <= tp < Tp:
                e[kw, tp, t] = 1.0
    return jnp.asarray(e)


def make_sel(KH, OH, stride, rows):
    """Row-selection matrices for stride-`stride` convs, stacked over kh."""
    s = np.zeros((KH * OH, rows), np.float32)
    for kh in range(KH):
        for oh in range(OH):
            s[kh * OH + oh, stride * oh + kh] = 1.0
    return jnp.asarray(s)


def conv_taps_tiled(w_1chw, T):
    """(1, C, KH, KW) -> (KH*KW, T*C) tap table, channel-minor, tiled over t."""
    _, C, KH, KW = w_1chw.shape
    taps = jnp.transpose(w_1chw[0], (1, 2, 0)).reshape(KH * KW, C)
    return jnp.tile(taps, (1, T))


def conv2dsame_pads(H, W, KH, KW, sh, sw):
    def calc(i, k, s):
        return max((math.ceil(i / s) - 1) * s + (k - 1) + 1 - i, 0)
    ph = calc(H, KH, sh)
    pw = calc(W, KW, sw)
    return ((ph // 2, ph - ph // 2), (pw // 2, pw - pw // 2))


def fold_bn_identity(w, b):
    # Registered BatchNorm2d layers with freshly-initialised stats
    # (running_mean=0, running_var=1, gamma=1, beta=0):
    #   y = x / sqrt(1 + eps)  -> fold into conv weights/bias.
    # TODO(synk): loading trained basic_pitch BN stats would need a real fold.
    s = 1.0 / math.sqrt(1.0 + BN_EPS)
    return w * s, b * s


# --------------------- harmonic stacking + (pseudo) CQT --------------------

def harmonic_stack_ntf(spec_ntf, bins_per_semitone, harmonics, n_output_freqs):
    # spec_ntf: (batch, time, freq) lane-dense -> NHWC (batch, freq_out, time, nh)
    shifts = [int(np.round(12 * bins_per_semitone * np.log2(float(h))))
              for h in harmonics]
    chans = []
    for s in shifts:
        if s == 0:
            v = spec_ntf
        elif s > 0:
            v = jnp.pad(spec_ntf[:, :, s:], ((0, 0), (0, 0), (0, s)))
        else:
            v = jnp.pad(spec_ntf[:, :, :s], ((0, 0), (0, 0), (-s, 0)))
        chans.append(v[:, :, :n_output_freqs])
    x = jnp.stack(chans, axis=-1)                     # (N, T, Fout, C)
    return jnp.transpose(x, (0, 2, 1, 3))             # (N, Fout, T, C)


def make_cqt_basis(n_fft, n_bins, n_bins_pad, bins_per_octave, fmin, sr):
    # TODO(synk): nnAudio.CQT2010v2 (multi-rate downsampled CQT) has no clean
    # Pallas equivalent; this is a single-resolution windowed log-frequency
    # projection with the same bin spacing, computed on the MXU.
    # cos and sin bases are concatenated into one lane-dense RHS; bins are
    # zero-padded to a multiple of 128.
    t = np.arange(n_fft) / float(sr)
    window = 0.5 - 0.5 * np.cos(2.0 * np.pi * np.arange(n_fft) / n_fft)
    freqs = fmin * 2.0 ** (np.arange(n_bins) / float(bins_per_octave))
    ang = 2.0 * np.pi * freqs[None, :] * t[:, None]   # (n_fft, n_bins)
    basis = np.zeros((n_fft, 2 * n_bins_pad), np.float32)
    basis[:, :n_bins] = (window[:, None] * np.cos(ang)) / n_fft
    basis[:, n_bins_pad:n_bins_pad + n_bins] = (window[:, None] * np.sin(ang)) / n_fft
    return jnp.asarray(basis)


def frame_audio(audio, n_fft, hop):
    N, S = audio.shape
    n_frames = 1 + (S - n_fft) // hop
    if hop == n_fft:
        frames = audio[:, :n_frames * n_fft].reshape(N * n_frames, n_fft)
    else:
        idx = np.arange(n_frames)[:, None] * hop + np.arange(n_fft)[None, :]
        frames = audio[:, idx].reshape(N * n_frames, n_fft)
    return frames.astype(jnp.float32), n_frames


# --------------------------------- model -----------------------------------

def init_params(key, cfg):
    nh = cfg["n_harmonics"]
    nfo = cfg["n_filters_onsets"]
    nfn = cfg["n_filters_notes"]
    shapes = {
        "contour1_w": (8, nh, 3 * 13, 3), "contour1_b": (8,),
        "contour2_w": (1, 8, 5, 5), "contour2_b": (1,),
        "note1a_w": (nfn, 1, 7, 7), "note1a_b": (nfn,),
        "note1b_w": (1, nfn, 3, 7), "note1b_b": (1,),
        "onset1_w": (nfo, nh, 5, 5), "onset1_b": (nfo,),
        "onset2_w": (1, nfo + 1, 3, 3), "onset2_b": (1,),
    }
    params = {}
    names = sorted(shapes)
    keys = jax.random.split(key, len(names))
    for k_, name in zip(keys, names):
        shp = shapes[name]
        fan_in = int(np.prod(shp[1:])) if len(shp) > 1 else int(shp[0])
        scale = 1.0 / math.sqrt(max(fan_in, 1))
        params[name] = scale * jax.random.normal(k_, shp, dtype=jnp.float32)
    return params


def forward(params, audio, cfg):
    sr, hop = cfg["sr"], cfg["hop_length"]
    fmin = cfg["annotation_base"]
    cbps = cfg["contour_bins_per_semitone"]
    nh = cfg["n_harmonics"]
    H = cfg["annotation_semitones"] * cbps            # n_freq_bins_contour

    max_semitones = int(np.floor(12.0 * np.log2(0.5 * sr / fmin)))
    n_semitones = int(np.min([int(np.ceil(12.0 * np.log2(nh))
                                  + cfg["annotation_semitones"]),
                              max_semitones]))
    n_bins = n_semitones * cbps
    n_bins_pad = ((n_bins + 127) // 128) * 128
    bpo = 12 * cbps
    n_fft = hop
    N = audio.shape[0]

    # ---- kernel 1: CQT projection + |.|^2 + dB norm + batch-norm (fused) ----
    basis = make_cqt_basis(n_fft, n_bins, n_bins_pad, bpo, fmin, sr)
    frames, n_frames = frame_audio(audio, n_fft, hop)
    spec_flat = cqt_db_norm(frames, basis, N, n_frames, n_bins, n_bins_pad)
    spec_ntf = spec_flat.reshape(N, n_frames, n_bins_pad)    # padded bins = 0

    # ---- harmonic stacking (cheap slicing glue) -> NHWC (N, H, W, nh) ----
    harmonics = ([0.5] + list(range(1, nh))) if nh > 1 else [1]
    x = harmonic_stack_ntf(spec_ntf, cbps, harmonics, H)
    W = x.shape[2]                                            # time frames

    # ---- kernel 2 operand / weight preparation (all tiny) ----
    C1 = 8
    Cn = params["note1a_w"].shape[0]
    Co = params["onset1_w"].shape[0]
    assert C1 == Cn == Co, "shared channel-sum matrix assumes 8 channels"
    OH = int(math.ceil(H / 3))

    KH1, KW1 = params["contour1_w"].shape[2], params["contour1_w"].shape[3]
    # The in-kernel pad offsets for the stride-(3,1) convs are architecture
    # constants; guard them here.
    assert conv2dsame_pads(H, W, 7, 7, 3, 1) == ((2, 2), (3, 3))
    assert conv2dsame_pads(H, W, 5, 5, 3, 1) == ((1, 1), (2, 2))

    # contour_1 operand: freq padded (same), time handled inside the weights.
    ph1 = (KH1 - 1) // 2
    xc = jnp.pad(x, ((0, 0), (ph1, ph1), (0, 0), (0, 0)))
    xc = xc.reshape(N, H + KH1 - 1, W * nh)

    # onset_1 operand: Conv2dSame pads for (5,5) stride (3,1).
    xo = jnp.pad(x, ((0, 0), (1, 1), (2, 2), (0, 0)))
    xo = xo.reshape(N, H + 2, (W + 4) * nh)

    # contour_1 weights -> sliding-K matmul matrix (time taps folded in).
    w1f, b1f = fold_bn_identity(params["contour1_w"], params["contour1_b"])
    E3 = time_mix_mat(KW1, W, W, (KW1 - 1) // 2)
    w1m = jnp.einsum('oihw,wst->hsito', w1f, E3).reshape(KH1 * W * nh, W * C1)
    b1v = jnp.tile(b1f.reshape(1, C1), (1, W))

    w2t = conv_taps_tiled(params["contour2_w"], W)            # (25, W*C1)

    # note_1a: selection matrices + per-kh weight matrices (time cols padded
    # to 16 so every slice is sublane-aligned).
    seln = make_sel(7, OH, 3, H + 4)                          # (7*OH, H+4)
    E7 = time_mix_mat(7, W, 16, 0)
    wn1m = jnp.einsum('ohw,wst->hsto', params["note1a_w"][:, 0],
                      E7).reshape(7 * 16, W * Cn)
    bn1v = jnp.tile(params["note1a_b"].reshape(1, Cn), (1, W))

    wn2t = conv_taps_tiled(params["note1b_w"], W)             # (21, W*Cn)

    # onset_1: folded BN, selection matrices, per-kh weight matrices.
    wo1f, bo1f = fold_bn_identity(params["onset1_w"], params["onset1_b"])
    selo = make_sel(5, OH, 3, H + 2)                          # (5*OH, H+2)
    E5 = time_mix_mat(5, W, W + 4, 0)
    wo1m = jnp.einsum('oihw,wst->hsito', wo1f, E5).reshape(5 * (W + 4) * nh,
                                                           W * Co)
    bo1v = jnp.tile(bo1f.reshape(1, Co), (1, W))

    # onset_2: onset-channel taps (VMEM) + notes-channel taps (SMEM scalars).
    wo2c = conv_taps_tiled(params["onset2_w"][:, 1:], W)      # (9, W*Co)
    wo2n = params["onset2_w"][0, 0].reshape(-1)               # (9,)

    ssum = jnp.asarray(np.kron(np.eye(W, dtype=np.float32),
                               np.ones((C1, 1), np.float32)))  # (W*C1, W)
    scal = jnp.concatenate([params["contour2_b"], params["note1b_b"],
                            params["onset2_b"]]).astype(jnp.float32)

    x_contours, x_notes, x_onset = amt_head_block(
        xc, xo, w1m, b1v, w2t, seln, wn1m, bn1v, wn2t,
        selo, wo1m, bo1v, wo2c, ssum, wo2n, scal,
        H, W, nh, C1, KH1, OH, Cn, Co)

    return {"onset": x_onset, "contour": x_contours, "note": x_notes}


# --------------------------------- driver -----------------------------------

if __name__ == "__main__":
    # Small model configuration consistent with the module's constructor.
    cfg = dict(sr=16000, hop_length=256, annotation_semitones=16,
               annotation_base=27.5, n_harmonics=4,
               n_filters_onsets=8, n_filters_notes=8,
               contour_bins_per_semitone=3)

    key = jax.random.PRNGKey(0)
    k_audio, k_params = jax.random.split(key)
    audio = jax.random.normal(k_audio, (2, 2048), dtype=jnp.float32)
    params = init_params(k_params, cfg)

    fwd = jax.jit(functools.partial(forward, cfg=cfg))
    out = fwd(params, audio)
    out = jax.block_until_ready(out)

    assert out["contour"].shape == (2, 48, 8)
    assert out["note"].shape == (2, 16, 8)
    assert out["onset"].shape == (2, 16, 8)
    assert all(bool(jnp.all(jnp.isfinite(v))) for v in out.values())
    print("KERNEL_OK")
</pallas_src>

<mosaic_0001>
module attributes {stable_mosaic.version = 11 : i64} {
  func.func @_cqt_db_kernel(%arg0: memref<16x256xf32, #tpu.memory_space<vmem>>, %arg1: memref<256x256xf32, #tpu.memory_space<vmem>>, %arg2: memref<16x128xf32, #tpu.memory_space<vmem>>) attributes {dimension_semantics = [], scalar_prefetch = 0 : i64, scratch_operands = 0 : i64, tpu.core_type = #tpu.core_type<tc>} {
    %c0 = arith.constant 0 : index
    %c0_0 = arith.constant 0 : index
    %0 = vector.load %arg0[%c0, %c0_0] : memref<16x256xf32, #tpu.memory_space<vmem>>, vector<16x256xf32>
    %c0_1 = arith.constant 0 : index
    %c0_2 = arith.constant 0 : index
    %1 = vector.load %arg1[%c0_1, %c0_2] : memref<256x256xf32, #tpu.memory_space<vmem>>, vector<256x256xf32>
    %cst = arith.constant dense<0.000000e+00> : vector<16x256xf32>
    %2 = tpu.matmul %0, %1, %cst {dimension_numbers = #tpu.dot_dimension_numbers<[1], [0], [0], [1], [0, 0, 1, 1], [], []>} : vector<16x256xf32>, vector<256x256xf32>, vector<16x256xf32> -> vector<16x256xf32>
    %3 = vector.extract_strided_slice %2 {offsets = [0, 0], sizes = [16, 128], strides = [1, 1]} : vector<16x256xf32> to vector<16x128xf32>
    %4 = vector.extract_strided_slice %2 {offsets = [0, 128], sizes = [16, 128], strides = [1, 1]} : vector<16x256xf32> to vector<16x128xf32>
    %5 = arith.mulf %3, %3 : vector<16x128xf32>
    %6 = arith.mulf %4, %4 : vector<16x128xf32>
    %7 = arith.addf %5, %6 : vector<16x128xf32>
    %cst_3 = arith.constant 1.000000e-10 : f32
    %8 = vector.broadcast %cst_3 : f32 to vector<16x128xf32>
    %9 = arith.addf %7, %8 : vector<16x128xf32>
    %10 = math.log %9 : vector<16x128xf32>
    %cst_4 = arith.constant 0.434294492 : f32
    %11 = vector.broadcast %cst_4 : f32 to vector<16x128xf32>
    %12 = arith.mulf %10, %11 : vector<16x128xf32>
    %cst_5 = arith.constant 1.000000e+01 : f32
    %13 = vector.broadcast %cst_5 : f32 to vector<16x128xf32>
    %14 = arith.mulf %13, %12 : vector<16x128xf32>
    %15 = tpu.iota {dimensions = array<i32: 1>} : vector<1x128xi32>
    %c120_i32 = arith.constant 120 : i32
    %16 = vector.broadcast %c120_i32 : i32 to vector<1x128xi32>
    %17 = arith.cmpi slt, %15, %16 : vector<1x128xi32>
    %18 = vector.shape_cast %17 : vector<1x128xi1> to vector<1x1x128xi1>
    %19 = vector.shape_cast %14 : vector<16x128xf32> to vector<2x8x128xf32>
    %cst_6 = arith.constant 1.000000e+30 : f32
    %20 = vector.shape_cast %18 : vector<1x1x128xi1> to vector<1x1x128xi1>
    %21 = vector.broadcast %20 : vector<1x1x128xi1> to vector<2x8x128xi1>
    %22 = vector.broadcast %cst_6 : f32 to vector<2x8x128xf32>
    %23 = arith.select %21, %19, %22 : vector<2x8x128xi1>, vector<2x8x128xf32>
    %cst_7 = arith.constant dense<0x7F800000> : vector<2x8xf32>
    %24 = vector.multi_reduction <minimumf>, %23, %cst_7 [2] : vector<2x8x128xf32> to vector<2x8xf32>
    %25 = vector.shape_cast %24 : vector<2x8xf32> to vector<2x8x1xf32>
    %cst_8 = arith.constant dense<0x7F800000> : vector<2x1xf32>
    %26 = vector.multi_reduction <minimumf>, %25, %cst_8 [1] : vector<2x8x1xf32> to vector<2x1xf32>
    %27 = vector.shape_cast %26 : vector<2x1xf32> to vector<2x1x1xf32>
    %28 = vector.broadcast %27 : vector<2x1x1xf32> to vector<2x8x128xf32>
    %29 = arith.subf %19, %28 : vector<2x8x128xf32>
    %cst_9 = arith.constant -1.000000e+30 : f32
    %30 = vector.shape_cast %18 : vector<1x1x128xi1> to vector<1x1x128xi1>
    %31 = vector.broadcast %30 : vector<1x1x128xi1> to vector<2x8x128xi1>
    %32 = vector.broadcast %cst_9 : f32 to vector<2x8x128xf32>
    %33 = arith.select %31, %29, %32 : vector<2x8x128xi1>, vector<2x8x128xf32>
    %cst_10 = arith.constant dense<0xFF800000> : vector<2x8xf32>
    %34 = vector.multi_reduction <maximumf>, %33, %cst_10 [2] : vector<2x8x128xf32> to vector<2x8xf32>
    %35 = vector.shape_cast %34 : vector<2x8xf32> to vector<2x8x1xf32>
    %cst_11 = arith.constant dense<0xFF800000> : vector<2x1xf32>
    %36 = vector.multi_reduction <maximumf>, %35, %cst_11 [1] : vector<2x8x1xf32> to vector<2x1xf32>
    %37 = vector.shape_cast %36 : vector<2x1xf32> to vector<2x1x1xf32>
    %38 = vector.broadcast %37 : vector<2x1x1xf32> to vector<2x8x128xf32>
    %39 = arith.divf %29, %38 : vector<2x8x128xf32>
    %40 = vector.shape_cast %39 : vector<2x8x128xf32> to vector<16x128xf32>
    %cst_12 = arith.constant 0.000000e+00 : f32
    %41 = vector.shape_cast %17 : vector<1x128xi1> to vector<1x128xi1>
    %42 = vector.broadcast %41 : vector<1x128xi1> to vector<16x128xi1>
    %43 = vector.broadcast %cst_12 : f32 to vector<16x128xf32>
    %44 = arith.select %42, %40, %43 : vector<16x128xi1>, vector<16x128xf32>
    %45 = vector.shape_cast %44 : vector<16x128xf32> to vector<1x16x128xf32>
    %cst_13 = arith.constant dense<0.000000e+00> : vector<1xf32>
    %46 = vector.multi_reduction <add>, %45, %cst_13 [1, 2] : vector<1x16x128xf32> to vector<1xf32>
    %47 = vector.shape_cast %46 : vector<1xf32> to vector<1x1x1xf32>
    %48 = vector.extract %47[0, 0, 0] : f32 from vector<1x1x1xf32>
    %cst_14 = arith.constant 1.920000e+03 : f32
    %49 = arith.divf %48, %cst_14 : f32
    %50 = vector.broadcast %49 : f32 to vector<16x128xf32>
    %51 = arith.subf %40, %50 : vector<16x128xf32>
    %52 = arith.mulf %51, %51 : vector<16x128xf32>
    %cst_15 = arith.constant 0.000000e+00 : f32
    %53 = vector.shape_cast %17 : vector<1x128xi1> to vector<1x128xi1>
    %54 = vector.broadcast %53 : vector<1x128xi1> to vector<16x128xi1>
    %55 = vector.broadcast %cst_15 : f32 to vector<16x128xf32>
    %56 = arith.select %54, %52, %55 : vector<16x128xi1>, vector<16x128xf32>
    %57 = vector.shape_cast %56 : vector<16x128xf32> to vector<1x16x128xf32>
    %cst_16 = arith.constant dense<0.000000e+00> : vector<1xf32>
    %58 = vector.multi_reduction <add>, %57, %cst_16 [1, 2] : vector<1x16x128xf32> to vector<1xf32>
    %59 = vector.shape_cast %58 : vector<1xf32> to vector<1x1x1xf32>
    %60 = vector.extract %59[0, 0, 0] : f32 from vector<1x1x1xf32>
    %cst_17 = arith.constant 1.920000e+03 : f32
    %61 = arith.divf %60, %cst_17 : f32
    %62 = vector.broadcast %49 : f32 to vector<16x128xf32>
    %63 = arith.subf %40, %62 : vector<16x128xf32>
    %cst_18 = arith.constant 9.99999974E-6 : f32
    %64 = arith.addf %61, %cst_18 : f32
    %65 = math.rsqrt %64 : f32
    %66 = vector.broadcast %65 : f32 to vector<16x128xf32>
    %67 = arith.mulf %63, %66 : vector<16x128xf32>
    %cst_19 = arith.constant 0.000000e+00 : f32
    %68 = vector.shape_cast %17 : vector<1x128xi1> to vector<1x128xi1>
    %69 = vector.broadcast %68 : vector<1x128xi1> to vector<16x128xi1>
    %70 = vector.broadcast %cst_19 : f32 to vector<16x128xf32>
    %71 = arith.select %69, %67, %70 : vector<16x128xi1>, vector<16x128xf32>
    %c0_20 = arith.constant 0 : index
    %c0_21 = arith.constant 0 : index
    %72 = vector.load %arg2[%c0_20, %c0_21] : memref<16x128xf32, #tpu.memory_space<vmem>>, vector<16x128xf32>
    tpu.vector_store %arg2[%c0_20, %c0_21], %71 {strides = array<i32>} : memref<16x128xf32, #tpu.memory_space<vmem>>, vector<16x128xf32>,
    return
  }
}

module attributes {stable_mosaic.version = 11 : i64} {
  func.func @_fused_amt_kernel(%arg0: i32, %arg1: memref<1x86x32xf32, #tpu.memory_space<vmem>>, %arg2: memref<1x50x48xf32, #tpu.memory_space<vmem>>, %arg3: memref<1248x64xf32, #tpu.memory_space<vmem>>, %arg4: memref<1x64xf32, #tpu.memory_space<vmem>>, %arg5: memref<25x64xf32, #tpu.memory_space<vmem>>, %arg6: memref<112x52xf32, #tpu.memory_space<vmem>>, %arg7: memref<112x64xf32, #tpu.memory_space<vmem>>, %arg8: memref<1x64xf32, #tpu.memory_space<vmem>>, %arg9: memref<21x64xf32, #tpu.memory_space<vmem>>, %arg10: memref<80x50xf32, #tpu.memory_space<vmem>>, %arg11: memref<240x64xf32, #tpu.memory_space<vmem>>, %arg12: memref<1x64xf32, #tpu.memory_space<vmem>>, %arg13: memref<9x64xf32, #tpu.memory_space<vmem>>, %arg14: memref<64x8xf32, #tpu.memory_space<vmem>>, %arg15: memref<9xf32, #tpu.memory_space<smem>>, %arg16: memref<3xf32, #tpu.memory_space<smem>>, %arg17: memref<1x48x8xf32, #tpu.memory_space<vmem>>, %arg18: memref<1x16x8xf32, #tpu.memory_space<vmem>>, %arg19: memref<1x16x8xf32, #tpu.memory_space<vmem>>, %arg20: memref<52x96xf32, #tpu.memory_space<vmem>>, %arg21: memref<52x16xf32, #tpu.memory_space<vmem>>, %arg22: memref<18x112xf32, #tpu.memory_space<vmem>>, %arg23: memref<18x80xf32, #tpu.memory_space<vmem>>, %arg24: memref<18x10xf32, #tpu.memory_space<vmem>>) attributes {dimension_semantics = [#tpu.dimension_semantics<parallel>], iteration_bounds = array<i64: 2>, scalar_prefetch = 0 : i64, scratch_operands = 5 : i64, tpu.core_type = #tpu.core_type<tc>, window_params = [{transform_indices = @transform_0, window_bounds = array<i64: 1, 86, 32>}, {transform_indices = @transform_1, window_bounds = array<i64: 1, 50, 48>}, {pipeline_mode = #tpu.pipeline_mode<synchronous>, transform_indices = @transform_2, window_bounds = array<i64: 1248, 64>}, {pipeline_mode = #tpu.pipeline_mode<synchronous>, transform_indices = @transform_3, window_bounds = array<i64: 1, 64>}, {pipeline_mode = #tpu.pipeline_mode<synchronous>, transform_indices = @transform_4, window_bounds = array<i64: 25, 64>}, {pipeline_mode = #tpu.pipeline_mode<synchronous>, transform_indices = @transform_5, window_bounds = array<i64: 112, 52>}, {pipeline_mode = #tpu.pipeline_mode<synchronous>, transform_indices = @transform_6, window_bounds = array<i64: 112, 64>}, {pipeline_mode = #tpu.pipeline_mode<synchronous>, transform_indices = @transform_7, window_bounds = array<i64: 1, 64>}, {pipeline_mode = #tpu.pipeline_mode<synchronous>, transform_indices = @transform_8, window_bounds = array<i64: 21, 64>}, {pipeline_mode = #tpu.pipeline_mode<synchronous>, transform_indices = @transform_9, window_bounds = array<i64: 80, 50>}, {pipeline_mode = #tpu.pipeline_mode<synchronous>, transform_indices = @transform_10, window_bounds = array<i64: 240, 64>}, {pipeline_mode = #tpu.pipeline_mode<synchronous>, transform_indices = @transform_11, window_bounds = array<i64: 1, 64>}, {pipeline_mode = #tpu.pipeline_mode<synchronous>, transform_indices = @transform_12, window_bounds = array<i64: 9, 64>}, {pipeline_mode = #tpu.pipeline_mode<synchronous>, transform_indices = @transform_13, window_bounds = array<i64: 64, 8>}, {transform_indices = @transform_14, window_bounds = array<i64: 9>}, {transform_indices = @transform_15, window_bounds = array<i64: 3>}, {transform_indices = @transform_16, window_bounds = array<i64: 1, 48, 8>}, {transform_indices = @transform_17, window_bounds = array<i64: 1, 16, 8>}, {transform_indices = @transform_18, window_bounds = array<i64: 1, 16, 8>}]} {
    %cst = arith.constant 0.000000e+00 : f32
    %0 = vector.broadcast %cst : f32 to vector<52x96xf32>
    %c0 = arith.constant 0 : index
    %c0_0 = arith.constant 0 : index
    %1 = vector.load %arg20[%c0, %c0_0] : memref<52x96xf32, #tpu.memory_space<vmem>>, vector<52x96xf32>
    tpu.vector_store %arg20[%c0, %c0_0], %0 {strides = array<i32>} : memref<52x96xf32, #tpu.memory_space<vmem>>, vector<52x96xf32>,
    %cst_1 = arith.constant 0.000000e+00 : f32
    %2 = vector.broadcast %cst_1 : f32 to vector<52x16xf32>
    %c0_2 = arith.constant 0 : index
    %c0_3 = arith.constant 0 : index
    %3 = vector.load %arg21[%c0_2, %c0_3] : memref<52x16xf32, #tpu.memory_space<vmem>>, vector<52x16xf32>
    tpu.vector_store %arg21[%c0_2, %c0_3], %2 {strides = array<i32>} : memref<52x16xf32, #tpu.memory_space<vmem>>, vector<52x16xf32>,
    %cst_4 = arith.constant 0.000000e+00 : f32
    %4 = vector.broadcast %cst_4 : f32 to vector<18x112xf32>
    %c0_5 = arith.constant 0 : index
    %c0_6 = arith.constant 0 : index
    %5 = vector.load %arg22[%c0_5, %c0_6] : memref<18x112xf32, #tpu.memory_space<vmem>>, vector<18x112xf32>
    tpu.vector_store %arg22[%c0_5, %c0_6], %4 {strides = array<i32>} : memref<18x112xf32, #tpu.memory_space<vmem>>, vector<18x112xf32>,
    %cst_7 = arith.constant 0.000000e+00 : f32
    %6 = vector.broadcast %cst_7 : f32 to vector<18x80xf32>
    %c0_8 = arith.constant 0 : index
    %c0_9 = arith.constant 0 : index
    %7 = vector.load %arg23[%c0_8, %c0_9] : memref<18x80xf32, #tpu.memory_space<vmem>>, vector<18x80xf32>
    tpu.vector_store %arg23[%c0_8, %c0_9], %6 {strides = array<i32>} : memref<18x80xf32, #tpu.memory_space<vmem>>, vector<18x80xf32>,
    %cst_10 = arith.constant 0.000000e+00 : f32
    %8 = vector.broadcast %cst_10 : f32 to vector<18x10xf32>
    %c0_11 = arith.constant 0 : index
    %c0_12 = arith.constant 0 : index
    %9 = vector.load %arg24[%c0_11, %c0_12] : memref<18x10xf32, #tpu.memory_space<vmem>>, vector<18x10xf32>
    tpu.vector_store %arg24[%c0_11, %c0_12], %8 {strides = array<i32>} : memref<18x10xf32, #tpu.memory_space<vmem>>, vector<18x10xf32>,
    %c0_13 = arith.constant 0 : index
    %c0_14 = arith.constant 0 : index
    %10 = vector.load %arg14[%c0_13, %c0_14] : memref<64x8xf32, #tpu.memory_space<vmem>>, vector<64x8xf32>
    %c0_15 = arith.constant 0 : index
    %c0_16 = arith.constant 0 : index
    %c0_17 = arith.constant 0 : index
    %11 = vector.load %arg1[%c0_15, %c0_16, %c0_17] : memref<1x86x32xf32, #tpu.memory_space<vmem>>, vector<1x86x32xf32>
    %12 = vector.shape_cast %11 : vector<1x86x32xf32> to vector<86x32xf32>
    %cst_18 = arith.constant 0.000000e+00 : f32
    %13 = vector.broadcast %cst_18 : f32 to vector<48x64xf32>
    %14 = vector.extract_strided_slice %12 {offsets = [0, 0], sizes = [48, 32], strides = [1, 1]} : vector<86x32xf32> to vector<48x32xf32>
    %c0_19 = arith.constant 0 : index
    %c0_20 = arith.constant 0 : index
    %15 = vector.load %arg3[%c0_19, %c0_20] : memref<1248x64xf32, #tpu.memory_space<vmem>>, vector<32x64xf32>
    %cst_21 = arith.constant dense<0.000000e+00> : vector<48x64xf32>
    %16 = tpu.matmul %14, %15, %cst_21 {dimension_numbers = #tpu.dot_dimension_numbers<[1], [0], [0], [1], [0, 0, 1, 1], [], []>} : vector<48x32xf32>, vector<32x64xf32>, vector<48x64xf32> -> vector<48x64xf32>
    %17 = arith.addf %13, %16 : vector<48x64xf32>
    %18 = vector.extract_strided_slice %12 {offsets = [1, 0], sizes = [48, 32], strides = [1, 1]} : vector<86x32xf32> to vector<48x32xf32>
    %c32 = arith.constant 32 : index
    %c0_22 = arith.constant 0 : index
    %19 = vector.load %arg3[%c32, %c0_22] : memref<1248x64xf32, #tpu.memory_space<vmem>>, vector<32x64xf32>
    %cst_23 = arith.constant dense<0.000000e+00> : vector<48x64xf32>
    %20 = tpu.matmul %18, %19, %cst_23 {dimension_numbers = #tpu.dot_dimension_numbers<[1], [0], [0], [1], [0, 0, 1, 1], [], []>} : vector<48x32xf32>, vector<32x64xf32>, vector<48x64xf32> -> vector<48x64xf32>
    %21 = arith.addf %17, %20 : vector<48x64xf32>
    %22 = vector.extract_strided_slice %12 {offsets = [2, 0], sizes = [48, 32], strides = [1, 1]} : vector<86x32xf32> to vector<48x32xf32>
    %c64 = arith.constant 64 : index
    %c0_24 = arith.constant 0 : index
    %23 = vector.load %arg3[%c64, %c0_24] : memref<1248x64xf32, #tpu.memory_space<vmem>>, vector<32x64xf32>
    %cst_25 = arith.constant dense<0.000000e+00> : vector<48x64xf32>
    %24 = tpu.matmul %22, %23, %cst_25 {dimension_numbers = #tpu.dot_dimension_numbers<[1], [0], [0], [1], [0, 0, 1, 1], [], []>} : vector<48x32xf32>, vector<32x64xf32>, vector<48x64xf32> -> vector<48x64xf32>
    %25 = arith.addf %21, %24 : vector<48x64xf32>
    %26 = vector.extract_strided_slice %12 {offsets = [3, 0], sizes = [48, 32], strides = [1, 1]} : vector<86x32xf32> to vector<48x32xf32>
    %c96 = arith.constant 96 : index
    %c0_26 = arith.constant 0 : index
    %27 = vector.load %arg3[%c96, %c0_26] : memref<1248x64xf32, #tpu.memory_space<vmem>>, vector<32x64xf32>
    %cst_27 = arith.constant dense<0.000000e+00> : vector<48x64xf32>
    %28 = tpu.matmul %26, %27, %cst_27 {dimension_numbers = #tpu.dot_dimension_numbers<[1], [0], [0], [1], [0, 0, 1, 1], [], []>} : vector<48x32xf32>, vector<32x64xf32>, vector<48x64xf32> -> vector<48x64xf32>
    %29 = arith.addf %25, %28 : vector<48x64xf32>
    %30 = vector.extract_strided_slice %12 {offsets = [4, 0], sizes = [48, 32], strides = [1, 1]} : vector<86x32xf32> to vector<48x32xf32>
    %c128 = arith.constant 128 : index
    %c0_28 = arith.constant 0 : index
    %31 = vector.load %arg3[%c128, %c0_28] : memref<1248x64xf32, #tpu.memory_space<vmem>>, vector<32x64xf32>
    %cst_29 = arith.constant dense<0.000000e+00> : vector<48x64xf32>
    %32 = tpu.matmul %30, %31, %cst_29 {dimension_numbers = #tpu.dot_dimension_numbers<[1], [0], [0], [1], [0, 0, 1, 1], [], []>} : vector<48x32xf32>, vector<32x64xf32>, vector<48x64xf32> -> vector<48x64xf32>
    %33 = arith.addf %29, %32 : vector<48x64xf32>
    %34 = vector.extract_strided_slice %12 {offsets = [5, 0], sizes = [48, 32], strides = [1, 1]} : vector<86x32xf32> to vector<48x32xf32>
    %c160 = arith.constant 160 : index
    %c0_30 = arith.constant 0 : index
    %35 = vector.load %arg3[%c160, %c0_30] : memref<1248x64xf32, #tpu.memory_space<vmem>>, vector<32x64xf32>
    %cst_31 = arith.constant dense<0.000000e+00> : vector<48x64xf32>
    %36 = tpu.matmul %34, %35, %cst_31 {dimension_numbers = #tpu.dot_dimension_numbers<[1], [0], [0], [1], [0, 0, 1, 1], [], []>} : vector<48x32xf32>, vector<32x64xf32>, vector<48x64xf32> -> vector<48x64xf32>
    %37 = arith.addf %33, %36 : vector<48x64xf32>
    %38 = vector.extract_strided_slice %12 {offsets = [6, 0], sizes = [48, 32], strides = [1, 1]} : vector<86x32xf32> to vector<48x32xf32>
    %c192 = arith.constant 192 : index
    %c0_32 = arith.constant 0 : index
    %39 = vector.load %arg3[%c192, %c0_32] : memref<1248x64xf32, #tpu.memory_space<vmem>>, vector<32x64xf32>
    %cst_33 = arith.constant dense<0.000000e+00> : vector<48x64xf32>
    %40 = tpu.matmul %38, %39, %cst_33 {dimension_numbers = #tpu.dot_dimension_numbers<[1], [0], [0], [1], [0, 0, 1, 1], [], []>} : vector<48x32xf32>, vector<32x64xf32>, vector<48x64xf32> -> vector<48x64xf32>
    %41 = arith.addf %37, %40 : vector<48x64xf32>
    %42 = vector.extract_strided_slice %12 {offsets = [7, 0], sizes = [48, 32], strides = [1, 1]} : vector<86x32xf32> to vector<48x32xf32>
    %c224 = arith.constant 224 : index
    %c0_34 = arith.constant 0 : index
    %43 = vector.load %arg3[%c224, %c0_34] : memref<1248x64xf32, #tpu.memory_space<vmem>>, vector<32x64xf32>
    %cst_35 = arith.constant dense<0.000000e+00> : vector<48x64xf32>
    %44 = tpu.matmul %42, %43, %cst_35 {dimension_numbers = #tpu.dot_dimension_numbers<[1], [0], [0], [1], [0, 0, 1, 1], [], []>} : vector<48x32xf32>, vector<32x64xf32>, vector<48x64xf32> -> vector<48x64xf32>
    %45 = arith.addf %41, %44 : vector<48x64xf32>
    %46 = vector.extract_strided_slice %12 {offsets = [8, 0], sizes = [48, 32], strides = [1, 1]} : vector<86x32xf32> to vector<48x32xf32>
    %c256 = arith.constant 256 : index
    %c0_36 = arith.constant 0 : index
    %47 = vector.load %arg3[%c256, %c0_36] : memref<1248x64xf32, #tpu.memory_space<vmem>>, vector<32x64xf32>
    %cst_37 = arith.constant dense<0.000000e+00> : vector<48x64xf32>
    %48 = tpu.matmul %46, %47, %cst_37 {dimension_numbers = #tpu.dot_dimension_numbers<[1], [0], [0], [1], [0, 0, 1, 1], [], []>} : vector<48x32xf32>, vector<32x64xf32>, vector<48x64xf32> -> vector<48x64xf32>
    %49 = arith.addf %45, %48 : vector<48x64xf32>
    %50 = vector.extract_strided_slice %12 {offsets = [9, 0], sizes = [48, 32], strides = [1, 1]} : vector<86x32xf32> to vector<48x32xf32>
    %c288 = arith.constant 288 : index
    %c0_38 = arith.constant 0 : index
    %51 = vector.load %arg3[%c288, %c0_38] : memref<1248x64xf32, #tpu.memory_space<vmem>>, vector<32x64xf32>
    %cst_39 = arith.constant dense<0.000000e+00> : vector<48x64xf32>
    %52 = tpu.matmul %50, %51, %cst_39 {dimension_numbers = #tpu.dot_dimension_numbers<[1], [0], [0], [1], [0, 0, 1, 1], [], []>} : vector<48x32xf32>, vector<32x64xf32>, vector<48x64xf32> -> vector<48x64xf32>
    %53 = arith.addf %49, %52 : vector<48x64xf32>
    %54 = vector.extract_strided_slice %12 {offsets = [10, 0], sizes = [48, 32], strides = [1, 1]} : vector<86x32xf32> to vector<48x32xf32>
    %c320 = arith.constant 320 : index
    %c0_40 = arith.constant 0 : index
    %55 = vector.load %arg3[%c320, %c0_40] : memref<1248x64xf32, #tpu.memory_space<vmem>>, vector<32x64xf32>
    %cst_41 = arith.constant dense<0.000000e+00> : vector<48x64xf32>
    %56 = tpu.matmul %54, %55, %cst_41 {dimension_numbers = #tpu.dot_dimension_numbers<[1], [0], [0], [1], [0, 0, 1, 1], [], []>} : vector<48x32xf32>, vector<32x64xf32>, vector<48x64xf32> -> vector<48x64xf32>
    %57 = arith.addf %53, %56 : vector<48x64xf32>
    %58 = vector.extract_strided_slice %12 {offsets = [11, 0], sizes = [48, 32], strides = [1, 1]} : vector<86x32xf32> to vector<48x32xf32>
    %c352 = arith.constant 352 : index
    %c0_42 = arith.constant 0 : index
    %59 = vector.load %arg3[%c352, %c0_42] : memref<1248x64xf32, #tpu.memory_space<vmem>>, vector<32x64xf32>
    %cst_43 = arith.constant dense<0.000000e+00> : vector<48x64xf32>
    %60 = tpu.matmul %58, %59, %cst_43 {dimension_numbers = #tpu.dot_dimension_numbers<[1], [0], [0], [1], [0, 0, 1, 1], [], []>} : vector<48x32xf32>, vector<32x64xf32>, vector<48x64xf32> -> vector<48x64xf32>
    %61 = arith.addf %57, %60 : vector<48x64xf32>
    %62 = vector.extract_strided_slice %12 {offsets = [12, 0], sizes = [48, 32], strides = [1, 1]} : vector<86x32xf32> to vector<48x32xf32>
    %c384 = arith.constant 384 : index
    %c0_44 = arith.constant 0 : index
    %63 = vector.load %arg3[%c384, %c0_44] : memref<1248x64xf32, #tpu.memory_space<vmem>>, vector<32x64xf32>
    %cst_45 = arith.constant dense<0.000000e+00> : vector<48x64xf32>
    %64 = tpu.matmul %62, %63, %cst_45 {dimension_numbers = #tpu.dot_dimension_numbers<[1], [0], [0], [1], [0, 0, 1, 1], [], []>} : vector<48x32xf32>, vector<32x64xf32>, vector<48x64xf32> -> vector<48x64xf32>
    %65 = arith.addf %61, %64 : vector<48x64xf32>
    %66 = vector.extract_strided_slice %12 {offsets = [13, 0], sizes = [48, 32], strides = [1, 1]} : vector<86x32xf32> to vector<48x32xf32>
    %c416 = arith.constant 416 : index
    %c0_46 = arith.constant 0 : index
    %67 = vector.load %arg3[%c416, %c0_46] : memref<1248x64xf32, #tpu.memory_space<vmem>>, vector<32x64xf32>
    %cst_47 = arith.constant dense<0.000000e+00> : vector<48x64xf32>
    %68 = tpu.matmul %66, %67, %cst_47 {dimension_numbers = #tpu.dot_dimension_numbers<[1], [0], [0], [1], [0, 0, 1, 1], [], []>} : vector<48x32xf32>, vector<32x64xf32>, vector<48x64xf32> -> vector<48x64xf32>
    %69 = arith.addf %65, %68 : vector<48x64xf32>
    %70 = vector.extract_strided_slice %12 {offsets = [14, 0], sizes = [48, 32], strides = [1, 1]} : vector<86x32xf32> to vector<48x32xf32>
    %c448 = arith.constant 448 : index
    %c0_48 = arith.constant 0 : index
    %71 = vector.load %arg3[%c448, %c0_48] : memref<1248x64xf32, #tpu.memory_space<vmem>>, vector<32x64xf32>
    %cst_49 = arith.constant dense<0.000000e+00> : vector<48x64xf32>
    %72 = tpu.matmul %70, %71, %cst_49 {dimension_numbers = #tpu.dot_dimension_numbers<[1], [0], [0], [1], [0, 0, 1, 1], [], []>} : vector<48x32xf32>, vector<32x64xf32>, vector<48x64xf32> -> vector<48x64xf32>
    %73 = arith.addf %69, %72 : vector<48x64xf32>
    %74 = vector.extract_strided_slice %12 {offsets = [15, 0], sizes = [48, 32], strides = [1, 1]} : vector<86x32xf32> to vector<48x32xf32>
    %c480 = arith.constant 480 : index
    %c0_50 = arith.constant 0 : index
    %75 = vector.load %arg3[%c480, %c0_50] : memref<1248x64xf32, #tpu.memory_space<vmem>>, vector<32x64xf32>
    %cst_51 = arith.constant dense<0.000000e+00> : vector<48x64xf32>
    %76 = tpu.matmul %74, %75, %cst_51 {dimension_numbers = #tpu.dot_dimension_numbers<[1], [0], [0], [1], [0, 0, 1, 1], [], []>} : vector<48x32xf32>, vector<32x64xf32>, vector<48x64xf32> -> vector<48x64xf32>
    %77 = arith.addf %73, %76 : vector<48x64xf32>
    %78 = vector.extract_strided_slice %12 {offsets = [16, 0], sizes = [48, 32], strides = [1, 1]} : vector<86x32xf32> to vector<48x32xf32>
    %c512 = arith.constant 512 : index
    %c0_52 = arith.constant 0 : index
    %79 = vector.load %arg3[%c512, %c0_52] : memref<1248x64xf32, #tpu.memory_space<vmem>>, vector<32x64xf32>
    %cst_53 = arith.constant dense<0.000000e+00> : vector<48x64xf32>
    %80 = tpu.matmul %78, %79, %cst_53 {dimension_numbers = #tpu.dot_dimension_numbers<[1], [0], [0], [1], [0, 0, 1, 1], [], []>} : vector<48x32xf32>, vector<32x64xf32>, vector<48x64xf32> -> vector<48x64xf32>
    %81 = arith.addf %77, %80 : vector<48x64xf32>
    %82 = vector.extract_strided_slice %12 {offsets = [17, 0], sizes = [48, 32], strides = [1, 1]} : vector<86x32xf32> to vector<48x32xf32>
    %c544 = arith.constant 544 : index
    %c0_54 = arith.constant 0 : index
    %83 = vector.load %arg3[%c544, %c0_54] : memref<1248x64xf32, #tpu.memory_space<vmem>>, vector<32x64xf32>
    %cst_55 = arith.constant dense<0.000000e+00> : vector<48x64xf32>
    %84 = tpu.matmul %82, %83, %cst_55 {dimension_numbers = #tpu.dot_dimension_numbers<[1], [0], [0], [1], [0, 0, 1, 1], [], []>} : vector<48x32xf32>, vector<32x64xf32>, vector<48x64xf32> -> vector<48x64xf32>
    %85 = arith.addf %81, %84 : vector<48x64xf32>
    %86 = vector.extract_strided_slice %12 {offsets = [18, 0], sizes = [48, 32], strides = [1, 1]} : vector<86x32xf32> to vector<48x32xf32>
    %c576 = arith.constant 576 : index
    %c0_56 = arith.constant 0 : index
    %87 = vector.load %arg3[%c576, %c0_56] : memref<1248x64xf32, #tpu.memory_space<vmem>>, vector<32x64xf32>
    %cst_57 = arith.constant dense<0.000000e+00> : vector<48x64xf32>
    %88 = tpu.matmul %86, %87, %cst_57 {dimension_numbers = #tpu.dot_dimension_numbers<[1], [0], [0], [1], [0, 0, 1, 1], [], []>} : vector<48x32xf32>, vector<32x64xf32>, vector<48x64xf32> -> vector<48x64xf32>
    %89 = arith.addf %85, %88 : vector<48x64xf32>
    %90 = vector.extract_strided_slice %12 {offsets = [19, 0], sizes = [48, 32], strides = [1, 1]} : vector<86x32xf32> to vector<48x32xf32>
    %c608 = arith.constant 608 : index
    %c0_58 = arith.constant 0 : index
    %91 = vector.load %arg3[%c608, %c0_58] : memref<1248x64xf32, #tpu.memory_space<vmem>>, vector<32x64xf32>
    %cst_59 = arith.constant dense<0.000000e+00> : vector<48x64xf32>
    %92 = tpu.matmul %90, %91, %cst_59 {dimension_numbers = #tpu.dot_dimension_numbers<[1], [0], [0], [1], [0, 0, 1, 1], [], []>} : vector<48x32xf32>, vector<32x64xf32>, vector<48x64xf32> -> vector<48x64xf32>
    %93 = arith.addf %89, %92 : vector<48x64xf32>
    %94 = vector.extract_strided_slice %12 {offsets = [20, 0], sizes = [48, 32], strides = [1, 1]} : vector<86x32xf32> to vector<48x32xf32>
    %c640 = arith.constant 640 : index
    %c0_60 = arith.constant 0 : index
    %95 = vector.load %arg3[%c640, %c0_60] : memref<1248x64xf32, #tpu.memory_space<vmem>>, vector<32x64xf32>
    %cst_61 = arith.constant dense<0.000000e+00> : vector<48x64xf32>
    %96 = tpu.matmul %94, %95, %cst_61 {dimension_numbers = #tpu.dot_dimension_numbers<[1], [0], [0], [1], [0, 0, 1, 1], [], []>} : vector<48x32xf32>, vector<32x64xf32>, vector<48x64xf32> -> vector<48x64xf32>
    %97 = arith.addf %93, %96 : vector<48x64xf32>
    %98 = vector.extract_strided_slice %12 {offsets = [21, 0], sizes = [48, 32], strides = [1, 1]} : vector<86x32xf32> to vector<48x32xf32>
    %c672 = arith.constant 672 : index
    %c0_62 = arith.constant 0 : index
    %99 = vector.load %arg3[%c672, %c0_62] : memref<1248x64xf32, #tpu.memory_space<vmem>>, vector<32x64xf32>
    %cst_63 = arith.constant dense<0.000000e+00> : vector<48x64xf32>
    %100 = tpu.matmul %98, %99, %cst_63 {dimension_numbers = #tpu.dot_dimension_numbers<[1], [0], [0], [1], [0, 0, 1, 1], [], []>} : vector<48x32xf32>, vector<32x64xf32>, vector<48x64xf32> -> vector<48x64xf32>
    %101 = arith.addf %97, %100 : vector<48x64xf32>
    %102 = vector.extract_strided_slice %12 {offsets = [22, 0], sizes = [48, 32], strides = [1, 1]} : vector<86x32xf32> to vector<48x32xf32>
    %c704 = arith.constant 704 : index
    %c0_64 = arith.constant 0 : index
    %103 = vector.load %arg3[%c704, %c0_64] : memref<1248x64xf32, #tpu.memory_space<vmem>>, vector<32x64xf32>
    %cst_65 = arith.constant dense<0.000000e+00> : vector<48x64xf32>
    %104 = tpu.matmul %102, %103, %cst_65 {dimension_numbers = #tpu.dot_dimension_numbers<[1], [0], [0], [1], [0, 0, 1, 1], [], []>} : vector<48x32xf32>, vector<32x64xf32>, vector<48x64xf32> -> vector<48x64xf32>
    %105 = arith.addf %101, %104 : vector<48x64xf32>
    %106 = vector.extract_strided_slice %12 {offsets = [23, 0], sizes = [48, 32], strides = [1, 1]} : vector<86x32xf32> to vector<48x32xf32>
    %c736 = arith.constant 736 : index
    %c0_66 = arith.constant 0 : index
    %107 = vector.load %arg3[%c736, %c0_66] : memref<1248x64xf32, #tpu.memory_space<vmem>>, vector<32x64xf32>
    %cst_67 = arith.constant dense<0.000000e+00> : vector<48x64xf32>
    %108 = tpu.matmul %106, %107, %cst_67 {dimension_numbers = #tpu.dot_dimension_numbers<[1], [0], [0], [1], [0, 0, 1, 1], [], []>} : vector<48x32xf32>, vector<32x64xf32>, vector<48x64xf32> -> vector<48x64xf32>
    %109 = arith.addf %105, %108 : vector<48x64xf32>
    %110 = vector.extract_strided_slice %12 {offsets = [24, 0], sizes = [48, 32], strides = [1, 1]} : vector<86x32xf32> to vector<48x32xf32>
    %c768 = arith.constant 768 : index
    %c0_68 = arith.constant 0 : index
    %111 = vector.load %arg3[%c768, %c0_68] : memref<1248x64xf32, #tpu.memory_space<vmem>>, vector<32x64xf32>
    %cst_69 = arith.constant dense<0.000000e+00> : vector<48x64xf32>
    %112 = tpu.matmul %110, %111, %cst_69 {dimension_numbers = #tpu.dot_dimension_numbers<[1], [0], [0], [1], [0, 0, 1, 1], [], []>} : vector<48x32xf32>, vector<32x64xf32>, vector<48x64xf32> -> vector<48x64xf32>
    %113 = arith.addf %109, %112 : vector<48x64xf32>
    %114 = vector.extract_strided_slice %12 {offsets = [25, 0], sizes = [48, 32], strides = [1, 1]} : vector<86x32xf32> to vector<48x32xf32>
    %c800 = arith.constant 800 : index
    %c0_70 = arith.constant 0 : index
    %115 = vector.load %arg3[%c800, %c0_70] : memref<1248x64xf32, #tpu.memory_space<vmem>>, vector<32x64xf32>
    %cst_71 = arith.constant dense<0.000000e+00> : vector<48x64xf32>
    %116 = tpu.matmul %114, %115, %cst_71 {dimension_numbers = #tpu.dot_dimension_numbers<[1], [0], [0], [1], [0, 0, 1, 1], [], []>} : vector<48x32xf32>, vector<32x64xf32>, vector<48x64xf32> -> vector<48x64xf32>
    %117 = arith.addf %113, %116 : vector<48x64xf32>
    %118 = vector.extract_strided_slice %12 {offsets = [26, 0], sizes = [48, 32], strides = [1, 1]} : vector<86x32xf32> to vector<48x32xf32>
    %c832 = arith.constant 832 : index
    %c0_72 = arith.constant 0 : index
    %119 = vector.load %arg3[%c832, %c0_72] : memref<1248x64xf32, #tpu.memory_space<vmem>>, vector<32x64xf32>
    %cst_73 = arith.constant dense<0.000000e+00> : vector<48x64xf32>
    %120 = tpu.matmul %118, %119, %cst_73 {dimension_numbers = #tpu.dot_dimension_numbers<[1], [0], [0], [1], [0, 0, 1, 1], [], []>} : vector<48x32xf32>, vector<32x64xf32>, vector<48x64xf32> -> vector<48x64xf32>
    %121 = arith.addf %117, %120 : vector<48x64xf32>
    %122 = vector.extract_strided_slice %12 {offsets = [27, 0], sizes = [48, 32], strides = [1, 1]} : vector<86x32xf32> to vector<48x32xf32>
    %c864 = arith.constant 864 : index
    %c0_74 = arith.constant 0 : index
    %123 = vector.load %arg3[%c864, %c0_74] : memref<1248x64xf32, #tpu.memory_space<vmem>>, vector<32x64xf32>
    %cst_75 = arith.constant dense<0.000000e+00> : vector<48x64xf32>
    %124 = tpu.matmul %122, %123, %cst_75 {dimension_numbers = #tpu.dot_dimension_numbers<[1], [0], [0], [1], [0, 0, 1, 1], [], []>} : vector<48x32xf32>, vector<32x64xf32>, vector<48x64xf32> -> vector<48x64xf32>
    %125 = arith.addf %121, %124 : vector<48x64xf32>
    %126 = vector.extract_strided_slice %12 {offsets = [28, 0], sizes = [48, 32], strides = [1, 1]} : vector<86x32xf32> to vector<48x32xf32>
    %c896 = arith.constant 896 : index
    %c0_76 = arith.constant 0 : index
    %127 = vector.load %arg3[%c896, %c0_76] : memref<1248x64xf32, #tpu.memory_space<vmem>>, vector<32x64xf32>
    %cst_77 = arith.constant dense<0.000000e+00> : vector<48x64xf32>
    %128 = tpu.matmul %126, %127, %cst_77 {dimension_numbers = #tpu.dot_dimension_numbers<[1], [0], [0], [1], [0, 0, 1, 1], [], []>} : vector<48x32xf32>, vector<32x64xf32>, vector<48x64xf32> -> vector<48x64xf32>
    %129 = arith.addf %125, %128 : vector<48x64xf32>
    %130 = vector.extract_strided_slice %12 {offsets = [29, 0], sizes = [48, 32], strides = [1, 1]} : vector<86x32xf32> to vector<48x32xf32>
    %c928 = arith.constant 928 : index
    %c0_78 = arith.constant 0 : index
    %131 = vector.load %arg3[%c928, %c0_78] : memref<1248x64xf32, #tpu.memory_space<vmem>>, vector<32x64xf32>
    %cst_79 = arith.constant dense<0.000000e+00> : vector<48x64xf32>
    %132 = tpu.matmul %130, %131, %cst_79 {dimension_numbers = #tpu.dot_dimension_numbers<[1], [0], [0], [1], [0, 0, 1, 1], [], []>} : vector<48x32xf32>, vector<32x64xf32>, vector<48x64xf32> -> vector<48x64xf32>
    %133 = arith.addf %129, %132 : vector<48x64xf32>
    %134 = vector.extract_strided_slice %12 {offsets = [30, 0], sizes = [48, 32], strides = [1, 1]} : vector<86x32xf32> to vector<48x32xf32>
    %c960 = arith.constant 960 : index
    %c0_80 = arith.constant 0 : index
    %135 = vector.load %arg3[%c960, %c0_80] : memref<1248x64xf32, #tpu.memory_space<vmem>>, vector<32x64xf32>
    %cst_81 = arith.constant dense<0.000000e+00> : vector<48x64xf32>
    %136 = tpu.matmul %134, %135, %cst_81 {dimension_numbers = #tpu.dot_dimension_numbers<[1], [0], [0], [1], [0, 0, 1, 1], [], []>} : vector<48x32xf32>, vector<32x64xf32>, vector<48x64xf32> -> vector<48x64xf32>
    %137 = arith.addf %133, %136 : vector<48x64xf32>
    %138 = vector.extract_strided_slice %12 {offsets = [31, 0], sizes = [48, 32], strides = [1, 1]} : vector<86x32xf32> to vector<48x32xf32>
    %c992 = arith.constant 992 : index
    %c0_82 = arith.constant 0 : index
    %139 = vector.load %arg3[%c992, %c0_82] : memref<1248x64xf32, #tpu.memory_space<vmem>>, vector<32x64xf32>
    %cst_83 = arith.constant dense<0.000000e+00> : vector<48x64xf32>
    %140 = tpu.matmul %138, %139, %cst_83 {dimension_numbers = #tpu.dot_dimension_numbers<[1], [0], [0], [1], [0, 0, 1, 1], [], []>} : vector<48x32xf32>, vector<32x64xf32>, vector<48x64xf32> -> vector<48x64xf32>
    %141 = arith.addf %137, %140 : vector<48x64xf32>
    %142 = vector.extract_strided_slice %12 {offsets = [32, 0], sizes = [48, 32], strides = [1, 1]} : vector<86x32xf32> to vector<48x32xf32>
    %c1024 = arith.constant 1024 : index
    %c0_84 = arith.constant 0 : index
    %143 = vector.load %arg3[%c1024, %c0_84] : memref<1248x64xf32, #tpu.memory_space<vmem>>, vector<32x64xf32>
    %cst_85 = arith.constant dense<0.000000e+00> : vector<48x64xf32>
    %144 = tpu.matmul %142, %143, %cst_85 {dimension_numbers = #tpu.dot_dimension_numbers<[1], [0], [0], [1], [0, 0, 1, 1], [], []>} : vector<48x32xf32>, vector<32x64xf32>, vector<48x64xf32> -> vector<48x64xf32>
    %145 = arith.addf %141, %144 : vector<48x64xf32>
    %146 = vector.extract_strided_slice %12 {offsets = [33, 0], sizes = [48, 32], strides = [1, 1]} : vector<86x32xf32> to vector<48x32xf32>
    %c1056 = arith.constant 1056 : index
    %c0_86 = arith.constant 0 : index
    %147 = vector.load %arg3[%c1056, %c0_86] : memref<1248x64xf32, #tpu.memory_space<vmem>>, vector<32x64xf32>
    %cst_87 = arith.constant dense<0.000000e+00> : vector<48x64xf32>
    %148 = tpu.matmul %146, %147, %cst_87 {dimension_numbers = #tpu.dot_dimension_numbers<[1], [0], [0], [1], [0, 0, 1, 1], [], []>} : vector<48x32xf32>, vector<32x64xf32>, vector<48x64xf32> -> vector<48x64xf32>
    %149 = arith.addf %145, %148 : vector<48x64xf32>
    %150 = vector.extract_strided_slice %12 {offsets = [34, 0], sizes = [48, 32], strides = [1, 1]} : vector<86x32xf32> to vector<48x32xf32>
    %c1088 = arith.constant 1088 : index
    %c0_88 = arith.constant 0 : index
    %151 = vector.load %arg3[%c1088, %c0_88] : memref<1248x64xf32, #tpu.memory_space<vmem>>, vector<32x64xf32>
    %cst_89 = arith.constant dense<0.000000e+00> : vector<48x64xf32>
    %152 = tpu.matmul %150, %151, %cst_89 {dimension_numbers = #tpu.dot_dimension_numbers<[1], [0], [0], [1], [0, 0, 1, 1], [], []>} : vector<48x32xf32>, vector<32x64xf32>, vector<48x64xf32> -> vector<48x64xf32>
    %153 = arith.addf %149, %152 : vector<48x64xf32>
    %154 = vector.extract_strided_slice %12 {offsets = [35, 0], sizes = [48, 32], strides = [1, 1]} : vector<86x32xf32> to vector<48x32xf32>
    %c1120 = arith.constant 1120 : index
    %c0_90 = arith.constant 0 : index
    %155 = vector.load %arg3[%c1120, %c0_90] : memref<1248x64xf32, #tpu.memory_space<vmem>>, vector<32x64xf32>
    %cst_91 = arith.constant dense<0.000000e+00> : vector<48x64xf32>
    %156 = tpu.matmul %154, %155, %cst_91 {dimension_numbers = #tpu.dot_dimension_numbers<[1], [0], [0], [1], [0, 0, 1, 1], [], []>} : vector<48x32xf32>, vector<32x64xf32>, vector<48x64xf32> -> vector<48x64xf32>
    %157 = arith.addf %153, %156 : vector<48x64xf32>
    %158 = vector.extract_strided_slice %12 {offsets = [36, 0], sizes = [48, 32], strides = [1, 1]} : vector<86x32xf32> to vector<48x32xf32>
    %c1152 = arith.constant 1152 : index
    %c0_92 = arith.constant 0 : index
    %159 = vector.load %arg3[%c1152, %c0_92] : memref<1248x64xf32, #tpu.memory_space<vmem>>, vector<32x64xf32>
    %cst_93 = arith.constant dense<0.000000e+00> : vector<48x64xf32>
    %160 = tpu.matmul %158, %159, %cst_93 {dimension_numbers = #tpu.dot_dimension_numbers<[1], [0], [0], [1], [0, 0, 1, 1], [], []>} : vector<48x32xf32>, vector<32x64xf32>, vector<48x64xf32> -> vector<48x64xf32>
    %161 = arith.addf %157, %160 : vector<48x64xf32>
    %162 = vector.extract_strided_slice %12 {offsets = [37, 0], sizes = [48, 32], strides = [1, 1]} : vector<86x32xf32> to vector<48x32xf32>
    %c1184 = arith.constant 1184 : index
    %c0_94 = arith.constant 0 : index
    %163 = vector.load %arg3[%c1184, %c0_94] : memref<1248x64xf32, #tpu.memory_space<vmem>>, vector<32x64xf32>
    %cst_95 = arith.constant dense<0.000000e+00> : vector<48x64xf32>
    %164 = tpu.matmul %162, %163, %cst_95 {dimension_numbers = #tpu.dot_dimension_numbers<[1], [0], [0], [1], [0, 0, 1, 1], [], []>} : vector<48x32xf32>, vector<32x64xf32>, vector<48x64xf32> -> vector<48x64xf32>
    %165 = arith.addf %161, %164 : vector<48x64xf32>
    %166 = vector.extract_strided_slice %12 {offsets = [38, 0], sizes = [48, 32], strides = [1, 1]} : vector<86x32xf32> to vector<48x32xf32>
    %c1216 = arith.constant 1216 : index
    %c0_96 = arith.constant 0 : index
    %167 = vector.load %arg3[%c1216, %c0_96] : memref<1248x64xf32, #tpu.memory_space<vmem>>, vector<32x64xf32>
    %cst_97 = arith.constant dense<0.000000e+00> : vector<48x64xf32>
    %168 = tpu.matmul %166, %167, %cst_97 {dimension_numbers = #tpu.dot_dimension_numbers<[1], [0], [0], [1], [0, 0, 1, 1], [], []>} : vector<48x32xf32>, vector<32x64xf32>, vector<48x64xf32> -> vector<48x64xf32>
    %169 = arith.addf %165, %168 : vector<48x64xf32>
    %c0_98 = arith.constant 0 : index
    %c0_99 = arith.constant 0 : index
    %170 = vector.load %arg4[%c0_98, %c0_99] : memref<1x64xf32, #tpu.memory_space<vmem>>, vector<1x64xf32>
    %171 = vector.broadcast %170 : vector<1x64xf32> to vector<48x64xf32>
    %172 = arith.addf %169, %171 : vector<48x64xf32>
    %cst_100 = arith.constant 0.000000e+00 : f32
    %173 = vector.broadcast %cst_100 : f32 to vector<48x64xf32>
    %174 = arith.maximumf %172, %173 : vector<48x64xf32>
    %c2 = arith.constant 2 : index
    %c16 = arith.constant 16 : index
    %175 = vector.load %arg20[%c2, %c16] : memref<52x96xf32, #tpu.memory_space<vmem>>, vector<48x64xf32>
    tpu.vector_store %arg20[%c2, %c16], %174 {strides = array<i32>} : memref<52x96xf32, #tpu.memory_space<vmem>>, vector<48x64xf32>,
    %cst_101 = arith.constant 0.000000e+00 : f32
    %176 = vector.broadcast %cst_101 : f32 to vector<48x64xf32>
    %c0_102 = arith.constant 0 : index
    %c0_103 = arith.constant 0 : index
    %177 = vector.load %arg20[%c0_102, %c0_103] : memref<52x96xf32, #tpu.memory_space<vmem>>, vector<48x64xf32>
    %c0_104 = arith.constant 0 : index
    %c0_105 = arith.constant 0 : index
    %178 = vector.load %arg5[%c0_104, %c0_105] : memref<25x64xf32, #tpu.memory_space<vmem>>, vector<1x64xf32>
    %179 = vector.broadcast %178 : vector<1x64xf32> to vector<48x64xf32>
    %180 = arith.mulf %177, %179 : vector<48x64xf32>
    %181 = arith.addf %176, %180 : vector<48x64xf32>
    %c0_106 = arith.constant 0 : index
    %c8 = arith.constant 8 : index
    %182 = vector.load %arg20[%c0_106, %c8] : memref<52x96xf32, #tpu.memory_space<vmem>>, vector<48x64xf32>
    %c1 = arith.constant 1 : index
    %c0_107 = arith.constant 0 : index
    %183 = vector.load %arg5[%c1, %c0_107] : memref<25x64xf32, #tpu.memory_space<vmem>>, vector<1x64xf32>
    %184 = vector.broadcast %183 : vector<1x64xf32> to vector<48x64xf32>
    %185 = arith.mulf %182, %184 : vector<48x64xf32>
    %186 = arith.addf %181, %185 : vector<48x64xf32>
    %c0_108 = arith.constant 0 : index
    %c16_109 = arith.constant 16 : index
    %187 = vector.load %arg20[%c0_108, %c16_109] : memref<52x96xf32, #tpu.memory_space<vmem>>, vector<48x64xf32>
    %c2_110 = arith.constant 2 : index
    %c0_111 = arith.constant 0 : index
    %188 = vector.load %arg5[%c2_110, %c0_111] : memref<25x64xf32, #tpu.memory_space<vmem>>, vector<1x64xf32>
    %189 = vector.broadcast %188 : vector<1x64xf32> to vector<48x64xf32>
    %190 = arith.mulf %187, %189 : vector<48x64xf32>
    %191 = arith.addf %186, %190 : vector<48x64xf32>
    %c0_112 = arith.constant 0 : index
    %c24 = arith.constant 24 : index
    %192 = vector.load %arg20[%c0_112, %c24] : memref<52x96xf32, #tpu.memory_space<vmem>>, vector<48x64xf32>
    %c3 = arith.constant 3 : index
    %c0_113 = arith.constant 0 : index
    %193 = vector.load %arg5[%c3, %c0_113] : memref<25x64xf32, #tpu.memory_space<vmem>>, vector<1x64xf32>
    %194 = vector.broadcast %193 : vector<1x64xf32> to vector<48x64xf32>
    %195 = arith.mulf %192, %194 : vector<48x64xf32>
    %196 = arith.addf %191, %195 : vector<48x64xf32>
    %c0_114 = arith.constant 0 : index
    %c32_115 = arith.constant 32 : index
    %197 = vector.load %arg20[%c0_114, %c32_115] : memref<52x96xf32, #tpu.memory_space<vmem>>, vector<48x64xf32>
    %c4 = arith.constant 4 : index
    %c0_116 = arith.constant 0 : index
    %198 = vector.load %arg5[%c4, %c0_116] : memref<25x64xf32, #tpu.memory_space<vmem>>, vector<1x64xf32>
    %199 = vector.broadcast %198 : vector<1x64xf32> to vector<48x64xf32>
    %200 = arith.mulf %197, %199 : vector<48x64xf32>
    %201 = arith.addf %196, %200 : vector<48x64xf32>
    %c1_117 = arith.constant 1 : index
    %c0_118 = arith.constant 0 : index
    %202 = vector.load %arg20[%c1_117, %c0_118] : memref<52x96xf32, #tpu.memory_space<vmem>>, vector<48x64xf32>
    %c5 = arith.constant 5 : index
    %c0_119 = arith.constant 0 : index
    %203 = vector.load %arg5[%c5, %c0_119] : memref<25x64xf32, #tpu.memory_space<vmem>>, vector<1x64xf32>
    %204 = vector.broadcast %203 : vector<1x64xf32> to vector<48x64xf32>
    %205 = arith.mulf %202, %204 : vector<48x64xf32>
    %206 = arith.addf %201, %205 : vector<48x64xf32>
    %c1_120 = arith.constant 1 : index
    %c8_121 = arith.constant 8 : index
    %207 = vector.load %arg20[%c1_120, %c8_121] : memref<52x96xf32, #tpu.memory_space<vmem>>, vector<48x64xf32>
    %c6 = arith.constant 6 : index
    %c0_122 = arith.constant 0 : index
    %208 = vector.load %arg5[%c6, %c0_122] : memref<25x64xf32, #tpu.memory_space<vmem>>, vector<1x64xf32>
    %209 = vector.broadcast %208 : vector<1x64xf32> to vector<48x64xf32>
    %210 = arith.mulf %207, %209 : vector<48x64xf32>
    %211 = arith.addf %206, %210 : vector<48x64xf32>
    %c1_123 = arith.constant 1 : index
    %c16_124 = arith.constant 16 : index
    %212 = vector.load %arg20[%c1_123, %c16_124] : memref<52x96xf32, #tpu.memory_space<vmem>>, vector<48x64xf32>
    %c7 = arith.constant 7 : index
    %c0_125 = arith.constant 0 : index
    %213 = vector.load %arg5[%c7, %c0_125] : memref<25x64xf32, #tpu.memory_space<vmem>>, vector<1x64xf32>
    %214 = vector.broadcast %213 : vector<1x64xf32> to vector<48x64xf32>
    %215 = arith.mulf %212, %214 : vector<48x64xf32>
    %216 = arith.addf %211, %215 : vector<48x64xf32>
    %c1_126 = arith.constant 1 : index
    %c24_127 = arith.constant 24 : index
    %217 = vector.load %arg20[%c1_126, %c24_127] : memref<52x96xf32, #tpu.memory_space<vmem>>, vector<48x64xf32>
    %c8_128 = arith.constant 8 : index
    %c0_129 = arith.constant 0 : index
    %218 = vector.load %arg5[%c8_128, %c0_129] : memref<25x64xf32, #tpu.memory_space<vmem>>, vector<1x64xf32>
    %219 = vector.broadcast %218 : vector<1x64xf32> to vector<48x64xf32>
    %220 = arith.mulf %217, %219 : vector<48x64xf32>
    %221 = arith.addf %216, %220 : vector<48x64xf32>
    %c1_130 = arith.constant 1 : index
    %c32_131 = arith.constant 32 : index
    %222 = vector.load %arg20[%c1_130, %c32_131] : memref<52x96xf32, #tpu.memory_space<vmem>>, vector<48x64xf32>
    %c9 = arith.constant 9 : index
    %c0_132 = arith.constant 0 : index
    %223 = vector.load %arg5[%c9, %c0_132] : memref<25x64xf32, #tpu.memory_space<vmem>>, vector<1x64xf32>
    %224 = vector.broadcast %223 : vector<1x64xf32> to vector<48x64xf32>
    %225 = arith.mulf %222, %224 : vector<48x64xf32>
    %226 = arith.addf %221, %225 : vector<48x64xf32>
    %c2_133 = arith.constant 2 : index
    %c0_134 = arith.constant 0 : index
    %227 = vector.load %arg20[%c2_133, %c0_134] : memref<52x96xf32, #tpu.memory_space<vmem>>, vector<48x64xf32>
    %c10 = arith.constant 10 : index
    %c0_135 = arith.constant 0 : index
    %228 = vector.load %arg5[%c10, %c0_135] : memref<25x64xf32, #tpu.memory_space<vmem>>, vector<1x64xf32>
    %229 = vector.broadcast %228 : vector<1x64xf32> to vector<48x64xf32>
    %230 = arith.mulf %227, %229 : vector<48x64xf32>
    %231 = arith.addf %226, %230 : vector<48x64xf32>
    %c2_136 = arith.constant 2 : index
    %c8_137 = arith.constant 8 : index
    %232 = vector.load %arg20[%c2_136, %c8_137] : memref<52x96xf32, #tpu.memory_space<vmem>>, vector<48x64xf32>
    %c11 = arith.constant 11 : index
    %c0_138 = arith.constant 0 : index
    %233 = vector.load %arg5[%c11, %c0_138] : memref<25x64xf32, #tpu.memory_space<vmem>>, vector<1x64xf32>
    %234 = vector.broadcast %233 : vector<1x64xf32> to vector<48x64xf32>
    %235 = arith.mulf %232, %234 : vector<48x64xf32>
    %236 = arith.addf %231, %235 : vector<48x64xf32>
    %c2_139 = arith.constant 2 : index
    %c16_140 = arith.constant 16 : index
    %237 = vector.load %arg20[%c2_139, %c16_140] : memref<52x96xf32, #tpu.memory_space<vmem>>, vector<48x64xf32>
    %c12 = arith.constant 12 : index
    %c0_141 = arith.constant 0 : index
    %238 = vector.load %arg5[%c12, %c0_141] : memref<25x64xf32, #tpu.memory_space<vmem>>, vector<1x64xf32>
    %239 = vector.broadcast %238 : vector<1x64xf32> to vector<48x64xf32>
    %240 = arith.mulf %237, %239 : vector<48x64xf32>
    %241 = arith.addf %236, %240 : vector<48x64xf32>
    %c2_142 = arith.constant 2 : index
    %c24_143 = arith.constant 24 : index
    %242 = vector.load %arg20[%c2_142, %c24_143] : memref<52x96xf32, #tpu.memory_space<vmem>>, vector<48x64xf32>
    %c13 = arith.constant 13 : index
    %c0_144 = arith.constant 0 : index
    %243 = vector.load %arg5[%c13, %c0_144] : memref<25x64xf32, #tpu.memory_space<vmem>>, vector<1x64xf32>
    %244 = vector.broadcast %243 : vector<1x64xf32> to vector<48x64xf32>
    %245 = arith.mulf %242, %244 : vector<48x64xf32>
    %246 = arith.addf %241, %245 : vector<48x64xf32>
    %c2_145 = arith.constant 2 : index
    %c32_146 = arith.constant 32 : index
    %247 = vector.load %arg20[%c2_145, %c32_146] : memref<52x96xf32, #tpu.memory_space<vmem>>, vector<48x64xf32>
    %c14 = arith.constant 14 : index
    %c0_147 = arith.constant 0 : index
    %248 = vector.load %arg5[%c14, %c0_147] : memref<25x64xf32, #tpu.memory_space<vmem>>, vector<1x64xf32>
    %249 = vector.broadcast %248 : vector<1x64xf32> to vector<48x64xf32>
    %250 = arith.mulf %247, %249 : vector<48x64xf32>
    %251 = arith.addf %246, %250 : vector<48x64xf32>
    %c3_148 = arith.constant 3 : index
    %c0_149 = arith.constant 0 : index
    %252 = vector.load %arg20[%c3_148, %c0_149] : memref<52x96xf32, #tpu.memory_space<vmem>>, vector<48x64xf32>
    %c15 = arith.constant 15 : index
    %c0_150 = arith.constant 0 : index
    %253 = vector.load %arg5[%c15, %c0_150] : memref<25x64xf32, #tpu.memory_space<vmem>>, vector<1x64xf32>
    %254 = vector.broadcast %253 : vector<1x64xf32> to vector<48x64xf32>
    %255 = arith.mulf %252, %254 : vector<48x64xf32>
    %256 = arith.addf %251, %255 : vector<48x64xf32>
    %c3_151 = arith.constant 3 : index
    %c8_152 = arith.constant 8 : index
    %257 = vector.load %arg20[%c3_151, %c8_152] : memref<52x96xf32, #tpu.memory_space<vmem>>, vector<48x64xf32>
    %c16_153 = arith.constant 16 : index
    %c0_154 = arith.constant 0 : index
    %258 = vector.load %arg5[%c16_153, %c0_154] : memref<25x64xf32, #tpu.memory_space<vmem>>, vector<1x64xf32>
    %259 = vector.broadcast %258 : vector<1x64xf32> to vector<48x64xf32>
    %260 = arith.mulf %257, %259 : vector<48x64xf32>
    %261 = arith.addf %256, %260 : vector<48x64xf32>
    %c3_155 = arith.constant 3 : index
    %c16_156 = arith.constant 16 : index
    %262 = vector.load %arg20[%c3_155, %c16_156] : memref<52x96xf32, #tpu.memory_space<vmem>>, vector<48x64xf32>
    %c17 = arith.constant 17 : index
    %c0_157 = arith.constant 0 : index
    %263 = vector.load %arg5[%c17, %c0_157] : memref<25x64xf32, #tpu.memory_space<vmem>>, vector<1x64xf32>
    %264 = vector.broadcast %263 : vector<1x64xf32> to vector<48x64xf32>
    %265 = arith.mulf %262, %264 : vector<48x64xf32>
    %266 = arith.addf %261, %265 : vector<48x64xf32>
    %c3_158 = arith.constant 3 : index
    %c24_159 = arith.constant 24 : index
    %267 = vector.load %arg20[%c3_158, %c24_159] : memref<52x96xf32, #tpu.memory_space<vmem>>, vector<48x64xf32>
    %c18 = arith.constant 18 : index
    %c0_160 = arith.constant 0 : index
    %268 = vector.load %arg5[%c18, %c0_160] : memref<25x64xf32, #tpu.memory_space<vmem>>, vector<1x64xf32>
    %269 = vector.broadcast %268 : vector<1x64xf32> to vector<48x64xf32>
    %270 = arith.mulf %267, %269 : vector<48x64xf32>
    %271 = arith.addf %266, %270 : vector<48x64xf32>
    %c3_161 = arith.constant 3 : index
    %c32_162 = arith.constant 32 : index
    %272 = vector.load %arg20[%c3_161, %c32_162] : memref<52x96xf32, #tpu.memory_space<vmem>>, vector<48x64xf32>
    %c19 = arith.constant 19 : index
    %c0_163 = arith.constant 0 : index
    %273 = vector.load %arg5[%c19, %c0_163] : memref<25x64xf32, #tpu.memory_space<vmem>>, vector<1x64xf32>
    %274 = vector.broadcast %273 : vector<1x64xf32> to vector<48x64xf32>
    %275 = arith.mulf %272, %274 : vector<48x64xf32>
    %276 = arith.addf %271, %275 : vector<48x64xf32>
    %c4_164 = arith.constant 4 : index
    %c0_165 = arith.constant 0 : index
    %277 = vector.load %arg20[%c4_164, %c0_165] : memref<52x96xf32, #tpu.memory_space<vmem>>, vector<48x64xf32>
    %c20 = arith.constant 20 : index
    %c0_166 = arith.constant 0 : index
    %278 = vector.load %arg5[%c20, %c0_166] : memref<25x64xf32, #tpu.memory_space<vmem>>, vector<1x64xf32>
    %279 = vector.broadcast %278 : vector<1x64xf32> to vector<48x64xf32>
    %280 = arith.mulf %277, %279 : vector<48x64xf32>
    %281 = arith.addf %276, %280 : vector<48x64xf32>
    %c4_167 = arith.constant 4 : index
    %c8_168 = arith.constant 8 : index
    %282 = vector.load %arg20[%c4_167, %c8_168] : memref<52x96xf32, #tpu.memory_space<vmem>>, vector<48x64xf32>
    %c21 = arith.constant 21 : index
    %c0_169 = arith.constant 0 : index
    %283 = vector.load %arg5[%c21, %c0_169] : memref<25x64xf32, #tpu.memory_space<vmem>>, vector<1x64xf32>
    %284 = vector.broadcast %283 : vector<1x64xf32> to vector<48x64xf32>
    %285 = arith.mulf %282, %284 : vector<48x64xf32>
    %286 = arith.addf %281, %285 : vector<48x64xf32>
    %c4_170 = arith.constant 4 : index
    %c16_171 = arith.constant 16 : index
    %287 = vector.load %arg20[%c4_170, %c16_171] : memref<52x96xf32, #tpu.memory_space<vmem>>, vector<48x64xf32>
    %c22 = arith.constant 22 : index
    %c0_172 = arith.constant 0 : index
    %288 = vector.load %arg5[%c22, %c0_172] : memref<25x64xf32, #tpu.memory_space<vmem>>, vector<1x64xf32>
    %289 = vector.broadcast %288 : vector<1x64xf32> to vector<48x64xf32>
    %290 = arith.mulf %287, %289 : vector<48x64xf32>
    %291 = arith.addf %286, %290 : vector<48x64xf32>
    %c4_173 = arith.constant 4 : index
    %c24_174 = arith.constant 24 : index
    %292 = vector.load %arg20[%c4_173, %c24_174] : memref<52x96xf32, #tpu.memory_space<vmem>>, vector<48x64xf32>
    %c23 = arith.constant 23 : index
    %c0_175 = arith.constant 0 : index
    %293 = vector.load %arg5[%c23, %c0_175] : memref<25x64xf32, #tpu.memory_space<vmem>>, vector<1x64xf32>
    %294 = vector.broadcast %293 : vector<1x64xf32> to vector<48x64xf32>
    %295 = arith.mulf %292, %294 : vector<48x64xf32>
    %296 = arith.addf %291, %295 : vector<48x64xf32>
    %c4_176 = arith.constant 4 : index
    %c32_177 = arith.constant 32 : index
    %297 = vector.load %arg20[%c4_176, %c32_177] : memref<52x96xf32, #tpu.memory_space<vmem>>, vector<48x64xf32>
    %c24_178 = arith.constant 24 : index
    %c0_179 = arith.constant 0 : index
    %298 = vector.load %arg5[%c24_178, %c0_179] : memref<25x64xf32, #tpu.memory_space<vmem>>, vector<1x64xf32>
    %299 = vector.broadcast %298 : vector<1x64xf32> to vector<48x64xf32>
    %300 = arith.mulf %297, %299 : vector<48x64xf32>
    %301 = arith.addf %296, %300 : vector<48x64xf32>
    %cst_180 = arith.constant dense<0.000000e+00> : vector<48x8xf32>
    %302 = tpu.matmul %301, %10, %cst_180 {dimension_numbers = #tpu.dot_dimension_numbers<[1], [0], [0], [1], [0, 0, 1, 1], [], []>} : vector<48x64xf32>, vector<64x8xf32>, vector<48x8xf32> -> vector<48x8xf32>
    %c0_181 = arith.constant 0 : index
    %303 = memref.load %arg16[%c0_181] : memref<3xf32, #tpu.memory_space<smem>>
    %304 = vector.broadcast %303 : f32 to vector<48x8xf32>
    %305 = arith.addf %302, %304 : vector<48x8xf32>
    %306 = arith.negf %305 : vector<48x8xf32>
    %307 = math.exp %306 : vector<48x8xf32>
    %cst_182 = arith.constant 1.000000e+00 : f32
    %308 = vector.broadcast %cst_182 : f32 to vector<48x8xf32>
    %309 = arith.addf %308, %307 : vector<48x8xf32>
    %310 = arith.divf %308, %309 : vector<48x8xf32>
    %c0_183 = arith.constant 0 : index
    %c0_184 = arith.constant 0 : index
    %c0_185 = arith.constant 0 : index
    %311 = vector.load %arg17[%c0_183, %c0_184, %c0_185] : memref<1x48x8xf32, #tpu.memory_space<vmem>>, vector<1x48x8xf32>
    %312 = vector.shape_cast %311 : vector<1x48x8xf32> to vector<48x8xf32>
    %313 = vector.shape_cast %310 : vector<48x8xf32> to vector<1x48x8xf32>
    tpu.vector_store %arg17[%c0_183, %c0_184, %c0_185], %313 {strides = array<i32>} : memref<1x48x8xf32, #tpu.memory_space<vmem>>, vector<1x48x8xf32>,
    %c2_186 = arith.constant 2 : index
    %c3_187 = arith.constant 3 : index
    %314 = vector.load %arg21[%c2_186, %c3_187] : memref<52x16xf32, #tpu.memory_space<vmem>>, vector<48x8xf32>
    tpu.vector_store %arg21[%c2_186, %c3_187], %310 {strides = array<i32>} : memref<52x16xf32, #tpu.memory_space<vmem>>, vector<48x8xf32>,
    %c0_188 = arith.constant 0 : index
    %c0_189 = arith.constant 0 : index
    %315 = vector.load %arg21[%c0_188, %c0_189] : memref<52x16xf32, #tpu.memory_space<vmem>>, vector<52x16xf32>
    %cst_190 = arith.constant 0.000000e+00 : f32
    %316 = vector.broadcast %cst_190 : f32 to vector<16x64xf32>
    %c0_191 = arith.constant 0 : index
    %c0_192 = arith.constant 0 : index
    %317 = vector.load %arg6[%c0_191, %c0_192] : memref<112x52xf32, #tpu.memory_space<vmem>>, vector<16x52xf32>
    %cst_193 = arith.constant dense<0.000000e+00> : vector<16x16xf32>
    %318 = tpu.matmul %317, %315, %cst_193 {dimension_numbers = #tpu.dot_dimension_numbers<[1], [0], [0], [1], [0, 0, 1, 1], [], []>} : vector<16x52xf32>, vector<52x16xf32>, vector<16x16xf32> -> vector<16x16xf32>
    %c0_194 = arith.constant 0 : index
    %c0_195 = arith.constant 0 : index
    %319 = vector.load %arg7[%c0_194, %c0_195] : memref<112x64xf32, #tpu.memory_space<vmem>>, vector<16x64xf32>
    %cst_196 = arith.constant dense<0.000000e+00> : vector<16x64xf32>
    %320 = tpu.matmul %318, %319, %cst_196 {dimension_numbers = #tpu.dot_dimension_numbers<[1], [0], [0], [1], [0, 0, 1, 1], [], []>} : vector<16x16xf32>, vector<16x64xf32>, vector<16x64xf32> -> vector<16x64xf32>
    %321 = arith.addf %316, %320 : vector<16x64xf32>
    %c16_197 = arith.constant 16 : index
    %c0_198 = arith.constant 0 : index
    %322 = vector.load %arg6[%c16_197, %c0_198] : memref<112x52xf32, #tpu.memory_space<vmem>>, vector<16x52xf32>
    %cst_199 = arith.constant dense<0.000000e+00> : vector<16x16xf32>
    %323 = tpu.matmul %322, %315, %cst_199 {dimension_numbers = #tpu.dot_dimension_numbers<[1], [0], [0], [1], [0, 0, 1, 1], [], []>} : vector<16x52xf32>, vector<52x16xf32>, vector<16x16xf32> -> vector<16x16xf32>
    %c16_200 = arith.constant 16 : index
    %c0_201 = arith.constant 0 : index
    %324 = vector.load %arg7[%c16_200, %c0_201] : memref<112x64xf32, #tpu.memory_space<vmem>>, vector<16x64xf32>
    %cst_202 = arith.constant dense<0.000000e+00> : vector<16x64xf32>
    %325 = tpu.matmul %323, %324, %cst_202 {dimension_numbers = #tpu.dot_dimension_numbers<[1], [0], [0], [1], [0, 0, 1, 1], [], []>} : vector<16x16xf32>, vector<16x64xf32>, vector<16x64xf32> -> vector<16x64xf32>
    %326 = arith.addf %321, %325 : vector<16x64xf32>
    %c32_203 = arith.constant 32 : index
    %c0_204 = arith.constant 0 : index
    %327 = vector.load %arg6[%c32_203, %c0_204] : memref<112x52xf32, #tpu.memory_space<vmem>>, vector<16x52xf32>
    %cst_205 = arith.constant dense<0.000000e+00> : vector<16x16xf32>
    %328 = tpu.matmul %327, %315, %cst_205 {dimension_numbers = #tpu.dot_dimension_numbers<[1], [0], [0], [1], [0, 0, 1, 1], [], []>} : vector<16x52xf32>, vector<52x16xf32>, vector<16x16xf32> -> vector<16x16xf32>
    %c32_206 = arith.constant 32 : index
    %c0_207 = arith.constant 0 : index
    %329 = vector.load %arg7[%c32_206, %c0_207] : memref<112x64xf32, #tpu.memory_space<vmem>>, vector<16x64xf32>
    %cst_208 = arith.constant dense<0.000000e+00> : vector<16x64xf32>
    %330 = tpu.matmul %328, %329, %cst_208 {dimension_numbers = #tpu.dot_dimension_numbers<[1], [0], [0], [1], [0, 0, 1, 1], [], []>} : vector<16x16xf32>, vector<16x64xf32>, vector<16x64xf32> -> vector<16x64xf32>
    %331 = arith.addf %326, %330 : vector<16x64xf32>
    %c48 = arith.constant 48 : index
    %c0_209 = arith.constant 0 : index
    %332 = vector.load %arg6[%c48, %c0_209] : memref<112x52xf32, #tpu.memory_space<vmem>>, vector<16x52xf32>
    %cst_210 = arith.constant dense<0.000000e+00> : vector<16x16xf32>
    %333 = tpu.matmul %332, %315, %cst_210 {dimension_numbers = #tpu.dot_dimension_numbers<[1], [0], [0], [1], [0, 0, 1, 1], [], []>} : vector<16x52xf32>, vector<52x16xf32>, vector<16x16xf32> -> vector<16x16xf32>
    %c48_211 = arith.constant 48 : index
    %c0_212 = arith.constant 0 : index
    %334 = vector.load %arg7[%c48_211, %c0_212] : memref<112x64xf32, #tpu.memory_space<vmem>>, vector<16x64xf32>
    %cst_213 = arith.constant dense<0.000000e+00> : vector<16x64xf32>
    %335 = tpu.matmul %333, %334, %cst_213 {dimension_numbers = #tpu.dot_dimension_numbers<[1], [0], [0], [1], [0, 0, 1, 1], [], []>} : vector<16x16xf32>, vector<16x64xf32>, vector<16x64xf32> -> vector<16x64xf32>
    %336 = arith.addf %331, %335 : vector<16x64xf32>
    %c64_214 = arith.constant 64 : index
    %c0_215 = arith.constant 0 : index
    %337 = vector.load %arg6[%c64_214, %c0_215] : memref<112x52xf32, #tpu.memory_space<vmem>>, vector<16x52xf32>
    %cst_216 = arith.constant dense<0.000000e+00> : vector<16x16xf32>
    %338 = tpu.matmul %337, %315, %cst_216 {dimension_numbers = #tpu.dot_dimension_numbers<[1], [0], [0], [1], [0, 0, 1, 1], [], []>} : vector<16x52xf32>, vector<52x16xf32>, vector<16x16xf32> -> vector<16x16xf32>
    %c64_217 = arith.constant 64 : index
    %c0_218 = arith.constant 0 : index
    %339 = vector.load %arg7[%c64_217, %c0_218] : memref<112x64xf32, #tpu.memory_space<vmem>>, vector<16x64xf32>
    %cst_219 = arith.constant dense<0.000000e+00> : vector<16x64xf32>
    %340 = tpu.matmul %338, %339, %cst_219 {dimension_numbers = #tpu.dot_dimension_numbers<[1], [0], [0], [1], [0, 0, 1, 1], [], []>} : vector<16x16xf32>, vector<16x64xf32>, vector<16x64xf32> -> vector<16x64xf32>
    %341 = arith.addf %336, %340 : vector<16x64xf32>
    %c80 = arith.constant 80 : index
    %c0_220 = arith.constant 0 : index
    %342 = vector.load %arg6[%c80, %c0_220] : memref<112x52xf32, #tpu.memory_space<vmem>>, vector<16x52xf32>
    %cst_221 = arith.constant dense<0.000000e+00> : vector<16x16xf32>
    %343 = tpu.matmul %342, %315, %cst_221 {dimension_numbers = #tpu.dot_dimension_numbers<[1], [0], [0], [1], [0, 0, 1, 1], [], []>} : vector<16x52xf32>, vector<52x16xf32>, vector<16x16xf32> -> vector<16x16xf32>
    %c80_222 = arith.constant 80 : index
    %c0_223 = arith.constant 0 : index
    %344 = vector.load %arg7[%c80_222, %c0_223] : memref<112x64xf32, #tpu.memory_space<vmem>>, vector<16x64xf32>
    %cst_224 = arith.constant dense<0.000000e+00> : vector<16x64xf32>
    %345 = tpu.matmul %343, %344, %cst_224 {dimension_numbers = #tpu.dot_dimension_numbers<[1], [0], [0], [1], [0, 0, 1, 1], [], []>} : vector<16x16xf32>, vector<16x64xf32>, vector<16x64xf32> -> vector<16x64xf32>
    %346 = arith.addf %341, %345 : vector<16x64xf32>
    %c96_225 = arith.constant 96 : index
    %c0_226 = arith.constant 0 : index
    %347 = vector.load %arg6[%c96_225, %c0_226] : memref<112x52xf32, #tpu.memory_space<vmem>>, vector<16x52xf32>
    %cst_227 = arith.constant dense<0.000000e+00> : vector<16x16xf32>
    %348 = tpu.matmul %347, %315, %cst_227 {dimension_numbers = #tpu.dot_dimension_numbers<[1], [0], [0], [1], [0, 0, 1, 1], [], []>} : vector<16x52xf32>, vector<52x16xf32>, vector<16x16xf32> -> vector<16x16xf32>
    %c96_228 = arith.constant 96 : index
    %c0_229 = arith.constant 0 : index
    %349 = vector.load %arg7[%c96_228, %c0_229] : memref<112x64xf32, #tpu.memory_space<vmem>>, vector<16x64xf32>
    %cst_230 = arith.constant dense<0.000000e+00> : vector<16x64xf32>
    %350 = tpu.matmul %348, %349, %cst_230 {dimension_numbers = #tpu.dot_dimension_numbers<[1], [0], [0], [1], [0, 0, 1, 1], [], []>} : vector<16x16xf32>, vector<16x64xf32>, vector<16x64xf32> -> vector<16x64xf32>
    %351 = arith.addf %346, %350 : vector<16x64xf32>
    %c0_231 = arith.constant 0 : index
    %c0_232 = arith.constant 0 : index
    %352 = vector.load %arg8[%c0_231, %c0_232] : memref<1x64xf32, #tpu.memory_space<vmem>>, vector<1x64xf32>
    %353 = vector.broadcast %352 : vector<1x64xf32> to vector<16x64xf32>
    %354 = arith.addf %351, %353 : vector<16x64xf32>
    %cst_233 = arith.constant 0.000000e+00 : f32
    %355 = vector.broadcast %cst_233 : f32 to vector<16x64xf32>
    %356 = arith.maximumf %354, %355 : vector<16x64xf32>
    %c1_234 = arith.constant 1 : index
    %c24_235 = arith.constant 24 : index
    %357 = vector.load %arg22[%c1_234, %c24_235] : memref<18x112xf32, #tpu.memory_space<vmem>>, vector<16x64xf32>
    tpu.vector_store %arg22[%c1_234, %c24_235], %356 {strides = array<i32>} : memref<18x112xf32, #tpu.memory_space<vmem>>, vector<16x64xf32>,
    %cst_236 = arith.constant 0.000000e+00 : f32
    %358 = vector.broadcast %cst_236 : f32 to vector<16x64xf32>
    %c0_237 = arith.constant 0 : index
    %c0_238 = arith.constant 0 : index
    %359 = vector.load %arg22[%c0_237, %c0_238] : memref<18x112xf32, #tpu.memory_space<vmem>>, vector<16x64xf32>
    %c0_239 = arith.constant 0 : index
    %c0_240 = arith.constant 0 : index
    %360 = vector.load %arg9[%c0_239, %c0_240] : memref<21x64xf32, #tpu.memory_space<vmem>>, vector<1x64xf32>
    %361 = vector.broadcast %360 : vector<1x64xf32> to vector<16x64xf32>
    %362 = arith.mulf %359, %361 : vector<16x64xf32>
    %363 = arith.addf %358, %362 : vector<16x64xf32>
    %c0_241 = arith.constant 0 : index
    %c8_242 = arith.constant 8 : index
    %364 = vector.load %arg22[%c0_241, %c8_242] : memref<18x112xf32, #tpu.memory_space<vmem>>, vector<16x64xf32>
    %c1_243 = arith.constant 1 : index
    %c0_244 = arith.constant 0 : index
    %365 = vector.load %arg9[%c1_243, %c0_244] : memref<21x64xf32, #tpu.memory_space<vmem>>, vector<1x64xf32>
    %366 = vector.broadcast %365 : vector<1x64xf32> to vector<16x64xf32>
    %367 = arith.mulf %364, %366 : vector<16x64xf32>
    %368 = arith.addf %363, %367 : vector<16x64xf32>
    %c0_245 = arith.constant 0 : index
    %c16_246 = arith.constant 16 : index
    %369 = vector.load %arg22[%c0_245, %c16_246] : memref<18x112xf32, #tpu.memory_space<vmem>>, vector<16x64xf32>
    %c2_247 = arith.constant 2 : index
    %c0_248 = arith.constant 0 : index
    %370 = vector.load %arg9[%c2_247, %c0_248] : memref<21x64xf32, #tpu.memory_space<vmem>>, vector<1x64xf32>
    %371 = vector.broadcast %370 : vector<1x64xf32> to vector<16x64xf32>
    %372 = arith.mulf %369, %371 : vector<16x64xf32>
    %373 = arith.addf %368, %372 : vector<16x64xf32>
    %c0_249 = arith.constant 0 : index
    %c24_250 = arith.constant 24 : index
    %374 = vector.load %arg22[%c0_249, %c24_250] : memref<18x112xf32, #tpu.memory_space<vmem>>, vector<16x64xf32>
    %c3_251 = arith.constant 3 : index
    %c0_252 = arith.constant 0 : index
    %375 = vector.load %arg9[%c3_251, %c0_252] : memref<21x64xf32, #tpu.memory_space<vmem>>, vector<1x64xf32>
    %376 = vector.broadcast %375 : vector<1x64xf32> to vector<16x64xf32>
    %377 = arith.mulf %374, %376 : vector<16x64xf32>
    %378 = arith.addf %373, %377 : vector<16x64xf32>
    %c0_253 = arith.constant 0 : index
    %c32_254 = arith.constant 32 : index
    %379 = vector.load %arg22[%c0_253, %c32_254] : memref<18x112xf32, #tpu.memory_space<vmem>>, vector<16x64xf32>
    %c4_255 = arith.constant 4 : index
    %c0_256 = arith.constant 0 : index
    %380 = vector.load %arg9[%c4_255, %c0_256] : memref<21x64xf32, #tpu.memory_space<vmem>>, vector<1x64xf32>
    %381 = vector.broadcast %380 : vector<1x64xf32> to vector<16x64xf32>
    %382 = arith.mulf %379, %381 : vector<16x64xf32>
    %383 = arith.addf %378, %382 : vector<16x64xf32>
    %c0_257 = arith.constant 0 : index
    %c40 = arith.constant 40 : index
    %384 = vector.load %arg22[%c0_257, %c40] : memref<18x112xf32, #tpu.memory_space<vmem>>, vector<16x64xf32>
    %c5_258 = arith.constant 5 : index
    %c0_259 = arith.constant 0 : index
    %385 = vector.load %arg9[%c5_258, %c0_259] : memref<21x64xf32, #tpu.memory_space<vmem>>, vector<1x64xf32>
    %386 = vector.broadcast %385 : vector<1x64xf32> to vector<16x64xf32>
    %387 = arith.mulf %384, %386 : vector<16x64xf32>
    %388 = arith.addf %383, %387 : vector<16x64xf32>
    %c0_260 = arith.constant 0 : index
    %c48_261 = arith.constant 48 : index
    %389 = vector.load %arg22[%c0_260, %c48_261] : memref<18x112xf32, #tpu.memory_space<vmem>>, vector<16x64xf32>
    %c6_262 = arith.constant 6 : index
    %c0_263 = arith.constant 0 : index
    %390 = vector.load %arg9[%c6_262, %c0_263] : memref<21x64xf32, #tpu.memory_space<vmem>>, vector<1x64xf32>
    %391 = vector.broadcast %390 : vector<1x64xf32> to vector<16x64xf32>
    %392 = arith.mulf %389, %391 : vector<16x64xf32>
    %393 = arith.addf %388, %392 : vector<16x64xf32>
    %c1_264 = arith.constant 1 : index
    %c0_265 = arith.constant 0 : index
    %394 = vector.load %arg22[%c1_264, %c0_265] : memref<18x112xf32, #tpu.memory_space<vmem>>, vector<16x64xf32>
    %c7_266 = arith.constant 7 : index
    %c0_267 = arith.constant 0 : index
    %395 = vector.load %arg9[%c7_266, %c0_267] : memref<21x64xf32, #tpu.memory_space<vmem>>, vector<1x64xf32>
    %396 = vector.broadcast %395 : vector<1x64xf32> to vector<16x64xf32>
    %397 = arith.mulf %394, %396 : vector<16x64xf32>
    %398 = arith.addf %393, %397 : vector<16x64xf32>
    %c1_268 = arith.constant 1 : index
    %c8_269 = arith.constant 8 : index
    %399 = vector.load %arg22[%c1_268, %c8_269] : memref<18x112xf32, #tpu.memory_space<vmem>>, vector<16x64xf32>
    %c8_270 = arith.constant 8 : index
    %c0_271 = arith.constant 0 : index
    %400 = vector.load %arg9[%c8_270, %c0_271] : memref<21x64xf32, #tpu.memory_space<vmem>>, vector<1x64xf32>
    %401 = vector.broadcast %400 : vector<1x64xf32> to vector<16x64xf32>
    %402 = arith.mulf %399, %401 : vector<16x64xf32>
    %403 = arith.addf %398, %402 : vector<16x64xf32>
    %c1_272 = arith.constant 1 : index
    %c16_273 = arith.constant 16 : index
    %404 = vector.load %arg22[%c1_272, %c16_273] : memref<18x112xf32, #tpu.memory_space<vmem>>, vector<16x64xf32>
    %c9_274 = arith.constant 9 : index
    %c0_275 = arith.constant 0 : index
    %405 = vector.load %arg9[%c9_274, %c0_275] : memref<21x64xf32, #tpu.memory_space<vmem>>, vector<1x64xf32>
    %406 = vector.broadcast %405 : vector<1x64xf32> to vector<16x64xf32>
    %407 = arith.mulf %404, %406 : vector<16x64xf32>
    %408 = arith.addf %403, %407 : vector<16x64xf32>
    %c1_276 = arith.constant 1 : index
    %c24_277 = arith.constant 24 : index
    %409 = vector.load %arg22[%c1_276, %c24_277] : memref<18x112xf32, #tpu.memory_space<vmem>>, vector<16x64xf32>
    %c10_278 = arith.constant 10 : index
    %c0_279 = arith.constant 0 : index
    %410 = vector.load %arg9[%c10_278, %c0_279] : memref<21x64xf32, #tpu.memory_space<vmem>>, vector<1x64xf32>
    %411 = vector.broadcast %410 : vector<1x64xf32> to vector<16x64xf32>
    %412 = arith.mulf %409, %411 : vector<16x64xf32>
    %413 = arith.addf %408, %412 : vector<16x64xf32>
    %c1_280 = arith.constant 1 : index
    %c32_281 = arith.constant 32 : index
    %414 = vector.load %arg22[%c1_280, %c32_281] : memref<18x112xf32, #tpu.memory_space<vmem>>, vector<16x64xf32>
    %c11_282 = arith.constant 11 : index
    %c0_283 = arith.constant 0 : index
    %415 = vector.load %arg9[%c11_282, %c0_283] : memref<21x64xf32, #tpu.memory_space<vmem>>, vector<1x64xf32>
    %416 = vector.broadcast %415 : vector<1x64xf32> to vector<16x64xf32>
    %417 = arith.mulf %414, %416 : vector<16x64xf32>
    %418 = arith.addf %413, %417 : vector<16x64xf32>
    %c1_284 = arith.constant 1 : index
    %c40_285 = arith.constant 40 : index
    %419 = vector.load %arg22[%c1_284, %c40_285] : memref<18x112xf32, #tpu.memory_space<vmem>>, vector<16x64xf32>
    %c12_286 = arith.constant 12 : index
    %c0_287 = arith.constant 0 : index
    %420 = vector.load %arg9[%c12_286, %c0_287] : memref<21x64xf32, #tpu.memory_space<vmem>>, vector<1x64xf32>
    %421 = vector.broadcast %420 : vector<1x64xf32> to vector<16x64xf32>
    %422 = arith.mulf %419, %421 : vector<16x64xf32>
    %423 = arith.addf %418, %422 : vector<16x64xf32>
    %c1_288 = arith.constant 1 : index
    %c48_289 = arith.constant 48 : index
    %424 = vector.load %arg22[%c1_288, %c48_289] : memref<18x112xf32, #tpu.memory_space<vmem>>, vector<16x64xf32>
    %c13_290 = arith.constant 13 : index
    %c0_291 = arith.constant 0 : index
    %425 = vector.load %arg9[%c13_290, %c0_291] : memref<21x64xf32, #tpu.memory_space<vmem>>, vector<1x64xf32>
    %426 = vector.broadcast %425 : vector<1x64xf32> to vector<16x64xf32>
    %427 = arith.mulf %424, %426 : vector<16x64xf32>
    %428 = arith.addf %423, %427 : vector<16x64xf32>
    %c2_292 = arith.constant 2 : index
    %c0_293 = arith.constant 0 : index
    %429 = vector.load %arg22[%c2_292, %c0_293] : memref<18x112xf32, #tpu.memory_space<vmem>>, vector<16x64xf32>
    %c14_294 = arith.constant 14 : index
    %c0_295 = arith.constant 0 : index
    %430 = vector.load %arg9[%c14_294, %c0_295] : memref<21x64xf32, #tpu.memory_space<vmem>>, vector<1x64xf32>
    %431 = vector.broadcast %430 : vector<1x64xf32> to vector<16x64xf32>
    %432 = arith.mulf %429, %431 : vector<16x64xf32>
    %433 = arith.addf %428, %432 : vector<16x64xf32>
    %c2_296 = arith.constant 2 : index
    %c8_297 = arith.constant 8 : index
    %434 = vector.load %arg22[%c2_296, %c8_297] : memref<18x112xf32, #tpu.memory_space<vmem>>, vector<16x64xf32>
    %c15_298 = arith.constant 15 : index
    %c0_299 = arith.constant 0 : index
    %435 = vector.load %arg9[%c15_298, %c0_299] : memref<21x64xf32, #tpu.memory_space<vmem>>, vector<1x64xf32>
    %436 = vector.broadcast %435 : vector<1x64xf32> to vector<16x64xf32>
    %437 = arith.mulf %434, %436 : vector<16x64xf32>
    %438 = arith.addf %433, %437 : vector<16x64xf32>
    %c2_300 = arith.constant 2 : index
    %c16_301 = arith.constant 16 : index
    %439 = vector.load %arg22[%c2_300, %c16_301] : memref<18x112xf32, #tpu.memory_space<vmem>>, vector<16x64xf32>
    %c16_302 = arith.constant 16 : index
    %c0_303 = arith.constant 0 : index
    %440 = vector.load %arg9[%c16_302, %c0_303] : memref<21x64xf32, #tpu.memory_space<vmem>>, vector<1x64xf32>
    %441 = vector.broadcast %440 : vector<1x64xf32> to vector<16x64xf32>
    %442 = arith.mulf %439, %441 : vector<16x64xf32>
    %443 = arith.addf %438, %442 : vector<16x64xf32>
    %c2_304 = arith.constant 2 : index
    %c24_305 = arith.constant 24 : index
    %444 = vector.load %arg22[%c2_304, %c24_305] : memref<18x112xf32, #tpu.memory_space<vmem>>, vector<16x64xf32>
    %c17_306 = arith.constant 17 : index
    %c0_307 = arith.constant 0 : index
    %445 = vector.load %arg9[%c17_306, %c0_307] : memref<21x64xf32, #tpu.memory_space<vmem>>, vector<1x64xf32>
    %446 = vector.broadcast %445 : vector<1x64xf32> to vector<16x64xf32>
    %447 = arith.mulf %444, %446 : vector<16x64xf32>
    %448 = arith.addf %443, %447 : vector<16x64xf32>
    %c2_308 = arith.constant 2 : index
    %c32_309 = arith.constant 32 : index
    %449 = vector.load %arg22[%c2_308, %c32_309] : memref<18x112xf32, #tpu.memory_space<vmem>>, vector<16x64xf32>
    %c18_310 = arith.constant 18 : index
    %c0_311 = arith.constant 0 : index
    %450 = vector.load %arg9[%c18_310, %c0_311] : memref<21x64xf32, #tpu.memory_space<vmem>>, vector<1x64xf32>
    %451 = vector.broadcast %450 : vector<1x64xf32> to vector<16x64xf32>
    %452 = arith.mulf %449, %451 : vector<16x64xf32>
    %453 = arith.addf %448, %452 : vector<16x64xf32>
    %c2_312 = arith.constant 2 : index
    %c40_313 = arith.constant 40 : index
    %454 = vector.load %arg22[%c2_312, %c40_313] : memref<18x112xf32, #tpu.memory_space<vmem>>, vector<16x64xf32>
    %c19_314 = arith.constant 19 : index
    %c0_315 = arith.constant 0 : index
    %455 = vector.load %arg9[%c19_314, %c0_315] : memref<21x64xf32, #tpu.memory_space<vmem>>, vector<1x64xf32>
    %456 = vector.broadcast %455 : vector<1x64xf32> to vector<16x64xf32>
    %457 = arith.mulf %454, %456 : vector<16x64xf32>
    %458 = arith.addf %453, %457 : vector<16x64xf32>
    %c2_316 = arith.constant 2 : index
    %c48_317 = arith.constant 48 : index
    %459 = vector.load %arg22[%c2_316, %c48_317] : memref<18x112xf32, #tpu.memory_space<vmem>>, vector<16x64xf32>
    %c20_318 = arith.constant 20 : index
    %c0_319 = arith.constant 0 : index
    %460 = vector.load %arg9[%c20_318, %c0_319] : memref<21x64xf32, #tpu.memory_space<vmem>>, vector<1x64xf32>
    %461 = vector.broadcast %460 : vector<1x64xf32> to vector<16x64xf32>
    %462 = arith.mulf %459, %461 : vector<16x64xf32>
    %463 = arith.addf %458, %462 : vector<16x64xf32>
    %cst_320 = arith.constant dense<0.000000e+00> : vector<16x8xf32>
    %464 = tpu.matmul %463, %10, %cst_320 {dimension_numbers = #tpu.dot_dimension_numbers<[1], [0], [0], [1], [0, 0, 1, 1], [], []>} : vector<16x64xf32>, vector<64x8xf32>, vector<16x8xf32> -> vector<16x8xf32>
    %c1_321 = arith.constant 1 : index
    %465 = memref.load %arg16[%c1_321] : memref<3xf32, #tpu.memory_space<smem>>
    %466 = vector.broadcast %465 : f32 to vector<16x8xf32>
    %467 = arith.addf %464, %466 : vector<16x8xf32>
    %468 = arith.negf %467 : vector<16x8xf32>
    %469 = math.exp %468 : vector<16x8xf32>
    %cst_322 = arith.constant 1.000000e+00 : f32
    %470 = vector.broadcast %cst_322 : f32 to vector<16x8xf32>
    %471 = arith.addf %470, %469 : vector<16x8xf32>
    %472 = arith.divf %470, %471 : vector<16x8xf32>
    %c0_323 = arith.constant 0 : index
    %c0_324 = arith.constant 0 : index
    %c0_325 = arith.constant 0 : index
    %473 = vector.load %arg18[%c0_323, %c0_324, %c0_325] : memref<1x16x8xf32, #tpu.memory_space<vmem>>, vector<1x16x8xf32>
    %474 = vector.shape_cast %473 : vector<1x16x8xf32> to vector<16x8xf32>
    %475 = vector.shape_cast %472 : vector<16x8xf32> to vector<1x16x8xf32>
    tpu.vector_store %arg18[%c0_323, %c0_324, %c0_325], %475 {strides = array<i32>} : memref<1x16x8xf32, #tpu.memory_space<vmem>>, vector<1x16x8xf32>,
    %c0_326 = arith.constant 0 : index
    %c0_327 = arith.constant 0 : index
    %c0_328 = arith.constant 0 : index
    %476 = vector.load %arg2[%c0_326, %c0_327, %c0_328] : memref<1x50x48xf32, #tpu.memory_space<vmem>>, vector<1x50x48xf32>
    %477 = vector.shape_cast %476 : vector<1x50x48xf32> to vector<50x48xf32>
    %cst_329 = arith.constant 0.000000e+00 : f32
    %478 = vector.broadcast %cst_329 : f32 to vector<16x64xf32>
    %c0_330 = arith.constant 0 : index
    %c0_331 = arith.constant 0 : index
    %479 = vector.load %arg10[%c0_330, %c0_331] : memref<80x50xf32, #tpu.memory_space<vmem>>, vector<16x50xf32>
    %cst_332 = arith.constant dense<0.000000e+00> : vector<16x48xf32>
    %480 = tpu.matmul %479, %477, %cst_332 {dimension_numbers = #tpu.dot_dimension_numbers<[1], [0], [0], [1], [0, 0, 1, 1], [], []>} : vector<16x50xf32>, vector<50x48xf32>, vector<16x48xf32> -> vector<16x48xf32>
    %c0_333 = arith.constant 0 : index
    %c0_334 = arith.constant 0 : index
    %481 = vector.load %arg11[%c0_333, %c0_334] : memref<240x64xf32, #tpu.memory_space<vmem>>, vector<48x64xf32>
    %cst_335 = arith.constant dense<0.000000e+00> : vector<16x64xf32>
    %482 = tpu.matmul %480, %481, %cst_335 {dimension_numbers = #tpu.dot_dimension_numbers<[1], [0], [0], [1], [0, 0, 1, 1], [], []>} : vector<16x48xf32>, vector<48x64xf32>, vector<16x64xf32> -> vector<16x64xf32>
    %483 = arith.addf %478, %482 : vector<16x64xf32>
    %c16_336 = arith.constant 16 : index
    %c0_337 = arith.constant 0 : index
    %484 = vector.load %arg10[%c16_336, %c0_337] : memref<80x50xf32, #tpu.memory_space<vmem>>, vector<16x50xf32>
    %cst_338 = arith.constant dense<0.000000e+00> : vector<16x48xf32>
    %485 = tpu.matmul %484, %477, %cst_338 {dimension_numbers = #tpu.dot_dimension_numbers<[1], [0], [0], [1], [0, 0, 1, 1], [], []>} : vector<16x50xf32>, vector<50x48xf32>, vector<16x48xf32> -> vector<16x48xf32>
    %c48_339 = arith.constant 48 : index
    %c0_340 = arith.constant 0 : index
    %486 = vector.load %arg11[%c48_339, %c0_340] : memref<240x64xf32, #tpu.memory_space<vmem>>, vector<48x64xf32>
    %cst_341 = arith.constant dense<0.000000e+00> : vector<16x64xf32>
    %487 = tpu.matmul %485, %486, %cst_341 {dimension_numbers = #tpu.dot_dimension_numbers<[1], [0], [0], [1], [0, 0, 1, 1], [], []>} : vector<16x48xf32>, vector<48x64xf32>, vector<16x64xf32> -> vector<16x64xf32>
    %488 = arith.addf %483, %487 : vector<16x64xf32>
    %c32_342 = arith.constant 32 : index
    %c0_343 = arith.constant 0 : index
    %489 = vector.load %arg10[%c32_342, %c0_343] : memref<80x50xf32, #tpu.memory_space<vmem>>, vector<16x50xf32>
    %cst_344 = arith.constant dense<0.000000e+00> : vector<16x48xf32>
    %490 = tpu.matmul %489, %477, %cst_344 {dimension_numbers = #tpu.dot_dimension_numbers<[1], [0], [0], [1], [0, 0, 1, 1], [], []>} : vector<16x50xf32>, vector<50x48xf32>, vector<16x48xf32> -> vector<16x48xf32>
    %c96_345 = arith.constant 96 : index
    %c0_346 = arith.constant 0 : index
    %491 = vector.load %arg11[%c96_345, %c0_346] : memref<240x64xf32, #tpu.memory_space<vmem>>, vector<48x64xf32>
    %cst_347 = arith.constant dense<0.000000e+00> : vector<16x64xf32>
    %492 = tpu.matmul %490, %491, %cst_347 {dimension_numbers = #tpu.dot_dimension_numbers<[1], [0], [0], [1], [0, 0, 1, 1], [], []>} : vector<16x48xf32>, vector<48x64xf32>, vector<16x64xf32> -> vector<16x64xf32>
    %493 = arith.addf %488, %492 : vector<16x64xf32>
    %c48_348 = arith.constant 48 : index
    %c0_349 = arith.constant 0 : index
    %494 = vector.load %arg10[%c48_348, %c0_349] : memref<80x50xf32, #tpu.memory_space<vmem>>, vector<16x50xf32>
    %cst_350 = arith.constant dense<0.000000e+00> : vector<16x48xf32>
    %495 = tpu.matmul %494, %477, %cst_350 {dimension_numbers = #tpu.dot_dimension_numbers<[1], [0], [0], [1], [0, 0, 1, 1], [], []>} : vector<16x50xf32>, vector<50x48xf32>, vector<16x48xf32> -> vector<16x48xf32>
    %c144 = arith.constant 144 : index
    %c0_351 = arith.constant 0 : index
    %496 = vector.load %arg11[%c144, %c0_351] : memref<240x64xf32, #tpu.memory_space<vmem>>, vector<48x64xf32>
    %cst_352 = arith.constant dense<0.000000e+00> : vector<16x64xf32>
    %497 = tpu.matmul %495, %496, %cst_352 {dimension_numbers = #tpu.dot_dimension_numbers<[1], [0], [0], [1], [0, 0, 1, 1], [], []>} : vector<16x48xf32>, vector<48x64xf32>, vector<16x64xf32> -> vector<16x64xf32>
    %498 = arith.addf %493, %497 : vector<16x64xf32>
    %c64_353 = arith.constant 64 : index
    %c0_354 = arith.constant 0 : index
    %499 = vector.load %arg10[%c64_353, %c0_354] : memref<80x50xf32, #tpu.memory_space<vmem>>, vector<16x50xf32>
    %cst_355 = arith.constant dense<0.000000e+00> : vector<16x48xf32>
    %500 = tpu.matmul %499, %477, %cst_355 {dimension_numbers = #tpu.dot_dimension_numbers<[1], [0], [0], [1], [0, 0, 1, 1], [], []>} : vector<16x50xf32>, vector<50x48xf32>, vector<16x48xf32> -> vector<16x48xf32>
    %c192_356 = arith.constant 192 : index
    %c0_357 = arith.constant 0 : index
    %501 = vector.load %arg11[%c192_356, %c0_357] : memref<240x64xf32, #tpu.memory_space<vmem>>, vector<48x64xf32>
    %cst_358 = arith.constant dense<0.000000e+00> : vector<16x64xf32>
    %502 = tpu.matmul %500, %501, %cst_358 {dimension_numbers = #tpu.dot_dimension_numbers<[1], [0], [0], [1], [0, 0, 1, 1], [], []>} : vector<16x48xf32>, vector<48x64xf32>, vector<16x64xf32> -> vector<16x64xf32>
    %503 = arith.addf %498, %502 : vector<16x64xf32>
    %c0_359 = arith.constant 0 : index
    %c0_360 = arith.constant 0 : index
    %504 = vector.load %arg12[%c0_359, %c0_360] : memref<1x64xf32, #tpu.memory_space<vmem>>, vector<1x64xf32>
    %505 = vector.broadcast %504 : vector<1x64xf32> to vector<16x64xf32>
    %506 = arith.addf %503, %505 : vector<16x64xf32>
    %cst_361 = arith.constant 0.000000e+00 : f32
    %507 = vector.broadcast %cst_361 : f32 to vector<16x64xf32>
    %508 = arith.maximumf %506, %507 : vector<16x64xf32>
    %c1_362 = arith.constant 1 : index
    %c8_363 = arith.constant 8 : index
    %509 = vector.load %arg23[%c1_362, %c8_363] : memref<18x80xf32, #tpu.memory_space<vmem>>, vector<16x64xf32>
    tpu.vector_store %arg23[%c1_362, %c8_363], %508 {strides = array<i32>} : memref<18x80xf32, #tpu.memory_space<vmem>>, vector<16x64xf32>,
    %c1_364 = arith.constant 1 : index
    %c1_365 = arith.constant 1 : index
    %510 = vector.load %arg24[%c1_364, %c1_365] : memref<18x10xf32, #tpu.memory_space<vmem>>, vector<16x8xf32>
    tpu.vector_store %arg24[%c1_364, %c1_365], %472 {strides = array<i32>} : memref<18x10xf32, #tpu.memory_space<vmem>>, vector<16x8xf32>,
    %cst_366 = arith.constant 0.000000e+00 : f32
    %511 = vector.broadcast %cst_366 : f32 to vector<16x64xf32>
    %cst_367 = arith.constant 0.000000e+00 : f32
    %512 = vector.broadcast %cst_367 : f32 to vector<16x8xf32>
    %c0_368 = arith.constant 0 : index
    %c0_369 = arith.constant 0 : index
    %513 = vector.load %arg23[%c0_368, %c0_369] : memref<18x80xf32, #tpu.memory_space<vmem>>, vector<16x64xf32>
    %c0_370 = arith.constant 0 : index
    %c0_371 = arith.constant 0 : index
    %514 = vector.load %arg13[%c0_370, %c0_371] : memref<9x64xf32, #tpu.memory_space<vmem>>, vector<1x64xf32>
    %515 = vector.broadcast %514 : vector<1x64xf32> to vector<16x64xf32>
    %516 = arith.mulf %513, %515 : vector<16x64xf32>
    %517 = arith.addf %511, %516 : vector<16x64xf32>
    %c0_372 = arith.constant 0 : index
    %c0_373 = arith.constant 0 : index
    %518 = vector.load %arg24[%c0_372, %c0_373] : memref<18x10xf32, #tpu.memory_space<vmem>>, vector<16x8xf32>
    %c0_374 = arith.constant 0 : index
    %519 = memref.load %arg15[%c0_374] : memref<9xf32, #tpu.memory_space<smem>>
    %520 = vector.broadcast %519 : f32 to vector<16x8xf32>
    %521 = arith.mulf %518, %520 : vector<16x8xf32>
    %522 = arith.addf %512, %521 : vector<16x8xf32>
    %c0_375 = arith.constant 0 : index
    %c8_376 = arith.constant 8 : index
    %523 = vector.load %arg23[%c0_375, %c8_376] : memref<18x80xf32, #tpu.memory_space<vmem>>, vector<16x64xf32>
    %c1_377 = arith.constant 1 : index
    %c0_378 = arith.constant 0 : index
    %524 = vector.load %arg13[%c1_377, %c0_378] : memref<9x64xf32, #tpu.memory_space<vmem>>, vector<1x64xf32>
    %525 = vector.broadcast %524 : vector<1x64xf32> to vector<16x64xf32>
    %526 = arith.mulf %523, %525 : vector<16x64xf32>
    %527 = arith.addf %517, %526 : vector<16x64xf32>
    %c0_379 = arith.constant 0 : index
    %c1_380 = arith.constant 1 : index
    %528 = vector.load %arg24[%c0_379, %c1_380] : memref<18x10xf32, #tpu.memory_space<vmem>>, vector<16x8xf32>
    %c1_381 = arith.constant 1 : index
    %529 = memref.load %arg15[%c1_381] : memref<9xf32, #tpu.memory_space<smem>>
    %530 = vector.broadcast %529 : f32 to vector<16x8xf32>
    %531 = arith.mulf %528, %530 : vector<16x8xf32>
    %532 = arith.addf %522, %531 : vector<16x8xf32>
    %c0_382 = arith.constant 0 : index
    %c16_383 = arith.constant 16 : index
    %533 = vector.load %arg23[%c0_382, %c16_383] : memref<18x80xf32, #tpu.memory_space<vmem>>, vector<16x64xf32>
    %c2_384 = arith.constant 2 : index
    %c0_385 = arith.constant 0 : index
    %534 = vector.load %arg13[%c2_384, %c0_385] : memref<9x64xf32, #tpu.memory_space<vmem>>, vector<1x64xf32>
    %535 = vector.broadcast %534 : vector<1x64xf32> to vector<16x64xf32>
    %536 = arith.mulf %533, %535 : vector<16x64xf32>
    %537 = arith.addf %527, %536 : vector<16x64xf32>
    %c0_386 = arith.constant 0 : index
    %c2_387 = arith.constant 2 : index
    %538 = vector.load %arg24[%c0_386, %c2_387] : memref<18x10xf32, #tpu.memory_space<vmem>>, vector<16x8xf32>
    %c2_388 = arith.constant 2 : index
    %539 = memref.load %arg15[%c2_388] : memref<9xf32, #tpu.memory_space<smem>>
    %540 = vector.broadcast %539 : f32 to vector<16x8xf32>
    %541 = arith.mulf %538, %540 : vector<16x8xf32>
    %542 = arith.addf %532, %541 : vector<16x8xf32>
    %c1_389 = arith.constant 1 : index
    %c0_390 = arith.constant 0 : index
    %543 = vector.load %arg23[%c1_389, %c0_390] : memref<18x80xf32, #tpu.memory_space<vmem>>, vector<16x64xf32>
    %c3_391 = arith.constant 3 : index
    %c0_392 = arith.constant 0 : index
    %544 = vector.load %arg13[%c3_391, %c0_392] : memref<9x64xf32, #tpu.memory_space<vmem>>, vector<1x64xf32>
    %545 = vector.broadcast %544 : vector<1x64xf32> to vector<16x64xf32>
    %546 = arith.mulf %543, %545 : vector<16x64xf32>
    %547 = arith.addf %537, %546 : vector<16x64xf32>
    %c1_393 = arith.constant 1 : index
    %c0_394 = arith.constant 0 : index
    %548 = vector.load %arg24[%c1_393, %c0_394] : memref<18x10xf32, #tpu.memory_space<vmem>>, vector<16x8xf32>
    %c3_395 = arith.constant 3 : index
    %549 = memref.load %arg15[%c3_395] : memref<9xf32, #tpu.memory_space<smem>>
    %550 = vector.broadcast %549 : f32 to vector<16x8xf32>
    %551 = arith.mulf %548, %550 : vector<16x8xf32>
    %552 = arith.addf %542, %551 : vector<16x8xf32>
    %c1_396 = arith.constant 1 : index
    %c8_397 = arith.constant 8 : index
    %553 = vector.load %arg23[%c1_396, %c8_397] : memref<18x80xf32, #tpu.memory_space<vmem>>, vector<16x64xf32>
    %c4_398 = arith.constant 4 : index
    %c0_399 = arith.constant 0 : index
    %554 = vector.load %arg13[%c4_398, %c0_399] : memref<9x64xf32, #tpu.memory_space<vmem>>, vector<1x64xf32>
    %555 = vector.broadcast %554 : vector<1x64xf32> to vector<16x64xf32>
    %556 = arith.mulf %553, %555 : vector<16x64xf32>
    %557 = arith.addf %547, %556 : vector<16x64xf32>
    %c1_400 = arith.constant 1 : index
    %c1_401 = arith.constant 1 : index
    %558 = vector.load %arg24[%c1_400, %c1_401] : memref<18x10xf32, #tpu.memory_space<vmem>>, vector<16x8xf32>
    %c4_402 = arith.constant 4 : index
    %559 = memref.load %arg15[%c4_402] : memref<9xf32, #tpu.memory_space<smem>>
    %560 = vector.broadcast %559 : f32 to vector<16x8xf32>
    %561 = arith.mulf %558, %560 : vector<16x8xf32>
    %562 = arith.addf %552, %561 : vector<16x8xf32>
    %c1_403 = arith.constant 1 : index
    %c16_404 = arith.constant 16 : index
    %563 = vector.load %arg23[%c1_403, %c16_404] : memref<18x80xf32, #tpu.memory_space<vmem>>, vector<16x64xf32>
    %c5_405 = arith.constant 5 : index
    %c0_406 = arith.constant 0 : index
    %564 = vector.load %arg13[%c5_405, %c0_406] : memref<9x64xf32, #tpu.memory_space<vmem>>, vector<1x64xf32>
    %565 = vector.broadcast %564 : vector<1x64xf32> to vector<16x64xf32>
    %566 = arith.mulf %563, %565 : vector<16x64xf32>
    %567 = arith.addf %557, %566 : vector<16x64xf32>
    %c1_407 = arith.constant 1 : index
    %c2_408 = arith.constant 2 : index
    %568 = vector.load %arg24[%c1_407, %c2_408] : memref<18x10xf32, #tpu.memory_space<vmem>>, vector<16x8xf32>
    %c5_409 = arith.constant 5 : index
    %569 = memref.load %arg15[%c5_409] : memref<9xf32, #tpu.memory_space<smem>>
    %570 = vector.broadcast %569 : f32 to vector<16x8xf32>
    %571 = arith.mulf %568, %570 : vector<16x8xf32>
    %572 = arith.addf %562, %571 : vector<16x8xf32>
    %c2_410 = arith.constant 2 : index
    %c0_411 = arith.constant 0 : index
    %573 = vector.load %arg23[%c2_410, %c0_411] : memref<18x80xf32, #tpu.memory_space<vmem>>, vector<16x64xf32>
    %c6_412 = arith.constant 6 : index
    %c0_413 = arith.constant 0 : index
    %574 = vector.load %arg13[%c6_412, %c0_413] : memref<9x64xf32, #tpu.memory_space<vmem>>, vector<1x64xf32>
    %575 = vector.broadcast %574 : vector<1x64xf32> to vector<16x64xf32>
    %576 = arith.mulf %573, %575 : vector<16x64xf32>
    %577 = arith.addf %567, %576 : vector<16x64xf32>
    %c2_414 = arith.constant 2 : index
    %c0_415 = arith.constant 0 : index
    %578 = vector.load %arg24[%c2_414, %c0_415] : memref<18x10xf32, #tpu.memory_space<vmem>>, vector<16x8xf32>
    %c6_416 = arith.constant 6 : index
    %579 = memref.load %arg15[%c6_416] : memref<9xf32, #tpu.memory_space<smem>>
    %580 = vector.broadcast %579 : f32 to vector<16x8xf32>
    %581 = arith.mulf %578, %580 : vector<16x8xf32>
    %582 = arith.addf %572, %581 : vector<16x8xf32>
    %c2_417 = arith.constant 2 : index
    %c8_418 = arith.constant 8 : index
    %583 = vector.load %arg23[%c2_417, %c8_418] : memref<18x80xf32, #tpu.memory_space<vmem>>, vector<16x64xf32>
    %c7_419 = arith.constant 7 : index
    %c0_420 = arith.constant 0 : index
    %584 = vector.load %arg13[%c7_419, %c0_420] : memref<9x64xf32, #tpu.memory_space<vmem>>, vector<1x64xf32>
    %585 = vector.broadcast %584 : vector<1x64xf32> to vector<16x64xf32>
    %586 = arith.mulf %583, %585 : vector<16x64xf32>
    %587 = arith.addf %577, %586 : vector<16x64xf32>
    %c2_421 = arith.constant 2 : index
    %c1_422 = arith.constant 1 : index
    %588 = vector.load %arg24[%c2_421, %c1_422] : memref<18x10xf32, #tpu.memory_space<vmem>>, vector<16x8xf32>
    %c7_423 = arith.constant 7 : index
    %589 = memref.load %arg15[%c7_423] : memref<9xf32, #tpu.memory_space<smem>>
    %590 = vector.broadcast %589 : f32 to vector<16x8xf32>
    %591 = arith.mulf %588, %590 : vector<16x8xf32>
    %592 = arith.addf %582, %591 : vector<16x8xf32>
    %c2_424 = arith.constant 2 : index
    %c16_425 = arith.constant 16 : index
    %593 = vector.load %arg23[%c2_424, %c16_425] : memref<18x80xf32, #tpu.memory_space<vmem>>, vector<16x64xf32>
    %c8_426 = arith.constant 8 : index
    %c0_427 = arith.constant 0 : index
    %594 = vector.load %arg13[%c8_426, %c0_427] : memref<9x64xf32, #tpu.memory_space<vmem>>, vector<1x64xf32>
    %595 = vector.broadcast %594 : vector<1x64xf32> to vector<16x64xf32>
    %596 = arith.mulf %593, %595 : vector<16x64xf32>
    %597 = arith.addf %587, %596 : vector<16x64xf32>
    %c2_428 = arith.constant 2 : index
    %c2_429 = arith.constant 2 : index
    %598 = vector.load %arg24[%c2_428, %c2_429] : memref<18x10xf32, #tpu.memory_space<vmem>>, vector<16x8xf32>
    %c8_430 = arith.constant 8 : index
    %599 = memref.load %arg15[%c8_430] : memref<9xf32, #tpu.memory_space<smem>>
    %600 = vector.broadcast %599 : f32 to vector<16x8xf32>
    %601 = arith.mulf %598, %600 : vector<16x8xf32>
    %602 = arith.addf %592, %601 : vector<16x8xf32>
    %cst_431 = arith.constant dense<0.000000e+00> : vector<16x8xf32>
    %603 = tpu.matmul %597, %10, %cst_431 {dimension_numbers = #tpu.dot_dimension_numbers<[1], [0], [0], [1], [0, 0, 1, 1], [], []>} : vector<16x64xf32>, vector<64x8xf32>, vector<16x8xf32> -> vector<16x8xf32>
    %604 = arith.addf %603, %602 : vector<16x8xf32>
    %c2_432 = arith.constant 2 : index
    %605 = memref.load %arg16[%c2_432] : memref<3xf32, #tpu.memory_space<smem>>
    %606 = vector.broadcast %605 : f32 to vector<16x8xf32>
    %607 = arith.addf %604, %606 : vector<16x8xf32>
    %608 = arith.negf %607 : vector<16x8xf32>
    %609 = math.exp %608 : vector<16x8xf32>
    %cst_433 = arith.constant 1.000000e+00 : f32
    %610 = vector.broadcast %cst_433 : f32 to vector<16x8xf32>
    %611 = arith.addf %610, %609 : vector<16x8xf32>
    %612 = arith.divf %610, %611 : vector<16x8xf32>
    %c0_434 = arith.constant 0 : index
    %c0_435 = arith.constant 0 : index
    %c0_436 = arith.constant 0 : index
    %613 = vector.load %arg19[%c0_434, %c0_435, %c0_436] : memref<1x16x8xf32, #tpu.memory_space<vmem>>, vector<1x16x8xf32>
    %614 = vector.shape_cast %613 : vector<1x16x8xf32> to vector<16x8xf32>
    %615 = vector.shape_cast %612 : vector<16x8xf32> to vector<1x16x8xf32>
    tpu.vector_store %arg19[%c0_434, %c0_435, %c0_436], %615 {strides = array<i32>} : memref<1x16x8xf32, #tpu.memory_space<vmem>>, vector<1x16x8xf32>,
    return
  }
  func.func @transform_0(%arg0: i32) -> (i32, i32, i32) {
    %c0_i32 = arith.constant 0 : i32
    %c0_i32_0 = arith.constant 0 : i32
    %c0_i32_1 = arith.constant 0 : i32
    return %arg0, %c0_i32, %c0_i32_0 : i32, i32, i32
  }
  func.func @transform_1(%arg0: i32) -> (i32, i32, i32) {
    %c0_i32 = arith.constant 0 : i32
    %c0_i32_0 = arith.constant 0 : i32
    %c0_i32_1 = arith.constant 0 : i32
    return %arg0, %c0_i32, %c0_i32_0 : i32, i32, i32
  }
  func.func @transform_2(%arg0: i32) -> (i32, i32) {
    %c0_i32 = arith.constant 0 : i32
    %c0_i32_0 = arith.constant 0 : i32
    %c0_i32_1 = arith.constant 0 : i32
    return %c0_i32, %c0_i32_0 : i32, i32
  }
  func.func @transform_3(%arg0: i32) -> (i32, i32) {
    %c0_i32 = arith.constant 0 : i32
    %c0_i32_0 = arith.constant 0 : i32
    %c0_i32_1 = arith.constant 0 : i32
    return %c0_i32, %c0_i32_0 : i32, i32
  }
  func.func @transform_4(%arg0: i32) -> (i32, i32) {
    %c0_i32 = arith.constant 0 : i32
    %c0_i32_0 = arith.constant 0 : i32
    %c0_i32_1 = arith.constant 0 : i32
    return %c0_i32, %c0_i32_0 : i32, i32
  }
  func.func @transform_5(%arg0: i32) -> (i32, i32) {
    %c0_i32 = arith.constant 0 : i32
    %c0_i32_0 = arith.constant 0 : i32
    %c0_i32_1 = arith.constant 0 : i32
    return %c0_i32, %c0_i32_0 : i32, i32
  }
  func.func @transform_6(%arg0: i32) -> (i32, i32) {
    %c0_i32 = arith.constant 0 : i32
    %c0_i32_0 = arith.constant 0 : i32
    %c0_i32_1 = arith.constant 0 : i32
    return %c0_i32, %c0_i32_0 : i32, i32
  }
  func.func @transform_7(%arg0: i32) -> (i32, i32) {
    %c0_i32 = arith.constant 0 : i32
    %c0_i32_0 = arith.constant 0 : i32
    %c0_i32_1 = arith.constant 0 : i32
    return %c0_i32, %c0_i32_0 : i32, i32
  }
  func.func @transform_8(%arg0: i32) -> (i32, i32) {
    %c0_i32 = arith.constant 0 : i32
    %c0_i32_0 = arith.constant 0 : i32
    %c0_i32_1 = arith.constant 0 : i32
    return %c0_i32, %c0_i32_0 : i32, i32
  }
  func.func @transform_9(%arg0: i32) -> (i32, i32) {
    %c0_i32 = arith.constant 0 : i32
    %c0_i32_0 = arith.constant 0 : i32
    %c0_i32_1 = arith.constant 0 : i32
    return %c0_i32, %c0_i32_0 : i32, i32
  }
  func.func @transform_10(%arg0: i32) -> (i32, i32) {
    %c0_i32 = arith.constant 0 : i32
    %c0_i32_0 = arith.constant 0 : i32
    %c0_i32_1 = arith.constant 0 : i32
    return %c0_i32, %c0_i32_0 : i32, i32
  }
  func.func @transform_11(%arg0: i32) -> (i32, i32) {
    %c0_i32 = arith.constant 0 : i32
    %c0_i32_0 = arith.constant 0 : i32
    %c0_i32_1 = arith.constant 0 : i32
    return %c0_i32, %c0_i32_0 : i32, i32
  }
  func.func @transform_12(%arg0: i32) -> (i32, i32) {
    %c0_i32 = arith.constant 0 : i32
    %c0_i32_0 = arith.constant 0 : i32
    %c0_i32_1 = arith.constant 0 : i32
    return %c0_i32, %c0_i32_0 : i32, i32
  }
  func.func @transform_13(%arg0: i32) -> (i32, i32) {
    %c0_i32 = arith.constant 0 : i32
    %c0_i32_0 = arith.constant 0 : i32
    %c0_i32_1 = arith.constant 0 : i32
    return %c0_i32, %c0_i32_0 : i32, i32
  }
  func.func @transform_14(%arg0: i32) -> i32 {
    %c0_i32 = arith.constant 0 : i32
    %c0_i32_0 = arith.constant 0 : i32
    return %c0_i32 : i32
  }
  func.func @transform_15(%arg0: i32) -> i32 {
    %c0_i32 = arith.constant 0 : i32
    %c0_i32_0 = arith.constant 0 : i32
    return %c0_i32 : i32
  }
  func.func @transform_16(%arg0: i32) -> (i32, i32, i32) {
    %c0_i32 = arith.constant 0 : i32
    %c0_i32_0 = arith.constant 0 : i32
    %c0_i32_1 = arith.constant 0 : i32
    return %arg0, %c0_i32, %c0_i32_0 : i32, i32, i32
  }
  func.func @transform_17(%arg0: i32) -> (i32, i32, i32) {
    %c0_i32 = arith.constant 0 : i32
    %c0_i32_0 = arith.constant 0 : i32
    %c0_i32_1 = arith.constant 0 : i32
    return %arg0, %c0_i32, %c0_i32_0 : i32, i32, i32
  }
  func.func @transform_18(%arg0: i32) -> (i32, i32, i32) {
    %c0_i32 = arith.constant 0 : i32
    %c0_i32_0 = arith.constant 0 : i32
    %c0_i32_1 = arith.constant 0 : i32
    return %arg0, %c0_i32, %c0_i32_0 : i32, i32, i32
  }
}

</mosaic_0001>

<llo_original>
// kernel: forward.2
$region0: #{forward.2}
  #allocation0 [shape = 'u32[]', space=smem, size = 0x4, offset = 0x4, fixed_abs, tag = 'smem constant byte address 0x4 - core index']
  #allocation1 [shape = 'u32[72,128]{1,0:T(1,128)}', space=vmem, size = 0x9000, scoped, tag = 'internal scratch']
  %s0 = inlined_call_operand.vmem [shape: f32[16,256], index: 0, kind: input, shape index: {}]
  %s1 = inlined_call_operand.hbm [shape: f32[256,256], index: 1, kind: input, shape index: {}]
  %s2 = inlined_call_operand.vmem [shape: f32[16,128], index: 2, kind: output, shape index: {}]
  %s3 = sld [smem:[#allocation0]]
  $region22: #{forward.2} parent=0
    _
  %s5 = ssub.s32 1, %s3
  %s6 = scalar_select 0, %s5, %s3
  $region1: #{forward.2} parent=0
    #allocation2 [shape = 'u8[262144]{0}', space=vmem, size = 0x40000, scoped, tag = 'input window, operand 1, single buffered']
    #allocation3 [shape = 's32[1]{0}', space=sflag, size = 0x4, scoped, tag = 'scoped memory for forward.2']
    %7 = vsyncpa [#allocation3], 0
    // Predicated region
    $region2: #{forward.2} parent=1 // pred_check
      _
    $region3: #{forward.2} parent=1 // pred_check_branch
      %9 = sbr.rel (0) target = $region5
    $region4: #{forward.2} parent=1 // pred_region
      _
    $region5: #{forward.2} parent=1 // pred_fallthru
      _
    // Predicated region
    $region6: #{forward.2} parent=1 // pred_check
      _
    $region7: #{forward.2} parent=1 // pred_check_branch
      %11 = sbr.rel (0) target = $region9
    $region8: #{forward.2} parent=1 // pred_region
      %13 = vsyncadd [#allocation3], 0
      %s14 = sshll.u32 %s1, 4
      %s15 = int_to_ptr.hbm [resolvable:$true] %s14
      %s16 = sshll.u32 [#allocation2], 4
      %s17 = int_to_ptr.vmem [resolvable:$true] %s16
      %22 = dma.hbm_to_vmem [thread:$0]  %s15, 8192, %s17, [#allocation3], 256, 256, 16
    $region9: #{forward.2} parent=1 // pred_fallthru
      _
    // Predicated region
    $region10: #{forward.2} parent=1 // pred_check
      _
    $region11: #{forward.2} parent=1 // pred_check_branch
      %24 = sbr.rel (0) target = $region13
    $region12: #{forward.2} parent=1 // pred_region
      %26 = dma.done [#allocation3], 8192
    $region13: #{forward.2} parent=1 // pred_fallthru
      _
    %v27 = vld [vmem:[%s0] sm:$0xff]
    %v28 = vld [vmem:[%s0 + $0x8] sm:$0xff]
    %v29 = vld [vmem:[%s0 + $0x10] sm:$0xff]
    %v30 = vld [vmem:[%s0 + $0x18] sm:$0xff]
    %v31 = vld [vmem:[#allocation2] sm:$0xff]
    %v32 = vld [vmem:[#allocation2 + $0x8] sm:$0xff]
    %v33 = vld [vmem:[#allocation2 + $0x10] sm:$0xff]
    %v34 = vld [vmem:[#allocation2 + $0x18] sm:$0xff]
    %v35 = vld [vmem:[#allocation2 + $0x20] sm:$0xff]
    %v36 = vld [vmem:[#allocation2 + $0x28] sm:$0xff]
    %v37 = vld [vmem:[#allocation2 + $0x30] sm:$0xff]
    %v38 = vld [vmem:[#allocation2 + $0x38] sm:$0xff]
    %v39 = vld [vmem:[#allocation2 + $0x40] sm:$0xff]
    %v40 = vld [vmem:[#allocation2 + $0x48] sm:$0xff]
    %v41 = vld [vmem:[#allocation2 + $0x50] sm:$0xff]
    %v42 = vld [vmem:[#allocation2 + $0x58] sm:$0xff]
    %v43 = vld [vmem:[#allocation2 + $0x60] sm:$0xff]
    %v44 = vld [vmem:[#allocation2 + $0x68] sm:$0xff]
    %v45 = vld [vmem:[#allocation2 + $0x70] sm:$0xff]
    %v46 = vld [vmem:[#allocation2 + $0x78] sm:$0xff]
    %v47 = vld [vmem:[#allocation2 + $0x80] sm:$0xff]
    %v48 = vld [vmem:[#allocation2 + $0x88] sm:$0xff]
    %v49 = vld [vmem:[#allocation2 + $0x90] sm:$0xff]
    %v50 = vld [vmem:[#allocation2 + $0x98] sm:$0xff]
    %v51 = vld [vmem:[#allocation2 + $0xa0] sm:$0xff]
    %v52 = vld [vmem:[#allocation2 + $0xa8] sm:$0xff]
    %v53 = vld [vmem:[#allocation2 + $0xb0] sm:$0xff]
    %v54 = vld [vmem:[#allocation2 + $0xb8] sm:$0xff]
    %v55 = vld [vmem:[#allocation2 + $0xc0] sm:$0xff]
    %v56 = vld [vmem:[#allocation2 + $0xc8] sm:$0xff]
    %v57 = vld [vmem:[#allocation2 + $0xd0] sm:$0xff]
    %v58 = vld [vmem:[#allocation2 + $0xd8] sm:$0xff]
    %v59 = vld [vmem:[#allocation2 + $0xe0] sm:$0xff]
    %v60 = vld [vmem:[#allocation2 + $0xe8] sm:$0xff]
    %v61 = vld [vmem:[#allocation2 + $0xf0] sm:$0xff]
    %v62 = vld [vmem:[#allocation2 + $0xf8] sm:$0xff]
    %v63 = vld [vmem:[#allocation2 + $0x100] sm:$0xff]
    %v64 = vld [vmem:[#allocation2 + $0x108] sm:$0xff]
    %v65 = vld [vmem:[#allocation2 + $0x110] sm:$0xff]
    %v66 = vld [vmem:[#allocation2 + $0x118] sm:$0xff]
    %v67 = vld [vmem:[#allocation2 + $0x120] sm:$0xff]
    %v68 = vld [vmem:[#allocation2 + $0x128] sm:$0xff]
    %v69 = vld [vmem:[#allocation2 + $0x130] sm:$0xff]
    %v70 = vld [vmem:[#allocation2 + $0x138] sm:$0xff]
    %v71 = vld [vmem:[#allocation2 + $0x140] sm:$0xff]
    %v72 = vld [vmem:[#allocation2 + $0x148] sm:$0xff]
    %v73 = vld [vmem:[#allocation2 + $0x150] sm:$0xff]
    %v74 = vld [vmem:[#allocation2 + $0x158] sm:$0xff]
    %v75 = vld [vmem:[#allocation2 + $0x160] sm:$0xff]
    %v76 = vld [vmem:[#allocation2 + $0x168] sm:$0xff]
    %v77 = vld [vmem:[#allocation2 + $0x170] sm:$0xff]
    %v78 = vld [vmem:[#allocation2 + $0x178] sm:$0xff]
    %v79 = vld [vmem:[#allocation2 + $0x180] sm:$0xff]
    %v80 = vld [vmem:[#allocation2 + $0x188] sm:$0xff]
    %v81 = vld [vmem:[#allocation2 + $0x190] sm:$0xff]
    %v82 = vld [vmem:[#allocation2 + $0x198] sm:$0xff]
    %v83 = vld [vmem:[#allocation2 + $0x1a0] sm:$0xff]
    %v84 = vld [vmem:[#allocation2 + $0x1a8] sm:$0xff]
    %v85 = vld [vmem:[#allocation2 + $0x1b0] sm:$0xff]
    %v86 = vld [vmem:[#allocation2 + $0x1b8] sm:$0xff]
    %v87 = vld [vmem:[#allocation2 + $0x1c0] sm:$0xff]
    %v88 = vld [vmem:[#allocation2 + $0x1c8] sm:$0xff]
    %v89 = vld [vmem:[#allocation2 + $0x1d0] sm:$0xff]
    %v90 = vld [vmem:[#allocation2 + $0x1d8] sm:$0xff]
    %v91 = vld [vmem:[#allocation2 + $0x1e0] sm:$0xff]
    %v92 = vld [vmem:[#allocation2 + $0x1e8] sm:$0xff]
    %v93 = vld [vmem:[#allocation2 + $0x1f0] sm:$0xff]
    %v94 = vld [vmem:[#allocation2 + $0x1f8] sm:$0xff]
    %95 = vmatpush.msra.mxu0 %v61
    %96 = vmatpush.msra.mxu0 %v59
    %97 = vmatpush.msra.mxu0 %v57
    %98 = vmatpush.msra.mxu0 %v55
    %99 = vmatpush.msra.mxu0 %v53
    %100 = vmatpush.msra.mxu0 %v51
    %101 = vmatpush.msra.mxu0 %v49
    %102 = vmatpush.msra.mxu0 %v47
    %103 = vmatpush.msra.mxu0 %v45
    %104 = vmatpush.msra.mxu0 %v43
    %105 = vmatpush.msra.mxu0 %v41
    %106 = vmatpush.msra.mxu0 %v39
    %107 = vmatpush.msra.mxu0 %v37
    %108 = vmatpush.msra.mxu0 %v35
    %109 = vmatpush.msra.mxu0 %v33
    %110 = vmatpush.msra.mxu0 %v31
    %111 = vmatmul.f32.gmra.mxu0 %v27
    %v112 = vpop.f32.mrf.mxu0
    %v113 = vadd.f32 0.0, %v112
    %114 = vmatmul.f32.gmra.mxu0 %v29
    %v115 = vpop.f32.mrf.mxu0
    %v116 = vadd.f32 0.0, %v115
    %117 = vdwg.mxu0
    %118 = vmatpush.msra.mxu0 %v93
    %119 = vmatpush.msra.mxu0 %v91
    %120 = vmatpush.msra.mxu0 %v89
    %121 = vmatpush.msra.mxu0 %v87
    %122 = vmatpush.msra.mxu0 %v85
    %123 = vmatpush.msra.mxu0 %v83
    %124 = vmatpush.msra.mxu0 %v81
    %125 = vmatpush.msra.mxu0 %v79
    %126 = vmatpush.msra.mxu0 %v77
    %127 = vmatpush.msra.mxu0 %v75
    %128 = vmatpush.msra.mxu0 %v73
    %129 = vmatpush.msra.mxu0 %v71
    %130 = vmatpush.msra.mxu0 %v69
    %131 = vmatpush.msra.mxu0 %v67
    %132 = vmatpush.msra.mxu0 %v65
    %133 = vmatpush.msra.mxu0 %v63
    %134 = vmatmul.f32.gmra.mxu0 %v28
    %v135 = vpop.f32.mrf.mxu0
    %v136 = vadd.f32 %v113, %v135
    %137 = vmatmul.f32.gmra.mxu0 %v30
    %v138 = vpop.f32.mrf.mxu0
    %v139 = vadd.f32 %v116, %v138
    %140 = vdwg.mxu0
    %141 = vmatpush.msra.mxu0 %v62
    %142 = vmatpush.msra.mxu0 %v60
    %143 = vmatpush.msra.mxu0 %v58
    %144 = vmatpush.msra.mxu0 %v56
    %145 = vmatpush.msra.mxu0 %v54
    %146 = vmatpush.msra.mxu0 %v52
    %147 = vmatpush.msra.mxu0 %v50
    %148 = vmatpush.msra.mxu0 %v48
    %149 = vmatpush.msra.mxu0 %v46
    %150 = vmatpush.msra.mxu0 %v44
    %151 = vmatpush.msra.mxu0 %v42
    %152 = vmatpush.msra.mxu0 %v40
    %153 = vmatpush.msra.mxu0 %v38
    %154 = vmatpush.msra.mxu0 %v36
    %155 = vmatpush.msra.mxu0 %v34
    %156 = vmatpush.msra.mxu0 %v32
    %157 = vmatmul.f32.gmra.mxu0 %v27
    %v158 = vpop.f32.mrf.mxu0
    %v159 = vadd.f32 0.0, %v158
    %160 = vmatmul.f32.gmra.mxu0 %v29
    %v161 = vpop.f32.mrf.mxu0
    %v162 = vadd.f32 0.0, %v161
    %163 = vdwg.mxu0
    %164 = vmatpush.msra.mxu0 %v94
    %165 = vmatpush.msra.mxu0 %v92
    %166 = vmatpush.msra.mxu0 %v90
    %167 = vmatpush.msra.mxu0 %v88
    %168 = vmatpush.msra.mxu0 %v86
    %169 = vmatpush.msra.mxu0 %v84
    %170 = vmatpush.msra.mxu0 %v82
    %171 = vmatpush.msra.mxu0 %v80
    %172 = vmatpush.msra.mxu0 %v78
    %173 = vmatpush.msra.mxu0 %v76
    %174 = vmatpush.msra.mxu0 %v74
    %175 = vmatpush.msra.mxu0 %v72
    %176 = vmatpush.msra.mxu0 %v70
    %177 = vmatpush.msra.mxu0 %v68
    %178 = vmatpush.msra.mxu0 %v66
    %179 = vmatpush.msra.mxu0 %v64
    %180 = vmatmul.f32.gmra.mxu0 %v28
    %v181 = vpop.f32.mrf.mxu0
    %v182 = vadd.f32 %v159, %v181
    %183 = vmatmul.f32.gmra.mxu0 %v30
    %v184 = vpop.f32.mrf.mxu0
    %v185 = vadd.f32 %v162, %v184
    %186 = vdwg.mxu0
    %v187 = vmul.f32 %v136, %v136
    %v188 = vmul.f32 %v139, %v139
    %v189 = vmul.f32 %v182, %v182
    %v190 = vmul.f32 %v185, %v185
    %v191 = vadd.f32 %v187, %v189
    %v192 = vadd.f32 %v188, %v190
    %v193 = vadd.f32 %v191, 1e-10
    %v194 = vadd.f32 %v192, 1e-10
    %v195 = vlog2.pop %v193
    %v196 = vmul.f32 %v195, 0.6931472
    %v197 = vlog2.pop %v194
    %v198 = vmul.f32 %v197, 0.6931472
    %v199 = vmul.f32 %v196, 0.4342945
    %v200 = vmul.f32 %v198, 0.4342945
    %v201 = vmul.f32 %v199, 10.0
    %v202 = vmul.f32 %v200, 10.0
    %v203 = vlaneseq
    %v204 = vand.u32 %v203, 127
    %vm205 = vcmp.lt.s32.totalorder %v204, 120
    %v206 = vsel %vm205, 1, 0
    %vm207 = vcmp.eq.s32.totalorder %v206, 1
    %v208 = vsel %vm207, %v201, 1e+30
    %v209 = vsel %vm207, %v202, 1e+30
    %210 = vmin.xlane.f32.xlu0 %v208
    %v211 = vpop.xlane.xlu0 %210
    %212 = vmin.xlane.f32.xlu0 %v209
    %v213 = vpop.xlane.xlu0 %212
    %v214 = vrot.slane %v211, 4
    %v215 = vmin.f32 %v211, %v214
    %v216 = vrot.slane %v215, 2
    %v217 = vmin.f32 %v215, %v216
    %v218 = vrot.slane %v217, 1
    %v219 = vmin.f32 %v217, %v218
    %v220 = vrot.slane %v213, 4
    %v221 = vmin.f32 %v213, %v220
    %v222 = vrot.slane %v221, 2
    %v223 = vmin.f32 %v221, %v222
    %v224 = vrot.slane %v223, 1
    %v225 = vmin.f32 %v223, %v224
    %v226 = vsub.f32 %v201, %v219
    %v227 = vsub.f32 %v202, %v225
    %v228 = vsel %vm207, %v226, -1e+30
    %v229 = vsel %vm207, %v227, -1e+30
    %230 = vmax.xlane.f32.xlu0 %v228
    %v231 = vpop.xlane.xlu0 %230
    %232 = vmax.xlane.f32.xlu0 %v229
    %v233 = vpop.xlane.xlu0 %232
    %v234 = vrot.slane %v231, 4
    %v235 = vmax.f32 %v231, %v234
    %v236 = vrot.slane %v235, 2
    %v237 = vmax.f32 %v235, %v236
    %v238 = vrot.slane %v237, 1
    %v239 = vmax.f32 %v237, %v238
    %v240 = vrot.slane %v233, 4
    %v241 = vmax.f32 %v233, %v240
    %v242 = vrot.slane %v241, 2
    %v243 = vmax.f32 %v241, %v242
    %v244 = vrot.slane %v243, 1
    %v245 = vmax.f32 %v243, %v244
    %v246 = vrcp.pop %v239
    %v247 = vmul.f32 %v239, %v246
    %v248 = vsub.f32 1.0, %v247
    %v249 = vmul.f32 %v246, %v248
    %v250 = vadd.f32 %v246, %v249
    %vm251 = vweird.f32 %v239
    %vm252 = vweird.f32 %v246
    %vm253 = vmor %vm251, %vm252
    %v254 = vsel %vm253, %v246, %v250
    %v255 = vand.u32 2147483647, %v239
    %vm256 = vcmp.eq.f32.partialorder %v255, 8.507059e+37
    %v257 = vand.u32 %v239, 2147483648
    %v258 = vor.u32 1.1754944e-38, %v257
    %v259 = vsel %vm256, %v258, %v254
    %v260 = vmul.f32 %v226, %v259
    %v261 = vrcp.pop %v245
    %v262 = vmul.f32 %v245, %v261
    %v263 = vsub.f32 1.0, %v262
    %v264 = vmul.f32 %v261, %v263
    %v265 = vadd.f32 %v261, %v264
    %vm266 = vweird.f32 %v245
    %vm267 = vweird.f32 %v261
    %vm268 = vmor %vm266, %vm267
    %v269 = vsel %vm268, %v261, %v265
    %v270 = vand.u32 2147483647, %v245
    %vm271 = vcmp.eq.f32.partialorder %v270, 8.507059e+37
    %v272 = vand.u32 %v245, 2147483648
    %v273 = vor.u32 1.1754944e-38, %v272
    %v274 = vsel %vm271, %v273, %v269
    %v275 = vmul.f32 %v227, %v274
    %v276 = vsel %vm207, %v260, 0.0
    %v277 = vsel %vm207, %v275, 0.0
    %v278 = vadd.f32 %v276, %v277
    %279 = vadd.xlane.f32.xlu0 %v278
    %v280 = vpop.xlane.xlu0 %279
    %v281 = vrot.slane %v280, 4
    %v282 = vadd.f32 %v280, %v281
    %v283 = vrot.slane %v282, 2
    %v284 = vadd.f32 %v282, %v283
    %v285 = vrot.slane %v284, 1
    %v286 = vadd.f32 %v284, %v285
    %s287 = vtos %v286
    %v288 = vrcp.pop 1920.0
    %v289 = vmul.f32 1920.0, %v288
    %v290 = vsub.f32 1.0, %v289
    %v291 = vmul.f32 %v288, %v290
    %v292 = vadd.f32 %v288, %v291
    %vm293 = vweird.f32 %v288
    %v294 = vsel %vm293, %v288, %v292
    %s295 = vtos %v294
    %s296 = smul.f32 %s287, %s295
    %v297 = vstv %s296
    %v298 = vsub.f32 %v260, %v297
    %v299 = vsub.f32 %v275, %v297
    %v300 = vmul.f32 %v298, %v298
    %v301 = vmul.f32 %v299, %v299
    %v302 = vsel %vm207, %v300, 0.0
    %v303 = vsel %vm207, %v301, 0.0
    %v304 = vadd.f32 %v302, %v303
    %305 = vadd.xlane.f32.xlu0 %v304
    %v306 = vpop.xlane.xlu0 %305
    %v307 = vrot.slane %v306, 4
    %v308 = vadd.f32 %v306, %v307
    %v309 = vrot.slane %v308, 2
    %v310 = vadd.f32 %v308, %v309
    %v311 = vrot.slane %v310, 1
    %v312 = vadd.f32 %v310, %v311
    %s313 = vtos %v312
    %v314 = vrcp.pop 1920.0
    %v315 = vmul.f32 1920.0, %v314
    %v316 = vsub.f32 1.0, %v315
    %v317 = vmul.f32 %v314, %v316
    %v318 = vadd.f32 %v314, %v317
    %vm319 = vweird.f32 %v314
    %v320 = vsel %vm319, %v314, %v318
    %s321 = vtos %v320
    %s322 = smul.f32 %s313, %s321
    %s323 = sadd.f32 %s322, 1e-05
    %v324 = vstv %s323
    %v325 = vrsqrt.pop %v324
    %v326 = vmul.f32 %v325, %v324
    %v327 = vmul.f32 %v326, %v325
    %v328 = vmul.f32 0.5, %v327
    %v329 = vsub.f32 1.5, %v328
    %v330 = vmul.f32 %v325, %v329
    %vm331 = vweird.f32 %v324
    %vm332 = vweird.f32 %v325
    %vm333 = vmor %vm331, %vm332
    %v334 = vsel %vm333, %v325, %v330
    %s335 = vtos %v334
    %v336 = vstv %s335
    %v337 = vmul.f32 %v298, %v336
    %v338 = vmul.f32 %v299, %v336
    %v339 = vsel %vm207, %v337, 0.0
    %v340 = vsel %vm207, %v338, 0.0
    %341 = vst [vmem:[%s2] sm:$0xff] %v339
    %342 = vst [vmem:[%s2 + $0x8] sm:$0xff] %v340
    // Predicated region
    $region14: #{forward.2} parent=1 // pred_check
      _
    $region15: #{forward.2} parent=1 // pred_check_branch
      %344 = sbr.rel (0) target = $region17
    $region16: #{forward.2} parent=1 // pred_region
      _
    $region17: #{forward.2} parent=1 // pred_fallthru
      _
    // Predicated region
    $region18: #{forward.2} parent=1 // pred_check
      _
    $region19: #{forward.2} parent=1 // pred_check_branch
      %346 = sbr.rel (0) target = $region21
    $region20: #{forward.2} parent=1 // pred_region
      _
    $region21: #{forward.2} parent=1 // pred_fallthru
      _
    %347 = vsyncpa [#allocation3], 1

// kernel: tile.47
$region0: #{tile.47}
  %s0 = inlined_call_operand.vmem [shape: f32[9,8,8], index: 0, kind: input, shape index: {}]
  %s1 = inlined_call_operand.vmem [shape: f32[9,64], index: 1, kind: output, shape index: {}]
  %v2 = vld [vmem:[%s0] ss:$8 sm:$0xf]
  %v3 = vld [vmem:[%s0] ss:$8 sm:$0xf0]
  %vm4 = vcmask 1047556
  %v5 = vsel %vm4, %v3, %v2
  %vm6 = vcmask 64512
  %7 = vst.msk [vmem:[%s1] sm:$0xff] %vm6, %v5
  %s8 = scalar_lea.vmem %s0, 64
  %v9 = vld [vmem:[%s8] sm:$0x1]
  %vm10 = vcmask 64512
  %s11 = scalar_lea.vmem %s1, 8
  %12 = vst.msk [vmem:[%s11] sm:$0x1] %vm10, %v9
  %s13 = scalar_lea.vmem %s0, 7
  %v14 = vld [vmem:[%s13] ss:$8 sm:$0xf]
  %s15 = scalar_lea.vmem %s0, 7
  %v16 = vld [vmem:[%s15] ss:$8 sm:$0xf0]
  %vm17 = vcmask 1047556
  %v18 = vsel %vm17, %v16, %v14
  %19 = vrot.lane.b32.xlu0 %v18, 56
  %v20 = vpop.permute.xlu0 %19
  %vm21 = vcmask 523712
  %22 = vst.msk [vmem:[%s1] sm:$0xff] %vm21, %v20
  %s23 = scalar_lea.vmem %s0, 71
  %v24 = vld [vmem:[%s23] sm:$0x1]
  %25 = vrot.lane.b32.xlu0 %v24, 56
  %v26 = vpop.permute.xlu0 %25
  %vm27 = vcmask 523712
  %s28 = scalar_lea.vmem %s1, 8
  %29 = vst.msk [vmem:[%s28] sm:$0x1] %vm27, %v26
  %s30 = scalar_lea.vmem %s0, 6
  %v31 = vld [vmem:[%s30] ss:$8 sm:$0xf]
  %s32 = scalar_lea.vmem %s0, 6
  %v33 = vld [vmem:[%s32] ss:$8 sm:$0xf0]
  %vm34 = vcmask 1047556
  %v35 = vsel %vm34, %v33, %v31
  %36 = vrot.lane.b32.xlu0 %v35, 48
  %v37 = vpop.permute.xlu0 %36
  %vm38 = vcmask 458112
  %39 = vst.msk [vmem:[%s1] sm:$0xff] %vm38, %v37
  %s40 = scalar_lea.vmem %s0, 70
  %v41 = vld [vmem:[%s40] sm:$0x1]
  %42 = vrot.lane.b32.xlu0 %v41, 48
  %v43 = vpop.permute.xlu0 %42
  %vm44 = vcmask 458112
  %s45 = scalar_lea.vmem %s1, 8
  %46 = vst.msk [vmem:[%s45] sm:$0x1] %vm44, %v43
  %s47 = scalar_lea.vmem %s0, 5
  %v48 = vld [vmem:[%s47] ss:$8 sm:$0xf]
  %s49 = scalar_lea.vmem %s0, 5
  %v50 = vld [vmem:[%s49] ss:$8 sm:$0xf0]
  %vm51 = vcmask 1047556
  %v52 = vsel %vm51, %v50, %v48
  %53 = vrot.lane.b32.xlu0 %v52, 40
  %v54 = vpop.permute.xlu0 %53
  %vm55 = vcmask 392512
  %56 = vst.msk [vmem:[%s1] sm:$0xff] %vm55, %v54
  %s57 = scalar_lea.vmem %s0, 69
  %v58 = vld [vmem:[%s57] sm:$0x1]
  %59 = vrot.lane.b32.xlu0 %v58, 40
  %v60 = vpop.permute.xlu0 %59
  %vm61 = vcmask 392512
  %s62 = scalar_lea.vmem %s1, 8
  %63 = vst.msk [vmem:[%s62] sm:$0x1] %vm61, %v60
  %s64 = scalar_lea.vmem %s0, 4
  %v65 = vld [vmem:[%s64] ss:$8 sm:$0xf]
  %s66 = scalar_lea.vmem %s0, 4
  %v67 = vld [vmem:[%s66] ss:$8 sm:$0xf0]
  %vm68 = vcmask 1047556
  %v69 = vsel %vm68, %v67, %v65
  %70 = vrot.lane.b32.xlu0 %v69, 32
  %v71 = vpop.permute.xlu0 %70
  %vm72 = vcmask 326912
  %73 = vst.msk [vmem:[%s1] sm:$0xff] %vm72, %v71
  %s74 = scalar_lea.vmem %s0, 68
  %v75 = vld [vmem:[%s74] sm:$0x1]
  %76 = vrot.lane.b32.xlu0 %v75, 32
  %v77 = vpop.permute.xlu0 %76
  %vm78 = vcmask 326912
  %s79 = scalar_lea.vmem %s1, 8
  %80 = vst.msk [vmem:[%s79] sm:$0x1] %vm78, %v77
  %s81 = scalar_lea.vmem %s0, 3
  %v82 = vld [vmem:[%s81] ss:$8 sm:$0xf]
  %s83 = scalar_lea.vmem %s0, 3
  %v84 = vld [vmem:[%s83] ss:$8 sm:$0xf0]
  %vm85 = vcmask 1047556
  %v86 = vsel %vm85, %v84, %v82
  %87 = vrot.lane.b32.xlu0 %v86, 24
  %v88 = vpop.permute.xlu0 %87
  %vm89 = vcmask 261312
  %90 = vst.msk [vmem:[%s1] sm:$0xff] %vm89, %v88
  %s91 = scalar_lea.vmem %s0, 67
  %v92 = vld [vmem:[%s91] sm:$0x1]
  %93 = vrot.lane.b32.xlu0 %v92, 24
  %v94 = vpop.permute.xlu0 %93
  %vm95 = vcmask 261312
  %s96 = scalar_lea.vmem %s1, 8
  %97 = vst.msk [vmem:[%s96] sm:$0x1] %vm95, %v94
  %s98 = scalar_lea.vmem %s0, 2
  %v99 = vld [vmem:[%s98] ss:$8 sm:$0xf]
  %s100 = scalar_lea.vmem %s0, 2
  %v101 = vld [vmem:[%s100] ss:$8 sm:$0xf0]
  %vm102 = vcmask 1047556
  %v103 = vsel %vm102, %v101, %v99
  %104 = vrot.lane.b32.xlu0 %v103, 16
  %v105 = vpop.permute.xlu0 %104
  %vm106 = vcmask 195712
  %107 = vst.msk [vmem:[%s1] sm:$0xff] %vm106, %v105
  %s108 = scalar_lea.vmem %s0, 66
  %v109 = vld [vmem:[%s108] sm:$0x1]
  %110 = vrot.lane.b32.xlu0 %v109, 16
  %v111 = vpop.permute.xlu0 %110
  %vm112 = vcmask 195712
  %s113 = scalar_lea.vmem %s1, 8
  %114 = vst.msk [vmem:[%s113] sm:$0x1] %vm112, %v111
  %s115 = scalar_lea.vmem %s0, 1
  %v116 = vld [vmem:[%s115] ss:$8 sm:$0xf]
  %s117 = scalar_lea.vmem %s0, 1
  %v118 = vld [vmem:[%s117] ss:$8 sm:$0xf0]
  %vm119 = vcmask 1047556
  %v120 = vsel %vm119, %v118, %v116
  %121 = vrot.lane.b32.xlu0 %v120, 8
  %v122 = vpop.permute.xlu0 %121
  %vm123 = vcmask 130112
  %124 = vst.msk [vmem:[%s1] sm:$0xff] %vm123, %v122
  %s125 = scalar_lea.vmem %s0, 65
  %v126 = vld [vmem:[%s125] sm:$0x1]
  %127 = vrot.lane.b32.xlu0 %v126, 8
  %v128 = vpop.permute.xlu0 %127
  %vm129 = vcmask 130112
  %s130 = scalar_lea.vmem %s1, 8
  %131 = vst.msk [vmem:[%s130] sm:$0x1] %vm129, %v128

// kernel: squeeze.9
$region0: #{squeeze.9}
  %s0 = inlined_call_operand.vmem [shape: f32[3,3], index: 0, kind: input, shape index: {}]
  %s1 = inlined_call_operand.vmem [shape: f32[9], index: 1, kind: output, shape index: {}]
  $region1: #{squeeze.9} parent=0
    #allocation0 [shape = 'u8[4096]{0}', space=vmem, size = 0x1000, scoped, tag = 'scoped mem for output reshape']
    #allocation1 [shape = 'u8[4096]{0}', space=vmem, size = 0x1000, scoped, tag = 'scoped mem for input reshape']
    %s3 = ssub.s32 16, 1
    %v4 = vld [vmem:[%s0] sm:%s3]
    %5 = vst [vmem:[#allocation1] sm:%s3] %v4
    %v6 = vld [vmem:[#allocation1] sm:$0x1]
    %vm7 = vcmask 23552
    %8 = vst.msk [vmem:[#allocation0] sm:$0x1] %vm7, %v6
    %s9 = scalar_lea.vmem [#allocation1], 2
    %v10 = vld [vmem:[%s9] sm:$0x1]
    %11 = vrot.lane.b32.xlu0 %v10, 6
    %v12 = vpop.permute.xlu0 %11
    %vm13 = vcmask 72752
    %14 = vst.msk [vmem:[#allocation0] sm:$0x1] %vm13, %v12
    %s15 = scalar_lea.vmem [#allocation1], 1
    %v16 = vld [vmem:[%s15] sm:$0x1]
    %17 = vrot.lane.b32.xlu0 %v16, 3
    %v18 = vpop.permute.xlu0 %17
    %vm19 = vcmask 48152
    %20 = vst.msk [vmem:[#allocation0] sm:$0x1] %vm19, %v18
    %s22 = ssub.s32 2, 1
    %v23 = vld [vmem:[#allocation0] sm:%s22]
    %s25 = ssub.s32 2, 1
    %26 = vst [vmem:[%s1] sm:%s25] %v23

// kernel: forward.3
$region0: #{forward.3}
  #allocation0 [shape = 'u32[]', space=smem, size = 0x4, offset = 0x4, fixed_abs, tag = 'smem constant byte address 0x4 - core index']
  #allocation1 [shape = 'u32[72,128]{1,0:T(1,128)}', space=vmem, size = 0x9000, scoped, tag = 'internal scratch']
  #allocation2 [shape = 'f32[52,96]{1,0:T(8,128)}', space=vmem, size = 0x7000, scoped, tag = 'scratch operand']
  #allocation3 [shape = 'f32[52,16]{1,0:T(8,128)}', space=vmem, size = 0x7000, scoped, tag = 'scratch operand']
  #allocation4 [shape = 'f32[18,112]{1,0:T(8,128)}', space=vmem, size = 0x3000, scoped, tag = 'scratch operand']
  #allocation5 [shape = 'f32[18,80]{1,0:T(8,128)}', space=vmem, size = 0x3000, scoped, tag = 'scratch operand']
  #allocation6 [shape = 'f32[18,10]{1,0:T(8,128)}', space=vmem, size = 0x3000, scoped, tag = 'scratch operand']
  %s0 = inlined_call_operand.vmem [shape: f32[2,86,32], index: 0, kind: input, shape index: {}]
  %s1 = inlined_call_operand.vmem [shape: f32[2,50,48], index: 1, kind: input, shape index: {}]
  %s2 = inlined_call_operand.vmem [shape: f32[1248,64], index: 2, kind: input, shape index: {}]
  %s3 = inlined_call_operand.vmem [shape: f32[1,64], index: 3, kind: input, shape index: {}]
  %s4 = inlined_call_operand.vmem [shape: f32[25,64], index: 4, kind: input, shape index: {}]
  %s5 = inlined_call_operand.vmem [shape: f32[112,52], index: 5, kind: input, shape index: {}]
  %s6 = inlined_call_operand.vmem [shape: f32[112,64], index: 6, kind: input, shape index: {}]
  %s7 = inlined_call_operand.vmem [shape: f32[1,64], index: 7, kind: input, shape index: {}]
  %s8 = inlined_call_operand.vmem [shape: f32[21,64], index: 8, kind: input, shape index: {}]
  %s9 = inlined_call_operand.vmem [shape: f32[80,50], index: 9, kind: input, shape index: {}]
  %s10 = inlined_call_operand.vmem [shape: f32[240,64], index: 10, kind: input, shape index: {}]
  %s11 = inlined_call_operand.vmem [shape: f32[1,64], index: 11, kind: input, shape index: {}]
  %s12 = inlined_call_operand.vmem [shape: f32[9,64], index: 12, kind: input, shape index: {}]
  %s13 = inlined_call_operand.vmem [shape: f32[64,8], index: 13, kind: input, shape index: {}]
  %s14 = inlined_call_operand.vmem [shape: f32[9], index: 14, kind: input, shape index: {}]
  %s15 = inlined_call_operand.vmem [shape: f32[3], index: 15, kind: input, shape index: {}]
  %s16 = inlined_call_operand.vmem [shape: f32[2,48,8], index: 16, kind: output, shape index: {0}]
  %s17 = inlined_call_operand.vmem [shape: f32[2,16,8], index: 17, kind: output, shape index: {1}]
  %s18 = inlined_call_operand.vmem [shape: f32[2,16,8], index: 18, kind: output, shape index: {2}]
  %19 = xla_tuple %s16, %s17, %s18
  %s20 = sld [smem:[#allocation0]]
  $region121: #{forward.3} parent=0
    _
  %s22 = ssub.s32 1, %s20
  %s23 = scalar_select 0, %s22, %s20
  $region1: #{forward.3} parent=0
    #allocation7 [shape = 'u8[512]{0}', space=smem, size = 0x200, scoped, tag = 'input window, operand 14, single buffered']
    #allocation8 [shape = 's32[2]{0}', space=sflag, size = 0x8, scoped, tag = 'scoped memory for forward.3']
    #allocation9 [shape = 'u8[512]{0}', space=smem, size = 0x200, scoped, tag = 'input window, operand 15, single buffered']
    #allocation10 [shape = 's32[1]{0}', space=sflag, size = 0x4, scoped, tag = 'scoped memory for forward.3']
    %24 = vsyncpa [#allocation8], 0
    %25 = vsyncpa [#allocation10], 0
    loop: start=0, step=1, limit=4
    $region2: #{forward.3} parent=1 // loop_pre_header
      _
    $region3: #{forward.3} parent=1 // loop_header
      %s27 = sphi 0, %s31
      %p28 = scmp.ge.s32.totalorder %s27, 4
      %s37 = sphi 0, %s39
      %s40 = sphi 0, %s37
      %s41 = sphi 0, %s40
      %s57 = sphi 0, %s41
      %s63 = sphi 0, %s65
      %s66 = sphi 0, %s63
      %s67 = sphi 0, %s66
      %s83 = sphi 0, %s67
      %s87 = sphi 0, %s87
      %s89 = sphi 0, %s87
      %s90 = sphi 0, %s89
      %s104 = sphi 0, %s90
      %s108 = sphi 0, %s108
      %s110 = sphi 0, %s108
      %s111 = sphi 0, %s110
      %s125 = sphi 0, %s111
      %s129 = sphi 0, %s129
      %s131 = sphi 0, %s129
      %s132 = sphi 0, %s131
      %s146 = sphi 0, %s132
      %s150 = sphi 0, %s150
      %s152 = sphi 0, %s150
      %s153 = sphi 0, %s152
      %s167 = sphi 0, %s153
      %s171 = sphi 0, %s171
      %s173 = sphi 0, %s171
      %s174 = sphi 0, %s173
      %s188 = sphi 0, %s174
      %s192 = sphi 0, %s192
      %s194 = sphi 0, %s192
      %s195 = sphi 0, %s194
      %s209 = sphi 0, %s195
      %s213 = sphi 0, %s213
      %s215 = sphi 0, %s213
      %s216 = sphi 0, %s215
      %s230 = sphi 0, %s216
      %s234 = sphi 0, %s234
      %s236 = sphi 0, %s234
      %s237 = sphi 0, %s236
      %s251 = sphi 0, %s237
      %s255 = sphi 0, %s255
      %s257 = sphi 0, %s255
      %s258 = sphi 0, %s257
      %s272 = sphi 0, %s258
      %s276 = sphi 0, %s276
      %s278 = sphi 0, %s276
      %s279 = sphi 0, %s278
      %s293 = sphi 0, %s279
      %s297 = sphi 0, %s297
      %s299 = sphi 0, %s297
      %s300 = sphi 0, %s299
      %s314 = sphi 0, %s300
      %s318 = sphi 0, %s318
      %s320 = sphi 0, %s318
      %s321 = sphi 0, %s320
      %s335 = sphi 0, %s321
      %s339 = sphi 0, %s339
      %s341 = sphi 0, %s339
      %s342 = sphi 0, %s341
      %s356 = sphi 0, %s342
      %s360 = sphi 0, %s360
      %s362 = sphi 0, %s360
      %s363 = sphi 0, %s362
      %s377 = sphi 0, %s363
      %s383 = sphi 0, %s385
      %s386 = sphi 0, %s383
      %s387 = sphi 0, %s386
      %s403 = sphi 0, %s387
      %s409 = sphi 0, %s411
      %s412 = sphi 0, %s409
      %s413 = sphi 0, %s412
      %s429 = sphi 0, %s413
      %s435 = sphi 0, %s437
      %s438 = sphi 0, %s435
      %s439 = sphi 0, %s438
      %s455 = sphi 0, %s439
    $region4: #{forward.3} parent=1 // loop_header_branch
      %30 = sbr.rel (%p28) target = $region8
    $region5: #{forward.3} parent=1 // loop_body
      %s32 = ssub.s32 %s27, 1
      %s33 = ssub.s32 %s27, 2
      %s34 = sadd.s32 %s27, 1
      %s35 = ssub.s32 %s27, %s34
      %p36 = scmp.eq.s32.totalorder %s35, 0
      %s38 = sadd.s32 %s37, 1
      %s39 = scalar_select %p36, %s37, %s38
      %p42 = pneg %p36
      %p43 = scmp.eq.s32.totalorder %s27, 1
      %p44 = por %p42, %p43
      %p45 = scmp.ne.s32.totalorder %s37, %s40
      %p46 = scmp.eq.s32.totalorder %s27, 0
      %p47 = por %p45, %p46
      %p48 = scmp.ne.s32.totalorder %s37, %s40
      %p49 = scmp.eq.s32.totalorder %s32, 1
      %p50 = por %p48, %p49
      %p51 = scmp.ne.s32.totalorder %s40, %s41
      %p52 = scmp.eq.s32.totalorder %s32, 0
      %p53 = por %p51, %p52
      %p54 = scmp.ne.s32.totalorder %s40, %s41
      %p55 = scmp.eq.s32.totalorder %s33, 1
      %p56 = por %p54, %p55
      %p58 = scmp.ne.s32.totalorder %s41, %s57
      %p59 = scmp.eq.s32.totalorder %s33, 0
      %p60 = por %p58, %p59
      %s61 = ssub.s32 %s27, %s34
      %p62 = scmp.eq.s32.totalorder %s61, 0
      %s64 = sadd.s32 %s63, 1
      %s65 = scalar_select %p62, %s63, %s64
      %p68 = pneg %p62
      %p69 = scmp.eq.s32.totalorder %s27, 1
      %p70 = por %p68, %p69
      %p71 = scmp.ne.s32.totalorder %s63, %s66
      %p72 = scmp.eq.s32.totalorder %s27, 0
      %p73 = por %p71, %p72
      %p74 = scmp.ne.s32.totalorder %s63, %s66
      %p75 = scmp.eq.s32.totalorder %s32, 1
      %p76 = por %p74, %p75
      %p77 = scmp.ne.s32.totalorder %s66, %s67
      %p78 = scmp.eq.s32.totalorder %s32, 0
      %p79 = por %p77, %p78
      %p80 = scmp.ne.s32.totalorder %s66, %s67
      %p81 = scmp.eq.s32.totalorder %s33, 1
      %p82 = por %p80, %p81
      %p84 = scmp.ne.s32.totalorder %s67, %s83
      %p85 = scmp.eq.s32.totalorder %s33, 0
      %p86 = por %p84, %p85
      %s88 = sadd.s32 %s87, 1
      %p91 = scmp.eq.s32.totalorder %s27, 1
      %p92 = scmp.ne.s32.totalorder %s87, %s89
      %p93 = scmp.eq.s32.totalorder %s27, 0
      %p94 = por %p92, %p93
      %p95 = scmp.ne.s32.totalorder %s87, %s89
      %p96 = scmp.eq.s32.totalorder %s32, 1
      %p97 = por %p95, %p96
      %p98 = scmp.ne.s32.totalorder %s89, %s90
      %p99 = scmp.eq.s32.totalorder %s32, 0
      %p100 = por %p98, %p99
      %p101 = scmp.ne.s32.totalorder %s89, %s90
      %p102 = scmp.eq.s32.totalorder %s33, 1
      %p103 = por %p101, %p102
      %p105 = scmp.ne.s32.totalorder %s90, %s104
      %p106 = scmp.eq.s32.totalorder %s33, 0
      %p107 = por %p105, %p106
      %s109 = sadd.s32 %s108, 1
      %p112 = scmp.eq.s32.totalorder %s27, 1
      %p113 = scmp.ne.s32.totalorder %s108, %s110
      %p114 = scmp.eq.s32.totalorder %s27, 0
      %p115 = por %p113, %p114
      %p116 = scmp.ne.s32.totalorder %s108, %s110
      %p117 = scmp.eq.s32.totalorder %s32, 1
      %p118 = por %p116, %p117
      %p119 = scmp.ne.s32.totalorder %s110, %s111
      %p120 = scmp.eq.s32.totalorder %s32, 0
      %p121 = por %p119, %p120
      %p122 = scmp.ne.s32.totalorder %s110, %s111
      %p123 = scmp.eq.s32.totalorder %s33, 1
      %p124 = por %p122, %p123
      %p126 = scmp.ne.s32.totalorder %s111, %s125
      %p127 = scmp.eq.s32.totalorder %s33, 0
      %p128 = por %p126, %p127
      %s130 = sadd.s32 %s129, 1
      %p133 = scmp.eq.s32.totalorder %s27, 1
      %p134 = scmp.ne.s32.totalorder %s129, %s131
      %p135 = scmp.eq.s32.totalorder %s27, 0
      %p136 = por %p134, %p135
      %p137 = scmp.ne.s32.totalorder %s129, %s131
      %p138 = scmp.eq.s32.totalorder %s32, 1
      %p139 = por %p137, %p138
      %p140 = scmp.ne.s32.totalorder %s131, %s132
      %p141 = scmp.eq.s32.totalorder %s32, 0
      %p142 = por %p140, %p141
      %p143 = scmp.ne.s32.totalorder %s131, %s132
      %p144 = scmp.eq.s32.totalorder %s33, 1
      %p145 = por %p143, %p144
      %p147 = scmp.ne.s32.totalorder %s132, %s146
      %p148 = scmp.eq.s32.totalorder %s33, 0
      %p149 = por %p147, %p148
      %s151 = sadd.s32 %s150, 1
      %p154 = scmp.eq.s32.totalorder %s27, 1
      %p155 = scmp.ne.s32.totalorder %s150, %s152
      %p156 = scmp.eq.s32.totalorder %s27, 0
      %p157 = por %p155, %p156
      %p158 = scmp.ne.s32.totalorder %s150, %s152
      %p159 = scmp.eq.s32.totalorder %s32, 1
      %p160 = por %p158, %p159
      %p161 = scmp.ne.s32.totalorder %s152, %s153
      %p162 = scmp.eq.s32.totalorder %s32, 0
      %p163 = por %p161, %p162
      %p164 = scmp.ne.s32.totalorder %s152, %s153
      %p165 = scmp.eq.s32.totalorder %s33, 1
      %p166 = por %p164, %p165
      %p168 = scmp.ne.s32.totalorder %s153, %s167
      %p169 = scmp.eq.s32.totalorder %s33, 0
      %p170 = por %p168, %p169
      %s172 = sadd.s32 %s171, 1
      %p175 = scmp.eq.s32.totalorder %s27, 1
      %p176 = scmp.ne.s32.totalorder %s171, %s173
      %p177 = scmp.eq.s32.totalorder %s27, 0
      %p178 = por %p176, %p177
      %p179 = scmp.ne.s32.totalorder %s171, %s173
      %p180 = scmp.eq.s32.totalorder %s32, 1
      %p181 = por %p179, %p180
      %p182 = scmp.ne.s32.totalorder %s173, %s174
      %p183 = scmp.eq.s32.totalorder %s32, 0
      %p184 = por %p182, %p183
      %p185 = scmp.ne.s32.totalorder %s173, %s174
      %p186 = scmp.eq.s32.totalorder %s33, 1
      %p187 = por %p185, %p186
      %p189 = scmp.ne.s32.totalorder %s174, %s188
      %p190 = scmp.eq.s32.totalorder %s33, 0
      %p191 = por %p189, %p190
      %s193 = sadd.s32 %s192, 1
      %p196 = scmp.eq.s32.totalorder %s27, 1
      %p197 = scmp.ne.s32.totalorder %s192, %s194
      %p198 = scmp.eq.s32.totalorder %s27, 0
      %p199 = por %p197, %p198
      %p200 = scmp.ne.s32.totalorder %s192, %s194
      %p201 = scmp.eq.s32.totalorder %s32, 1
      %p202 = por %p200, %p201
      %p203 = scmp.ne.s32.totalorder %s194, %s195
      %p204 = scmp.eq.s32.totalorder %s32, 0
      %p205 = por %p203, %p204
      %p206 = scmp.ne.s32.totalorder %s194, %s195
      %p207 = scmp.eq.s32.totalorder %s33, 1
      %p208 = por %p206, %p207
      %p210 = scmp.ne.s32.totalorder %s195, %s209
      %p211 = scmp.eq.s32.totalorder %s33, 0
      %p212 = por %p210, %p211
      %s214 = sadd.s32 %s213, 1
      %p217 = scmp.eq.s32.totalorder %s27, 1
      %p218 = scmp.ne.s32.totalorder %s213, %s215
      %p219 = scmp.eq.s32.totalorder %s27, 0
      %p220 = por %p218, %p219
      %p221 = scmp.ne.s32.totalorder %s213, %s215
      %p222 = scmp.eq.s32.totalorder %s32, 1
      %p223 = por %p221, %p222
      %p224 = scmp.ne.s32.totalorder %s215, %s216
      %p225 = scmp.eq.s32.totalorder %s32, 0
      %p226 = por %p224, %p225
      %p227 = scmp.ne.s32.totalorder %s215, %s216
      %p228 = scmp.eq.s32.totalorder %s33, 1
      %p229 = por %p227, %p228
      %p231 = scmp.ne.s32.totalorder %s216, %s230
      %p232 = scmp.eq.s32.totalorder %s33, 0
      %p233 = por %p231, %p232
      %s235 = sadd.s32 %s234, 1
      %p238 = scmp.eq.s32.totalorder %s27, 1
      %p239 = scmp.ne.s32.totalorder %s234, %s236
      %p240 = scmp.eq.s32.totalorder %s27, 0
      %p241 = por %p239, %p240
      %p242 = scmp.ne.s32.totalorder %s234, %s236
      %p243 = scmp.eq.s32.totalorder %s32, 1
      %p244 = por %p242, %p243
      %p245 = scmp.ne.s32.totalorder %s236, %s237
      %p246 = scmp.eq.s32.totalorder %s32, 0
      %p247 = por %p245, %p246
      %p248 = scmp.ne.s32.totalorder %s236, %s237
      %p249 = scmp.eq.s32.totalorder %s33, 1
      %p250 = por %p248, %p249
      %p252 = scmp.ne.s32.totalorder %s237, %s251
      %p253 = scmp.eq.s32.totalorder %s33, 0
      %p254 = por %p252, %p253
      %s256 = sadd.s32 %s255, 1
      %p259 = scmp.eq.s32.totalorder %s27, 1
      %p260 = scmp.ne.s32.totalorder %s255, %s257
      %p261 = scmp.eq.s32.totalorder %s27, 0
      %p262 = por %p260, %p261
      %p263 = scmp.ne.s32.totalorder %s255, %s257
      %p264 = scmp.eq.s32.totalorder %s32, 1
      %p265 = por %p263, %p264
      %p266 = scmp.ne.s32.totalorder %s257, %s258
      %p267 = scmp.eq.s32.totalorder %s32, 0
      %p268 = por %p266, %p267
      %p269 = scmp.ne.s32.totalorder %s257, %s258
      %p270 = scmp.eq.s32.totalorder %s33, 1
      %p271 = por %p269, %p270
      %p273 = scmp.ne.s32.totalorder %s258, %s272
      %p274 = scmp.eq.s32.totalorder %s33, 0
      %p275 = por %p273, %p274
      %s277 = sadd.s32 %s276, 1
      %p280 = scmp.eq.s32.totalorder %s27, 1
      %p281 = scmp.ne.s32.totalorder %s276, %s278
      %p282 = scmp.eq.s32.totalorder %s27, 0
      %p283 = por %p281, %p282
      %p284 = scmp.ne.s32.totalorder %s276, %s278
      %p285 = scmp.eq.s32.totalorder %s32, 1
      %p286 = por %p284, %p285
      %p287 = scmp.ne.s32.totalorder %s278, %s279
      %p288 = scmp.eq.s32.totalorder %s32, 0
      %p289 = por %p287, %p288
      %p290 = scmp.ne.s32.totalorder %s278, %s279
      %p291 = scmp.eq.s32.totalorder %s33, 1
      %p292 = por %p290, %p291
      %p294 = scmp.ne.s32.totalorder %s279, %s293
      %p295 = scmp.eq.s32.totalorder %s33, 0
      %p296 = por %p294, %p295
      %s298 = sadd.s32 %s297, 1
      %p301 = scmp.eq.s32.totalorder %s27, 1
      %p302 = scmp.ne.s32.totalorder %s297, %s299
      %p303 = scmp.eq.s32.totalorder %s27, 0
      %p304 = por %p302, %p303
      %p305 = scmp.ne.s32.totalorder %s297, %s299
      %p306 = scmp.eq.s32.totalorder %s32, 1
      %p307 = por %p305, %p306
      %p308 = scmp.ne.s32.totalorder %s299, %s300
      %p309 = scmp.eq.s32.totalorder %s32, 0
      %p310 = por %p308, %p309
      %p311 = scmp.ne.s32.totalorder %s299, %s300
      %p312 = scmp.eq.s32.totalorder %s33, 1
      %p313 = por %p311, %p312
      %p315 = scmp.ne.s32.totalorder %s300, %s314
      %p316 = scmp.eq.s32.totalorder %s33, 0
      %p317 = por %p315, %p316
      %s319 = sadd.s32 %s318, 1
      %p322 = scmp.eq.s32.totalorder %s27, 1
      %p323 = scmp.ne.s32.totalorder %s318, %s320
      %p324 = scmp.eq.s32.totalorder %s27, 0
      %p325 = por %p323, %p324
      %p326 = scmp.ne.s32.totalorder %s318, %s320
      %p327 = scmp.eq.s32.totalorder %s32, 1
      %p328 = por %p326, %p327
      %p329 = scmp.ne.s32.totalorder %s320, %s321
      %p330 = scmp.eq.s32.totalorder %s32, 0
      %p331 = por %p329, %p330
      %p332 = scmp.ne.s32.totalorder %s320, %s321
      %p333 = scmp.eq.s32.totalorder %s33, 1
      %p334 = por %p332, %p333
      %p336 = scmp.ne.s32.totalorder %s321, %s335
      %p337 = scmp.eq.s32.totalorder %s33, 0
      %p338 = por %p336, %p337
      %s340 = sadd.s32 %s339, 1
      %p343 = scmp.eq.s32.totalorder %s27, 1
      %p344 = scmp.ne.s32.totalorder %s339, %s341
      %p345 = scmp.eq.s32.totalorder %s27, 0
      %p346 = por %p344, %p345
      %p347 = scmp.ne.s32.totalorder %s339, %s341
      %p348 = scmp.eq.s32.totalorder %s32, 1
      %p349 = por %p347, %p348
      %p350 = scmp.ne.s32.totalorder %s341, %s342
      %p351 = scmp.eq.s32.totalorder %s32, 0
      %p352 = por %p350, %p351
      %p353 = scmp.ne.s32.totalorder %s341, %s342
      %p354 = scmp.eq.s32.totalorder %s33, 1
      %p355 = por %p353, %p354
      %p357 = scmp.ne.s32.totalorder %s342, %s356
      %p358 = scmp.eq.s32.totalorder %s33, 0
      %p359 = por %p357, %p358
      %s361 = sadd.s32 %s360, 1
      %p364 = scmp.eq.s32.totalorder %s27, 1
      %p365 = scmp.ne.s32.totalorder %s360, %s362
      %p366 = scmp.eq.s32.totalorder %s27, 0
      %p367 = por %p365, %p366
      %p368 = scmp.ne.s32.totalorder %s360, %s362
      %p369 = scmp.eq.s32.totalorder %s32, 1
      %p370 = por %p368, %p369
      %p371 = scmp.ne.s32.totalorder %s362, %s363
      %p372 = scmp.eq.s32.totalorder %s32, 0
      %p373 = por %p371, %p372
      %p374 = scmp.ne.s32.totalorder %s362, %s363
      %p375 = scmp.eq.s32.totalorder %s33, 1
      %p376 = por %p374, %p375
      %p378 = scmp.ne.s32.totalorder %s363, %s377
      %p379 = scmp.eq.s32.totalorder %s33, 0
      %p380 = por %p378, %p379
      %s381 = ssub.s32 %s27, %s34
      %p382 = scmp.eq.s32.totalorder %s381, 0
      %s384 = sadd.s32 %s383, 1
      %s385 = scalar_select %p382, %s383, %s384
      %p388 = pneg %p382
      %p389 = scmp.eq.s32.totalorder %s27, 1
      %p390 = por %p388, %p389
      %p391 = scmp.ne.s32.totalorder %s383, %s386
      %p392 = scmp.eq.s32.totalorder %s27, 0
      %p393 = por %p391, %p392
      %p394 = scmp.ne.s32.totalorder %s383, %s386
      %p395 = scmp.eq.s32.totalorder %s32, 1
      %p396 = por %p394, %p395
      %p397 = scmp.ne.s32.totalorder %s386, %s387
      %p398 = scmp.eq.s32.totalorder %s32, 0
      %p399 = por %p397, %p398
      %p400 = scmp.ne.s32.totalorder %s386, %s387
      %p401 = scmp.eq.s32.totalorder %s33, 1
      %p402 = por %p400, %p401
      %p404 = scmp.ne.s32.totalorder %s387, %s403
      %p405 = scmp.eq.s32.totalorder %s33, 0
      %p406 = por %p404, %p405
      %s407 = ssub.s32 %s27, %s34
      %p408 = scmp.eq.s32.totalorder %s407, 0
      %s410 = sadd.s32 %s409, 1
      %s411 = scalar_select %p408, %s409, %s410
      %p414 = pneg %p408
      %p415 = scmp.eq.s32.totalorder %s27, 1
      %p416 = por %p414, %p415
      %p417 = scmp.ne.s32.totalorder %s409, %s412
      %p418 = scmp.eq.s32.totalorder %s27, 0
      %p419 = por %p417, %p418
      %p420 = scmp.ne.s32.totalorder %s409, %s412
      %p421 = scmp.eq.s32.totalorder %s32, 1
      %p422 = por %p420, %p421
      %p423 = scmp.ne.s32.totalorder %s412, %s413
      %p424 = scmp.eq.s32.totalorder %s32, 0
      %p425 = por %p423, %p424
      %p426 = scmp.ne.s32.totalorder %s412, %s413
      %p427 = scmp.eq.s32.totalorder %s33, 1
      %p428 = por %p426, %p427
      %p430 = scmp.ne.s32.totalorder %s413, %s429
      %p431 = scmp.eq.s32.totalorder %s33, 0
      %p432 = por %p430, %p431
      %s433 = ssub.s32 %s27, %s34
      %p434 = scmp.eq.s32.totalorder %s433, 0
      %s436 = sadd.s32 %s435, 1
      %s437 = scalar_select %p434, %s435, %s436
      %p440 = pneg %p434
      %p441 = scmp.eq.s32.totalorder %s27, 1
      %p442 = por %p440, %p441
      %p443 = scmp.ne.s32.totalorder %s435, %s438
      %p444 = scmp.eq.s32.totalorder %s27, 0
      %p445 = por %p443, %p444
      %p446 = scmp.ne.s32.totalorder %s435, %s438
      %p447 = scmp.eq.s32.totalorder %s32, 1
      %p448 = por %p446, %p447
      %p449 = scmp.ne.s32.totalorder %s438, %s439
      %p450 = scmp.eq.s32.totalorder %s32, 0
      %p451 = por %p449, %p450
      %p452 = scmp.ne.s32.totalorder %s438, %s439
      %p453 = scmp.eq.s32.totalorder %s33, 1
      %p454 = por %p452, %p453
      %p456 = scmp.ne.s32.totalorder %s439, %s455
      %p457 = scmp.eq.s32.totalorder %s33, 0
      %p458 = por %p456, %p457
      %p459 = scmp.le.s32.totalorder 1, %s27
      %p460 = scmp.lt.s32.totalorder %s27, 3
      %p461 = pnand %p459, %p460
      %p462 = pneg %p461
      // Predicated region
      $region9: #{forward.3} parent=5 // pred_check
        _
      $region10: #{forward.3} parent=5 // pred_check_branch
        %464 = sbr.rel (%p461) target = $region12
      $region11: #{forward.3} parent=5 // pred_region
        %s465 = ssub.s32 %s27, 1
        // Predicated region
        $region13: #{forward.3} parent=11 // pred_check
          %p466 = pneg %p100
        $region14: #{forward.3} parent=11 // pred_check_branch
          %468 = sbr.rel (%p466) target = $region16
        $region15: #{forward.3} parent=11 // pred_region
          _
        $region16: #{forward.3} parent=11 // pred_fallthru
          _
        // Predicated region
        $region17: #{forward.3} parent=11 // pred_check
          %p469 = pneg %p121
        $region18: #{forward.3} parent=11 // pred_check_branch
          %471 = sbr.rel (%p469) target = $region20
        $region19: #{forward.3} parent=11 // pred_region
          _
        $region20: #{forward.3} parent=11 // pred_fallthru
          _
        // Predicated region
        $region21: #{forward.3} parent=11 // pred_check
          %p472 = pneg %p142
        $region22: #{forward.3} parent=11 // pred_check_branch
          %474 = sbr.rel (%p472) target = $region24
        $region23: #{forward.3} parent=11 // pred_region
          _
        $region24: #{forward.3} parent=11 // pred_fallthru
          _
        // Predicated region
        $region25: #{forward.3} parent=11 // pred_check
          %p475 = pneg %p163
        $region26: #{forward.3} parent=11 // pred_check_branch
          %477 = sbr.rel (%p475) target = $region28
        $region27: #{forward.3} parent=11 // pred_region
          _
        $region28: #{forward.3} parent=11 // pred_fallthru
          _
        // Predicated region
        $region29: #{forward.3} parent=11 // pred_check
          %p478 = pneg %p184
        $region30: #{forward.3} parent=11 // pred_check_branch
          %480 = sbr.rel (%p478) target = $region32
        $region31: #{forward.3} parent=11 // pred_region
          _
        $region32: #{forward.3} parent=11 // pred_fallthru
          _
        // Predicated region
        $region33: #{forward.3} parent=11 // pred_check
          %p481 = pneg %p205
        $region34: #{forward.3} parent=11 // pred_check_branch
          %483 = sbr.rel (%p481) target = $region36
        $region35: #{forward.3} parent=11 // pred_region
          _
        $region36: #{forward.3} parent=11 // pred_fallthru
          _
        // Predicated region
        $region37: #{forward.3} parent=11 // pred_check
          %p484 = pneg %p226
        $region38: #{forward.3} parent=11 // pred_check_branch
          %486 = sbr.rel (%p484) target = $region40
        $region39: #{forward.3} parent=11 // pred_region
          _
        $region40: #{forward.3} parent=11 // pred_fallthru
          _
        // Predicated region
        $region41: #{forward.3} parent=11 // pred_check
          %p487 = pneg %p247
        $region42: #{forward.3} parent=11 // pred_check_branch
          %489 = sbr.rel (%p487) target = $region44
        $region43: #{forward.3} parent=11 // pred_region
          _
        $region44: #{forward.3} parent=11 // pred_fallthru
          _
        // Predicated region
        $region45: #{forward.3} parent=11 // pred_check
          %p490 = pneg %p268
        $region46: #{forward.3} parent=11 // pred_check_branch
          %492 = sbr.rel (%p490) target = $region48
        $region47: #{forward.3} parent=11 // pred_region
          _
        $region48: #{forward.3} parent=11 // pred_fallthru
          _
        // Predicated region
        $region49: #{forward.3} parent=11 // pred_check
          %p493 = pneg %p289
        $region50: #{forward.3} parent=11 // pred_check_branch
          %495 = sbr.rel (%p493) target = $region52
        $region51: #{forward.3} parent=11 // pred_region
          _
        $region52: #{forward.3} parent=11 // pred_fallthru
          _
        // Predicated region
        $region53: #{forward.3} parent=11 // pred_check
          %p496 = pneg %p310
        $region54: #{forward.3} parent=11 // pred_check_branch
          %498 = sbr.rel (%p496) target = $region56
        $region55: #{forward.3} parent=11 // pred_region
          _
        $region56: #{forward.3} parent=11 // pred_fallthru
          _
        // Predicated region
        $region57: #{forward.3} parent=11 // pred_check
          %p499 = pneg %p331
        $region58: #{forward.3} parent=11 // pred_check_branch
          %501 = sbr.rel (%p499) target = $region60
        $region59: #{forward.3} parent=11 // pred_region
          _
        $region60: #{forward.3} parent=11 // pred_fallthru
          _
        // Predicated region
        $region61: #{forward.3} parent=11 // pred_check
          %p502 = pneg %p352
        $region62: #{forward.3} parent=11 // pred_check_branch
          %504 = sbr.rel (%p502) target = $region64
        $region63: #{forward.3} parent=11 // pred_region
          %506 = vsyncadd [#allocation8], 0
          %s508 = sshll.u32 %s14, 4
          %s509 = int_to_ptr.vmem [resolvable:$true] %s508
          %511 = dma.vmem_to_smem %s509, 16, [#allocation7], [#allocation8]
        $region64: #{forward.3} parent=11 // pred_fallthru
          _
        // Predicated region
        $region65: #{forward.3} parent=11 // pred_check
          %p512 = pneg %p373
        $region66: #{forward.3} parent=11 // pred_check_branch
          %514 = sbr.rel (%p512) target = $region68
        $region67: #{forward.3} parent=11 // pred_region
          %516 = vsyncadd [#allocation10], 0
          %s518 = sshll.u32 %s15, 4
          %s519 = int_to_ptr.vmem [resolvable:$true] %s518
          %521 = dma.vmem_to_smem %s519, 16, [#allocation9], [#allocation10]
        $region68: #{forward.3} parent=11 // pred_fallthru
          _
      $region12: #{forward.3} parent=5 // pred_fallthru
        _
      %p522 = scmp.lt.s32.totalorder %s27, 2
      // Predicated region
      $region69: #{forward.3} parent=5 // pred_check
        %p523 = pneg %p522
      $region70: #{forward.3} parent=5 // pred_check_branch
        %525 = sbr.rel (%p523) target = $region72
      $region71: #{forward.3} parent=5 // pred_region
        // Predicated region
        $region73: #{forward.3} parent=71 // pred_check
          %p526 = pneg %p47
        $region74: #{forward.3} parent=71 // pred_check_branch
          %528 = sbr.rel (%p526) target = $region76
        $region75: #{forward.3} parent=71 // pred_region
          %p529 = scmp.lt.s32.totalorder %s27, 1
          %s530 = scalar_select %p529, %s27, 1
          %s531 = smul.addr %s530, 11
          %s532 = smul.addr %s531, 8
          %s533 = scalar_lea.vmem %s0, %s532
        $region76: #{forward.3} parent=71 // pred_fallthru
          _
        // Predicated region
        $region77: #{forward.3} parent=71 // pred_check
          %p534 = pneg %p73
        $region78: #{forward.3} parent=71 // pred_check_branch
          %536 = sbr.rel (%p534) target = $region80
        $region79: #{forward.3} parent=71 // pred_region
          %p537 = scmp.lt.s32.totalorder %s27, 1
          %s538 = scalar_select %p537, %s27, 1
          %s539 = smul.addr %s538, 7
          %s540 = smul.addr %s539, 8
          %s541 = scalar_lea.vmem %s1, %s540
        $region80: #{forward.3} parent=71 // pred_fallthru
          _
      $region72: #{forward.3} parent=5 // pred_fallthru
        _
      %p542 = scmp.le.s32.totalorder 1, %s27
      %p543 = scmp.lt.s32.totalorder %s27, 3
      %p544 = pnand %p542, %p543
      %p545 = pneg %p544
      // Predicated region
      $region81: #{forward.3} parent=5 // pred_check
        _
      $region82: #{forward.3} parent=5 // pred_check_branch
        %547 = sbr.rel (%p544) target = $region84
      $region83: #{forward.3} parent=5 // pred_region
        %s548 = ssub.s32 %s27, 1
        // Predicated region
        $region85: #{forward.3} parent=83 // pred_check
          %p549 = pneg %p352
        $region86: #{forward.3} parent=83 // pred_check_branch
          %551 = sbr.rel (%p549) target = $region88
        $region87: #{forward.3} parent=83 // pred_region
          %553 = dma.done [#allocation8], 16
        $region88: #{forward.3} parent=83 // pred_fallthru
          _
        // Predicated region
        $region89: #{forward.3} parent=83 // pred_check
          %p554 = pneg %p373
        $region90: #{forward.3} parent=83 // pred_check_branch
          %556 = sbr.rel (%p554) target = $region92
        $region91: #{forward.3} parent=83 // pred_region
          %558 = dma.done [#allocation10], 16
        $region92: #{forward.3} parent=83 // pred_fallthru
          _
        %559 = sfence
        %p560 = scmp.lt.s32.totalorder %s32, 1
        %s561 = scalar_select %p560, %s32, 1
        %s562 = smul.addr %s561, 11
        %s563 = smul.addr %s562, 8
        %s564 = scalar_lea.vmem %s0, %s563
        %p565 = pneg %p53
        %p566 = pneg %p50
        %p567 = scmp.lt.s32.totalorder %s32, 1
        %s568 = scalar_select %p567, %s32, 1
        %s569 = smul.addr %s568, 7
        %s570 = smul.addr %s569, 8
        %s571 = scalar_lea.vmem %s1, %s570
        %p572 = pneg %p79
        %p573 = pneg %p76
        %p574 = pneg %p100
        %p575 = pneg %p97
        %p576 = pneg %p121
        %p577 = pneg %p118
        %p578 = pneg %p142
        %p579 = pneg %p139
        %p580 = pneg %p163
        %p581 = pneg %p160
        %p582 = pneg %p184
        %p583 = pneg %p181
        %p584 = pneg %p205
        %p585 = pneg %p202
        %p586 = pneg %p226
        %p587 = pneg %p223
        %p588 = pneg %p247
        %p589 = pneg %p244
        %p590 = pneg %p268
        %p591 = pneg %p265
        %p592 = pneg %p289
        %p593 = pneg %p286
        %p594 = pneg %p310
        %p595 = pneg %p307
        %p596 = pneg %p331
        %p597 = pneg %p328
        %p598 = pneg %p352
        %p599 = pneg %p349
        %p600 = pneg %p373
        %p601 = pneg %p370
        %p602 = pneg %p399
        %p603 = pneg %p396
        %p604 = scmp.lt.s32.totalorder %s32, 1
        %s605 = scalar_select %p604, %s32, 1
        %s606 = smul.addr %s605, 6
        %s607 = smul.addr %s606, 8
        %s608 = scalar_lea.vmem %s16, %s607
        %p609 = pneg %p425
        %p610 = pneg %p422
        %p611 = scmp.lt.s32.totalorder %s32, 1
        %s612 = scalar_select %p611, %s32, 1
        %s613 = smul.addr %s612, 2
        %s614 = smul.addr %s613, 8
        %s615 = scalar_lea.vmem %s17, %s614
        %p616 = pneg %p451
        %p617 = pneg %p448
        %p618 = scmp.lt.s32.totalorder %s32, 1
        %s619 = scalar_select %p618, %s32, 1
        %s620 = smul.addr %s619, 2
        %s621 = smul.addr %s620, 8
        %s622 = scalar_lea.vmem %s18, %s621
        %p623 = scmp.lt.s32.totalorder %s32, 1
        %s624 = scalar_select %p623, %s32, 1
        %s625 = smul.addr %s624, 11
        %s626 = smul.addr %s625, 8
        %s627 = scalar_lea.vmem %s0, %s626
        %p628 = scmp.lt.s32.totalorder %s32, 1
        %s629 = scalar_select %p628, %s32, 1
        %s630 = smul.addr %s629, 7
        %s631 = smul.addr %s630, 8
        %s632 = scalar_lea.vmem %s1, %s631
        %p633 = scmp.lt.s32.totalorder %s32, 1
        %s634 = scalar_select %p633, %s32, 1
        %s635 = smul.addr %s634, 6
        %s636 = smul.addr %s635, 8
        %s637 = scalar_lea.vmem %s16, %s636
        %p638 = scmp.lt.s32.totalorder %s32, 1
        %s639 = scalar_select %p638, %s32, 1
        %s640 = smul.addr %s639, 2
        %s641 = smul.addr %s640, 8
        %s642 = scalar_lea.vmem %s17, %s641
        %p643 = scmp.lt.s32.totalorder %s32, 1
        %s644 = scalar_select %p643, %s32, 1
        %s645 = smul.addr %s644, 2
        %s646 = smul.addr %s645, 8
        %s647 = scalar_lea.vmem %s18, %s646
        %vm648 = vcmask 785408
        %649 = vst.msk [vmem:[#allocation2] sm:$0xff] %vm648, 0.0
        %650 = vst.msk [vmem:[#allocation2 + $0x8] sm:$0xff] %vm648, 0.0
        %651 = vst.msk [vmem:[#allocation2 + $0x10] sm:$0xff] %vm648, 0.0
        %652 = vst.msk [vmem:[#allocation2 + $0x18] sm:$0xff] %vm648, 0.0
        %653 = vst.msk [vmem:[#allocation2 + $0x20] sm:$0xff] %vm648, 0.0
        %654 = vst.msk [vmem:[#allocation2 + $0x28] sm:$0xff] %vm648, 0.0
        %vm655 = vcmask 781312
        %656 = vst.msk [vmem:[#allocation2 + $0x30] sm:$0xf] %vm655, 0.0
        %vm657 = vcmask 130048
        %658 = vst.msk [vmem:[#allocation3] sm:$0xff] %vm657, 0.0
        %659 = vst.msk [vmem:[#allocation3 + $0x8] sm:$0xff] %vm657, 0.0
        %660 = vst.msk [vmem:[#allocation3 + $0x10] sm:$0xff] %vm657, 0.0
        %661 = vst.msk [vmem:[#allocation3 + $0x18] sm:$0xff] %vm657, 0.0
        %662 = vst.msk [vmem:[#allocation3 + $0x20] sm:$0xff] %vm657, 0.0
        %663 = vst.msk [vmem:[#allocation3 + $0x28] sm:$0xff] %vm657, 0.0
        %vm664 = vcmask 125952
        %665 = vst.msk [vmem:[#allocation3 + $0x30] sm:$0xf] %vm664, 0.0
        %vm666 = vcmask 916480
        %667 = vst.msk [vmem:[#allocation4] sm:$0xff] %vm666, 0.0
        %668 = vst.msk [vmem:[#allocation4 + $0x8] sm:$0xff] %vm666, 0.0
        %vm669 = vcmask 910336
        %670 = vst.msk [vmem:[#allocation4 + $0x10] sm:$0x3] %vm669, 0.0
        %vm671 = vcmask 654336
        %672 = vst.msk [vmem:[#allocation5] sm:$0xff] %vm671, 0.0
        %673 = vst.msk [vmem:[#allocation5 + $0x8] sm:$0xff] %vm671, 0.0
        %vm674 = vcmask 648192
        %675 = vst.msk [vmem:[#allocation5 + $0x10] sm:$0x3] %vm674, 0.0
        %vm676 = vcmask 80896
        %677 = vst.msk [vmem:[#allocation6] sm:$0xff] %vm676, 0.0
        %678 = vst.msk [vmem:[#allocation6 + $0x8] sm:$0xff] %vm676, 0.0
        %vm679 = vcmask 74752
        %680 = vst.msk [vmem:[#allocation6 + $0x10] sm:$0x3] %vm679, 0.0
        %v681 = vld [vmem:[%s13] sm:$0xff]
        %v682 = vld [vmem:[%s13 + $0x8] sm:$0xff]
        %v683 = vld [vmem:[%s13 + $0x10] sm:$0xff]
        %v684 = vld [vmem:[%s13 + $0x18] sm:$0xff]
        %v685 = vld [vmem:[%s13 + $0x20] sm:$0xff]
        %v686 = vld [vmem:[%s13 + $0x28] sm:$0xff]
        %v687 = vld [vmem:[%s13 + $0x30] sm:$0xff]
        %v688 = vld [vmem:[%s13 + $0x38] sm:$0xff]
        %v689 = vld [vmem:[%s627] sm:$0xff]
        %v690 = vld [vmem:[%s627 + $0x8] sm:$0xff]
        %v691 = vld [vmem:[%s627 + $0x10] sm:$0xff]
        %v692 = vld [vmem:[%s627 + $0x18] sm:$0xff]
        %v693 = vld [vmem:[%s627 + $0x20] sm:$0xff]
        %v694 = vld [vmem:[%s627 + $0x28] sm:$0xff]
        %v695 = vld [vmem:[%s627 + $0x30] sm:$0xff]
        %v696 = vld [vmem:[%s627 + $0x38] sm:$0xff]
        %v697 = vld [vmem:[%s627 + $0x40] sm:$0xff]
        %v698 = vld [vmem:[%s627 + $0x48] sm:$0xff]
        %v699 = vld [vmem:[%s627 + $0x50] sm:$0x3f]
        %v700 = vld [vmem:[%s2] sm:$0xff]
        %v701 = vld [vmem:[%s2 + $0x8] sm:$0xff]
        %v702 = vld [vmem:[%s2 + $0x10] sm:$0xff]
        %v703 = vld [vmem:[%s2 + $0x18] sm:$0xff]
        %v704 = vld [vmem:[%s2 + $0x20] sm:$0xff]
        %v705 = vld [vmem:[%s2 + $0x28] sm:$0xff]
        %v706 = vld [vmem:[%s2 + $0x30] sm:$0xff]
        %v707 = vld [vmem:[%s2 + $0x38] sm:$0xff]
        %vm715 = vcmask 1046528
        %v716 = vrot.slane %v689, 1
        %v717 = vrot.slane %v690, 1
        %v718 = vsel %vm715, %v716, %v717
        %v719 = vrot.slane %v691, 1
        %v720 = vsel %vm715, %v717, %v719
        %v721 = vrot.slane %v692, 1
        %v722 = vsel %vm715, %v719, %v721
        %v723 = vrot.slane %v693, 1
        %v724 = vsel %vm715, %v721, %v723
        %v725 = vrot.slane %v694, 1
        %v726 = vsel %vm715, %v723, %v725
        %v727 = vrot.slane %v695, 1
        %v728 = vsel %vm715, %v725, %v727
        %vm729 = vcmask 261120
        %v730 = vsel %vm729, %v718, 0
        %v732 = vsel %vm729, %v720, 0
        %v734 = vsel %vm729, %v722, 0
        %v736 = vsel %vm729, %v724, 0
        %v738 = vsel %vm729, %v726, 0
        %v740 = vsel %vm729, %v728, 0
        %742 = vmatpush.msra.mxu0 0.0
        %743 = vmatpush.msra.mxu0 0.0
        %744 = vmatpush.msra.mxu0 0.0
        %745 = vmatpush.msra.mxu0 0.0
        %746 = vmatpush.msra.mxu0 0.0
        %747 = vmatpush.msra.mxu0 0.0
        %748 = vmatpush.msra.mxu0 0.0
        %749 = vmatpush.msra.mxu0 0.0
        %750 = vmatpush.msra.mxu0 0.0
        %751 = vmatpush.msra.mxu0 0.0
        %752 = vmatpush.msra.mxu0 0.0
        %753 = vmatpush.msra.mxu0 0.0
        %754 = vmatpush.msra.mxu0 %v707
        %755 = vmatpush.msra.mxu0 %v706
        %756 = vmatpush.msra.mxu0 %v705
        %757 = vmatpush.msra.mxu0 %v704
        %758 = vmatmul.f32.gmra.mxu0 %v730
        %v759 = vpop.f32.mrf.mxu0
        %v760 = vadd.f32 0.0, %v759
        %761 = vmatmul.f32.gmra.mxu0 %v732
        %v762 = vpop.f32.mrf.mxu0
        %v763 = vadd.f32 0.0, %v762
        %764 = vmatmul.f32.gmra.mxu0 %v734
        %v765 = vpop.f32.mrf.mxu0
        %v766 = vadd.f32 0.0, %v765
        %767 = vmatmul.f32.gmra.mxu0 %v736
        %v768 = vpop.f32.mrf.mxu0
        %v769 = vadd.f32 0.0, %v768
        %770 = vmatmul.f32.gmra.mxu0 %v738
        %v771 = vpop.f32.mrf.mxu0
        %v772 = vadd.f32 0.0, %v771
        %773 = vmatmul.f32.gmra.mxu0 %v740
        %v774 = vpop.f32.mrf.mxu0
        %v775 = vadd.f32 0.0, %v774
        %776 = vdwg.mxu0
        %v777 = vsel %vm729, %v689, 0
        %v779 = vsel %vm729, %v690, 0
        %v781 = vsel %vm729, %v691, 0
        %v783 = vsel %vm729, %v692, 0
        %v785 = vsel %vm729, %v693, 0
        %v787 = vsel %vm729, %v694, 0
        %789 = vmatpush.msra.mxu0 0.0
        %790 = vmatpush.msra.mxu0 0.0
        %791 = vmatpush.msra.mxu0 0.0
        %792 = vmatpush.msra.mxu0 0.0
        %793 = vmatpush.msra.mxu0 0.0
        %794 = vmatpush.msra.mxu0 0.0
        %795 = vmatpush.msra.mxu0 0.0
        %796 = vmatpush.msra.mxu0 0.0
        %797 = vmatpush.msra.mxu0 0.0
        %798 = vmatpush.msra.mxu0 0.0
        %799 = vmatpush.msra.mxu0 0.0
        %800 = vmatpush.msra.mxu0 0.0
        %801 = vmatpush.msra.mxu0 %v703
        %802 = vmatpush.msra.mxu0 %v702
        %803 = vmatpush.msra.mxu0 %v701
        %804 = vmatpush.msra.mxu0 %v700
        %805 = vmatmul.f32.gmra.mxu0 %v777
        %v806 = vpop.f32.mrf.mxu0
        %v807 = vadd.f32 %v760, %v806
        %808 = vmatmul.f32.gmra.mxu0 %v779
        %v809 = vpop.f32.mrf.mxu0
        %v810 = vadd.f32 %v763, %v809
        %811 = vmatmul.f32.gmra.mxu0 %v781
        %v812 = vpop.f32.mrf.mxu0
        %v813 = vadd.f32 %v766, %v812
        %814 = vmatmul.f32.gmra.mxu0 %v783
        %v815 = vpop.f32.mrf.mxu0
        %v816 = vadd.f32 %v769, %v815
        %817 = vmatmul.f32.gmra.mxu0 %v785
        %v818 = vpop.f32.mrf.mxu0
        %v819 = vadd.f32 %v772, %v818
        %820 = vmatmul.f32.gmra.mxu0 %v787
        %v821 = vpop.f32.mrf.mxu0
        %v822 = vadd.f32 %v775, %v821
        %823 = vdwg.mxu0
        %v824 = vld [vmem:[%s2 + $0x40] sm:$0xff]
        %v825 = vld [vmem:[%s2 + $0x48] sm:$0xff]
        %v826 = vld [vmem:[%s2 + $0x50] sm:$0xff]
        %v827 = vld [vmem:[%s2 + $0x58] sm:$0xff]
        %vm828 = vcmask 1045504
        %v829 = vrot.slane %v689, 2
        %v830 = vrot.slane %v690, 2
        %v831 = vsel %vm828, %v829, %v830
        %v832 = vrot.slane %v691, 2
        %v833 = vsel %vm828, %v830, %v832
        %v834 = vrot.slane %v692, 2
        %v835 = vsel %vm828, %v832, %v834
        %v836 = vrot.slane %v693, 2
        %v837 = vsel %vm828, %v834, %v836
        %v838 = vrot.slane %v694, 2
        %v839 = vsel %vm828, %v836, %v838
        %v840 = vrot.slane %v695, 2
        %v841 = vsel %vm828, %v838, %v840
        %v842 = vsel %vm729, %v831, 0
        %v844 = vsel %vm729, %v833, 0
        %v846 = vsel %vm729, %v835, 0
        %v848 = vsel %vm729, %v837, 0
        %v850 = vsel %vm729, %v839, 0
        %v852 = vsel %vm729, %v841, 0
        %854 = vmatpush.msra.mxu0 0.0
        %855 = vmatpush.msra.mxu0 0.0
        %856 = vmatpush.msra.mxu0 0.0
        %857 = vmatpush.msra.mxu0 0.0
        %858 = vmatpush.msra.mxu0 0.0
        %859 = vmatpush.msra.mxu0 0.0
        %860 = vmatpush.msra.mxu0 0.0
        %861 = vmatpush.msra.mxu0 0.0
        %862 = vmatpush.msra.mxu0 0.0
        %863 = vmatpush.msra.mxu0 0.0
        %864 = vmatpush.msra.mxu0 0.0
        %865 = vmatpush.msra.mxu0 0.0
        %866 = vmatpush.msra.mxu0 %v827
        %867 = vmatpush.msra.mxu0 %v826
        %868 = vmatpush.msra.mxu0 %v825
        %869 = vmatpush.msra.mxu0 %v824
        %870 = vmatmul.f32.gmra.mxu0 %v842
        %v871 = vpop.f32.mrf.mxu0
        %v872 = vadd.f32 0.0, %v871
        %873 = vmatmul.f32.gmra.mxu0 %v844
        %v874 = vpop.f32.mrf.mxu0
        %v875 = vadd.f32 0.0, %v874
        %876 = vmatmul.f32.gmra.mxu0 %v846
        %v877 = vpop.f32.mrf.mxu0
        %v878 = vadd.f32 0.0, %v877
        %879 = vmatmul.f32.gmra.mxu0 %v848
        %v880 = vpop.f32.mrf.mxu0
        %v881 = vadd.f32 0.0, %v880
        %882 = vmatmul.f32.gmra.mxu0 %v850
        %v883 = vpop.f32.mrf.mxu0
        %v884 = vadd.f32 0.0, %v883
        %885 = vmatmul.f32.gmra.mxu0 %v852
        %v886 = vpop.f32.mrf.mxu0
        %v887 = vadd.f32 0.0, %v886
        %888 = vdwg.mxu0
        %v889 = vadd.f32 %v807, %v872
        %v890 = vadd.f32 %v810, %v875
        %v891 = vadd.f32 %v813, %v878
        %v892 = vadd.f32 %v816, %v881
        %v893 = vadd.f32 %v819, %v884
        %v894 = vadd.f32 %v822, %v887
        %v895 = vld [vmem:[%s2 + $0x60] sm:$0xff]
        %v896 = vld [vmem:[%s2 + $0x68] sm:$0xff]
        %v897 = vld [vmem:[%s2 + $0x70] sm:$0xff]
        %v898 = vld [vmem:[%s2 + $0x78] sm:$0xff]
        %vm899 = vcmask 1044480
        %v900 = vrot.slane %v689, 3
        %v901 = vrot.slane %v690, 3
        %v902 = vsel %vm899, %v900, %v901
        %v903 = vrot.slane %v691, 3
        %v904 = vsel %vm899, %v901, %v903
        %v905 = vrot.slane %v692, 3
        %v906 = vsel %vm899, %v903, %v905
        %v907 = vrot.slane %v693, 3
        %v908 = vsel %vm899, %v905, %v907
        %v909 = vrot.slane %v694, 3
        %v910 = vsel %vm899, %v907, %v909
        %v911 = vrot.slane %v695, 3
        %v912 = vsel %vm899, %v909, %v911
        %v913 = vsel %vm729, %v902, 0
        %v915 = vsel %vm729, %v904, 0
        %v917 = vsel %vm729, %v906, 0
        %v919 = vsel %vm729, %v908, 0
        %v921 = vsel %vm729, %v910, 0
        %v923 = vsel %vm729, %v912, 0
        %925 = vmatpush.msra.mxu0 0.0
        %926 = vmatpush.msra.mxu0 0.0
        %927 = vmatpush.msra.mxu0 0.0
        %928 = vmatpush.msra.mxu0 0.0
        %929 = vmatpush.msra.mxu0 0.0
        %930 = vmatpush.msra.mxu0 0.0
        %931 = vmatpush.msra.mxu0 0.0
        %932 = vmatpush.msra.mxu0 0.0
        %933 = vmatpush.msra.mxu0 0.0
        %934 = vmatpush.msra.mxu0 0.0
        %935 = vmatpush.msra.mxu0 0.0
        %936 = vmatpush.msra.mxu0 0.0
        %937 = vmatpush.msra.mxu0 %v898
        %938 = vmatpush.msra.mxu0 %v897
        %939 = vmatpush.msra.mxu0 %v896
        %940 = vmatpush.msra.mxu0 %v895
        %941 = vmatmul.f32.gmra.mxu0 %v913
        %v942 = vpop.f32.mrf.mxu0
        %v943 = vadd.f32 0.0, %v942
        %944 = vmatmul.f32.gmra.mxu0 %v915
        %v945 = vpop.f32.mrf.mxu0
        %v946 = vadd.f32 0.0, %v945
        %947 = vmatmul.f32.gmra.mxu0 %v917
        %v948 = vpop.f32.mrf.mxu0
        %v949 = vadd.f32 0.0, %v948
        %950 = vmatmul.f32.gmra.mxu0 %v919
        %v951 = vpop.f32.mrf.mxu0
        %v952 = vadd.f32 0.0, %v951
        %953 = vmatmul.f32.gmra.mxu0 %v921
        %v954 = vpop.f32.mrf.mxu0
        %v955 = vadd.f32 0.0, %v954
        %956 = vmatmul.f32.gmra.mxu0 %v923
        %v957 = vpop.f32.mrf.mxu0
        %v958 = vadd.f32 0.0, %v957
        %959 = vdwg.mxu0
        %v960 = vadd.f32 %v889, %v943
        %v961 = vadd.f32 %v890, %v946
        %v962 = vadd.f32 %v891, %v949
        %v963 = vadd.f32 %v892, %v952
        %v964 = vadd.f32 %v893, %v955
        %v965 = vadd.f32 %v894, %v958
        %v966 = vld [vmem:[%s2 + $0x80] sm:$0xff]
        %v967 = vld [vmem:[%s2 + $0x88] sm:$0xff]
        %v968 = vld [vmem:[%s2 + $0x90] sm:$0xff]
        %v969 = vld [vmem:[%s2 + $0x98] sm:$0xff]
        %vm970 = vcmask 1043456
        %v971 = vrot.slane %v689, 4
        %v972 = vrot.slane %v690, 4
        %v973 = vsel %vm970, %v971, %v972
        %v974 = vrot.slane %v691, 4
        %v975 = vsel %vm970, %v972, %v974
        %v976 = vrot.slane %v692, 4
        %v977 = vsel %vm970, %v974, %v976
        %v978 = vrot.slane %v693, 4
        %v979 = vsel %vm970, %v976, %v978
        %v980 = vrot.slane %v694, 4
        %v981 = vsel %vm970, %v978, %v980
        %v982 = vrot.slane %v695, 4
        %v983 = vsel %vm970, %v980, %v982
        %v984 = vsel %vm729, %v973, 0
        %v986 = vsel %vm729, %v975, 0
        %v988 = vsel %vm729, %v977, 0
        %v990 = vsel %vm729, %v979, 0
        %v992 = vsel %vm729, %v981, 0
        %v994 = vsel %vm729, %v983, 0
        %996 = vmatpush.msra.mxu0 0.0
        %997 = vmatpush.msra.mxu0 0.0
        %998 = vmatpush.msra.mxu0 0.0
        %999 = vmatpush.msra.mxu0 0.0
        %1000 = vmatpush.msra.mxu0 0.0
        %1001 = vmatpush.msra.mxu0 0.0
        %1002 = vmatpush.msra.mxu0 0.0
        %1003 = vmatpush.msra.mxu0 0.0
        %1004 = vmatpush.msra.mxu0 0.0
        %1005 = vmatpush.msra.mxu0 0.0
        %1006 = vmatpush.msra.mxu0 0.0
        %1007 = vmatpush.msra.mxu0 0.0
        %1008 = vmatpush.msra.mxu0 %v969
        %1009 = vmatpush.msra.mxu0 %v968
        %1010 = vmatpush.msra.mxu0 %v967
        %1011 = vmatpush.msra.mxu0 %v966
        %1012 = vmatmul.f32.gmra.mxu0 %v984
        %v1013 = vpop.f32.mrf.mxu0
        %v1014 = vadd.f32 0.0, %v1013
        %1015 = vmatmul.f32.gmra.mxu0 %v986
        %v1016 = vpop.f32.mrf.mxu0
        %v1017 = vadd.f32 0.0, %v1016
        %1018 = vmatmul.f32.gmra.mxu0 %v988
        %v1019 = vpop.f32.mrf.mxu0
        %v1020 = vadd.f32 0.0, %v1019
        %1021 = vmatmul.f32.gmra.mxu0 %v990
        %v1022 = vpop.f32.mrf.mxu0
        %v1023 = vadd.f32 0.0, %v1022
        %1024 = vmatmul.f32.gmra.mxu0 %v992
        %v1025 = vpop.f32.mrf.mxu0
        %v1026 = vadd.f32 0.0, %v1025
        %1027 = vmatmul.f32.gmra.mxu0 %v994
        %v1028 = vpop.f32.mrf.mxu0
        %v1029 = vadd.f32 0.0, %v1028
        %1030 = vdwg.mxu0
        %v1031 = vadd.f32 %v960, %v1014
        %v1032 = vadd.f32 %v961, %v1017
        %v1033 = vadd.f32 %v962, %v1020
        %v1034 = vadd.f32 %v963, %v1023
        %v1035 = vadd.f32 %v964, %v1026
        %v1036 = vadd.f32 %v965, %v1029
        %v1037 = vld [vmem:[%s2 + $0xa0] sm:$0xff]
        %v1038 = vld [vmem:[%s2 + $0xa8] sm:$0xff]
        %v1039 = vld [vmem:[%s2 + $0xb0] sm:$0xff]
        %v1040 = vld [vmem:[%s2 + $0xb8] sm:$0xff]
        %vm1041 = vcmask 1042432
        %v1042 = vrot.slane %v689, 5
        %v1043 = vrot.slane %v690, 5
        %v1044 = vsel %vm1041, %v1042, %v1043
        %v1045 = vrot.slane %v691, 5
        %v1046 = vsel %vm1041, %v1043, %v1045
        %v1047 = vrot.slane %v692, 5
        %v1048 = vsel %vm1041, %v1045, %v1047
        %v1049 = vrot.slane %v693, 5
        %v1050 = vsel %vm1041, %v1047, %v1049
        %v1051 = vrot.slane %v694, 5
        %v1052 = vsel %vm1041, %v1049, %v1051
        %v1053 = vrot.slane %v695, 5
        %v1054 = vsel %vm1041, %v1051, %v1053
        %v1055 = vsel %vm729, %v1044, 0
        %v1057 = vsel %vm729, %v1046, 0
        %v1059 = vsel %vm729, %v1048, 0
        %v1061 = vsel %vm729, %v1050, 0
        %v1063 = vsel %vm729, %v1052, 0
        %v1065 = vsel %vm729, %v1054, 0
        %1067 = vmatpush.msra.mxu0 0.0
        %1068 = vmatpush.msra.mxu0 0.0
        %1069 = vmatpush.msra.mxu0 0.0
        %1070 = vmatpush.msra.mxu0 0.0
        %1071 = vmatpush.msra.mxu0 0.0
        %1072 = vmatpush.msra.mxu0 0.0
        %1073 = vmatpush.msra.mxu0 0.0
        %1074 = vmatpush.msra.mxu0 0.0
        %1075 = vmatpush.msra.mxu0 0.0
        %1076 = vmatpush.msra.mxu0 0.0
        %1077 = vmatpush.msra.mxu0 0.0
        %1078 = vmatpush.msra.mxu0 0.0
        %1079 = vmatpush.msra.mxu0 %v1040
        %1080 = vmatpush.msra.mxu0 %v1039
        %1081 = vmatpush.msra.mxu0 %v1038
        %1082 = vmatpush.msra.mxu0 %v1037
        %1083 = vmatmul.f32.gmra.mxu0 %v1055
        %v1084 = vpop.f32.mrf.mxu0
        %v1085 = vadd.f32 0.0, %v1084
        %1086 = vmatmul.f32.gmra.mxu0 %v1057
        %v1087 = vpop.f32.mrf.mxu0
        %v1088 = vadd.f32 0.0, %v1087
        %1089 = vmatmul.f32.gmra.mxu0 %v1059
        %v1090 = vpop.f32.mrf.mxu0
        %v1091 = vadd.f32 0.0, %v1090
        %1092 = vmatmul.f32.gmra.mxu0 %v1061
        %v1093 = vpop.f32.mrf.mxu0
        %v1094 = vadd.f32 0.0, %v1093
        %1095 = vmatmul.f32.gmra.mxu0 %v1063
        %v1096 = vpop.f32.mrf.mxu0
        %v1097 = vadd.f32 0.0, %v1096
        %1098 = vmatmul.f32.gmra.mxu0 %v1065
        %v1099 = vpop.f32.mrf.mxu0
        %v1100 = vadd.f32 0.0, %v1099
        %1101 = vdwg.mxu0
        %v1102 = vadd.f32 %v1031, %v1085
        %v1103 = vadd.f32 %v1032, %v1088
        %v1104 = vadd.f32 %v1033, %v1091
        %v1105 = vadd.f32 %v1034, %v1094
        %v1106 = vadd.f32 %v1035, %v1097
        %v1107 = vadd.f32 %v1036, %v1100
        %v1108 = vld [vmem:[%s2 + $0xc0] sm:$0xff]
        %v1109 = vld [vmem:[%s2 + $0xc8] sm:$0xff]
        %v1110 = vld [vmem:[%s2 + $0xd0] sm:$0xff]
        %v1111 = vld [vmem:[%s2 + $0xd8] sm:$0xff]
        %vm1112 = vcmask 1041408
        %v1113 = vrot.slane %v689, 6
        %v1114 = vrot.slane %v690, 6
        %v1115 = vsel %vm1112, %v1113, %v1114
        %v1116 = vrot.slane %v691, 6
        %v1117 = vsel %vm1112, %v1114, %v1116
        %v1118 = vrot.slane %v692, 6
        %v1119 = vsel %vm1112, %v1116, %v1118
        %v1120 = vrot.slane %v693, 6
        %v1121 = vsel %vm1112, %v1118, %v1120
        %v1122 = vrot.slane %v694, 6
        %v1123 = vsel %vm1112, %v1120, %v1122
        %v1124 = vrot.slane %v695, 6
        %v1125 = vsel %vm1112, %v1122, %v1124
        %v1126 = vsel %vm729, %v1115, 0
        %v1128 = vsel %vm729, %v1117, 0
        %v1130 = vsel %vm729, %v1119, 0
        %v1132 = vsel %vm729, %v1121, 0
        %v1134 = vsel %vm729, %v1123, 0
        %v1136 = vsel %vm729, %v1125, 0
        %1138 = vmatpush.msra.mxu0 0.0
        %1139 = vmatpush.msra.mxu0 0.0
        %1140 = vmatpush.msra.mxu0 0.0
        %1141 = vmatpush.msra.mxu0 0.0
        %1142 = vmatpush.msra.mxu0 0.0
        %1143 = vmatpush.msra.mxu0 0.0
        %1144 = vmatpush.msra.mxu0 0.0
        %1145 = vmatpush.msra.mxu0 0.0
        %1146 = vmatpush.msra.mxu0 0.0
        %1147 = vmatpush.msra.mxu0 0.0
        %1148 = vmatpush.msra.mxu0 0.0
        %1149 = vmatpush.msra.mxu0 0.0
        %1150 = vmatpush.msra.mxu0 %v1111
        %1151 = vmatpush.msra.mxu0 %v1110
        %1152 = vmatpush.msra.mxu0 %v1109
        %1153 = vmatpush.msra.mxu0 %v1108
        %1154 = vmatmul.f32.gmra.mxu0 %v1126
        %v1155 = vpop.f32.mrf.mxu0
        %v1156 = vadd.f32 0.0, %v1155
        %1157 = vmatmul.f32.gmra.mxu0 %v1128
        %v1158 = vpop.f32.mrf.mxu0
        %v1159 = vadd.f32 0.0, %v1158
        %1160 = vmatmul.f32.gmra.mxu0 %v1130
        %v1161 = vpop.f32.mrf.mxu0
        %v1162 = vadd.f32 0.0, %v1161
        %1163 = vmatmul.f32.gmra.mxu0 %v1132
        %v1164 = vpop.f32.mrf.mxu0
        %v1165 = vadd.f32 0.0, %v1164
        %1166 = vmatmul.f32.gmra.mxu0 %v1134
        %v1167 = vpop.f32.mrf.mxu0
        %v1168 = vadd.f32 0.0, %v1167
        %1169 = vmatmul.f32.gmra.mxu0 %v1136
        %v1170 = vpop.f32.mrf.mxu0
        %v1171 = vadd.f32 0.0, %v1170
        %1172 = vdwg.mxu0
        %v1173 = vadd.f32 %v1102, %v1156
        %v1174 = vadd.f32 %v1103, %v1159
        %v1175 = vadd.f32 %v1104, %v1162
        %v1176 = vadd.f32 %v1105, %v1165
        %v1177 = vadd.f32 %v1106, %v1168
        %v1178 = vadd.f32 %v1107, %v1171
        %v1179 = vld [vmem:[%s2 + $0xe0] sm:$0xff]
        %v1180 = vld [vmem:[%s2 + $0xe8] sm:$0xff]
        %v1181 = vld [vmem:[%s2 + $0xf0] sm:$0xff]
        %v1182 = vld [vmem:[%s2 + $0xf8] sm:$0xff]
        %vm1183 = vcmask 1040384
        %v1184 = vrot.slane %v689, 7
        %v1185 = vrot.slane %v690, 7
        %v1186 = vsel %vm1183, %v1184, %v1185
        %v1187 = vrot.slane %v691, 7
        %v1188 = vsel %vm1183, %v1185, %v1187
        %v1189 = vrot.slane %v692, 7
        %v1190 = vsel %vm1183, %v1187, %v1189
        %v1191 = vrot.slane %v693, 7
        %v1192 = vsel %vm1183, %v1189, %v1191
        %v1193 = vrot.slane %v694, 7
        %v1194 = vsel %vm1183, %v1191, %v1193
        %v1195 = vrot.slane %v695, 7
        %v1196 = vsel %vm1183, %v1193, %v1195
        %v1197 = vsel %vm729, %v1186, 0
        %v1199 = vsel %vm729, %v1188, 0
        %v1201 = vsel %vm729, %v1190, 0
        %v1203 = vsel %vm729, %v1192, 0
        %v1205 = vsel %vm729, %v1194, 0
        %v1207 = vsel %vm729, %v1196, 0
        %1209 = vmatpush.msra.mxu0 0.0
        %1210 = vmatpush.msra.mxu0 0.0
        %1211 = vmatpush.msra.mxu0 0.0
        %1212 = vmatpush.msra.mxu0 0.0
        %1213 = vmatpush.msra.mxu0 0.0
        %1214 = vmatpush.msra.mxu0 0.0
        %1215 = vmatpush.msra.mxu0 0.0
        %1216 = vmatpush.msra.mxu0 0.0
        %1217 = vmatpush.msra.mxu0 0.0
        %1218 = vmatpush.msra.mxu0 0.0
        %1219 = vmatpush.msra.mxu0 0.0
        %1220 = vmatpush.msra.mxu0 0.0
        %1221 = vmatpush.msra.mxu0 %v1182
        %1222 = vmatpush.msra.mxu0 %v1181
        %1223 = vmatpush.msra.mxu0 %v1180
        %1224 = vmatpush.msra.mxu0 %v1179
        %1225 = vmatmul.f32.gmra.mxu0 %v1197
        %v1226 = vpop.f32.mrf.mxu0
        %v1227 = vadd.f32 0.0, %v1226
        %1228 = vmatmul.f32.gmra.mxu0 %v1199
        %v1229 = vpop.f32.mrf.mxu0
        %v1230 = vadd.f32 0.0, %v1229
        %1231 = vmatmul.f32.gmra.mxu0 %v1201
        %v1232 = vpop.f32.mrf.mxu0
        %v1233 = vadd.f32 0.0, %v1232
        %1234 = vmatmul.f32.gmra.mxu0 %v1203
        %v1235 = vpop.f32.mrf.mxu0
        %v1236 = vadd.f32 0.0, %v1235
        %1237 = vmatmul.f32.gmra.mxu0 %v1205
        %v1238 = vpop.f32.mrf.mxu0
        %v1239 = vadd.f32 0.0, %v1238
        %1240 = vmatmul.f32.gmra.mxu0 %v1207
        %v1241 = vpop.f32.mrf.mxu0
        %v1242 = vadd.f32 0.0, %v1241
        %1243 = vdwg.mxu0
        %v1244 = vadd.f32 %v1173, %v1227
        %v1245 = vadd.f32 %v1174, %v1230
        %v1246 = vadd.f32 %v1175, %v1233
        %v1247 = vadd.f32 %v1176, %v1236
        %v1248 = vadd.f32 %v1177, %v1239
        %v1249 = vadd.f32 %v1178, %v1242
        %v1250 = vld [vmem:[%s2 + $0x100] sm:$0xff]
        %v1251 = vld [vmem:[%s2 + $0x108] sm:$0xff]
        %v1252 = vld [vmem:[%s2 + $0x110] sm:$0xff]
        %v1253 = vld [vmem:[%s2 + $0x118] sm:$0xff]
        %v1254 = vsel %vm729, %v695, 0
        %1256 = vmatpush.msra.mxu0 0.0
        %1257 = vmatpush.msra.mxu0 0.0
        %1258 = vmatpush.msra.mxu0 0.0
        %1259 = vmatpush.msra.mxu0 0.0
        %1260 = vmatpush.msra.mxu0 0.0
        %1261 = vmatpush.msra.mxu0 0.0
        %1262 = vmatpush.msra.mxu0 0.0
        %1263 = vmatpush.msra.mxu0 0.0
        %1264 = vmatpush.msra.mxu0 0.0
        %1265 = vmatpush.msra.mxu0 0.0
        %1266 = vmatpush.msra.mxu0 0.0
        %1267 = vmatpush.msra.mxu0 0.0
        %1268 = vmatpush.msra.mxu0 %v1253
        %1269 = vmatpush.msra.mxu0 %v1252
        %1270 = vmatpush.msra.mxu0 %v1251
        %1271 = vmatpush.msra.mxu0 %v1250
        %1272 = vmatmul.f32.gmra.mxu0 %v779
        %v1273 = vpop.f32.mrf.mxu0
        %v1274 = vadd.f32 0.0, %v1273
        %1275 = vmatmul.f32.gmra.mxu0 %v781
        %v1276 = vpop.f32.mrf.mxu0
        %v1277 = vadd.f32 0.0, %v1276
        %1278 = vmatmul.f32.gmra.mxu0 %v783
        %v1279 = vpop.f32.mrf.mxu0
        %v1280 = vadd.f32 0.0, %v1279
        %1281 = vmatmul.f32.gmra.mxu0 %v785
        %v1282 = vpop.f32.mrf.mxu0
        %v1283 = vadd.f32 0.0, %v1282
        %1284 = vmatmul.f32.gmra.mxu0 %v787
        %v1285 = vpop.f32.mrf.mxu0
        %v1286 = vadd.f32 0.0, %v1285
        %1287 = vmatmul.f32.gmra.mxu0 %v1254
        %v1288 = vpop.f32.mrf.mxu0
        %v1289 = vadd.f32 0.0, %v1288
        %1290 = vdwg.mxu0
        %v1291 = vadd.f32 %v1244, %v1274
        %v1292 = vadd.f32 %v1245, %v1277
        %v1293 = vadd.f32 %v1246, %v1280
        %v1294 = vadd.f32 %v1247, %v1283
        %v1295 = vadd.f32 %v1248, %v1286
        %v1296 = vadd.f32 %v1249, %v1289
        %v1297 = vld [vmem:[%s2 + $0x120] sm:$0xff]
        %v1298 = vld [vmem:[%s2 + $0x128] sm:$0xff]
        %v1299 = vld [vmem:[%s2 + $0x130] sm:$0xff]
        %v1300 = vld [vmem:[%s2 + $0x138] sm:$0xff]
        %v1302 = vrot.slane %v696, 1
        %v1303 = vsel %vm715, %v727, %v1302
        %v1304 = vsel %vm729, %v1303, 0
        %1306 = vmatpush.msra.mxu0 0.0
        %1307 = vmatpush.msra.mxu0 0.0
        %1308 = vmatpush.msra.mxu0 0.0
        %1309 = vmatpush.msra.mxu0 0.0
        %1310 = vmatpush.msra.mxu0 0.0
        %1311 = vmatpush.msra.mxu0 0.0
        %1312 = vmatpush.msra.mxu0 0.0
        %1313 = vmatpush.msra.mxu0 0.0
        %1314 = vmatpush.msra.mxu0 0.0
        %1315 = vmatpush.msra.mxu0 0.0
        %1316 = vmatpush.msra.mxu0 0.0
        %1317 = vmatpush.msra.mxu0 0.0
        %1318 = vmatpush.msra.mxu0 %v1300
        %1319 = vmatpush.msra.mxu0 %v1299
        %1320 = vmatpush.msra.mxu0 %v1298
        %1321 = vmatpush.msra.mxu0 %v1297
        %1322 = vmatmul.f32.gmra.mxu0 %v732
        %v1323 = vpop.f32.mrf.mxu0
        %v1324 = vadd.f32 0.0, %v1323
        %1325 = vmatmul.f32.gmra.mxu0 %v734
        %v1326 = vpop.f32.mrf.mxu0
        %v1327 = vadd.f32 0.0, %v1326
        %1328 = vmatmul.f32.gmra.mxu0 %v736
        %v1329 = vpop.f32.mrf.mxu0
        %v1330 = vadd.f32 0.0, %v1329
        %1331 = vmatmul.f32.gmra.mxu0 %v738
        %v1332 = vpop.f32.mrf.mxu0
        %v1333 = vadd.f32 0.0, %v1332
        %1334 = vmatmul.f32.gmra.mxu0 %v740
        %v1335 = vpop.f32.mrf.mxu0
        %v1336 = vadd.f32 0.0, %v1335
        %1337 = vmatmul.f32.gmra.mxu0 %v1304
        %v1338 = vpop.f32.mrf.mxu0
        %v1339 = vadd.f32 0.0, %v1338
        %1340 = vdwg.mxu0
        %v1341 = vadd.f32 %v1291, %v1324
        %v1342 = vadd.f32 %v1292, %v1327
        %v1343 = vadd.f32 %v1293, %v1330
        %v1344 = vadd.f32 %v1294, %v1333
        %v1345 = vadd.f32 %v1295, %v1336
        %v1346 = vadd.f32 %v1296, %v1339
        %v1347 = vld [vmem:[%s2 + $0x140] sm:$0xff]
        %v1348 = vld [vmem:[%s2 + $0x148] sm:$0xff]
        %v1349 = vld [vmem:[%s2 + $0x150] sm:$0xff]
        %v1350 = vld [vmem:[%s2 + $0x158] sm:$0xff]
        %v1351 = vrot.slane %v696, 2
        %v1352 = vsel %vm828, %v840, %v1351
        %v1353 = vsel %vm729, %v1352, 0
        %1355 = vmatpush.msra.mxu0 0.0
        %1356 = vmatpush.msra.mxu0 0.0
        %1357 = vmatpush.msra.mxu0 0.0
        %1358 = vmatpush.msra.mxu0 0.0
        %1359 = vmatpush.msra.mxu0 0.0
        %1360 = vmatpush.msra.mxu0 0.0
        %1361 = vmatpush.msra.mxu0 0.0
        %1362 = vmatpush.msra.mxu0 0.0
        %1363 = vmatpush.msra.mxu0 0.0
        %1364 = vmatpush.msra.mxu0 0.0
        %1365 = vmatpush.msra.mxu0 0.0
        %1366 = vmatpush.msra.mxu0 0.0
        %1367 = vmatpush.msra.mxu0 %v1350
        %1368 = vmatpush.msra.mxu0 %v1349
        %1369 = vmatpush.msra.mxu0 %v1348
        %1370 = vmatpush.msra.mxu0 %v1347
        %1371 = vmatmul.f32.gmra.mxu0 %v844
        %v1372 = vpop.f32.mrf.mxu0
        %v1373 = vadd.f32 0.0, %v1372
        %1374 = vmatmul.f32.gmra.mxu0 %v846
        %v1375 = vpop.f32.mrf.mxu0
        %v1376 = vadd.f32 0.0, %v1375
        %1377 = vmatmul.f32.gmra.mxu0 %v848
        %v1378 = vpop.f32.mrf.mxu0
        %v1379 = vadd.f32 0.0, %v1378
        %1380 = vmatmul.f32.gmra.mxu0 %v850
        %v1381 = vpop.f32.mrf.mxu0
        %v1382 = vadd.f32 0.0, %v1381
        %1383 = vmatmul.f32.gmra.mxu0 %v852
        %v1384 = vpop.f32.mrf.mxu0
        %v1385 = vadd.f32 0.0, %v1384
        %1386 = vmatmul.f32.gmra.mxu0 %v1353
        %v1387 = vpop.f32.mrf.mxu0
        %v1388 = vadd.f32 0.0, %v1387
        %1389 = vdwg.mxu0
        %v1390 = vadd.f32 %v1341, %v1373
        %v1391 = vadd.f32 %v1342, %v1376
        %v1392 = vadd.f32 %v1343, %v1379
        %v1393 = vadd.f32 %v1344, %v1382
        %v1394 = vadd.f32 %v1345, %v1385
        %v1395 = vadd.f32 %v1346, %v1388
        %v1396 = vld [vmem:[%s2 + $0x160] sm:$0xff]
        %v1397 = vld [vmem:[%s2 + $0x168] sm:$0xff]
        %v1398 = vld [vmem:[%s2 + $0x170] sm:$0xff]
        %v1399 = vld [vmem:[%s2 + $0x178] sm:$0xff]
        %v1400 = vrot.slane %v696, 3
        %v1401 = vsel %vm899, %v911, %v1400
        %v1402 = vsel %vm729, %v1401, 0
        %1404 = vmatpush.msra.mxu0 0.0
        %1405 = vmatpush.msra.mxu0 0.0
        %1406 = vmatpush.msra.mxu0 0.0
        %1407 = vmatpush.msra.mxu0 0.0
        %1408 = vmatpush.msra.mxu0 0.0
        %1409 = vmatpush.msra.mxu0 0.0
        %1410 = vmatpush.msra.mxu0 0.0
        %1411 = vmatpush.msra.mxu0 0.0
        %1412 = vmatpush.msra.mxu0 0.0
        %1413 = vmatpush.msra.mxu0 0.0
        %1414 = vmatpush.msra.mxu0 0.0
        %1415 = vmatpush.msra.mxu0 0.0
        %1416 = vmatpush.msra.mxu0 %v1399
        %1417 = vmatpush.msra.mxu0 %v1398
        %1418 = vmatpush.msra.mxu0 %v1397
        %1419 = vmatpush.msra.mxu0 %v1396
        %1420 = vmatmul.f32.gmra.mxu0 %v915
        %v1421 = vpop.f32.mrf.mxu0
        %v1422 = vadd.f32 0.0, %v1421
        %1423 = vmatmul.f32.gmra.mxu0 %v917
        %v1424 = vpop.f32.mrf.mxu0
        %v1425 = vadd.f32 0.0, %v1424
        %1426 = vmatmul.f32.gmra.mxu0 %v919
        %v1427 = vpop.f32.mrf.mxu0
        %v1428 = vadd.f32 0.0, %v1427
        %1429 = vmatmul.f32.gmra.mxu0 %v921
        %v1430 = vpop.f32.mrf.mxu0
        %v1431 = vadd.f32 0.0, %v1430
        %1432 = vmatmul.f32.gmra.mxu0 %v923
        %v1433 = vpop.f32.mrf.mxu0
        %v1434 = vadd.f32 0.0, %v1433
        %1435 = vmatmul.f32.gmra.mxu0 %v1402
        %v1436 = vpop.f32.mrf.mxu0
        %v1437 = vadd.f32 0.0, %v1436
        %1438 = vdwg.mxu0
        %v1439 = vadd.f32 %v1390, %v1422
        %v1440 = vadd.f32 %v1391, %v1425
        %v1441 = vadd.f32 %v1392, %v1428
        %v1442 = vadd.f32 %v1393, %v1431
        %v1443 = vadd.f32 %v1394, %v1434
        %v1444 = vadd.f32 %v1395, %v1437
        %v1445 = vld [vmem:[%s2 + $0x180] sm:$0xff]
        %v1446 = vld [vmem:[%s2 + $0x188] sm:$0xff]
        %v1447 = vld [vmem:[%s2 + $0x190] sm:$0xff]
        %v1448 = vld [vmem:[%s2 + $0x198] sm:$0xff]
        %v1449 = vrot.slane %v696, 4
        %v1450 = vsel %vm970, %v982, %v1449
        %v1451 = vsel %vm729, %v1450, 0
        %1453 = vmatpush.msra.mxu0 0.0
        %1454 = vmatpush.msra.mxu0 0.0
        %1455 = vmatpush.msra.mxu0 0.0
        %1456 = vmatpush.msra.mxu0 0.0
        %1457 = vmatpush.msra.mxu0 0.0
        %1458 = vmatpush.msra.mxu0 0.0
        %1459 = vmatpush.msra.mxu0 0.0
        %1460 = vmatpush.msra.mxu0 0.0
        %1461 = vmatpush.msra.mxu0 0.0
        %1462 = vmatpush.msra.mxu0 0.0
        %1463 = vmatpush.msra.mxu0 0.0
        %1464 = vmatpush.msra.mxu0 0.0
        %1465 = vmatpush.msra.mxu0 %v1448
        %1466 = vmatpush.msra.mxu0 %v1447
        %1467 = vmatpush.msra.mxu0 %v1446
        %1468 = vmatpush.msra.mxu0 %v1445
        %1469 = vmatmul.f32.gmra.mxu0 %v986
        %v1470 = vpop.f32.mrf.mxu0
        %v1471 = vadd.f32 0.0, %v1470
        %1472 = vmatmul.f32.gmra.mxu0 %v988
        %v1473 = vpop.f32.mrf.mxu0
        %v1474 = vadd.f32 0.0, %v1473
        %1475 = vmatmul.f32.gmra.mxu0 %v990
        %v1476 = vpop.f32.mrf.mxu0
        %v1477 = vadd.f32 0.0, %v1476
        %1478 = vmatmul.f32.gmra.mxu0 %v992
        %v1479 = vpop.f32.mrf.mxu0
        %v1480 = vadd.f32 0.0, %v1479
        %1481 = vmatmul.f32.gmra.mxu0 %v994
        %v1482 = vpop.f32.mrf.mxu0
        %v1483 = vadd.f32 0.0, %v1482
        %1484 = vmatmul.f32.gmra.mxu0 %v1451
        %v1485 = vpop.f32.mrf.mxu0
        %v1486 = vadd.f32 0.0, %v1485
        %1487 = vdwg.mxu0
        %v1488 = vadd.f32 %v1439, %v1471
        %v1489 = vadd.f32 %v1440, %v1474
        %v1490 = vadd.f32 %v1441, %v1477
        %v1491 = vadd.f32 %v1442, %v1480
        %v1492 = vadd.f32 %v1443, %v1483
        %v1493 = vadd.f32 %v1444, %v1486
        %v1494 = vld [vmem:[%s2 + $0x1a0] sm:$0xff]
        %v1495 = vld [vmem:[%s2 + $0x1a8] sm:$0xff]
        %v1496 = vld [vmem:[%s2 + $0x1b0] sm:$0xff]
        %v1497 = vld [vmem:[%s2 + $0x1b8] sm:$0xff]
        %v1498 = vrot.slane %v696, 5
        %v1499 = vsel %vm1041, %v1053, %v1498
        %v1500 = vsel %vm729, %v1499, 0
        %1502 = vmatpush.msra.mxu0 0.0
        %1503 = vmatpush.msra.mxu0 0.0
        %1504 = vmatpush.msra.mxu0 0.0
        %1505 = vmatpush.msra.mxu0 0.0
        %1506 = vmatpush.msra.mxu0 0.0
        %1507 = vmatpush.msra.mxu0 0.0
        %1508 = vmatpush.msra.mxu0 0.0
        %1509 = vmatpush.msra.mxu0 0.0
        %1510 = vmatpush.msra.mxu0 0.0
        %1511 = vmatpush.msra.mxu0 0.0
        %1512 = vmatpush.msra.mxu0 0.0
        %1513 = vmatpush.msra.mxu0 0.0
        %1514 = vmatpush.msra.mxu0 %v1497
        %1515 = vmatpush.msra.mxu0 %v1496
        %1516 = vmatpush.msra.mxu0 %v1495
        %1517 = vmatpush.msra.mxu0 %v1494
        %1518 = vmatmul.f32.gmra.mxu0 %v1057
        %v1519 = vpop.f32.mrf.mxu0
        %v1520 = vadd.f32 0.0, %v1519
        %1521 = vmatmul.f32.gmra.mxu0 %v1059
        %v1522 = vpop.f32.mrf.mxu0
        %v1523 = vadd.f32 0.0, %v1522
        %1524 = vmatmul.f32.gmra.mxu0 %v1061
        %v1525 = vpop.f32.mrf.mxu0
        %v1526 = vadd.f32 0.0, %v1525
        %1527 = vmatmul.f32.gmra.mxu0 %v1063
        %v1528 = vpop.f32.mrf.mxu0
        %v1529 = vadd.f32 0.0, %v1528
        %1530 = vmatmul.f32.gmra.mxu0 %v1065
        %v1531 = vpop.f32.mrf.mxu0
        %v1532 = vadd.f32 0.0, %v1531
        %1533 = vmatmul.f32.gmra.mxu0 %v1500
        %v1534 = vpop.f32.mrf.mxu0
        %v1535 = vadd.f32 0.0, %v1534
        %1536 = vdwg.mxu0
        %v1537 = vadd.f32 %v1488, %v1520
        %v1538 = vadd.f32 %v1489, %v1523
        %v1539 = vadd.f32 %v1490, %v1526
        %v1540 = vadd.f32 %v1491, %v1529
        %v1541 = vadd.f32 %v1492, %v1532
        %v1542 = vadd.f32 %v1493, %v1535
        %v1543 = vld [vmem:[%s2 + $0x1c0] sm:$0xff]
        %v1544 = vld [vmem:[%s2 + $0x1c8] sm:$0xff]
        %v1545 = vld [vmem:[%s2 + $0x1d0] sm:$0xff]
        %v1546 = vld [vmem:[%s2 + $0x1d8] sm:$0xff]
        %v1547 = vrot.slane %v696, 6
        %v1548 = vsel %vm1112, %v1124, %v1547
        %v1549 = vsel %vm729, %v1548, 0
        %1551 = vmatpush.msra.mxu0 0.0
        %1552 = vmatpush.msra.mxu0 0.0
        %1553 = vmatpush.msra.mxu0 0.0
        %1554 = vmatpush.msra.mxu0 0.0
        %1555 = vmatpush.msra.mxu0 0.0
        %1556 = vmatpush.msra.mxu0 0.0
        %1557 = vmatpush.msra.mxu0 0.0
        %1558 = vmatpush.msra.mxu0 0.0
        %1559 = vmatpush.msra.mxu0 0.0
        %1560 = vmatpush.msra.mxu0 0.0
        %1561 = vmatpush.msra.mxu0 0.0
        %1562 = vmatpush.msra.mxu0 0.0
        %1563 = vmatpush.msra.mxu0 %v1546
        %1564 = vmatpush.msra.mxu0 %v1545
        %1565 = vmatpush.msra.mxu0 %v1544
        %1566 = vmatpush.msra.mxu0 %v1543
        %1567 = vmatmul.f32.gmra.mxu0 %v1128
        %v1568 = vpop.f32.mrf.mxu0
        %v1569 = vadd.f32 0.0, %v1568
        %1570 = vmatmul.f32.gmra.mxu0 %v1130
        %v1571 = vpop.f32.mrf.mxu0
        %v1572 = vadd.f32 0.0, %v1571
        %1573 = vmatmul.f32.gmra.mxu0 %v1132
        %v1574 = vpop.f32.mrf.mxu0
        %v1575 = vadd.f32 0.0, %v1574
        %1576 = vmatmul.f32.gmra.mxu0 %v1134
        %v1577 = vpop.f32.mrf.mxu0
        %v1578 = vadd.f32 0.0, %v1577
        %1579 = vmatmul.f32.gmra.mxu0 %v1136
        %v1580 = vpop.f32.mrf.mxu0
        %v1581 = vadd.f32 0.0, %v1580
        %1582 = vmatmul.f32.gmra.mxu0 %v1549
        %v1583 = vpop.f32.mrf.mxu0
        %v1584 = vadd.f32 0.0, %v1583
        %1585 = vdwg.mxu0
        %v1586 = vadd.f32 %v1537, %v1569
        %v1587 = vadd.f32 %v1538, %v1572
        %v1588 = vadd.f32 %v1539, %v1575
        %v1589 = vadd.f32 %v1540, %v1578
        %v1590 = vadd.f32 %v1541, %v1581
        %v1591 = vadd.f32 %v1542, %v1584
        %v1592 = vld [vmem:[%s2 + $0x1e0] sm:$0xff]
        %v1593 = vld [vmem:[%s2 + $0x1e8] sm:$0xff]
        %v1594 = vld [vmem:[%s2 + $0x1f0] sm:$0xff]
        %v1595 = vld [vmem:[%s2 + $0x1f8] sm:$0xff]
        %v1596 = vrot.slane %v696, 7
        %v1597 = vsel %vm1183, %v1195, %v1596
        %v1598 = vsel %vm729, %v1597, 0
        %1600 = vmatpush.msra.mxu0 0.0
        %1601 = vmatpush.msra.mxu0 0.0
        %1602 = vmatpush.msra.mxu0 0.0
        %1603 = vmatpush.msra.mxu0 0.0
        %1604 = vmatpush.msra.mxu0 0.0
        %1605 = vmatpush.msra.mxu0 0.0
        %1606 = vmatpush.msra.mxu0 0.0
        %1607 = vmatpush.msra.mxu0 0.0
        %1608 = vmatpush.msra.mxu0 0.0
        %1609 = vmatpush.msra.mxu0 0.0
        %1610 = vmatpush.msra.mxu0 0.0
        %1611 = vmatpush.msra.mxu0 0.0
        %1612 = vmatpush.msra.mxu0 %v1595
        %1613 = vmatpush.msra.mxu0 %v1594
        %1614 = vmatpush.msra.mxu0 %v1593
        %1615 = vmatpush.msra.mxu0 %v1592
        %1616 = vmatmul.f32.gmra.mxu0 %v1199
        %v1617 = vpop.f32.mrf.mxu0
        %v1618 = vadd.f32 0.0, %v1617
        %1619 = vmatmul.f32.gmra.mxu0 %v1201
        %v1620 = vpop.f32.mrf.mxu0
        %v1621 = vadd.f32 0.0, %v1620
        %1622 = vmatmul.f32.gmra.mxu0 %v1203
        %v1623 = vpop.f32.mrf.mxu0
        %v1624 = vadd.f32 0.0, %v1623
        %1625 = vmatmul.f32.gmra.mxu0 %v1205
        %v1626 = vpop.f32.mrf.mxu0
        %v1627 = vadd.f32 0.0, %v1626
        %1628 = vmatmul.f32.gmra.mxu0 %v1207
        %v1629 = vpop.f32.mrf.mxu0
        %v1630 = vadd.f32 0.0, %v1629
        %1631 = vmatmul.f32.gmra.mxu0 %v1598
        %v1632 = vpop.f32.mrf.mxu0
        %v1633 = vadd.f32 0.0, %v1632
        %1634 = vdwg.mxu0
        %v1635 = vadd.f32 %v1586, %v1618
        %v1636 = vadd.f32 %v1587, %v1621
        %v1637 = vadd.f32 %v1588, %v1624
        %v1638 = vadd.f32 %v1589, %v1627
        %v1639 = vadd.f32 %v1590, %v1630
        %v1640 = vadd.f32 %v1591, %v1633
        %v1641 = vld [vmem:[%s2 + $0x200] sm:$0xff]
        %v1642 = vld [vmem:[%s2 + $0x208] sm:$0xff]
        %v1643 = vld [vmem:[%s2 + $0x210] sm:$0xff]
        %v1644 = vld [vmem:[%s2 + $0x218] sm:$0xff]
        %v1645 = vsel %vm729, %v696, 0
        %1647 = vmatpush.msra.mxu0 0.0
        %1648 = vmatpush.msra.mxu0 0.0
        %1649 = vmatpush.msra.mxu0 0.0
        %1650 = vmatpush.msra.mxu0 0.0
        %1651 = vmatpush.msra.mxu0 0.0
        %1652 = vmatpush.msra.mxu0 0.0
        %1653 = vmatpush.msra.mxu0 0.0
        %1654 = vmatpush.msra.mxu0 0.0
        %1655 = vmatpush.msra.mxu0 0.0
        %1656 = vmatpush.msra.mxu0 0.0
        %1657 = vmatpush.msra.mxu0 0.0
        %1658 = vmatpush.msra.mxu0 0.0
        %1659 = vmatpush.msra.mxu0 %v1644
        %1660 = vmatpush.msra.mxu0 %v1643
        %1661 = vmatpush.msra.mxu0 %v1642
        %1662 = vmatpush.msra.mxu0 %v1641
        %1663 = vmatmul.f32.gmra.mxu0 %v781
        %v1664 = vpop.f32.mrf.mxu0
        %v1665 = vadd.f32 0.0, %v1664
        %1666 = vmatmul.f32.gmra.mxu0 %v783
        %v1667 = vpop.f32.mrf.mxu0
        %v1668 = vadd.f32 0.0, %v1667
        %1669 = vmatmul.f32.gmra.mxu0 %v785
        %v1670 = vpop.f32.mrf.mxu0
        %v1671 = vadd.f32 0.0, %v1670
        %1672 = vmatmul.f32.gmra.mxu0 %v787
        %v1673 = vpop.f32.mrf.mxu0
        %v1674 = vadd.f32 0.0, %v1673
        %1675 = vmatmul.f32.gmra.mxu0 %v1254
        %v1676 = vpop.f32.mrf.mxu0
        %v1677 = vadd.f32 0.0, %v1676
        %1678 = vmatmul.f32.gmra.mxu0 %v1645
        %v1679 = vpop.f32.mrf.mxu0
        %v1680 = vadd.f32 0.0, %v1679
        %1681 = vdwg.mxu0
        %v1682 = vadd.f32 %v1635, %v1665
        %v1683 = vadd.f32 %v1636, %v1668
        %v1684 = vadd.f32 %v1637, %v1671
        %v1685 = vadd.f32 %v1638, %v1674
        %v1686 = vadd.f32 %v1639, %v1677
        %v1687 = vadd.f32 %v1640, %v1680
        %v1688 = vld [vmem:[%s2 + $0x220] sm:$0xff]
        %v1689 = vld [vmem:[%s2 + $0x228] sm:$0xff]
        %v1690 = vld [vmem:[%s2 + $0x230] sm:$0xff]
        %v1691 = vld [vmem:[%s2 + $0x238] sm:$0xff]
        %v1693 = vrot.slane %v697, 1
        %v1694 = vsel %vm715, %v1302, %v1693
        %v1695 = vsel %vm729, %v1694, 0
        %1697 = vmatpush.msra.mxu0 0.0
        %1698 = vmatpush.msra.mxu0 0.0
        %1699 = vmatpush.msra.mxu0 0.0
        %1700 = vmatpush.msra.mxu0 0.0
        %1701 = vmatpush.msra.mxu0 0.0
        %1702 = vmatpush.msra.mxu0 0.0
        %1703 = vmatpush.msra.mxu0 0.0
        %1704 = vmatpush.msra.mxu0 0.0
        %1705 = vmatpush.msra.mxu0 0.0
        %1706 = vmatpush.msra.mxu0 0.0
        %1707 = vmatpush.msra.mxu0 0.0
        %1708 = vmatpush.msra.mxu0 0.0
        %1709 = vmatpush.msra.mxu0 %v1691
        %1710 = vmatpush.msra.mxu0 %v1690
        %1711 = vmatpush.msra.mxu0 %v1689
        %1712 = vmatpush.msra.mxu0 %v1688
        %1713 = vmatmul.f32.gmra.mxu0 %v734
        %v1714 = vpop.f32.mrf.mxu0
        %v1715 = vadd.f32 0.0, %v1714
        %1716 = vmatmul.f32.gmra.mxu0 %v736
        %v1717 = vpop.f32.mrf.mxu0
        %v1718 = vadd.f32 0.0, %v1717
        %1719 = vmatmul.f32.gmra.mxu0 %v738
        %v1720 = vpop.f32.mrf.mxu0
        %v1721 = vadd.f32 0.0, %v1720
        %1722 = vmatmul.f32.gmra.mxu0 %v740
        %v1723 = vpop.f32.mrf.mxu0
        %v1724 = vadd.f32 0.0, %v1723
        %1725 = vmatmul.f32.gmra.mxu0 %v1304
        %v1726 = vpop.f32.mrf.mxu0
        %v1727 = vadd.f32 0.0, %v1726
        %1728 = vmatmul.f32.gmra.mxu0 %v1695
        %v1729 = vpop.f32.mrf.mxu0
        %v1730 = vadd.f32 0.0, %v1729
        %1731 = vdwg.mxu0
        %v1732 = vadd.f32 %v1682, %v1715
        %v1733 = vadd.f32 %v1683, %v1718
        %v1734 = vadd.f32 %v1684, %v1721
        %v1735 = vadd.f32 %v1685, %v1724
        %v1736 = vadd.f32 %v1686, %v1727
        %v1737 = vadd.f32 %v1687, %v1730
        %v1738 = vld [vmem:[%s2 + $0x240] sm:$0xff]
        %v1739 = vld [vmem:[%s2 + $0x248] sm:$0xff]
        %v1740 = vld [vmem:[%s2 + $0x250] sm:$0xff]
        %v1741 = vld [vmem:[%s2 + $0x258] sm:$0xff]
        %v1742 = vrot.slane %v697, 2
        %v1743 = vsel %vm828, %v1351, %v1742
        %v1744 = vsel %vm729, %v1743, 0
        %1746 = vmatpush.msra.mxu0 0.0
        %1747 = vmatpush.msra.mxu0 0.0
        %1748 = vmatpush.msra.mxu0 0.0
        %1749 = vmatpush.msra.mxu0 0.0
        %1750 = vmatpush.msra.mxu0 0.0
        %1751 = vmatpush.msra.mxu0 0.0
        %1752 = vmatpush.msra.mxu0 0.0
        %1753 = vmatpush.msra.mxu0 0.0
        %1754 = vmatpush.msra.mxu0 0.0
        %1755 = vmatpush.msra.mxu0 0.0
        %1756 = vmatpush.msra.mxu0 0.0
        %1757 = vmatpush.msra.mxu0 0.0
        %1758 = vmatpush.msra.mxu0 %v1741
        %1759 = vmatpush.msra.mxu0 %v1740
        %1760 = vmatpush.msra.mxu0 %v1739
        %1761 = vmatpush.msra.mxu0 %v1738
        %1762 = vmatmul.f32.gmra.mxu0 %v846
        %v1763 = vpop.f32.mrf.mxu0
        %v1764 = vadd.f32 0.0, %v1763
        %1765 = vmatmul.f32.gmra.mxu0 %v848
        %v1766 = vpop.f32.mrf.mxu0
        %v1767 = vadd.f32 0.0, %v1766
        %1768 = vmatmul.f32.gmra.mxu0 %v850
        %v1769 = vpop.f32.mrf.mxu0
        %v1770 = vadd.f32 0.0, %v1769
        %1771 = vmatmul.f32.gmra.mxu0 %v852
        %v1772 = vpop.f32.mrf.mxu0
        %v1773 = vadd.f32 0.0, %v1772
        %1774 = vmatmul.f32.gmra.mxu0 %v1353
        %v1775 = vpop.f32.mrf.mxu0
        %v1776 = vadd.f32 0.0, %v1775
        %1777 = vmatmul.f32.gmra.mxu0 %v1744
        %v1778 = vpop.f32.mrf.mxu0
        %v1779 = vadd.f32 0.0, %v1778
        %1780 = vdwg.mxu0
        %v1781 = vadd.f32 %v1732, %v1764
        %v1782 = vadd.f32 %v1733, %v1767
        %v1783 = vadd.f32 %v1734, %v1770
        %v1784 = vadd.f32 %v1735, %v1773
        %v1785 = vadd.f32 %v1736, %v1776
        %v1786 = vadd.f32 %v1737, %v1779
        %v1787 = vld [vmem:[%s2 + $0x260] sm:$0xff]
        %v1788 = vld [vmem:[%s2 + $0x268] sm:$0xff]
        %v1789 = vld [vmem:[%s2 + $0x270] sm:$0xff]
        %v1790 = vld [vmem:[%s2 + $0x278] sm:$0xff]
        %v1791 = vrot.slane %v697, 3
        %v1792 = vsel %vm899, %v1400, %v1791
        %v1793 = vsel %vm729, %v1792, 0
        %1795 = vmatpush.msra.mxu0 0.0
        %1796 = vmatpush.msra.mxu0 0.0
        %1797 = vmatpush.msra.mxu0 0.0
        %1798 = vmatpush.msra.mxu0 0.0
        %1799 = vmatpush.msra.mxu0 0.0
        %1800 = vmatpush.msra.mxu0 0.0
        %1801 = vmatpush.msra.mxu0 0.0
        %1802 = vmatpush.msra.mxu0 0.0
        %1803 = vmatpush.msra.mxu0 0.0
        %1804 = vmatpush.msra.mxu0 0.0
        %1805 = vmatpush.msra.mxu0 0.0
        %1806 = vmatpush.msra.mxu0 0.0
        %1807 = vmatpush.msra.mxu0 %v1790
        %1808 = vmatpush.msra.mxu0 %v1789
        %1809 = vmatpush.msra.mxu0 %v1788
        %1810 = vmatpush.msra.mxu0 %v1787
        %1811 = vmatmul.f32.gmra.mxu0 %v917
        %v1812 = vpop.f32.mrf.mxu0
        %v1813 = vadd.f32 0.0, %v1812
        %1814 = vmatmul.f32.gmra.mxu0 %v919
        %v1815 = vpop.f32.mrf.mxu0
        %v1816 = vadd.f32 0.0, %v1815
        %1817 = vmatmul.f32.gmra.mxu0 %v921
        %v1818 = vpop.f32.mrf.mxu0
        %v1819 = vadd.f32 0.0, %v1818
        %1820 = vmatmul.f32.gmra.mxu0 %v923
        %v1821 = vpop.f32.mrf.mxu0
        %v1822 = vadd.f32 0.0, %v1821
        %1823 = vmatmul.f32.gmra.mxu0 %v1402
        %v1824 = vpop.f32.mrf.mxu0
        %v1825 = vadd.f32 0.0, %v1824
        %1826 = vmatmul.f32.gmra.mxu0 %v1793
        %v1827 = vpop.f32.mrf.mxu0
        %v1828 = vadd.f32 0.0, %v1827
        %1829 = vdwg.mxu0
        %v1830 = vadd.f32 %v1781, %v1813
        %v1831 = vadd.f32 %v1782, %v1816
        %v1832 = vadd.f32 %v1783, %v1819
        %v1833 = vadd.f32 %v1784, %v1822
        %v1834 = vadd.f32 %v1785, %v1825
        %v1835 = vadd.f32 %v1786, %v1828
        %v1836 = vld [vmem:[%s2 + $0x280] sm:$0xff]
        %v1837 = vld [vmem:[%s2 + $0x288] sm:$0xff]
        %v1838 = vld [vmem:[%s2 + $0x290] sm:$0xff]
        %v1839 = vld [vmem:[%s2 + $0x298] sm:$0xff]
        %v1840 = vrot.slane %v697, 4
        %v1841 = vsel %vm970, %v1449, %v1840
        %v1842 = vsel %vm729, %v1841, 0
        %1844 = vmatpush.msra.mxu0 0.0
        %1845 = vmatpush.msra.mxu0 0.0
        %1846 = vmatpush.msra.mxu0 0.0
        %1847 = vmatpush.msra.mxu0 0.0
        %1848 = vmatpush.msra.mxu0 0.0
        %1849 = vmatpush.msra.mxu0 0.0
        %1850 = vmatpush.msra.mxu0 0.0
        %1851 = vmatpush.msra.mxu0 0.0
        %1852 = vmatpush.msra.mxu0 0.0
        %1853 = vmatpush.msra.mxu0 0.0
        %1854 = vmatpush.msra.mxu0 0.0
        %1855 = vmatpush.msra.mxu0 0.0
        %1856 = vmatpush.msra.mxu0 %v1839
        %1857 = vmatpush.msra.mxu0 %v1838
        %1858 = vmatpush.msra.mxu0 %v1837
        %1859 = vmatpush.msra.mxu0 %v1836
        %1860 = vmatmul.f32.gmra.mxu0 %v988
        %v1861 = vpop.f32.mrf.mxu0
        %v1862 = vadd.f32 0.0, %v1861
        %1863 = vmatmul.f32.gmra.mxu0 %v990
        %v1864 = vpop.f32.mrf.mxu0
        %v1865 = vadd.f32 0.0, %v1864
        %1866 = vmatmul.f32.gmra.mxu0 %v992
        %v1867 = vpop.f32.mrf.mxu0
        %v1868 = vadd.f32 0.0, %v1867
        %1869 = vmatmul.f32.gmra.mxu0 %v994
        %v1870 = vpop.f32.mrf.mxu0
        %v1871 = vadd.f32 0.0, %v1870
        %1872 = vmatmul.f32.gmra.mxu0 %v1451
        %v1873 = vpop.f32.mrf.mxu0
        %v1874 = vadd.f32 0.0, %v1873
        %1875 = vmatmul.f32.gmra.mxu0 %v1842
        %v1876 = vpop.f32.mrf.mxu0
        %v1877 = vadd.f32 0.0, %v1876
        %1878 = vdwg.mxu0
        %v1879 = vadd.f32 %v1830, %v1862
        %v1880 = vadd.f32 %v1831, %v1865
        %v1881 = vadd.f32 %v1832, %v1868
        %v1882 = vadd.f32 %v1833, %v1871
        %v1883 = vadd.f32 %v1834, %v1874
        %v1884 = vadd.f32 %v1835, %v1877
        %v1885 = vld [vmem:[%s2 + $0x2a0] sm:$0xff]
        %v1886 = vld [vmem:[%s2 + $0x2a8] sm:$0xff]
        %v1887 = vld [vmem:[%s2 + $0x2b0] sm:$0xff]
        %v1888 = vld [vmem:[%s2 + $0x2b8] sm:$0xff]
        %v1889 = vrot.slane %v697, 5
        %v1890 = vsel %vm1041, %v1498, %v1889
        %v1891 = vsel %vm729, %v1890, 0
        %1893 = vmatpush.msra.mxu0 0.0
        %1894 = vmatpush.msra.mxu0 0.0
        %1895 = vmatpush.msra.mxu0 0.0
        %1896 = vmatpush.msra.mxu0 0.0
        %1897 = vmatpush.msra.mxu0 0.0
        %1898 = vmatpush.msra.mxu0 0.0
        %1899 = vmatpush.msra.mxu0 0.0
        %1900 = vmatpush.msra.mxu0 0.0
        %1901 = vmatpush.msra.mxu0 0.0
        %1902 = vmatpush.msra.mxu0 0.0
        %1903 = vmatpush.msra.mxu0 0.0
        %1904 = vmatpush.msra.mxu0 0.0
        %1905 = vmatpush.msra.mxu0 %v1888
        %1906 = vmatpush.msra.mxu0 %v1887
        %1907 = vmatpush.msra.mxu0 %v1886
        %1908 = vmatpush.msra.mxu0 %v1885
        %1909 = vmatmul.f32.gmra.mxu0 %v1059
        %v1910 = vpop.f32.mrf.mxu0
        %v1911 = vadd.f32 0.0, %v1910
        %1912 = vmatmul.f32.gmra.mxu0 %v1061
        %v1913 = vpop.f32.mrf.mxu0
        %v1914 = vadd.f32 0.0, %v1913
        %1915 = vmatmul.f32.gmra.mxu0 %v1063
        %v1916 = vpop.f32.mrf.mxu0
        %v1917 = vadd.f32 0.0, %v1916
        %1918 = vmatmul.f32.gmra.mxu0 %v1065
        %v1919 = vpop.f32.mrf.mxu0
        %v1920 = vadd.f32 0.0, %v1919
        %1921 = vmatmul.f32.gmra.mxu0 %v1500
        %v1922 = vpop.f32.mrf.mxu0
        %v1923 = vadd.f32 0.0, %v1922
        %1924 = vmatmul.f32.gmra.mxu0 %v1891
        %v1925 = vpop.f32.mrf.mxu0
        %v1926 = vadd.f32 0.0, %v1925
        %1927 = vdwg.mxu0
        %v1928 = vadd.f32 %v1879, %v1911
        %v1929 = vadd.f32 %v1880, %v1914
        %v1930 = vadd.f32 %v1881, %v1917
        %v1931 = vadd.f32 %v1882, %v1920
        %v1932 = vadd.f32 %v1883, %v1923
        %v1933 = vadd.f32 %v1884, %v1926
        %v1934 = vld [vmem:[%s2 + $0x2c0] sm:$0xff]
        %v1935 = vld [vmem:[%s2 + $0x2c8] sm:$0xff]
        %v1936 = vld [vmem:[%s2 + $0x2d0] sm:$0xff]
        %v1937 = vld [vmem:[%s2 + $0x2d8] sm:$0xff]
        %v1938 = vrot.slane %v697, 6
        %v1939 = vsel %vm1112, %v1547, %v1938
        %v1940 = vsel %vm729, %v1939, 0
        %1942 = vmatpush.msra.mxu0 0.0
        %1943 = vmatpush.msra.mxu0 0.0
        %1944 = vmatpush.msra.mxu0 0.0
        %1945 = vmatpush.msra.mxu0 0.0
        %1946 = vmatpush.msra.mxu0 0.0
        %1947 = vmatpush.msra.mxu0 0.0
        %1948 = vmatpush.msra.mxu0 0.0
        %1949 = vmatpush.msra.mxu0 0.0
        %1950 = vmatpush.msra.mxu0 0.0
        %1951 = vmatpush.msra.mxu0 0.0
        %1952 = vmatpush.msra.mxu0 0.0
        %1953 = vmatpush.msra.mxu0 0.0
        %1954 = vmatpush.msra.mxu0 %v1937
        %1955 = vmatpush.msra.mxu0 %v1936
        %1956 = vmatpush.msra.mxu0 %v1935
        %1957 = vmatpush.msra.mxu0 %v1934
        %1958 = vmatmul.f32.gmra.mxu0 %v1130
        %v1959 = vpop.f32.mrf.mxu0
        %v1960 = vadd.f32 0.0, %v1959
        %1961 = vmatmul.f32.gmra.mxu0 %v1132
        %v1962 = vpop.f32.mrf.mxu0
        %v1963 = vadd.f32 0.0, %v1962
        %1964 = vmatmul.f32.gmra.mxu0 %v1134
        %v1965 = vpop.f32.mrf.mxu0
        %v1966 = vadd.f32 0.0, %v1965
        %1967 = vmatmul.f32.gmra.mxu0 %v1136
        %v1968 = vpop.f32.mrf.mxu0
        %v1969 = vadd.f32 0.0, %v1968
        %1970 = vmatmul.f32.gmra.mxu0 %v1549
        %v1971 = vpop.f32.mrf.mxu0
        %v1972 = vadd.f32 0.0, %v1971
        %1973 = vmatmul.f32.gmra.mxu0 %v1940
        %v1974 = vpop.f32.mrf.mxu0
        %v1975 = vadd.f32 0.0, %v1974
        %1976 = vdwg.mxu0
        %v1977 = vadd.f32 %v1928, %v1960
        %v1978 = vadd.f32 %v1929, %v1963
        %v1979 = vadd.f32 %v1930, %v1966
        %v1980 = vadd.f32 %v1931, %v1969
        %v1981 = vadd.f32 %v1932, %v1972
        %v1982 = vadd.f32 %v1933, %v1975
        %v1983 = vld [vmem:[%s2 + $0x2e0] sm:$0xff]
        %v1984 = vld [vmem:[%s2 + $0x2e8] sm:$0xff]
        %v1985 = vld [vmem:[%s2 + $0x2f0] sm:$0xff]
        %v1986 = vld [vmem:[%s2 + $0x2f8] sm:$0xff]
        %v1987 = vrot.slane %v697, 7
        %v1988 = vsel %vm1183, %v1596, %v1987
        %v1989 = vsel %vm729, %v1988, 0
        %1991 = vmatpush.msra.mxu0 0.0
        %1992 = vmatpush.msra.mxu0 0.0
        %1993 = vmatpush.msra.mxu0 0.0
        %1994 = vmatpush.msra.mxu0 0.0
        %1995 = vmatpush.msra.mxu0 0.0
        %1996 = vmatpush.msra.mxu0 0.0
        %1997 = vmatpush.msra.mxu0 0.0
        %1998 = vmatpush.msra.mxu0 0.0
        %1999 = vmatpush.msra.mxu0 0.0
        %2000 = vmatpush.msra.mxu0 0.0
        %2001 = vmatpush.msra.mxu0 0.0
        %2002 = vmatpush.msra.mxu0 0.0
        %2003 = vmatpush.msra.mxu0 %v1986
        %2004 = vmatpush.msra.mxu0 %v1985
        %2005 = vmatpush.msra.mxu0 %v1984
        %2006 = vmatpush.msra.mxu0 %v1983
        %2007 = vmatmul.f32.gmra.mxu0 %v1201
        %v2008 = vpop.f32.mrf.mxu0
        %v2009 = vadd.f32 0.0, %v2008
        %2010 = vmatmul.f32.gmra.mxu0 %v1203
        %v2011 = vpop.f32.mrf.mxu0
        %v2012 = vadd.f32 0.0, %v2011
        %2013 = vmatmul.f32.gmra.mxu0 %v1205
        %v2014 = vpop.f32.mrf.mxu0
        %v2015 = vadd.f32 0.0, %v2014
        %2016 = vmatmul.f32.gmra.mxu0 %v1207
        %v2017 = vpop.f32.mrf.mxu0
        %v2018 = vadd.f32 0.0, %v2017
        %2019 = vmatmul.f32.gmra.mxu0 %v1598
        %v2020 = vpop.f32.mrf.mxu0
        %v2021 = vadd.f32 0.0, %v2020
        %2022 = vmatmul.f32.gmra.mxu0 %v1989
        %v2023 = vpop.f32.mrf.mxu0
        %v2024 = vadd.f32 0.0, %v2023
        %2025 = vdwg.mxu0
        %v2026 = vadd.f32 %v1977, %v2009
        %v2027 = vadd.f32 %v1978, %v2012
        %v2028 = vadd.f32 %v1979, %v2015
        %v2029 = vadd.f32 %v1980, %v2018
        %v2030 = vadd.f32 %v1981, %v2021
        %v2031 = vadd.f32 %v1982, %v2024
        %v2032 = vld [vmem:[%s2 + $0x300] sm:$0xff]
        %v2033 = vld [vmem:[%s2 + $0x308] sm:$0xff]
        %v2034 = vld [vmem:[%s2 + $0x310] sm:$0xff]
        %v2035 = vld [vmem:[%s2 + $0x318] sm:$0xff]
        %v2036 = vsel %vm729, %v697, 0
        %2038 = vmatpush.msra.mxu0 0.0
        %2039 = vmatpush.msra.mxu0 0.0
        %2040 = vmatpush.msra.mxu0 0.0
        %2041 = vmatpush.msra.mxu0 0.0
        %2042 = vmatpush.msra.mxu0 0.0
        %2043 = vmatpush.msra.mxu0 0.0
        %2044 = vmatpush.msra.mxu0 0.0
        %2045 = vmatpush.msra.mxu0 0.0
        %2046 = vmatpush.msra.mxu0 0.0
        %2047 = vmatpush.msra.mxu0 0.0
        %2048 = vmatpush.msra.mxu0 0.0
        %2049 = vmatpush.msra.mxu0 0.0
        %2050 = vmatpush.msra.mxu0 %v2035
        %2051 = vmatpush.msra.mxu0 %v2034
        %2052 = vmatpush.msra.mxu0 %v2033
        %2053 = vmatpush.msra.mxu0 %v2032
        %2054 = vmatmul.f32.gmra.mxu0 %v783
        %v2055 = vpop.f32.mrf.mxu0
        %v2056 = vadd.f32 0.0, %v2055
        %2057 = vmatmul.f32.gmra.mxu0 %v785
        %v2058 = vpop.f32.mrf.mxu0
        %v2059 = vadd.f32 0.0, %v2058
        %2060 = vmatmul.f32.gmra.mxu0 %v787
        %v2061 = vpop.f32.mrf.mxu0
        %v2062 = vadd.f32 0.0, %v2061
        %2063 = vmatmul.f32.gmra.mxu0 %v1254
        %v2064 = vpop.f32.mrf.mxu0
        %v2065 = vadd.f32 0.0, %v2064
        %2066 = vmatmul.f32.gmra.mxu0 %v1645
        %v2067 = vpop.f32.mrf.mxu0
        %v2068 = vadd.f32 0.0, %v2067
        %2069 = vmatmul.f32.gmra.mxu0 %v2036
        %v2070 = vpop.f32.mrf.mxu0
        %v2071 = vadd.f32 0.0, %v2070
        %2072 = vdwg.mxu0
        %v2073 = vadd.f32 %v2026, %v2056
        %v2074 = vadd.f32 %v2027, %v2059
        %v2075 = vadd.f32 %v2028, %v2062
        %v2076 = vadd.f32 %v2029, %v2065
        %v2077 = vadd.f32 %v2030, %v2068
        %v2078 = vadd.f32 %v2031, %v2071
        %v2079 = vld [vmem:[%s2 + $0x320] sm:$0xff]
        %v2080 = vld [vmem:[%s2 + $0x328] sm:$0xff]
        %v2081 = vld [vmem:[%s2 + $0x330] sm:$0xff]
        %v2082 = vld [vmem:[%s2 + $0x338] sm:$0xff]
        %v2084 = vrot.slane %v698, 1
        %v2085 = vsel %vm715, %v1693, %v2084
        %v2086 = vsel %vm729, %v2085, 0
        %2088 = vmatpush.msra.mxu0 0.0
        %2089 = vmatpush.msra.mxu0 0.0
        %2090 = vmatpush.msra.mxu0 0.0
        %2091 = vmatpush.msra.mxu0 0.0
        %2092 = vmatpush.msra.mxu0 0.0
        %2093 = vmatpush.msra.mxu0 0.0
        %2094 = vmatpush.msra.mxu0 0.0
        %2095 = vmatpush.msra.mxu0 0.0
        %2096 = vmatpush.msra.mxu0 0.0
        %2097 = vmatpush.msra.mxu0 0.0
        %2098 = vmatpush.msra.mxu0 0.0
        %2099 = vmatpush.msra.mxu0 0.0
        %2100 = vmatpush.msra.mxu0 %v2082
        %2101 = vmatpush.msra.mxu0 %v2081
        %2102 = vmatpush.msra.mxu0 %v2080
        %2103 = vmatpush.msra.mxu0 %v2079
        %2104 = vmatmul.f32.gmra.mxu0 %v736
        %v2105 = vpop.f32.mrf.mxu0
        %v2106 = vadd.f32 0.0, %v2105
        %2107 = vmatmul.f32.gmra.mxu0 %v738
        %v2108 = vpop.f32.mrf.mxu0
        %v2109 = vadd.f32 0.0, %v2108
        %2110 = vmatmul.f32.gmra.mxu0 %v740
        %v2111 = vpop.f32.mrf.mxu0
        %v2112 = vadd.f32 0.0, %v2111
        %2113 = vmatmul.f32.gmra.mxu0 %v1304
        %v2114 = vpop.f32.mrf.mxu0
        %v2115 = vadd.f32 0.0, %v2114
        %2116 = vmatmul.f32.gmra.mxu0 %v1695
        %v2117 = vpop.f32.mrf.mxu0
        %v2118 = vadd.f32 0.0, %v2117
        %2119 = vmatmul.f32.gmra.mxu0 %v2086
        %v2120 = vpop.f32.mrf.mxu0
        %v2121 = vadd.f32 0.0, %v2120
        %2122 = vdwg.mxu0
        %v2123 = vadd.f32 %v2073, %v2106
        %v2124 = vadd.f32 %v2074, %v2109
        %v2125 = vadd.f32 %v2075, %v2112
        %v2126 = vadd.f32 %v2076, %v2115
        %v2127 = vadd.f32 %v2077, %v2118
        %v2128 = vadd.f32 %v2078, %v2121
        %v2129 = vld [vmem:[%s2 + $0x340] sm:$0xff]
        %v2130 = vld [vmem:[%s2 + $0x348] sm:$0xff]
        %v2131 = vld [vmem:[%s2 + $0x350] sm:$0xff]
        %v2132 = vld [vmem:[%s2 + $0x358] sm:$0xff]
        %v2133 = vrot.slane %v698, 2
        %v2134 = vsel %vm828, %v1742, %v2133
        %v2135 = vsel %vm729, %v2134, 0
        %2137 = vmatpush.msra.mxu0 0.0
        %2138 = vmatpush.msra.mxu0 0.0
        %2139 = vmatpush.msra.mxu0 0.0
        %2140 = vmatpush.msra.mxu0 0.0
        %2141 = vmatpush.msra.mxu0 0.0
        %2142 = vmatpush.msra.mxu0 0.0
        %2143 = vmatpush.msra.mxu0 0.0
        %2144 = vmatpush.msra.mxu0 0.0
        %2145 = vmatpush.msra.mxu0 0.0
        %2146 = vmatpush.msra.mxu0 0.0
        %2147 = vmatpush.msra.mxu0 0.0
        %2148 = vmatpush.msra.mxu0 0.0
        %2149 = vmatpush.msra.mxu0 %v2132
        %2150 = vmatpush.msra.mxu0 %v2131
        %2151 = vmatpush.msra.mxu0 %v2130
        %2152 = vmatpush.msra.mxu0 %v2129
        %2153 = vmatmul.f32.gmra.mxu0 %v848
        %v2154 = vpop.f32.mrf.mxu0
        %v2155 = vadd.f32 0.0, %v2154
        %2156 = vmatmul.f32.gmra.mxu0 %v850
        %v2157 = vpop.f32.mrf.mxu0
        %v2158 = vadd.f32 0.0, %v2157
        %2159 = vmatmul.f32.gmra.mxu0 %v852
        %v2160 = vpop.f32.mrf.mxu0
        %v2161 = vadd.f32 0.0, %v2160
        %2162 = vmatmul.f32.gmra.mxu0 %v1353
        %v2163 = vpop.f32.mrf.mxu0
        %v2164 = vadd.f32 0.0, %v2163
        %2165 = vmatmul.f32.gmra.mxu0 %v1744
        %v2166 = vpop.f32.mrf.mxu0
        %v2167 = vadd.f32 0.0, %v2166
        %2168 = vmatmul.f32.gmra.mxu0 %v2135
        %v2169 = vpop.f32.mrf.mxu0
        %v2170 = vadd.f32 0.0, %v2169
        %2171 = vdwg.mxu0
        %v2172 = vadd.f32 %v2123, %v2155
        %v2173 = vadd.f32 %v2124, %v2158
        %v2174 = vadd.f32 %v2125, %v2161
        %v2175 = vadd.f32 %v2126, %v2164
        %v2176 = vadd.f32 %v2127, %v2167
        %v2177 = vadd.f32 %v2128, %v2170
        %v2178 = vld [vmem:[%s2 + $0x360] sm:$0xff]
        %v2179 = vld [vmem:[%s2 + $0x368] sm:$0xff]
        %v2180 = vld [vmem:[%s2 + $0x370] sm:$0xff]
        %v2181 = vld [vmem:[%s2 + $0x378] sm:$0xff]
        %v2182 = vrot.slane %v698, 3
        %v2183 = vsel %vm899, %v1791, %v2182
        %v2184 = vsel %vm729, %v2183, 0
        %2186 = vmatpush.msra.mxu0 0.0
        %2187 = vmatpush.msra.mxu0 0.0
        %2188 = vmatpush.msra.mxu0 0.0
        %2189 = vmatpush.msra.mxu0 0.0
        %2190 = vmatpush.msra.mxu0 0.0
        %2191 = vmatpush.msra.mxu0 0.0
        %2192 = vmatpush.msra.mxu0 0.0
        %2193 = vmatpush.msra.mxu0 0.0
        %2194 = vmatpush.msra.mxu0 0.0
        %2195 = vmatpush.msra.mxu0 0.0
        %2196 = vmatpush.msra.mxu0 0.0
        %2197 = vmatpush.msra.mxu0 0.0
        %2198 = vmatpush.msra.mxu0 %v2181
        %2199 = vmatpush.msra.mxu0 %v2180
        %2200 = vmatpush.msra.mxu0 %v2179
        %2201 = vmatpush.msra.mxu0 %v2178
        %2202 = vmatmul.f32.gmra.mxu0 %v919
        %v2203 = vpop.f32.mrf.mxu0
        %v2204 = vadd.f32 0.0, %v2203
        %2205 = vmatmul.f32.gmra.mxu0 %v921
        %v2206 = vpop.f32.mrf.mxu0
        %v2207 = vadd.f32 0.0, %v2206
        %2208 = vmatmul.f32.gmra.mxu0 %v923
        %v2209 = vpop.f32.mrf.mxu0
        %v2210 = vadd.f32 0.0, %v2209
        %2211 = vmatmul.f32.gmra.mxu0 %v1402
        %v2212 = vpop.f32.mrf.mxu0
        %v2213 = vadd.f32 0.0, %v2212
        %2214 = vmatmul.f32.gmra.mxu0 %v1793
        %v2215 = vpop.f32.mrf.mxu0
        %v2216 = vadd.f32 0.0, %v2215
        %2217 = vmatmul.f32.gmra.mxu0 %v2184
        %v2218 = vpop.f32.mrf.mxu0
        %v2219 = vadd.f32 0.0, %v2218
        %2220 = vdwg.mxu0
        %v2221 = vadd.f32 %v2172, %v2204
        %v2222 = vadd.f32 %v2173, %v2207
        %v2223 = vadd.f32 %v2174, %v2210
        %v2224 = vadd.f32 %v2175, %v2213
        %v2225 = vadd.f32 %v2176, %v2216
        %v2226 = vadd.f32 %v2177, %v2219
        %v2227 = vld [vmem:[%s2 + $0x380] sm:$0xff]
        %v2228 = vld [vmem:[%s2 + $0x388] sm:$0xff]
        %v2229 = vld [vmem:[%s2 + $0x390] sm:$0xff]
        %v2230 = vld [vmem:[%s2 + $0x398] sm:$0xff]
        %v2231 = vrot.slane %v698, 4
        %v2232 = vsel %vm970, %v1840, %v2231
        %v2233 = vsel %vm729, %v2232, 0
        %2235 = vmatpush.msra.mxu0 0.0
        %2236 = vmatpush.msra.mxu0 0.0
        %2237 = vmatpush.msra.mxu0 0.0
        %2238 = vmatpush.msra.mxu0 0.0
        %2239 = vmatpush.msra.mxu0 0.0
        %2240 = vmatpush.msra.mxu0 0.0
        %2241 = vmatpush.msra.mxu0 0.0
        %2242 = vmatpush.msra.mxu0 0.0
        %2243 = vmatpush.msra.mxu0 0.0
        %2244 = vmatpush.msra.mxu0 0.0
        %2245 = vmatpush.msra.mxu0 0.0
        %2246 = vmatpush.msra.mxu0 0.0
        %2247 = vmatpush.msra.mxu0 %v2230
        %2248 = vmatpush.msra.mxu0 %v2229
        %2249 = vmatpush.msra.mxu0 %v2228
        %2250 = vmatpush.msra.mxu0 %v2227
        %2251 = vmatmul.f32.gmra.mxu0 %v990
        %v2252 = vpop.f32.mrf.mxu0
        %v2253 = vadd.f32 0.0, %v2252
        %2254 = vmatmul.f32.gmra.mxu0 %v992
        %v2255 = vpop.f32.mrf.mxu0
        %v2256 = vadd.f32 0.0, %v2255
        %2257 = vmatmul.f32.gmra.mxu0 %v994
        %v2258 = vpop.f32.mrf.mxu0
        %v2259 = vadd.f32 0.0, %v2258
        %2260 = vmatmul.f32.gmra.mxu0 %v1451
        %v2261 = vpop.f32.mrf.mxu0
        %v2262 = vadd.f32 0.0, %v2261
        %2263 = vmatmul.f32.gmra.mxu0 %v1842
        %v2264 = vpop.f32.mrf.mxu0
        %v2265 = vadd.f32 0.0, %v2264
        %2266 = vmatmul.f32.gmra.mxu0 %v2233
        %v2267 = vpop.f32.mrf.mxu0
        %v2268 = vadd.f32 0.0, %v2267
        %2269 = vdwg.mxu0
        %v2270 = vadd.f32 %v2221, %v2253
        %v2271 = vadd.f32 %v2222, %v2256
        %v2272 = vadd.f32 %v2223, %v2259
        %v2273 = vadd.f32 %v2224, %v2262
        %v2274 = vadd.f32 %v2225, %v2265
        %v2275 = vadd.f32 %v2226, %v2268
        %v2276 = vld [vmem:[%s2 + $0x3a0] sm:$0xff]
        %v2277 = vld [vmem:[%s2 + $0x3a8] sm:$0xff]
        %v2278 = vld [vmem:[%s2 + $0x3b0] sm:$0xff]
        %v2279 = vld [vmem:[%s2 + $0x3b8] sm:$0xff]
        %v2280 = vrot.slane %v698, 5
        %v2281 = vsel %vm1041, %v1889, %v2280
        %v2282 = vsel %vm729, %v2281, 0
        %2284 = vmatpush.msra.mxu0 0.0
        %2285 = vmatpush.msra.mxu0 0.0
        %2286 = vmatpush.msra.mxu0 0.0
        %2287 = vmatpush.msra.mxu0 0.0
        %2288 = vmatpush.msra.mxu0 0.0
        %2289 = vmatpush.msra.mxu0 0.0
        %2290 = vmatpush.msra.mxu0 0.0
        %2291 = vmatpush.msra.mxu0 0.0
        %2292 = vmatpush.msra.mxu0 0.0
        %2293 = vmatpush.msra.mxu0 0.0
        %2294 = vmatpush.msra.mxu0 0.0
        %2295 = vmatpush.msra.mxu0 0.0
        %2296 = vmatpush.msra.mxu0 %v2279
        %2297 = vmatpush.msra.mxu0 %v2278
        %2298 = vmatpush.msra.mxu0 %v2277
        %2299 = vmatpush.msra.mxu0 %v2276
        %2300 = vmatmul.f32.gmra.mxu0 %v1061
        %v2301 = vpop.f32.mrf.mxu0
        %v2302 = vadd.f32 0.0, %v2301
        %2303 = vmatmul.f32.gmra.mxu0 %v1063
        %v2304 = vpop.f32.mrf.mxu0
        %v2305 = vadd.f32 0.0, %v2304
        %2306 = vmatmul.f32.gmra.mxu0 %v1065
        %v2307 = vpop.f32.mrf.mxu0
        %v2308 = vadd.f32 0.0, %v2307
        %2309 = vmatmul.f32.gmra.mxu0 %v1500
        %v2310 = vpop.f32.mrf.mxu0
        %v2311 = vadd.f32 0.0, %v2310
        %2312 = vmatmul.f32.gmra.mxu0 %v1891
        %v2313 = vpop.f32.mrf.mxu0
        %v2314 = vadd.f32 0.0, %v2313
        %2315 = vmatmul.f32.gmra.mxu0 %v2282
        %v2316 = vpop.f32.mrf.mxu0
        %v2317 = vadd.f32 0.0, %v2316
        %2318 = vdwg.mxu0
        %v2319 = vadd.f32 %v2270, %v2302
        %v2320 = vadd.f32 %v2271, %v2305
        %v2321 = vadd.f32 %v2272, %v2308
        %v2322 = vadd.f32 %v2273, %v2311
        %v2323 = vadd.f32 %v2274, %v2314
        %v2324 = vadd.f32 %v2275, %v2317
        %v2325 = vld [vmem:[%s2 + $0x3c0] sm:$0xff]
        %v2326 = vld [vmem:[%s2 + $0x3c8] sm:$0xff]
        %v2327 = vld [vmem:[%s2 + $0x3d0] sm:$0xff]
        %v2328 = vld [vmem:[%s2 + $0x3d8] sm:$0xff]
        %v2329 = vrot.slane %v698, 6
        %v2330 = vsel %vm1112, %v1938, %v2329
        %v2331 = vsel %vm729, %v2330, 0
        %2333 = vmatpush.msra.mxu0 0.0
        %2334 = vmatpush.msra.mxu0 0.0
        %2335 = vmatpush.msra.mxu0 0.0
        %2336 = vmatpush.msra.mxu0 0.0
        %2337 = vmatpush.msra.mxu0 0.0
        %2338 = vmatpush.msra.mxu0 0.0
        %2339 = vmatpush.msra.mxu0 0.0
        %2340 = vmatpush.msra.mxu0 0.0
        %2341 = vmatpush.msra.mxu0 0.0
        %2342 = vmatpush.msra.mxu0 0.0
        %2343 = vmatpush.msra.mxu0 0.0
        %2344 = vmatpush.msra.mxu0 0.0
        %2345 = vmatpush.msra.mxu0 %v2328
        %2346 = vmatpush.msra.mxu0 %v2327
        %2347 = vmatpush.msra.mxu0 %v2326
        %2348 = vmatpush.msra.mxu0 %v2325
        %2349 = vmatmul.f32.gmra.mxu0 %v1132
        %v2350 = vpop.f32.mrf.mxu0
        %v2351 = vadd.f32 0.0, %v2350
        %2352 = vmatmul.f32.gmra.mxu0 %v1134
        %v2353 = vpop.f32.mrf.mxu0
        %v2354 = vadd.f32 0.0, %v2353
        %2355 = vmatmul.f32.gmra.mxu0 %v1136
        %v2356 = vpop.f32.mrf.mxu0
        %v2357 = vadd.f32 0.0, %v2356
        %2358 = vmatmul.f32.gmra.mxu0 %v1549
        %v2359 = vpop.f32.mrf.mxu0
        %v2360 = vadd.f32 0.0, %v2359
        %2361 = vmatmul.f32.gmra.mxu0 %v1940
        %v2362 = vpop.f32.mrf.mxu0
        %v2363 = vadd.f32 0.0, %v2362
        %2364 = vmatmul.f32.gmra.mxu0 %v2331
        %v2365 = vpop.f32.mrf.mxu0
        %v2366 = vadd.f32 0.0, %v2365
        %2367 = vdwg.mxu0
        %v2368 = vadd.f32 %v2319, %v2351
        %v2369 = vadd.f32 %v2320, %v2354
        %v2370 = vadd.f32 %v2321, %v2357
        %v2371 = vadd.f32 %v2322, %v2360
        %v2372 = vadd.f32 %v2323, %v2363
        %v2373 = vadd.f32 %v2324, %v2366
        %v2374 = vld [vmem:[%s2 + $0x3e0] sm:$0xff]
        %v2375 = vld [vmem:[%s2 + $0x3e8] sm:$0xff]
        %v2376 = vld [vmem:[%s2 + $0x3f0] sm:$0xff]
        %v2377 = vld [vmem:[%s2 + $0x3f8] sm:$0xff]
        %v2378 = vrot.slane %v698, 7
        %v2379 = vsel %vm1183, %v1987, %v2378
        %v2380 = vsel %vm729, %v2379, 0
        %2382 = vmatpush.msra.mxu0 0.0
        %2383 = vmatpush.msra.mxu0 0.0
        %2384 = vmatpush.msra.mxu0 0.0
        %2385 = vmatpush.msra.mxu0 0.0
        %2386 = vmatpush.msra.mxu0 0.0
        %2387 = vmatpush.msra.mxu0 0.0
        %2388 = vmatpush.msra.mxu0 0.0
        %2389 = vmatpush.msra.mxu0 0.0
        %2390 = vmatpush.msra.mxu0 0.0
        %2391 = vmatpush.msra.mxu0 0.0
        %2392 = vmatpush.msra.mxu0 0.0
        %2393 = vmatpush.msra.mxu0 0.0
        %2394 = vmatpush.msra.mxu0 %v2377
        %2395 = vmatpush.msra.mxu0 %v2376
        %2396 = vmatpush.msra.mxu0 %v2375
        %2397 = vmatpush.msra.mxu0 %v2374
        %2398 = vmatmul.f32.gmra.mxu0 %v1203
        %v2399 = vpop.f32.mrf.mxu0
        %v2400 = vadd.f32 0.0, %v2399
        %2401 = vmatmul.f32.gmra.mxu0 %v1205
        %v2402 = vpop.f32.mrf.mxu0
        %v2403 = vadd.f32 0.0, %v2402
        %2404 = vmatmul.f32.gmra.mxu0 %v1207
        %v2405 = vpop.f32.mrf.mxu0
        %v2406 = vadd.f32 0.0, %v2405
        %2407 = vmatmul.f32.gmra.mxu0 %v1598
        %v2408 = vpop.f32.mrf.mxu0
        %v2409 = vadd.f32 0.0, %v2408
        %2410 = vmatmul.f32.gmra.mxu0 %v1989
        %v2411 = vpop.f32.mrf.mxu0
        %v2412 = vadd.f32 0.0, %v2411
        %2413 = vmatmul.f32.gmra.mxu0 %v2380
        %v2414 = vpop.f32.mrf.mxu0
        %v2415 = vadd.f32 0.0, %v2414
        %2416 = vdwg.mxu0
        %v2417 = vadd.f32 %v2368, %v2400
        %v2418 = vadd.f32 %v2369, %v2403
        %v2419 = vadd.f32 %v2370, %v2406
        %v2420 = vadd.f32 %v2371, %v2409
        %v2421 = vadd.f32 %v2372, %v2412
        %v2422 = vadd.f32 %v2373, %v2415
        %v2423 = vld [vmem:[%s2 + $0x400] sm:$0xff]
        %v2424 = vld [vmem:[%s2 + $0x408] sm:$0xff]
        %v2425 = vld [vmem:[%s2 + $0x410] sm:$0xff]
        %v2426 = vld [vmem:[%s2 + $0x418] sm:$0xff]
        %v2427 = vsel %vm729, %v698, 0
        %2429 = vmatpush.msra.mxu0 0.0
        %2430 = vmatpush.msra.mxu0 0.0
        %2431 = vmatpush.msra.mxu0 0.0
        %2432 = vmatpush.msra.mxu0 0.0
        %2433 = vmatpush.msra.mxu0 0.0
        %2434 = vmatpush.msra.mxu0 0.0
        %2435 = vmatpush.msra.mxu0 0.0
        %2436 = vmatpush.msra.mxu0 0.0
        %2437 = vmatpush.msra.mxu0 0.0
        %2438 = vmatpush.msra.mxu0 0.0
        %2439 = vmatpush.msra.mxu0 0.0
        %2440 = vmatpush.msra.mxu0 0.0
        %2441 = vmatpush.msra.mxu0 %v2426
        %2442 = vmatpush.msra.mxu0 %v2425
        %2443 = vmatpush.msra.mxu0 %v2424
        %2444 = vmatpush.msra.mxu0 %v2423
        %2445 = vmatmul.f32.gmra.mxu0 %v785
        %v2446 = vpop.f32.mrf.mxu0
        %v2447 = vadd.f32 0.0, %v2446
        %2448 = vmatmul.f32.gmra.mxu0 %v787
        %v2449 = vpop.f32.mrf.mxu0
        %v2450 = vadd.f32 0.0, %v2449
        %2451 = vmatmul.f32.gmra.mxu0 %v1254
        %v2452 = vpop.f32.mrf.mxu0
        %v2453 = vadd.f32 0.0, %v2452
        %2454 = vmatmul.f32.gmra.mxu0 %v1645
        %v2455 = vpop.f32.mrf.mxu0
        %v2456 = vadd.f32 0.0, %v2455
        %2457 = vmatmul.f32.gmra.mxu0 %v2036
        %v2458 = vpop.f32.mrf.mxu0
        %v2459 = vadd.f32 0.0, %v2458
        %2460 = vmatmul.f32.gmra.mxu0 %v2427
        %v2461 = vpop.f32.mrf.mxu0
        %v2462 = vadd.f32 0.0, %v2461
        %2463 = vdwg.mxu0
        %v2464 = vadd.f32 %v2417, %v2447
        %v2465 = vadd.f32 %v2418, %v2450
        %v2466 = vadd.f32 %v2419, %v2453
        %v2467 = vadd.f32 %v2420, %v2456
        %v2468 = vadd.f32 %v2421, %v2459
        %v2469 = vadd.f32 %v2422, %v2462
        %v2470 = vld [vmem:[%s2 + $0x420] sm:$0xff]
        %v2471 = vld [vmem:[%s2 + $0x428] sm:$0xff]
        %v2472 = vld [vmem:[%s2 + $0x430] sm:$0xff]
        %v2473 = vld [vmem:[%s2 + $0x438] sm:$0xff]
        %v2475 = vrot.slane %v699, 1
        %v2476 = vsel %vm715, %v2084, %v2475
        %v2477 = vsel %vm729, %v2476, 0
        %2479 = vmatpush.msra.mxu0 0.0
        %2480 = vmatpush.msra.mxu0 0.0
        %2481 = vmatpush.msra.mxu0 0.0
        %2482 = vmatpush.msra.mxu0 0.0
        %2483 = vmatpush.msra.mxu0 0.0
        %2484 = vmatpush.msra.mxu0 0.0
        %2485 = vmatpush.msra.mxu0 0.0
        %2486 = vmatpush.msra.mxu0 0.0
        %2487 = vmatpush.msra.mxu0 0.0
        %2488 = vmatpush.msra.mxu0 0.0
        %2489 = vmatpush.msra.mxu0 0.0
        %2490 = vmatpush.msra.mxu0 0.0
        %2491 = vmatpush.msra.mxu0 %v2473
        %2492 = vmatpush.msra.mxu0 %v2472
        %2493 = vmatpush.msra.mxu0 %v2471
        %2494 = vmatpush.msra.mxu0 %v2470
        %2495 = vmatmul.f32.gmra.mxu0 %v738
        %v2496 = vpop.f32.mrf.mxu0
        %v2497 = vadd.f32 0.0, %v2496
        %2498 = vmatmul.f32.gmra.mxu0 %v740
        %v2499 = vpop.f32.mrf.mxu0
        %v2500 = vadd.f32 0.0, %v2499
        %2501 = vmatmul.f32.gmra.mxu0 %v1304
        %v2502 = vpop.f32.mrf.mxu0
        %v2503 = vadd.f32 0.0, %v2502
        %2504 = vmatmul.f32.gmra.mxu0 %v1695
        %v2505 = vpop.f32.mrf.mxu0
        %v2506 = vadd.f32 0.0, %v2505
        %2507 = vmatmul.f32.gmra.mxu0 %v2086
        %v2508 = vpop.f32.mrf.mxu0
        %v2509 = vadd.f32 0.0, %v2508
        %2510 = vmatmul.f32.gmra.mxu0 %v2477
        %v2511 = vpop.f32.mrf.mxu0
        %v2512 = vadd.f32 0.0, %v2511
        %2513 = vdwg.mxu0
        %v2514 = vadd.f32 %v2464, %v2497
        %v2515 = vadd.f32 %v2465, %v2500
        %v2516 = vadd.f32 %v2466, %v2503
        %v2517 = vadd.f32 %v2467, %v2506
        %v2518 = vadd.f32 %v2468, %v2509
        %v2519 = vadd.f32 %v2469, %v2512
        %v2520 = vld [vmem:[%s2 + $0x440] sm:$0xff]
        %v2521 = vld [vmem:[%s2 + $0x448] sm:$0xff]
        %v2522 = vld [vmem:[%s2 + $0x450] sm:$0xff]
        %v2523 = vld [vmem:[%s2 + $0x458] sm:$0xff]
        %v2524 = vrot.slane %v699, 2
        %v2525 = vsel %vm828, %v2133, %v2524
        %v2526 = vsel %vm729, %v2525, 0
        %2528 = vmatpush.msra.mxu0 0.0
        %2529 = vmatpush.msra.mxu0 0.0
        %2530 = vmatpush.msra.mxu0 0.0
        %2531 = vmatpush.msra.mxu0 0.0
        %2532 = vmatpush.msra.mxu0 0.0
        %2533 = vmatpush.msra.mxu0 0.0
        %2534 = vmatpush.msra.mxu0 0.0
        %2535 = vmatpush.msra.mxu0 0.0
        %2536 = vmatpush.msra.mxu0 0.0
        %2537 = vmatpush.msra.mxu0 0.0
        %2538 = vmatpush.msra.mxu0 0.0
        %2539 = vmatpush.msra.mxu0 0.0
        %2540 = vmatpush.msra.mxu0 %v2523
        %2541 = vmatpush.msra.mxu0 %v2522
        %2542 = vmatpush.msra.mxu0 %v2521
        %2543 = vmatpush.msra.mxu0 %v2520
        %2544 = vmatmul.f32.gmra.mxu0 %v850
        %v2545 = vpop.f32.mrf.mxu0
        %v2546 = vadd.f32 0.0, %v2545
        %2547 = vmatmul.f32.gmra.mxu0 %v852
        %v2548 = vpop.f32.mrf.mxu0
        %v2549 = vadd.f32 0.0, %v2548
        %2550 = vmatmul.f32.gmra.mxu0 %v1353
        %v2551 = vpop.f32.mrf.mxu0
        %v2552 = vadd.f32 0.0, %v2551
        %2553 = vmatmul.f32.gmra.mxu0 %v1744
        %v2554 = vpop.f32.mrf.mxu0
        %v2555 = vadd.f32 0.0, %v2554
        %2556 = vmatmul.f32.gmra.mxu0 %v2135
        %v2557 = vpop.f32.mrf.mxu0
        %v2558 = vadd.f32 0.0, %v2557
        %2559 = vmatmul.f32.gmra.mxu0 %v2526
        %v2560 = vpop.f32.mrf.mxu0
        %v2561 = vadd.f32 0.0, %v2560
        %2562 = vdwg.mxu0
        %v2563 = vadd.f32 %v2514, %v2546
        %v2564 = vadd.f32 %v2515, %v2549
        %v2565 = vadd.f32 %v2516, %v2552
        %v2566 = vadd.f32 %v2517, %v2555
        %v2567 = vadd.f32 %v2518, %v2558
        %v2568 = vadd.f32 %v2519, %v2561
        %v2569 = vld [vmem:[%s2 + $0x460] sm:$0xff]
        %v2570 = vld [vmem:[%s2 + $0x468] sm:$0xff]
        %v2571 = vld [vmem:[%s2 + $0x470] sm:$0xff]
        %v2572 = vld [vmem:[%s2 + $0x478] sm:$0xff]
        %v2573 = vrot.slane %v699, 3
        %v2574 = vsel %vm899, %v2182, %v2573
        %v2575 = vsel %vm729, %v2574, 0
        %2577 = vmatpush.msra.mxu0 0.0
        %2578 = vmatpush.msra.mxu0 0.0
        %2579 = vmatpush.msra.mxu0 0.0
        %2580 = vmatpush.msra.mxu0 0.0
        %2581 = vmatpush.msra.mxu0 0.0
        %2582 = vmatpush.msra.mxu0 0.0
        %2583 = vmatpush.msra.mxu0 0.0
        %2584 = vmatpush.msra.mxu0 0.0
        %2585 = vmatpush.msra.mxu0 0.0
        %2586 = vmatpush.msra.mxu0 0.0
        %2587 = vmatpush.msra.mxu0 0.0
        %2588 = vmatpush.msra.mxu0 0.0
        %2589 = vmatpush.msra.mxu0 %v2572
        %2590 = vmatpush.msra.mxu0 %v2571
        %2591 = vmatpush.msra.mxu0 %v2570
        %2592 = vmatpush.msra.mxu0 %v2569
        %2593 = vmatmul.f32.gmra.mxu0 %v921
        %v2594 = vpop.f32.mrf.mxu0
        %v2595 = vadd.f32 0.0, %v2594
        %2596 = vmatmul.f32.gmra.mxu0 %v923
        %v2597 = vpop.f32.mrf.mxu0
        %v2598 = vadd.f32 0.0, %v2597
        %2599 = vmatmul.f32.gmra.mxu0 %v1402
        %v2600 = vpop.f32.mrf.mxu0
        %v2601 = vadd.f32 0.0, %v2600
        %2602 = vmatmul.f32.gmra.mxu0 %v1793
        %v2603 = vpop.f32.mrf.mxu0
        %v2604 = vadd.f32 0.0, %v2603
        %2605 = vmatmul.f32.gmra.mxu0 %v2184
        %v2606 = vpop.f32.mrf.mxu0
        %v2607 = vadd.f32 0.0, %v2606
        %2608 = vmatmul.f32.gmra.mxu0 %v2575
        %v2609 = vpop.f32.mrf.mxu0
        %v2610 = vadd.f32 0.0, %v2609
        %2611 = vdwg.mxu0
        %v2612 = vadd.f32 %v2563, %v2595
        %v2613 = vadd.f32 %v2564, %v2598
        %v2614 = vadd.f32 %v2565, %v2601
        %v2615 = vadd.f32 %v2566, %v2604
        %v2616 = vadd.f32 %v2567, %v2607
        %v2617 = vadd.f32 %v2568, %v2610
        %v2618 = vld [vmem:[%s2 + $0x480] sm:$0xff]
        %v2619 = vld [vmem:[%s2 + $0x488] sm:$0xff]
        %v2620 = vld [vmem:[%s2 + $0x490] sm:$0xff]
        %v2621 = vld [vmem:[%s2 + $0x498] sm:$0xff]
        %v2622 = vrot.slane %v699, 4
        %v2623 = vsel %vm970, %v2231, %v2622
        %v2624 = vsel %vm729, %v2623, 0
        %2626 = vmatpush.msra.mxu0 0.0
        %2627 = vmatpush.msra.mxu0 0.0
        %2628 = vmatpush.msra.mxu0 0.0
        %2629 = vmatpush.msra.mxu0 0.0
        %2630 = vmatpush.msra.mxu0 0.0
        %2631 = vmatpush.msra.mxu0 0.0
        %2632 = vmatpush.msra.mxu0 0.0
        %2633 = vmatpush.msra.mxu0 0.0
        %2634 = vmatpush.msra.mxu0 0.0
        %2635 = vmatpush.msra.mxu0 0.0
        %2636 = vmatpush.msra.mxu0 0.0
        %2637 = vmatpush.msra.mxu0 0.0
        %2638 = vmatpush.msra.mxu0 %v2621
        %2639 = vmatpush.msra.mxu0 %v2620
        %2640 = vmatpush.msra.mxu0 %v2619
        %2641 = vmatpush.msra.mxu0 %v2618
        %2642 = vmatmul.f32.gmra.mxu0 %v992
        %v2643 = vpop.f32.mrf.mxu0
        %v2644 = vadd.f32 0.0, %v2643
        %2645 = vmatmul.f32.gmra.mxu0 %v994
        %v2646 = vpop.f32.mrf.mxu0
        %v2647 = vadd.f32 0.0, %v2646
        %2648 = vmatmul.f32.gmra.mxu0 %v1451
        %v2649 = vpop.f32.mrf.mxu0
        %v2650 = vadd.f32 0.0, %v2649
        %2651 = vmatmul.f32.gmra.mxu0 %v1842
        %v2652 = vpop.f32.mrf.mxu0
        %v2653 = vadd.f32 0.0, %v2652
        %2654 = vmatmul.f32.gmra.mxu0 %v2233
        %v2655 = vpop.f32.mrf.mxu0
        %v2656 = vadd.f32 0.0, %v2655
        %2657 = vmatmul.f32.gmra.mxu0 %v2624
        %v2658 = vpop.f32.mrf.mxu0
        %v2659 = vadd.f32 0.0, %v2658
        %2660 = vdwg.mxu0
        %v2661 = vadd.f32 %v2612, %v2644
        %v2662 = vadd.f32 %v2613, %v2647
        %v2663 = vadd.f32 %v2614, %v2650
        %v2664 = vadd.f32 %v2615, %v2653
        %v2665 = vadd.f32 %v2616, %v2656
        %v2666 = vadd.f32 %v2617, %v2659
        %v2667 = vld [vmem:[%s2 + $0x4a0] sm:$0xff]
        %v2668 = vld [vmem:[%s2 + $0x4a8] sm:$0xff]
        %v2669 = vld [vmem:[%s2 + $0x4b0] sm:$0xff]
        %v2670 = vld [vmem:[%s2 + $0x4b8] sm:$0xff]
        %v2671 = vrot.slane %v699, 5
        %v2672 = vsel %vm1041, %v2280, %v2671
        %v2673 = vsel %vm729, %v2672, 0
        %2675 = vmatpush.msra.mxu0 0.0
        %2676 = vmatpush.msra.mxu0 0.0
        %2677 = vmatpush.msra.mxu0 0.0
        %2678 = vmatpush.msra.mxu0 0.0
        %2679 = vmatpush.msra.mxu0 0.0
        %2680 = vmatpush.msra.mxu0 0.0
        %2681 = vmatpush.msra.mxu0 0.0
        %2682 = vmatpush.msra.mxu0 0.0
        %2683 = vmatpush.msra.mxu0 0.0
        %2684 = vmatpush.msra.mxu0 0.0
        %2685 = vmatpush.msra.mxu0 0.0
        %2686 = vmatpush.msra.mxu0 0.0
        %2687 = vmatpush.msra.mxu0 %v2670
        %2688 = vmatpush.msra.mxu0 %v2669
        %2689 = vmatpush.msra.mxu0 %v2668
        %2690 = vmatpush.msra.mxu0 %v2667
        %2691 = vmatmul.f32.gmra.mxu0 %v1063
        %v2692 = vpop.f32.mrf.mxu0
        %v2693 = vadd.f32 0.0, %v2692
        %2694 = vmatmul.f32.gmra.mxu0 %v1065
        %v2695 = vpop.f32.mrf.mxu0
        %v2696 = vadd.f32 0.0, %v2695
        %2697 = vmatmul.f32.gmra.mxu0 %v1500
        %v2698 = vpop.f32.mrf.mxu0
        %v2699 = vadd.f32 0.0, %v2698
        %2700 = vmatmul.f32.gmra.mxu0 %v1891
        %v2701 = vpop.f32.mrf.mxu0
        %v2702 = vadd.f32 0.0, %v2701
        %2703 = vmatmul.f32.gmra.mxu0 %v2282
        %v2704 = vpop.f32.mrf.mxu0
        %v2705 = vadd.f32 0.0, %v2704
        %2706 = vmatmul.f32.gmra.mxu0 %v2673
        %v2707 = vpop.f32.mrf.mxu0
        %v2708 = vadd.f32 0.0, %v2707
        %2709 = vdwg.mxu0
        %v2710 = vadd.f32 %v2661, %v2693
        %v2711 = vadd.f32 %v2662, %v2696
        %v2712 = vadd.f32 %v2663, %v2699
        %v2713 = vadd.f32 %v2664, %v2702
        %v2714 = vadd.f32 %v2665, %v2705
        %v2715 = vadd.f32 %v2666, %v2708
        %v2716 = vld [vmem:[%s2 + $0x4c0] sm:$0xff]
        %v2717 = vld [vmem:[%s2 + $0x4c8] sm:$0xff]
        %v2718 = vld [vmem:[%s2 + $0x4d0] sm:$0xff]
        %v2719 = vld [vmem:[%s2 + $0x4d8] sm:$0xff]
        %v2720 = vrot.slane %v699, 6
        %v2721 = vsel %vm1112, %v2329, %v2720
        %v2722 = vsel %vm729, %v2721, 0
        %2724 = vmatpush.msra.mxu0 0.0
        %2725 = vmatpush.msra.mxu0 0.0
        %2726 = vmatpush.msra.mxu0 0.0
        %2727 = vmatpush.msra.mxu0 0.0
        %2728 = vmatpush.msra.mxu0 0.0
        %2729 = vmatpush.msra.mxu0 0.0
        %2730 = vmatpush.msra.mxu0 0.0
        %2731 = vmatpush.msra.mxu0 0.0
        %2732 = vmatpush.msra.mxu0 0.0
        %2733 = vmatpush.msra.mxu0 0.0
        %2734 = vmatpush.msra.mxu0 0.0
        %2735 = vmatpush.msra.mxu0 0.0
        %2736 = vmatpush.msra.mxu0 %v2719
        %2737 = vmatpush.msra.mxu0 %v2718
        %2738 = vmatpush.msra.mxu0 %v2717
        %2739 = vmatpush.msra.mxu0 %v2716
        %2740 = vmatmul.f32.gmra.mxu0 %v1134
        %v2741 = vpop.f32.mrf.mxu0
        %v2742 = vadd.f32 0.0, %v2741
        %2743 = vmatmul.f32.gmra.mxu0 %v1136
        %v2744 = vpop.f32.mrf.mxu0
        %v2745 = vadd.f32 0.0, %v2744
        %2746 = vmatmul.f32.gmra.mxu0 %v1549
        %v2747 = vpop.f32.mrf.mxu0
        %v2748 = vadd.f32 0.0, %v2747
        %2749 = vmatmul.f32.gmra.mxu0 %v1940
        %v2750 = vpop.f32.mrf.mxu0
        %v2751 = vadd.f32 0.0, %v2750
        %2752 = vmatmul.f32.gmra.mxu0 %v2331
        %v2753 = vpop.f32.mrf.mxu0
        %v2754 = vadd.f32 0.0, %v2753
        %2755 = vmatmul.f32.gmra.mxu0 %v2722
        %v2756 = vpop.f32.mrf.mxu0
        %v2757 = vadd.f32 0.0, %v2756
        %2758 = vdwg.mxu0
        %v2759 = vadd.f32 %v2710, %v2742
        %v2760 = vadd.f32 %v2711, %v2745
        %v2761 = vadd.f32 %v2712, %v2748
        %v2762 = vadd.f32 %v2713, %v2751
        %v2763 = vadd.f32 %v2714, %v2754
        %v2764 = vadd.f32 %v2715, %v2757
        %v2765 = vld [vmem:[%s3] sm:$0x1]
        %v2767 = vperm.slane %v2765, 0
        %v2769 = vadd.f32 %v2759, %v2767
        %v2770 = vadd.f32 %v2760, %v2767
        %v2771 = vadd.f32 %v2761, %v2767
        %v2772 = vadd.f32 %v2762, %v2767
        %v2773 = vadd.f32 %v2763, %v2767
        %v2774 = vadd.f32 %v2764, %v2767
        %v2775 = vmax.f32 %v2769, 0.0
        %v2776 = vmax.f32 %v2770, 0.0
        %v2777 = vmax.f32 %v2771, 0.0
        %v2778 = vmax.f32 %v2772, 0.0
        %v2779 = vmax.f32 %v2773, 0.0
        %v2780 = vmax.f32 %v2774, 0.0
        %2787 = vrot.lane.b32.xlu0 %v2775, 16
        %v2788 = vpop.permute.xlu0 %2787
        %2789 = vrot.lane.b32.xlu0 %v2776, 16
        %v2790 = vpop.permute.xlu0 %2789
        %2791 = vrot.lane.b32.xlu0 %v2777, 16
        %v2792 = vpop.permute.xlu0 %2791
        %2793 = vrot.lane.b32.xlu0 %v2778, 16
        %v2794 = vpop.permute.xlu0 %2793
        %2795 = vrot.lane.b32.xlu0 %v2779, 16
        %v2796 = vpop.permute.xlu0 %2795
        %2797 = vrot.lane.b32.xlu0 %v2780, 16
        %v2798 = vpop.permute.xlu0 %2797
        %vm2805 = vcmask 654464
        %2806 = vst.msk [vmem:[#allocation2 + $0x2] sm:$0xff] %vm2805, %v2788
        %2807 = vst.msk [vmem:[#allocation2 + $0xa] sm:$0xff] %vm2805, %v2790
        %2808 = vst.msk [vmem:[#allocation2 + $0x12] sm:$0xff] %vm2805, %v2792
        %2809 = vst.msk [vmem:[#allocation2 + $0x1a] sm:$0xff] %vm2805, %v2794
        %2810 = vst.msk [vmem:[#allocation2 + $0x22] sm:$0xff] %vm2805, %v2796
        %2811 = vst.msk [vmem:[#allocation2 + $0x2a] sm:$0xff] %vm2805, %v2798
        %v2812 = vld [vmem:[#allocation2] sm:$0xff]
        %v2813 = vld [vmem:[#allocation2 + $0x8] sm:$0xff]
        %v2814 = vld [vmem:[#allocation2 + $0x10] sm:$0xff]
        %v2815 = vld [vmem:[#allocation2 + $0x18] sm:$0xff]
        %v2816 = vld [vmem:[#allocation2 + $0x20] sm:$0xff]
        %v2817 = vld [vmem:[#allocation2 + $0x28] sm:$0xff]
        %v2818 = vld [vmem:[%s4] sm:$0x1]
        %v2819 = vperm.slane %v2818, 0
        %v2820 = vmul.f32 %v2812, %v2819
        %v2821 = vmul.f32 %v2813, %v2819
        %v2822 = vmul.f32 %v2814, %v2819
        %v2823 = vmul.f32 %v2815, %v2819
        %v2824 = vmul.f32 %v2816, %v2819
        %v2825 = vmul.f32 %v2817, %v2819
        %v2826 = vadd.f32 %v2820, 0.0
        %v2827 = vadd.f32 %v2821, 0.0
        %v2828 = vadd.f32 %v2822, 0.0
        %v2829 = vadd.f32 %v2823, 0.0
        %v2830 = vadd.f32 %v2824, 0.0
        %v2831 = vadd.f32 %v2825, 0.0
        %v2832 = vld [vmem:[%s4 + $0x1] sm:$0x1]
        %v2833 = vperm.slane %v2832, 0
        %2835 = vrot.lane.b32.xlu0 %v2833, 8
        %v2836 = vpop.permute.xlu0 %2835
        %v2838 = vmul.f32 %v2812, %v2836
        %v2839 = vmul.f32 %v2813, %v2836
        %v2840 = vmul.f32 %v2814, %v2836
        %v2841 = vmul.f32 %v2815, %v2836
        %v2842 = vmul.f32 %v2816, %v2836
        %v2843 = vmul.f32 %v2817, %v2836
        %2850 = vrot.lane.b32.xlu0 %v2838, 120
        %v2851 = vpop.permute.xlu0 %2850
        %2852 = vrot.lane.b32.xlu0 %v2839, 120
        %v2853 = vpop.permute.xlu0 %2852
        %2854 = vrot.lane.b32.xlu0 %v2840, 120
        %v2855 = vpop.permute.xlu0 %2854
        %2856 = vrot.lane.b32.xlu0 %v2841, 120
        %v2857 = vpop.permute.xlu0 %2856
        %2858 = vrot.lane.b32.xlu0 %v2842, 120
        %v2859 = vpop.permute.xlu0 %2858
        %2860 = vrot.lane.b32.xlu0 %v2843, 120
        %v2861 = vpop.permute.xlu0 %2860
        %v2868 = vadd.f32 %v2826, %v2851
        %v2869 = vadd.f32 %v2827, %v2853
        %v2870 = vadd.f32 %v2828, %v2855
        %v2871 = vadd.f32 %v2829, %v2857
        %v2872 = vadd.f32 %v2830, %v2859
        %v2873 = vadd.f32 %v2831, %v2861
        %v2874 = vld [vmem:[%s4 + $0x2] sm:$0x1]
        %v2875 = vperm.slane %v2874, 0
        %2877 = vrot.lane.b32.xlu0 %v2875, 16
        %v2878 = vpop.permute.xlu0 %2877
        %v2880 = vmul.f32 %v2812, %v2878
        %v2881 = vmul.f32 %v2813, %v2878
        %v2882 = vmul.f32 %v2814, %v2878
        %v2883 = vmul.f32 %v2815, %v2878
        %v2884 = vmul.f32 %v2816, %v2878
        %v2885 = vmul.f32 %v2817, %v2878
        %2892 = vrot.lane.b32.xlu0 %v2880, 112
        %v2893 = vpop.permute.xlu0 %2892
        %2894 = vrot.lane.b32.xlu0 %v2881, 112
        %v2895 = vpop.permute.xlu0 %2894
        %2896 = vrot.lane.b32.xlu0 %v2882, 112
        %v2897 = vpop.permute.xlu0 %2896
        %2898 = vrot.lane.b32.xlu0 %v2883, 112
        %v2899 = vpop.permute.xlu0 %2898
        %2900 = vrot.lane.b32.xlu0 %v2884, 112
        %v2901 = vpop.permute.xlu0 %2900
        %2902 = vrot.lane.b32.xlu0 %v2885, 112
        %v2903 = vpop.permute.xlu0 %2902
        %v2910 = vadd.f32 %v2868, %v2893
        %v2911 = vadd.f32 %v2869, %v2895
        %v2912 = vadd.f32 %v2870, %v2897
        %v2913 = vadd.f32 %v2871, %v2899
        %v2914 = vadd.f32 %v2872, %v2901
        %v2915 = vadd.f32 %v2873, %v2903
        %v2916 = vld [vmem:[%s4 + $0x3] sm:$0x1]
        %v2917 = vperm.slane %v2916, 0
        %2919 = vrot.lane.b32.xlu0 %v2917, 24
        %v2920 = vpop.permute.xlu0 %2919
        %v2922 = vmul.f32 %v2812, %v2920
        %v2923 = vmul.f32 %v2813, %v2920
        %v2924 = vmul.f32 %v2814, %v2920
        %v2925 = vmul.f32 %v2815, %v2920
        %v2926 = vmul.f32 %v2816, %v2920
        %v2927 = vmul.f32 %v2817, %v2920
        %2934 = vrot.lane.b32.xlu0 %v2922, 104
        %v2935 = vpop.permute.xlu0 %2934
        %2936 = vrot.lane.b32.xlu0 %v2923, 104
        %v2937 = vpop.permute.xlu0 %2936
        %2938 = vrot.lane.b32.xlu0 %v2924, 104
        %v2939 = vpop.permute.xlu0 %2938
        %2940 = vrot.lane.b32.xlu0 %v2925, 104
        %v2941 = vpop.permute.xlu0 %2940
        %2942 = vrot.lane.b32.xlu0 %v2926, 104
        %v2943 = vpop.permute.xlu0 %2942
        %2944 = vrot.lane.b32.xlu0 %v2927, 104
        %v2945 = vpop.permute.xlu0 %2944
        %v2952 = vadd.f32 %v2910, %v2935
        %v2953 = vadd.f32 %v2911, %v2937
        %v2954 = vadd.f32 %v2912, %v2939
        %v2955 = vadd.f32 %v2913, %v2941
        %v2956 = vadd.f32 %v2914, %v2943
        %v2957 = vadd.f32 %v2915, %v2945
        %v2958 = vld [vmem:[%s4 + $0x4] sm:$0x1]
        %v2959 = vperm.slane %v2958, 0
        %2961 = vrot.lane.b32.xlu0 %v2959, 32
        %v2962 = vpop.permute.xlu0 %2961
        %v2964 = vmul.f32 %v2812, %v2962
        %v2965 = vmul.f32 %v2813, %v2962
        %v2966 = vmul.f32 %v2814, %v2962
        %v2967 = vmul.f32 %v2815, %v2962
        %v2968 = vmul.f32 %v2816, %v2962
        %v2969 = vmul.f32 %v2817, %v2962
        %2976 = vrot.lane.b32.xlu0 %v2964, 96
        %v2977 = vpop.permute.xlu0 %2976
        %2978 = vrot.lane.b32.xlu0 %v2965, 96
        %v2979 = vpop.permute.xlu0 %2978
        %2980 = vrot.lane.b32.xlu0 %v2966, 96
        %v2981 = vpop.permute.xlu0 %2980
        %2982 = vrot.lane.b32.xlu0 %v2967, 96
        %v2983 = vpop.permute.xlu0 %2982
        %2984 = vrot.lane.b32.xlu0 %v2968, 96
        %v2985 = vpop.permute.xlu0 %2984
        %2986 = vrot.lane.b32.xlu0 %v2969, 96
        %v2987 = vpop.permute.xlu0 %2986
        %v2994 = vadd.f32 %v2952, %v2977
        %v2995 = vadd.f32 %v2953, %v2979
        %v2996 = vadd.f32 %v2954, %v2981
        %v2997 = vadd.f32 %v2955, %v2983
        %v2998 = vadd.f32 %v2956, %v2985
        %v2999 = vadd.f32 %v2957, %v2987
        %v3000 = vld [vmem:[#allocation2 + $0x1] sm:$0xff]
        %v3001 = vld [vmem:[#allocation2 + $0x9] sm:$0xff]
        %v3002 = vld [vmem:[#allocation2 + $0x11] sm:$0xff]
        %v3003 = vld [vmem:[#allocation2 + $0x19] sm:$0xff]
        %v3004 = vld [vmem:[#allocation2 + $0x21] sm:$0xff]
        %v3005 = vld [vmem:[#allocation2 + $0x29] sm:$0xff]
        %v3006 = vld [vmem:[%s4 + $0x5] sm:$0x1]
        %v3007 = vperm.slane %v3006, 0
        %v3008 = vmul.f32 %v3000, %v3007
        %v3009 = vmul.f32 %v3001, %v3007
        %v3010 = vmul.f32 %v3002, %v3007
        %v3011 = vmul.f32 %v3003, %v3007
        %v3012 = vmul.f32 %v3004, %v3007
        %v3013 = vmul.f32 %v3005, %v3007
        %v3014 = vadd.f32 %v2994, %v3008
        %v3015 = vadd.f32 %v2995, %v3009
        %v3016 = vadd.f32 %v2996, %v3010
        %v3017 = vadd.f32 %v2997, %v3011
        %v3018 = vadd.f32 %v2998, %v3012
        %v3019 = vadd.f32 %v2999, %v3013
        %v3020 = vld [vmem:[%s4 + $0x6] sm:$0x1]
        %v3021 = vperm.slane %v3020, 0
        %3023 = vrot.lane.b32.xlu0 %v3021, 8
        %v3024 = vpop.permute.xlu0 %3023
        %v3026 = vmul.f32 %v3000, %v3024
        %v3027 = vmul.f32 %v3001, %v3024
        %v3028 = vmul.f32 %v3002, %v3024
        %v3029 = vmul.f32 %v3003, %v3024
        %v3030 = vmul.f32 %v3004, %v3024
        %v3031 = vmul.f32 %v3005, %v3024
        %3038 = vrot.lane.b32.xlu0 %v3026, 120
        %v3039 = vpop.permute.xlu0 %3038
        %3040 = vrot.lane.b32.xlu0 %v3027, 120
        %v3041 = vpop.permute.xlu0 %3040
        %3042 = vrot.lane.b32.xlu0 %v3028, 120
        %v3043 = vpop.permute.xlu0 %3042
        %3044 = vrot.lane.b32.xlu0 %v3029, 120
        %v3045 = vpop.permute.xlu0 %3044
        %3046 = vrot.lane.b32.xlu0 %v3030, 120
        %v3047 = vpop.permute.xlu0 %3046
        %3048 = vrot.lane.b32.xlu0 %v3031, 120
        %v3049 = vpop.permute.xlu0 %3048
        %v3056 = vadd.f32 %v3014, %v3039
        %v3057 = vadd.f32 %v3015, %v3041
        %v3058 = vadd.f32 %v3016, %v3043
        %v3059 = vadd.f32 %v3017, %v3045
        %v3060 = vadd.f32 %v3018, %v3047
        %v3061 = vadd.f32 %v3019, %v3049
        %v3062 = vld [vmem:[%s4 + $0x7] sm:$0x1]
        %v3063 = vperm.slane %v3062, 0
        %3065 = vrot.lane.b32.xlu0 %v3063, 16
        %v3066 = vpop.permute.xlu0 %3065
        %v3068 = vmul.f32 %v3000, %v3066
        %v3069 = vmul.f32 %v3001, %v3066
        %v3070 = vmul.f32 %v3002, %v3066
        %v3071 = vmul.f32 %v3003, %v3066
        %v3072 = vmul.f32 %v3004, %v3066
        %v3073 = vmul.f32 %v3005, %v3066
        %3080 = vrot.lane.b32.xlu0 %v3068, 112
        %v3081 = vpop.permute.xlu0 %3080
        %3082 = vrot.lane.b32.xlu0 %v3069, 112
        %v3083 = vpop.permute.xlu0 %3082
        %3084 = vrot.lane.b32.xlu0 %v3070, 112
        %v3085 = vpop.permute.xlu0 %3084
        %3086 = vrot.lane.b32.xlu0 %v3071, 112
        %v3087 = vpop.permute.xlu0 %3086
        %3088 = vrot.lane.b32.xlu0 %v3072, 112
        %v3089 = vpop.permute.xlu0 %3088
        %3090 = vrot.lane.b32.xlu0 %v3073, 112
        %v3091 = vpop.permute.xlu0 %3090
        %v3098 = vadd.f32 %v3056, %v3081
        %v3099 = vadd.f32 %v3057, %v3083
        %v3100 = vadd.f32 %v3058, %v3085
        %v3101 = vadd.f32 %v3059, %v3087
        %v3102 = vadd.f32 %v3060, %v3089
        %v3103 = vadd.f32 %v3061, %v3091
        %v3104 = vld [vmem:[%s4 + $0x8] sm:$0x1]
        %v3105 = vperm.slane %v3104, 0
        %3107 = vrot.lane.b32.xlu0 %v3105, 24
        %v3108 = vpop.permute.xlu0 %3107
        %v3110 = vmul.f32 %v3000, %v3108
        %v3111 = vmul.f32 %v3001, %v3108
        %v3112 = vmul.f32 %v3002, %v3108
        %v3113 = vmul.f32 %v3003, %v3108
        %v3114 = vmul.f32 %v3004, %v3108
        %v3115 = vmul.f32 %v3005, %v3108
        %3122 = vrot.lane.b32.xlu0 %v3110, 104
        %v3123 = vpop.permute.xlu0 %3122
        %3124 = vrot.lane.b32.xlu0 %v3111, 104
        %v3125 = vpop.permute.xlu0 %3124
        %3126 = vrot.lane.b32.xlu0 %v3112, 104
        %v3127 = vpop.permute.xlu0 %3126
        %3128 = vrot.lane.b32.xlu0 %v3113, 104
        %v3129 = vpop.permute.xlu0 %3128
        %3130 = vrot.lane.b32.xlu0 %v3114, 104
        %v3131 = vpop.permute.xlu0 %3130
        %3132 = vrot.lane.b32.xlu0 %v3115, 104
        %v3133 = vpop.permute.xlu0 %3132
        %v3140 = vadd.f32 %v3098, %v3123
        %v3141 = vadd.f32 %v3099, %v3125
        %v3142 = vadd.f32 %v3100, %v3127
        %v3143 = vadd.f32 %v3101, %v3129
        %v3144 = vadd.f32 %v3102, %v3131
        %v3145 = vadd.f32 %v3103, %v3133
        %v3146 = vld [vmem:[%s4 + $0x9] sm:$0x1]
        %v3147 = vperm.slane %v3146, 0
        %3149 = vrot.lane.b32.xlu0 %v3147, 32
        %v3150 = vpop.permute.xlu0 %3149
        %v3152 = vmul.f32 %v3000, %v3150
        %v3153 = vmul.f32 %v3001, %v3150
        %v3154 = vmul.f32 %v3002, %v3150
        %v3155 = vmul.f32 %v3003, %v3150
        %v3156 = vmul.f32 %v3004, %v3150
        %v3157 = vmul.f32 %v3005, %v3150
        %3164 = vrot.lane.b32.xlu0 %v3152, 96
        %v3165 = vpop.permute.xlu0 %3164
        %3166 = vrot.lane.b32.xlu0 %v3153, 96
        %v3167 = vpop.permute.xlu0 %3166
        %3168 = vrot.lane.b32.xlu0 %v3154, 96
        %v3169 = vpop.permute.xlu0 %3168
        %3170 = vrot.lane.b32.xlu0 %v3155, 96
        %v3171 = vpop.permute.xlu0 %3170
        %3172 = vrot.lane.b32.xlu0 %v3156, 96
        %v3173 = vpop.permute.xlu0 %3172
        %3174 = vrot.lane.b32.xlu0 %v3157, 96
        %v3175 = vpop.permute.xlu0 %3174
        %v3182 = vadd.f32 %v3140, %v3165
        %v3183 = vadd.f32 %v3141, %v3167
        %v3184 = vadd.f32 %v3142, %v3169
        %v3185 = vadd.f32 %v3143, %v3171
        %v3186 = vadd.f32 %v3144, %v3173
        %v3187 = vadd.f32 %v3145, %v3175
        %v3188 = vld [vmem:[#allocation2 + $0x2] sm:$0xff]
        %v3189 = vld [vmem:[#allocation2 + $0xa] sm:$0xff]
        %v3190 = vld [vmem:[#allocation2 + $0x12] sm:$0xff]
        %v3191 = vld [vmem:[#allocation2 + $0x1a] sm:$0xff]
        %v3192 = vld [vmem:[#allocation2 + $0x22] sm:$0xff]
        %v3193 = vld [vmem:[#allocation2 + $0x2a] sm:$0xff]
        %v3194 = vld [vmem:[%s4 + $0xa] sm:$0x1]
        %v3195 = vperm.slane %v3194, 0
        %v3196 = vmul.f32 %v3188, %v3195
        %v3197 = vmul.f32 %v3189, %v3195
        %v3198 = vmul.f32 %v3190, %v3195
        %v3199 = vmul.f32 %v3191, %v3195
        %v3200 = vmul.f32 %v3192, %v3195
        %v3201 = vmul.f32 %v3193, %v3195
        %v3202 = vadd.f32 %v3182, %v3196
        %v3203 = vadd.f32 %v3183, %v3197
        %v3204 = vadd.f32 %v3184, %v3198
        %v3205 = vadd.f32 %v3185, %v3199
        %v3206 = vadd.f32 %v3186, %v3200
        %v3207 = vadd.f32 %v3187, %v3201
        %v3208 = vld [vmem:[%s4 + $0xb] sm:$0x1]
        %v3209 = vperm.slane %v3208, 0
        %3211 = vrot.lane.b32.xlu0 %v3209, 8
        %v3212 = vpop.permute.xlu0 %3211
        %v3214 = vmul.f32 %v3188, %v3212
        %v3215 = vmul.f32 %v3189, %v3212
        %v3216 = vmul.f32 %v3190, %v3212
        %v3217 = vmul.f32 %v3191, %v3212
        %v3218 = vmul.f32 %v3192, %v3212
        %v3219 = vmul.f32 %v3193, %v3212
        %3226 = vrot.lane.b32.xlu0 %v3214, 120
        %v3227 = vpop.permute.xlu0 %3226
        %3228 = vrot.lane.b32.xlu0 %v3215, 120
        %v3229 = vpop.permute.xlu0 %3228
        %3230 = vrot.lane.b32.xlu0 %v3216, 120
        %v3231 = vpop.permute.xlu0 %3230
        %3232 = vrot.lane.b32.xlu0 %v3217, 120
        %v3233 = vpop.permute.xlu0 %3232
        %3234 = vrot.lane.b32.xlu0 %v3218, 120
        %v3235 = vpop.permute.xlu0 %3234
        %3236 = vrot.lane.b32.xlu0 %v3219, 120
        %v3237 = vpop.permute.xlu0 %3236
        %v3244 = vadd.f32 %v3202, %v3227
        %v3245 = vadd.f32 %v3203, %v3229
        %v3246 = vadd.f32 %v3204, %v3231
        %v3247 = vadd.f32 %v3205, %v3233
        %v3248 = vadd.f32 %v3206, %v3235
        %v3249 = vadd.f32 %v3207, %v3237
        %v3250 = vld [vmem:[%s4 + $0xc] sm:$0x1]
        %v3251 = vperm.slane %v3250, 0
        %3253 = vrot.lane.b32.xlu0 %v3251, 16
        %v3254 = vpop.permute.xlu0 %3253
        %v3256 = vmul.f32 %v3188, %v3254
        %v3257 = vmul.f32 %v3189, %v3254
        %v3258 = vmul.f32 %v3190, %v3254
        %v3259 = vmul.f32 %v3191, %v3254
        %v3260 = vmul.f32 %v3192, %v3254
        %v3261 = vmul.f32 %v3193, %v3254
        %3268 = vrot.lane.b32.xlu0 %v3256, 112
        %v3269 = vpop.permute.xlu0 %3268
        %3270 = vrot.lane.b32.xlu0 %v3257, 112
        %v3271 = vpop.permute.xlu0 %3270
        %3272 = vrot.lane.b32.xlu0 %v3258, 112
        %v3273 = vpop.permute.xlu0 %3272
        %3274 = vrot.lane.b32.xlu0 %v3259, 112
        %v3275 = vpop.permute.xlu0 %3274
        %3276 = vrot.lane.b32.xlu0 %v3260, 112
        %v3277 = vpop.permute.xlu0 %3276
        %3278 = vrot.lane.b32.xlu0 %v3261, 112
        %v3279 = vpop.permute.xlu0 %3278
        %v3286 = vadd.f32 %v3244, %v3269
        %v3287 = vadd.f32 %v3245, %v3271
        %v3288 = vadd.f32 %v3246, %v3273
        %v3289 = vadd.f32 %v3247, %v3275
        %v3290 = vadd.f32 %v3248, %v3277
        %v3291 = vadd.f32 %v3249, %v3279
        %v3292 = vld [vmem:[%s4 + $0xd] sm:$0x1]
        %v3293 = vperm.slane %v3292, 0
        %3295 = vrot.lane.b32.xlu0 %v3293, 24
        %v3296 = vpop.permute.xlu0 %3295
        %v3298 = vmul.f32 %v3188, %v3296
        %v3299 = vmul.f32 %v3189, %v3296
        %v3300 = vmul.f32 %v3190, %v3296
        %v3301 = vmul.f32 %v3191, %v3296
        %v3302 = vmul.f32 %v3192, %v3296
        %v3303 = vmul.f32 %v3193, %v3296
        %3310 = vrot.lane.b32.xlu0 %v3298, 104
        %v3311 = vpop.permute.xlu0 %3310
        %3312 = vrot.lane.b32.xlu0 %v3299, 104
        %v3313 = vpop.permute.xlu0 %3312
        %3314 = vrot.lane.b32.xlu0 %v3300, 104
        %v3315 = vpop.permute.xlu0 %3314
        %3316 = vrot.lane.b32.xlu0 %v3301, 104
        %v3317 = vpop.permute.xlu0 %3316
        %3318 = vrot.lane.b32.xlu0 %v3302, 104
        %v3319 = vpop.permute.xlu0 %3318
        %3320 = vrot.lane.b32.xlu0 %v3303, 104
        %v3321 = vpop.permute.xlu0 %3320
        %v3328 = vadd.f32 %v3286, %v3311
        %v3329 = vadd.f32 %v3287, %v3313
        %v3330 = vadd.f32 %v3288, %v3315
        %v3331 = vadd.f32 %v3289, %v3317
        %v3332 = vadd.f32 %v3290, %v3319
        %v3333 = vadd.f32 %v3291, %v3321
        %v3334 = vld [vmem:[%s4 + $0xe] sm:$0x1]
        %v3335 = vperm.slane %v3334, 0
        %3337 = vrot.lane.b32.xlu0 %v3335, 32
        %v3338 = vpop.permute.xlu0 %3337
        %v3340 = vmul.f32 %v3188, %v3338
        %v3341 = vmul.f32 %v3189, %v3338
        %v3342 = vmul.f32 %v3190, %v3338
        %v3343 = vmul.f32 %v3191, %v3338
        %v3344 = vmul.f32 %v3192, %v3338
        %v3345 = vmul.f32 %v3193, %v3338
        %3352 = vrot.lane.b32.xlu0 %v3340, 96
        %v3353 = vpop.permute.xlu0 %3352
        %3354 = vrot.lane.b32.xlu0 %v3341, 96
        %v3355 = vpop.permute.xlu0 %3354
        %3356 = vrot.lane.b32.xlu0 %v3342, 96
        %v3357 = vpop.permute.xlu0 %3356
        %3358 = vrot.lane.b32.xlu0 %v3343, 96
        %v3359 = vpop.permute.xlu0 %3358
        %3360 = vrot.lane.b32.xlu0 %v3344, 96
        %v3361 = vpop.permute.xlu0 %3360
        %3362 = vrot.lane.b32.xlu0 %v3345, 96
        %v3363 = vpop.permute.xlu0 %3362
        %v3370 = vadd.f32 %v3328, %v3353
        %v3371 = vadd.f32 %v3329, %v3355
        %v3372 = vadd.f32 %v3330, %v3357
        %v3373 = vadd.f32 %v3331, %v3359
        %v3374 = vadd.f32 %v3332, %v3361
        %v3375 = vadd.f32 %v3333, %v3363
        %v3376 = vld [vmem:[#allocation2 + $0x3] sm:$0xff]
        %v3377 = vld [vmem:[#allocation2 + $0xb] sm:$0xff]
        %v3378 = vld [vmem:[#allocation2 + $0x13] sm:$0xff]
        %v3379 = vld [vmem:[#allocation2 + $0x1b] sm:$0xff]
        %v3380 = vld [vmem:[#allocation2 + $0x23] sm:$0xff]
        %v3381 = vld [vmem:[#allocation2 + $0x2b] sm:$0xff]
        %v3382 = vld [vmem:[%s4 + $0xf] sm:$0x1]
        %v3383 = vperm.slane %v3382, 0
        %v3384 = vmul.f32 %v3376, %v3383
        %v3385 = vmul.f32 %v3377, %v3383
        %v3386 = vmul.f32 %v3378, %v3383
        %v3387 = vmul.f32 %v3379, %v3383
        %v3388 = vmul.f32 %v3380, %v3383
        %v3389 = vmul.f32 %v3381, %v3383
        %v3390 = vadd.f32 %v3370, %v3384
        %v3391 = vadd.f32 %v3371, %v3385
        %v3392 = vadd.f32 %v3372, %v3386
        %v3393 = vadd.f32 %v3373, %v3387
        %v3394 = vadd.f32 %v3374, %v3388
        %v3395 = vadd.f32 %v3375, %v3389
        %v3396 = vld [vmem:[%s4 + $0x10] sm:$0x1]
        %v3397 = vperm.slane %v3396, 0
        %3399 = vrot.lane.b32.xlu0 %v3397, 8
        %v3400 = vpop.permute.xlu0 %3399
        %v3402 = vmul.f32 %v3376, %v3400
        %v3403 = vmul.f32 %v3377, %v3400
        %v3404 = vmul.f32 %v3378, %v3400
        %v3405 = vmul.f32 %v3379, %v3400
        %v3406 = vmul.f32 %v3380, %v3400
        %v3407 = vmul.f32 %v3381, %v3400
        %3414 = vrot.lane.b32.xlu0 %v3402, 120
        %v3415 = vpop.permute.xlu0 %3414
        %3416 = vrot.lane.b32.xlu0 %v3403, 120
        %v3417 = vpop.permute.xlu0 %3416
        %3418 = vrot.lane.b32.xlu0 %v3404, 120
        %v3419 = vpop.permute.xlu0 %3418
        %3420 = vrot.lane.b32.xlu0 %v3405, 120
        %v3421 = vpop.permute.xlu0 %3420
        %3422 = vrot.lane.b32.xlu0 %v3406, 120
        %v3423 = vpop.permute.xlu0 %3422
        %3424 = vrot.lane.b32.xlu0 %v3407, 120
        %v3425 = vpop.permute.xlu0 %3424
        %v3432 = vadd.f32 %v3390, %v3415
        %v3433 = vadd.f32 %v3391, %v3417
        %v3434 = vadd.f32 %v3392, %v3419
        %v3435 = vadd.f32 %v3393, %v3421
        %v3436 = vadd.f32 %v3394, %v3423
        %v3437 = vadd.f32 %v3395, %v3425
        %v3438 = vld [vmem:[%s4 + $0x11] sm:$0x1]
        %v3439 = vperm.slane %v3438, 0
        %3441 = vrot.lane.b32.xlu0 %v3439, 16
        %v3442 = vpop.permute.xlu0 %3441
        %v3444 = vmul.f32 %v3376, %v3442
        %v3445 = vmul.f32 %v3377, %v3442
        %v3446 = vmul.f32 %v3378, %v3442
        %v3447 = vmul.f32 %v3379, %v3442
        %v3448 = vmul.f32 %v3380, %v3442
        %v3449 = vmul.f32 %v3381, %v3442
        %3456 = vrot.lane.b32.xlu0 %v3444, 112
        %v3457 = vpop.permute.xlu0 %3456
        %3458 = vrot.lane.b32.xlu0 %v3445, 112
        %v3459 = vpop.permute.xlu0 %3458
        %3460 = vrot.lane.b32.xlu0 %v3446, 112
        %v3461 = vpop.permute.xlu0 %3460
        %3462 = vrot.lane.b32.xlu0 %v3447, 112
        %v3463 = vpop.permute.xlu0 %3462
        %3464 = vrot.lane.b32.xlu0 %v3448, 112
        %v3465 = vpop.permute.xlu0 %3464
        %3466 = vrot.lane.b32.xlu0 %v3449, 112
        %v3467 = vpop.permute.xlu0 %3466
        %v3474 = vadd.f32 %v3432, %v3457
        %v3475 = vadd.f32 %v3433, %v3459
        %v3476 = vadd.f32 %v3434, %v3461
        %v3477 = vadd.f32 %v3435, %v3463
        %v3478 = vadd.f32 %v3436, %v3465
        %v3479 = vadd.f32 %v3437, %v3467
        %v3480 = vld [vmem:[%s4 + $0x12] sm:$0x1]
        %v3481 = vperm.slane %v3480, 0
        %3483 = vrot.lane.b32.xlu0 %v3481, 24
        %v3484 = vpop.permute.xlu0 %3483
        %v3486 = vmul.f32 %v3376, %v3484
        %v3487 = vmul.f32 %v3377, %v3484
        %v3488 = vmul.f32 %v3378, %v3484
        %v3489 = vmul.f32 %v3379, %v3484
        %v3490 = vmul.f32 %v3380, %v3484
        %v3491 = vmul.f32 %v3381, %v3484
        %3498 = vrot.lane.b32.xlu0 %v3486, 104
        %v3499 = vpop.permute.xlu0 %3498
        %3500 = vrot.lane.b32.xlu0 %v3487, 104
        %v3501 = vpop.permute.xlu0 %3500
        %3502 = vrot.lane.b32.xlu0 %v3488, 104
        %v3503 = vpop.permute.xlu0 %3502
        %3504 = vrot.lane.b32.xlu0 %v3489, 104
        %v3505 = vpop.permute.xlu0 %3504
        %3506 = vrot.lane.b32.xlu0 %v3490, 104
        %v3507 = vpop.permute.xlu0 %3506
        %3508 = vrot.lane.b32.xlu0 %v3491, 104
        %v3509 = vpop.permute.xlu0 %3508
        %v3516 = vadd.f32 %v3474, %v3499
        %v3517 = vadd.f32 %v3475, %v3501
        %v3518 = vadd.f32 %v3476, %v3503
        %v3519 = vadd.f32 %v3477, %v3505
        %v3520 = vadd.f32 %v3478, %v3507
        %v3521 = vadd.f32 %v3479, %v3509
        %v3522 = vld [vmem:[%s4 + $0x13] sm:$0x1]
        %v3523 = vperm.slane %v3522, 0
        %3525 = vrot.lane.b32.xlu0 %v3523, 32
        %v3526 = vpop.permute.xlu0 %3525
        %v3528 = vmul.f32 %v3376, %v3526
        %v3529 = vmul.f32 %v3377, %v3526
        %v3530 = vmul.f32 %v3378, %v3526
        %v3531 = vmul.f32 %v3379, %v3526
        %v3532 = vmul.f32 %v3380, %v3526
        %v3533 = vmul.f32 %v3381, %v3526
        %3540 = vrot.lane.b32.xlu0 %v3528, 96
        %v3541 = vpop.permute.xlu0 %3540
        %3542 = vrot.lane.b32.xlu0 %v3529, 96
        %v3543 = vpop.permute.xlu0 %3542
        %3544 = vrot.lane.b32.xlu0 %v3530, 96
        %v3545 = vpop.permute.xlu0 %3544
        %3546 = vrot.lane.b32.xlu0 %v3531, 96
        %v3547 = vpop.permute.xlu0 %3546
        %3548 = vrot.lane.b32.xlu0 %v3532, 96
        %v3549 = vpop.permute.xlu0 %3548
        %3550 = vrot.lane.b32.xlu0 %v3533, 96
        %v3551 = vpop.permute.xlu0 %3550
        %v3558 = vadd.f32 %v3516, %v3541
        %v3559 = vadd.f32 %v3517, %v3543
        %v3560 = vadd.f32 %v3518, %v3545
        %v3561 = vadd.f32 %v3519, %v3547
        %v3562 = vadd.f32 %v3520, %v3549
        %v3563 = vadd.f32 %v3521, %v3551
        %v3564 = vld [vmem:[#allocation2 + $0x4] sm:$0xff]
        %v3565 = vld [vmem:[#allocation2 + $0xc] sm:$0xff]
        %v3566 = vld [vmem:[#allocation2 + $0x14] sm:$0xff]
        %v3567 = vld [vmem:[#allocation2 + $0x1c] sm:$0xff]
        %v3568 = vld [vmem:[#allocation2 + $0x24] sm:$0xff]
        %v3569 = vld [vmem:[#allocation2 + $0x2c] sm:$0xff]
        %v3570 = vld [vmem:[%s4 + $0x14] sm:$0x1]
        %v3571 = vperm.slane %v3570, 0
        %v3572 = vmul.f32 %v3564, %v3571
        %v3573 = vmul.f32 %v3565, %v3571
        %v3574 = vmul.f32 %v3566, %v3571
        %v3575 = vmul.f32 %v3567, %v3571
        %v3576 = vmul.f32 %v3568, %v3571
        %v3577 = vmul.f32 %v3569, %v3571
        %v3578 = vadd.f32 %v3558, %v3572
        %v3579 = vadd.f32 %v3559, %v3573
        %v3580 = vadd.f32 %v3560, %v3574
        %v3581 = vadd.f32 %v3561, %v3575
        %v3582 = vadd.f32 %v3562, %v3576
        %v3583 = vadd.f32 %v3563, %v3577
        %v3584 = vld [vmem:[%s4 + $0x15] sm:$0x1]
        %v3585 = vperm.slane %v3584, 0
        %3587 = vrot.lane.b32.xlu0 %v3585, 8
        %v3588 = vpop.permute.xlu0 %3587
        %v3590 = vmul.f32 %v3564, %v3588
        %v3591 = vmul.f32 %v3565, %v3588
        %v3592 = vmul.f32 %v3566, %v3588
        %v3593 = vmul.f32 %v3567, %v3588
        %v3594 = vmul.f32 %v3568, %v3588
        %v3595 = vmul.f32 %v3569, %v3588
        %3602 = vrot.lane.b32.xlu0 %v3590, 120
        %v3603 = vpop.permute.xlu0 %3602
        %3604 = vrot.lane.b32.xlu0 %v3591, 120
        %v3605 = vpop.permute.xlu0 %3604
        %3606 = vrot.lane.b32.xlu0 %v3592, 120
        %v3607 = vpop.permute.xlu0 %3606
        %3608 = vrot.lane.b32.xlu0 %v3593, 120
        %v3609 = vpop.permute.xlu0 %3608
        %3610 = vrot.lane.b32.xlu0 %v3594, 120
        %v3611 = vpop.permute.xlu0 %3610
        %3612 = vrot.lane.b32.xlu0 %v3595, 120
        %v3613 = vpop.permute.xlu0 %3612
        %v3620 = vadd.f32 %v3578, %v3603
        %v3621 = vadd.f32 %v3579, %v3605
        %v3622 = vadd.f32 %v3580, %v3607
        %v3623 = vadd.f32 %v3581, %v3609
        %v3624 = vadd.f32 %v3582, %v3611
        %v3625 = vadd.f32 %v3583, %v3613
        %v3626 = vld [vmem:[%s4 + $0x16] sm:$0x1]
        %v3627 = vperm.slane %v3626, 0
        %3629 = vrot.lane.b32.xlu0 %v3627, 16
        %v3630 = vpop.permute.xlu0 %3629
        %v3632 = vmul.f32 %v3564, %v3630
        %v3633 = vmul.f32 %v3565, %v3630
        %v3634 = vmul.f32 %v3566, %v3630
        %v3635 = vmul.f32 %v3567, %v3630
        %v3636 = vmul.f32 %v3568, %v3630
        %v3637 = vmul.f32 %v3569, %v3630
        %3644 = vrot.lane.b32.xlu0 %v3632, 112
        %v3645 = vpop.permute.xlu0 %3644
        %3646 = vrot.lane.b32.xlu0 %v3633, 112
        %v3647 = vpop.permute.xlu0 %3646
        %3648 = vrot.lane.b32.xlu0 %v3634, 112
        %v3649 = vpop.permute.xlu0 %3648
        %3650 = vrot.lane.b32.xlu0 %v3635, 112
        %v3651 = vpop.permute.xlu0 %3650
        %3652 = vrot.lane.b32.xlu0 %v3636, 112
        %v3653 = vpop.permute.xlu0 %3652
        %3654 = vrot.lane.b32.xlu0 %v3637, 112
        %v3655 = vpop.permute.xlu0 %3654
        %v3662 = vadd.f32 %v3620, %v3645
        %v3663 = vadd.f32 %v3621, %v3647
        %v3664 = vadd.f32 %v3622, %v3649
        %v3665 = vadd.f32 %v3623, %v3651
        %v3666 = vadd.f32 %v3624, %v3653
        %v3667 = vadd.f32 %v3625, %v3655
        %v3668 = vld [vmem:[%s4 + $0x17] sm:$0x1]
        %v3669 = vperm.slane %v3668, 0
        %3671 = vrot.lane.b32.xlu0 %v3669, 24
        %v3672 = vpop.permute.xlu0 %3671
        %v3674 = vmul.f32 %v3564, %v3672
        %v3675 = vmul.f32 %v3565, %v3672
        %v3676 = vmul.f32 %v3566, %v3672
        %v3677 = vmul.f32 %v3567, %v3672
        %v3678 = vmul.f32 %v3568, %v3672
        %v3679 = vmul.f32 %v3569, %v3672
        %3686 = vrot.lane.b32.xlu0 %v3674, 104
        %v3687 = vpop.permute.xlu0 %3686
        %3688 = vrot.lane.b32.xlu0 %v3675, 104
        %v3689 = vpop.permute.xlu0 %3688
        %3690 = vrot.lane.b32.xlu0 %v3676, 104
        %v3691 = vpop.permute.xlu0 %3690
        %3692 = vrot.lane.b32.xlu0 %v3677, 104
        %v3693 = vpop.permute.xlu0 %3692
        %3694 = vrot.lane.b32.xlu0 %v3678, 104
        %v3695 = vpop.permute.xlu0 %3694
        %3696 = vrot.lane.b32.xlu0 %v3679, 104
        %v3697 = vpop.permute.xlu0 %3696
        %v3704 = vadd.f32 %v3662, %v3687
        %v3705 = vadd.f32 %v3663, %v3689
        %v3706 = vadd.f32 %v3664, %v3691
        %v3707 = vadd.f32 %v3665, %v3693
        %v3708 = vadd.f32 %v3666, %v3695
        %v3709 = vadd.f32 %v3667, %v3697
        %v3710 = vld [vmem:[%s4 + $0x18] sm:$0x1]
        %v3711 = vperm.slane %v3710, 0
        %3713 = vrot.lane.b32.xlu0 %v3711, 32
        %v3714 = vpop.permute.xlu0 %3713
        %v3716 = vmul.f32 %v3564, %v3714
        %v3717 = vmul.f32 %v3565, %v3714
        %v3718 = vmul.f32 %v3566, %v3714
        %v3719 = vmul.f32 %v3567, %v3714
        %v3720 = vmul.f32 %v3568, %v3714
        %v3721 = vmul.f32 %v3569, %v3714
        %3728 = vrot.lane.b32.xlu0 %v3716, 96
        %v3729 = vpop.permute.xlu0 %3728
        %3730 = vrot.lane.b32.xlu0 %v3717, 96
        %v3731 = vpop.permute.xlu0 %3730
        %3732 = vrot.lane.b32.xlu0 %v3718, 96
        %v3733 = vpop.permute.xlu0 %3732
        %3734 = vrot.lane.b32.xlu0 %v3719, 96
        %v3735 = vpop.permute.xlu0 %3734
        %3736 = vrot.lane.b32.xlu0 %v3720, 96
        %v3737 = vpop.permute.xlu0 %3736
        %3738 = vrot.lane.b32.xlu0 %v3721, 96
        %v3739 = vpop.permute.xlu0 %3738
        %v3746 = vadd.f32 %v3704, %v3729
        %v3747 = vadd.f32 %v3705, %v3731
        %v3748 = vadd.f32 %v3706, %v3733
        %v3749 = vadd.f32 %v3707, %v3735
        %v3750 = vadd.f32 %v3708, %v3737
        %v3751 = vadd.f32 %v3709, %v3739
        %s3752 = sld [smem:[#allocation9]]
        %v3753 = vstv %s3752
        %vm3754 = vcmask 523264
        %v3756 = vsel %vm3754, %v3746, 0
        %v3759 = vsel %vm3754, %v3747, 0
        %v3762 = vsel %vm3754, %v3748, 0
        %v3765 = vsel %vm3754, %v3749, 0
        %v3768 = vsel %vm3754, %v3750, 0
        %v3771 = vsel %vm3754, %v3751, 0
        %3773 = vmatpush.msra.mxu0 0.0
        %3774 = vmatpush.msra.mxu0 0.0
        %3775 = vmatpush.msra.mxu0 0.0
        %3776 = vmatpush.msra.mxu0 0.0
        %3777 = vmatpush.msra.mxu0 0.0
        %3778 = vmatpush.msra.mxu0 0.0
        %3779 = vmatpush.msra.mxu0 0.0
        %3780 = vmatpush.msra.mxu0 0.0
        %3781 = vmatpush.msra.mxu0 %v688
        %3782 = vmatpush.msra.mxu0 %v687
        %3783 = vmatpush.msra.mxu0 %v686
        %3784 = vmatpush.msra.mxu0 %v685
        %3785 = vmatpush.msra.mxu0 %v684
        %3786 = vmatpush.msra.mxu0 %v683
        %3787 = vmatpush.msra.mxu0 %v682
        %3788 = vmatpush.msra.mxu0 %v681
        %3789 = vmatmul.f32.gmra.mxu0 %v3756
        %v3790 = vpop.f32.mrf.mxu0
        %v3791 = vadd.f32 %v3753, %v3790
        %3792 = vmatmul.f32.gmra.mxu0 %v3759
        %v3793 = vpop.f32.mrf.mxu0
        %v3794 = vadd.f32 %v3753, %v3793
        %3795 = vmatmul.f32.gmra.mxu0 %v3762
        %v3796 = vpop.f32.mrf.mxu0
        %v3797 = vadd.f32 %v3753, %v3796
        %3798 = vmatmul.f32.gmra.mxu0 %v3765
        %v3799 = vpop.f32.mrf.mxu0
        %v3800 = vadd.f32 %v3753, %v3799
        %3801 = vmatmul.f32.gmra.mxu0 %v3768
        %v3802 = vpop.f32.mrf.mxu0
        %v3803 = vadd.f32 %v3753, %v3802
        %3804 = vmatmul.f32.gmra.mxu0 %v3771
        %v3805 = vpop.f32.mrf.mxu0
        %v3806 = vadd.f32 %v3753, %v3805
        %3807 = vdwg.mxu0
        %v3808 = vxor.u32 %v3791, 2147483648
        %v3809 = vxor.u32 %v3794, 2147483648
        %v3810 = vxor.u32 %v3797, 2147483648
        %v3811 = vxor.u32 %v3800, 2147483648
        %v3812 = vxor.u32 %v3803, 2147483648
        %v3813 = vxor.u32 %v3806, 2147483648
        %v3814 = vmul.f32 %v3808, 1.442695
        %v3815 = vpow.pop %v3814
        %v3816 = vmul.f32 %v3809, 1.442695
        %v3817 = vpow.pop %v3816
        %v3818 = vmul.f32 %v3810, 1.442695
        %v3819 = vpow.pop %v3818
        %v3820 = vmul.f32 %v3811, 1.442695
        %v3821 = vpow.pop %v3820
        %v3822 = vmul.f32 %v3812, 1.442695
        %v3823 = vpow.pop %v3822
        %v3824 = vmul.f32 %v3813, 1.442695
        %v3825 = vpow.pop %v3824
        %v3826 = vadd.f32 %v3815, 1.0
        %v3827 = vadd.f32 %v3817, 1.0
        %v3828 = vadd.f32 %v3819, 1.0
        %v3829 = vadd.f32 %v3821, 1.0
        %v3830 = vadd.f32 %v3823, 1.0
        %v3831 = vadd.f32 %v3825, 1.0
        %v3832 = vrcp.pop %v3826
        %v3833 = vmul.f32 %v3826, %v3832
        %v3834 = vsub.f32 1.0, %v3833
        %v3835 = vmul.f32 %v3832, %v3834
        %v3836 = vadd.f32 %v3832, %v3835
        %vm3837 = vweird.f32 %v3826
        %vm3838 = vweird.f32 %v3832
        %vm3839 = vmor %vm3837, %vm3838
        %v3840 = vsel %vm3839, %v3832, %v3836
        %v3841 = vand.u32 2147483647, %v3826
        %vm3842 = vcmp.eq.f32.partialorder %v3841, 8.507059e+37
        %v3843 = vand.u32 %v3826, 2147483648
        %v3844 = vor.u32 1.1754944e-38, %v3843
        %v3845 = vsel %vm3842, %v3844, %v3840
        %v3846 = vmul.f32 1.0, %v3845
        %v3847 = vrcp.pop %v3827
        %v3848 = vmul.f32 %v3827, %v3847
        %v3849 = vsub.f32 1.0, %v3848
        %v3850 = vmul.f32 %v3847, %v3849
        %v3851 = vadd.f32 %v3847, %v3850
        %vm3852 = vweird.f32 %v3827
        %vm3853 = vweird.f32 %v3847
        %vm3854 = vmor %vm3852, %vm3853
        %v3855 = vsel %vm3854, %v3847, %v3851
        %v3856 = vand.u32 2147483647, %v3827
        %vm3857 = vcmp.eq.f32.partialorder %v3856, 8.507059e+37
        %v3858 = vand.u32 %v3827, 2147483648
        %v3859 = vor.u32 1.1754944e-38, %v3858
        %v3860 = vsel %vm3857, %v3859, %v3855
        %v3861 = vmul.f32 1.0, %v3860
        %v3862 = vrcp.pop %v3828
        %v3863 = vmul.f32 %v3828, %v3862
        %v3864 = vsub.f32 1.0, %v3863
        %v3865 = vmul.f32 %v3862, %v3864
        %v3866 = vadd.f32 %v3862, %v3865
        %vm3867 = vweird.f32 %v3828
        %vm3868 = vweird.f32 %v3862
        %vm3869 = vmor %vm3867, %vm3868
        %v3870 = vsel %vm3869, %v3862, %v3866
        %v3871 = vand.u32 2147483647, %v3828
        %vm3872 = vcmp.eq.f32.partialorder %v3871, 8.507059e+37
        %v3873 = vand.u32 %v3828, 2147483648
        %v3874 = vor.u32 1.1754944e-38, %v3873
        %v3875 = vsel %vm3872, %v3874, %v3870
        %v3876 = vmul.f32 1.0, %v3875
        %v3877 = vrcp.pop %v3829
        %v3878 = vmul.f32 %v3829, %v3877
        %v3879 = vsub.f32 1.0, %v3878
        %v3880 = vmul.f32 %v3877, %v3879
        %v3881 = vadd.f32 %v3877, %v3880
        %vm3882 = vweird.f32 %v3829
        %vm3883 = vweird.f32 %v3877
        %vm3884 = vmor %vm3882, %vm3883
        %v3885 = vsel %vm3884, %v3877, %v3881
        %v3886 = vand.u32 2147483647, %v3829
        %vm3887 = vcmp.eq.f32.partialorder %v3886, 8.507059e+37
        %v3888 = vand.u32 %v3829, 2147483648
        %v3889 = vor.u32 1.1754944e-38, %v3888
        %v3890 = vsel %vm3887, %v3889, %v3885
        %v3891 = vmul.f32 1.0, %v3890
        %v3892 = vrcp.pop %v3830
        %v3893 = vmul.f32 %v3830, %v3892
        %v3894 = vsub.f32 1.0, %v3893
        %v3895 = vmul.f32 %v3892, %v3894
        %v3896 = vadd.f32 %v3892, %v3895
        %vm3897 = vweird.f32 %v3830
        %vm3898 = vweird.f32 %v3892
        %vm3899 = vmor %vm3897, %vm3898
        %v3900 = vsel %vm3899, %v3892, %v3896
        %v3901 = vand.u32 2147483647, %v3830
        %vm3902 = vcmp.eq.f32.partialorder %v3901, 8.507059e+37
        %v3903 = vand.u32 %v3830, 2147483648
        %v3904 = vor.u32 1.1754944e-38, %v3903
        %v3905 = vsel %vm3902, %v3904, %v3900
        %v3906 = vmul.f32 1.0, %v3905
        %v3907 = vrcp.pop %v3831
        %v3908 = vmul.f32 %v3831, %v3907
        %v3909 = vsub.f32 1.0, %v3908
        %v3910 = vmul.f32 %v3907, %v3909
        %v3911 = vadd.f32 %v3907, %v3910
        %vm3912 = vweird.f32 %v3831
        %vm3913 = vweird.f32 %v3907
        %vm3914 = vmor %vm3912, %vm3913
        %v3915 = vsel %vm3914, %v3907, %v3911
        %v3916 = vand.u32 2147483647, %v3831
        %vm3917 = vcmp.eq.f32.partialorder %v3916, 8.507059e+37
        %v3918 = vand.u32 %v3831, 2147483648
        %v3919 = vor.u32 1.1754944e-38, %v3918
        %v3920 = vsel %vm3917, %v3919, %v3915
        %v3921 = vmul.f32 1.0, %v3920
        %vm3922 = vcmask 64512
        %3923 = vst.msk [vmem:[%s637] sm:$0xff] %vm3922, %v3846
        %3924 = vst.msk [vmem:[%s637 + $0x8] sm:$0xff] %vm3922, %v3861
        %3925 = vst.msk [vmem:[%s637 + $0x10] sm:$0xff] %vm3922, %v3876
        %3926 = vst.msk [vmem:[%s637 + $0x18] sm:$0xff] %vm3922, %v3891
        %3927 = vst.msk [vmem:[%s637 + $0x20] sm:$0xff] %vm3922, %v3906
        %3928 = vst.msk [vmem:[%s637 + $0x28] sm:$0xff] %vm3922, %v3921
        %3935 = vrot.lane.b32.xlu0 %v3846, 3
        %v3936 = vpop.permute.xlu0 %3935
        %3937 = vrot.lane.b32.xlu0 %v3861, 3
        %v3938 = vpop.permute.xlu0 %3937
        %3939 = vrot.lane.b32.xlu0 %v3876, 3
        %v3940 = vpop.permute.xlu0 %3939
        %3941 = vrot.lane.b32.xlu0 %v3891, 3
        %v3942 = vpop.permute.xlu0 %3941
        %3943 = vrot.lane.b32.xlu0 %v3906, 3
        %v3944 = vpop.permute.xlu0 %3943
        %3945 = vrot.lane.b32.xlu0 %v3921, 3
        %v3946 = vpop.permute.xlu0 %3945
        %vm3953 = vcmask 89112
        %3954 = vst.msk [vmem:[#allocation3 + $0x2] sm:$0xff] %vm3953, %v3936
        %3955 = vst.msk [vmem:[#allocation3 + $0xa] sm:$0xff] %vm3953, %v3938
        %3956 = vst.msk [vmem:[#allocation3 + $0x12] sm:$0xff] %vm3953, %v3940
        %3957 = vst.msk [vmem:[#allocation3 + $0x1a] sm:$0xff] %vm3953, %v3942
        %3958 = vst.msk [vmem:[#allocation3 + $0x22] sm:$0xff] %vm3953, %v3944
        %3959 = vst.msk [vmem:[#allocation3 + $0x2a] sm:$0xff] %vm3953, %v3946
        %v3960 = vld [vmem:[#allocation3] sm:$0xff]
        %v3961 = vld [vmem:[#allocation3 + $0x8] sm:$0xff]
        %v3962 = vld [vmem:[#allocation3 + $0x10] sm:$0xff]
        %v3963 = vld [vmem:[#allocation3 + $0x18] sm:$0xff]
        %v3964 = vld [vmem:[#allocation3 + $0x20] sm:$0xff]
        %v3965 = vld [vmem:[#allocation3 + $0x28] sm:$0xff]
        %v3966 = vld [vmem:[#allocation3 + $0x30] sm:$0xf]
        %v3967 = vld [vmem:[%s5] sm:$0xff]
        %v3968 = vld [vmem:[%s5 + $0x8] sm:$0xff]
        %vm3969 = vcmask 424960
        %v3971 = vsel %vm3969, %v3967, 0
        %v3974 = vsel %vm3969, %v3968, 0
        %v3977 = vsel %vm970, %v3966, 0
        %3979 = vmatpush.msra.mxu0 0.0
        %3980 = vmatpush.msra.mxu0 0.0
        %3981 = vmatpush.msra.mxu0 0.0
        %3982 = vmatpush.msra.mxu0 0.0
        %3983 = vmatpush.msra.mxu0 0.0
        %3984 = vmatpush.msra.mxu0 0.0
        %3985 = vmatpush.msra.mxu0 0.0
        %3986 = vmatpush.msra.mxu0 0.0
        %3987 = vmatpush.msra.mxu0 0.0
        %3988 = vmatpush.msra.mxu0 %v3977
        %3989 = vmatpush.msra.mxu0 %v3965
        %3990 = vmatpush.msra.mxu0 %v3964
        %3991 = vmatpush.msra.mxu0 %v3963
        %3992 = vmatpush.msra.mxu0 %v3962
        %3993 = vmatpush.msra.mxu0 %v3961
        %3994 = vmatpush.msra.mxu0 %v3960
        %3995 = vmatmul.f32.gmra.mxu0 %v3971
        %v3996 = vpop.f32.mrf.mxu0
        %v3997 = vadd.f32 0.0, %v3996
        %3998 = vmatmul.f32.gmra.mxu0 %v3974
        %v3999 = vpop.f32.mrf.mxu0
        %v4000 = vadd.f32 0.0, %v3999
        %4001 = vdwg.mxu0
        %v4002 = vld [vmem:[%s6] sm:$0xff]
        %v4003 = vld [vmem:[%s6 + $0x8] sm:$0xff]
        %v4004 = vld [vmem:[%s5 + $0x10] sm:$0xff]
        %v4005 = vld [vmem:[%s5 + $0x18] sm:$0xff]
        %v4007 = vsel %vm3969, %v4004, 0
        %v4010 = vsel %vm3969, %v4005, 0
        %4012 = vmatpush.msra.mxu0 0.0
        %4013 = vmatpush.msra.mxu0 0.0
        %4014 = vmatpush.msra.mxu0 0.0
        %4015 = vmatpush.msra.mxu0 0.0
        %4016 = vmatpush.msra.mxu0 0.0
        %4017 = vmatpush.msra.mxu0 0.0
        %4018 = vmatpush.msra.mxu0 0.0
        %4019 = vmatpush.msra.mxu0 0.0
        %4020 = vmatpush.msra.mxu0 0.0
        %4021 = vmatpush.msra.mxu0 %v3977
        %4022 = vmatpush.msra.mxu0 %v3965
        %4023 = vmatpush.msra.mxu0 %v3964
        %4024 = vmatpush.msra.mxu0 %v3963
        %4025 = vmatpush.msra.mxu0 %v3962
        %4026 = vmatpush.msra.mxu0 %v3961
        %4027 = vmatpush.msra.mxu0 %v3960
        %4028 = vmatmul.f32.gmra.mxu0 %v4007
        %v4029 = vpop.f32.mrf.mxu0
        %v4030 = vadd.f32 0.0, %v4029
        %4031 = vmatmul.f32.gmra.mxu0 %v4010
        %v4032 = vpop.f32.mrf.mxu0
        %v4033 = vadd.f32 0.0, %v4032
        %4034 = vdwg.mxu0
        %v4035 = vld [vmem:[%s6 + $0x10] sm:$0xff]
        %v4036 = vld [vmem:[%s6 + $0x18] sm:$0xff]
        %v4038 = vsel %vm657, %v4030, 0
        %v4041 = vsel %vm657, %v4033, 0
        %4043 = vmatpush.msra.mxu0 0.0
        %4044 = vmatpush.msra.mxu0 0.0
        %4045 = vmatpush.msra.mxu0 0.0
        %4046 = vmatpush.msra.mxu0 0.0
        %4047 = vmatpush.msra.mxu0 0.0
        %4048 = vmatpush.msra.mxu0 0.0
        %4049 = vmatpush.msra.mxu0 0.0
        %4050 = vmatpush.msra.mxu0 0.0
        %4051 = vmatpush.msra.mxu0 0.0
        %4052 = vmatpush.msra.mxu0 0.0
        %4053 = vmatpush.msra.mxu0 0.0
        %4054 = vmatpush.msra.mxu0 0.0
        %4055 = vmatpush.msra.mxu0 0.0
        %4056 = vmatpush.msra.mxu0 0.0
        %4057 = vmatpush.msra.mxu0 %v4036
        %4058 = vmatpush.msra.mxu0 %v4035
        %4059 = vmatmul.f32.gmra.mxu0 %v4038
        %v4060 = vpop.f32.mrf.mxu0
        %v4061 = vadd.f32 0.0, %v4060
        %4062 = vmatmul.f32.gmra.mxu0 %v4041
        %v4063 = vpop.f32.mrf.mxu0
        %v4064 = vadd.f32 0.0, %v4063
        %4065 = vdwg.mxu0
        %v4067 = vsel %vm657, %v3997, 0
        %v4070 = vsel %vm657, %v4000, 0
        %4072 = vmatpush.msra.mxu0 0.0
        %4073 = vmatpush.msra.mxu0 0.0
        %4074 = vmatpush.msra.mxu0 0.0
        %4075 = vmatpush.msra.mxu0 0.0
        %4076 = vmatpush.msra.mxu0 0.0
        %4077 = vmatpush.msra.mxu0 0.0
        %4078 = vmatpush.msra.mxu0 0.0
        %4079 = vmatpush.msra.mxu0 0.0
        %4080 = vmatpush.msra.mxu0 0.0
        %4081 = vmatpush.msra.mxu0 0.0
        %4082 = vmatpush.msra.mxu0 0.0
        %4083 = vmatpush.msra.mxu0 0.0
        %4084 = vmatpush.msra.mxu0 0.0
        %4085 = vmatpush.msra.mxu0 0.0
        %4086 = vmatpush.msra.mxu0 %v4003
        %4087 = vmatpush.msra.mxu0 %v4002
        %4088 = vmatmul.f32.gmra.mxu0 %v4067
        %v4089 = vpop.f32.mrf.mxu0
        %v4090 = vadd.f32 %v4061, %v4089
        %4091 = vmatmul.f32.gmra.mxu0 %v4070
        %v4092 = vpop.f32.mrf.mxu0
        %v4093 = vadd.f32 %v4064, %v4092
        %4094 = vdwg.mxu0
        %v4095 = vld [vmem:[%s5 + $0x20] sm:$0xff]
        %v4096 = vld [vmem:[%s5 + $0x28] sm:$0xff]
        %v4098 = vsel %vm3969, %v4095, 0
        %v4101 = vsel %vm3969, %v4096, 0
        %4103 = vmatpush.msra.mxu0 0.0
        %4104 = vmatpush.msra.mxu0 0.0
        %4105 = vmatpush.msra.mxu0 0.0
        %4106 = vmatpush.msra.mxu0 0.0
        %4107 = vmatpush.msra.mxu0 0.0
        %4108 = vmatpush.msra.mxu0 0.0
        %4109 = vmatpush.msra.mxu0 0.0
        %4110 = vmatpush.msra.mxu0 0.0
        %4111 = vmatpush.msra.mxu0 0.0
        %4112 = vmatpush.msra.mxu0 %v3977
        %4113 = vmatpush.msra.mxu0 %v3965
        %4114 = vmatpush.msra.mxu0 %v3964
        %4115 = vmatpush.msra.mxu0 %v3963
        %4116 = vmatpush.msra.mxu0 %v3962
        %4117 = vmatpush.msra.mxu0 %v3961
        %4118 = vmatpush.msra.mxu0 %v3960
        %4119 = vmatmul.f32.gmra.mxu0 %v4098
        %v4120 = vpop.f32.mrf.mxu0
        %v4121 = vadd.f32 0.0, %v4120
        %4122 = vmatmul.f32.gmra.mxu0 %v4101
        %v4123 = vpop.f32.mrf.mxu0
        %v4124 = vadd.f32 0.0, %v4123
        %4125 = vdwg.mxu0
        %v4126 = vld [vmem:[%s6 + $0x20] sm:$0xff]
        %v4127 = vld [vmem:[%s6 + $0x28] sm:$0xff]
        %v4129 = vsel %vm657, %v4121, 0
        %v4132 = vsel %vm657, %v4124, 0
        %4134 = vmatpush.msra.mxu0 0.0
        %4135 = vmatpush.msra.mxu0 0.0
        %4136 = vmatpush.msra.mxu0 0.0
        %4137 = vmatpush.msra.mxu0 0.0
        %4138 = vmatpush.msra.mxu0 0.0
        %4139 = vmatpush.msra.mxu0 0.0
        %4140 = vmatpush.msra.mxu0 0.0
        %4141 = vmatpush.msra.mxu0 0.0
        %4142 = vmatpush.msra.mxu0 0.0
        %4143 = vmatpush.msra.mxu0 0.0
        %4144 = vmatpush.msra.mxu0 0.0
        %4145 = vmatpush.msra.mxu0 0.0
        %4146 = vmatpush.msra.mxu0 0.0
        %4147 = vmatpush.msra.mxu0 0.0
        %4148 = vmatpush.msra.mxu0 %v4127
        %4149 = vmatpush.msra.mxu0 %v4126
        %4150 = vmatmul.f32.gmra.mxu0 %v4129
        %v4151 = vpop.f32.mrf.mxu0
        %v4152 = vadd.f32 0.0, %v4151
        %4153 = vmatmul.f32.gmra.mxu0 %v4132
        %v4154 = vpop.f32.mrf.mxu0
        %v4155 = vadd.f32 0.0, %v4154
        %4156 = vdwg.mxu0
        %v4157 = vadd.f32 %v4090, %v4152
        %v4158 = vadd.f32 %v4093, %v4155
        %v4159 = vld [vmem:[%s5 + $0x30] sm:$0xff]
        %v4160 = vld [vmem:[%s5 + $0x38] sm:$0xff]
        %v4162 = vsel %vm3969, %v4159, 0
        %v4165 = vsel %vm3969, %v4160, 0
        %4167 = vmatpush.msra.mxu0 0.0
        %4168 = vmatpush.msra.mxu0 0.0
        %4169 = vmatpush.msra.mxu0 0.0
        %4170 = vmatpush.msra.mxu0 0.0
        %4171 = vmatpush.msra.mxu0 0.0
        %4172 = vmatpush.msra.mxu0 0.0
        %4173 = vmatpush.msra.mxu0 0.0
        %4174 = vmatpush.msra.mxu0 0.0
        %4175 = vmatpush.msra.mxu0 0.0
        %4176 = vmatpush.msra.mxu0 %v3977
        %4177 = vmatpush.msra.mxu0 %v3965
        %4178 = vmatpush.msra.mxu0 %v3964
        %4179 = vmatpush.msra.mxu0 %v3963
        %4180 = vmatpush.msra.mxu0 %v3962
        %4181 = vmatpush.msra.mxu0 %v3961
        %4182 = vmatpush.msra.mxu0 %v3960
        %4183 = vmatmul.f32.gmra.mxu0 %v4162
        %v4184 = vpop.f32.mrf.mxu0
        %v4185 = vadd.f32 0.0, %v4184
        %4186 = vmatmul.f32.gmra.mxu0 %v4165
        %v4187 = vpop.f32.mrf.mxu0
        %v4188 = vadd.f32 0.0, %v4187
        %4189 = vdwg.mxu0
        %v4190 = vld [vmem:[%s6 + $0x30] sm:$0xff]
        %v4191 = vld [vmem:[%s6 + $0x38] sm:$0xff]
        %v4193 = vsel %vm657, %v4185, 0
        %v4196 = vsel %vm657, %v4188, 0
        %4198 = vmatpush.msra.mxu0 0.0
        %4199 = vmatpush.msra.mxu0 0.0
        %4200 = vmatpush.msra.mxu0 0.0
        %4201 = vmatpush.msra.mxu0 0.0
        %4202 = vmatpush.msra.mxu0 0.0
        %4203 = vmatpush.msra.mxu0 0.0
        %4204 = vmatpush.msra.mxu0 0.0
        %4205 = vmatpush.msra.mxu0 0.0
        %4206 = vmatpush.msra.mxu0 0.0
        %4207 = vmatpush.msra.mxu0 0.0
        %4208 = vmatpush.msra.mxu0 0.0
        %4209 = vmatpush.msra.mxu0 0.0
        %4210 = vmatpush.msra.mxu0 0.0
        %4211 = vmatpush.msra.mxu0 0.0
        %4212 = vmatpush.msra.mxu0 %v4191
        %4213 = vmatpush.msra.mxu0 %v4190
        %4214 = vmatmul.f32.gmra.mxu0 %v4193
        %v4215 = vpop.f32.mrf.mxu0
        %v4216 = vadd.f32 0.0, %v4215
        %4217 = vmatmul.f32.gmra.mxu0 %v4196
        %v4218 = vpop.f32.mrf.mxu0
        %v4219 = vadd.f32 0.0, %v4218
        %4220 = vdwg.mxu0
        %v4221 = vadd.f32 %v4157, %v4216
        %v4222 = vadd.f32 %v4158, %v4219
        %v4223 = vld [vmem:[%s5 + $0x40] sm:$0xff]
        %v4224 = vld [vmem:[%s5 + $0x48] sm:$0xff]
        %v4226 = vsel %vm3969, %v4223, 0
        %v4229 = vsel %vm3969, %v4224, 0
        %4231 = vmatpush.msra.mxu0 0.0
        %4232 = vmatpush.msra.mxu0 0.0
        %4233 = vmatpush.msra.mxu0 0.0
        %4234 = vmatpush.msra.mxu0 0.0
        %4235 = vmatpush.msra.mxu0 0.0
        %4236 = vmatpush.msra.mxu0 0.0
        %4237 = vmatpush.msra.mxu0 0.0
        %4238 = vmatpush.msra.mxu0 0.0
        %4239 = vmatpush.msra.mxu0 0.0
        %4240 = vmatpush.msra.mxu0 %v3977
        %4241 = vmatpush.msra.mxu0 %v3965
        %4242 = vmatpush.msra.mxu0 %v3964
        %4243 = vmatpush.msra.mxu0 %v3963
        %4244 = vmatpush.msra.mxu0 %v3962
        %4245 = vmatpush.msra.mxu0 %v3961
        %4246 = vmatpush.msra.mxu0 %v3960
        %4247 = vmatmul.f32.gmra.mxu0 %v4226
        %v4248 = vpop.f32.mrf.mxu0
        %v4249 = vadd.f32 0.0, %v4248
        %4250 = vmatmul.f32.gmra.mxu0 %v4229
        %v4251 = vpop.f32.mrf.mxu0
        %v4252 = vadd.f32 0.0, %v4251
        %4253 = vdwg.mxu0
        %v4254 = vld [vmem:[%s6 + $0x40] sm:$0xff]
        %v4255 = vld [vmem:[%s6 + $0x48] sm:$0xff]
        %v4257 = vsel %vm657, %v4249, 0
        %v4260 = vsel %vm657, %v4252, 0
        %4262 = vmatpush.msra.mxu0 0.0
        %4263 = vmatpush.msra.mxu0 0.0
        %4264 = vmatpush.msra.mxu0 0.0
        %4265 = vmatpush.msra.mxu0 0.0
        %4266 = vmatpush.msra.mxu0 0.0
        %4267 = vmatpush.msra.mxu0 0.0
        %4268 = vmatpush.msra.mxu0 0.0
        %4269 = vmatpush.msra.mxu0 0.0
        %4270 = vmatpush.msra.mxu0 0.0
        %4271 = vmatpush.msra.mxu0 0.0
        %4272 = vmatpush.msra.mxu0 0.0
        %4273 = vmatpush.msra.mxu0 0.0
        %4274 = vmatpush.msra.mxu0 0.0
        %4275 = vmatpush.msra.mxu0 0.0
        %4276 = vmatpush.msra.mxu0 %v4255
        %4277 = vmatpush.msra.mxu0 %v4254
        %4278 = vmatmul.f32.gmra.mxu0 %v4257
        %v4279 = vpop.f32.mrf.mxu0
        %v4280 = vadd.f32 0.0, %v4279
        %4281 = vmatmul.f32.gmra.mxu0 %v4260
        %v4282 = vpop.f32.mrf.mxu0
        %v4283 = vadd.f32 0.0, %v4282
        %4284 = vdwg.mxu0
        %v4285 = vadd.f32 %v4221, %v4280
        %v4286 = vadd.f32 %v4222, %v4283
        %v4287 = vld [vmem:[%s5 + $0x50] sm:$0xff]
        %v4288 = vld [vmem:[%s5 + $0x58] sm:$0xff]
        %v4290 = vsel %vm3969, %v4287, 0
        %v4293 = vsel %vm3969, %v4288, 0
        %4295 = vmatpush.msra.mxu0 0.0
        %4296 = vmatpush.msra.mxu0 0.0
        %4297 = vmatpush.msra.mxu0 0.0
        %4298 = vmatpush.msra.mxu0 0.0
        %4299 = vmatpush.msra.mxu0 0.0
        %4300 = vmatpush.msra.mxu0 0.0
        %4301 = vmatpush.msra.mxu0 0.0
        %4302 = vmatpush.msra.mxu0 0.0
        %4303 = vmatpush.msra.mxu0 0.0
        %4304 = vmatpush.msra.mxu0 %v3977
        %4305 = vmatpush.msra.mxu0 %v3965
        %4306 = vmatpush.msra.mxu0 %v3964
        %4307 = vmatpush.msra.mxu0 %v3963
        %4308 = vmatpush.msra.mxu0 %v3962
        %4309 = vmatpush.msra.mxu0 %v3961
        %4310 = vmatpush.msra.mxu0 %v3960
        %4311 = vmatmul.f32.gmra.mxu0 %v4290
        %v4312 = vpop.f32.mrf.mxu0
        %v4313 = vadd.f32 0.0, %v4312
        %4314 = vmatmul.f32.gmra.mxu0 %v4293
        %v4315 = vpop.f32.mrf.mxu0
        %v4316 = vadd.f32 0.0, %v4315
        %4317 = vdwg.mxu0
        %v4318 = vld [vmem:[%s6 + $0x50] sm:$0xff]
        %v4319 = vld [vmem:[%s6 + $0x58] sm:$0xff]
        %v4321 = vsel %vm657, %v4313, 0
        %v4324 = vsel %vm657, %v4316, 0
        %4326 = vmatpush.msra.mxu0 0.0
        %4327 = vmatpush.msra.mxu0 0.0
        %4328 = vmatpush.msra.mxu0 0.0
        %4329 = vmatpush.msra.mxu0 0.0
        %4330 = vmatpush.msra.mxu0 0.0
        %4331 = vmatpush.msra.mxu0 0.0
        %4332 = vmatpush.msra.mxu0 0.0
        %4333 = vmatpush.msra.mxu0 0.0
        %4334 = vmatpush.msra.mxu0 0.0
        %4335 = vmatpush.msra.mxu0 0.0
        %4336 = vmatpush.msra.mxu0 0.0
        %4337 = vmatpush.msra.mxu0 0.0
        %4338 = vmatpush.msra.mxu0 0.0
        %4339 = vmatpush.msra.mxu0 0.0
        %4340 = vmatpush.msra.mxu0 %v4319
        %4341 = vmatpush.msra.mxu0 %v4318
        %4342 = vmatmul.f32.gmra.mxu0 %v4321
        %v4343 = vpop.f32.mrf.mxu0
        %v4344 = vadd.f32 0.0, %v4343
        %4345 = vmatmul.f32.gmra.mxu0 %v4324
        %v4346 = vpop.f32.mrf.mxu0
        %v4347 = vadd.f32 0.0, %v4346
        %4348 = vdwg.mxu0
        %v4349 = vadd.f32 %v4285, %v4344
        %v4350 = vadd.f32 %v4286, %v4347
        %v4351 = vld [vmem:[%s5 + $0x60] sm:$0xff]
        %v4352 = vld [vmem:[%s5 + $0x68] sm:$0xff]
        %v4354 = vsel %vm3969, %v4351, 0
        %v4357 = vsel %vm3969, %v4352, 0
        %4359 = vmatpush.msra.mxu0 0.0
        %4360 = vmatpush.msra.mxu0 0.0
        %4361 = vmatpush.msra.mxu0 0.0
        %4362 = vmatpush.msra.mxu0 0.0
        %4363 = vmatpush.msra.mxu0 0.0
        %4364 = vmatpush.msra.mxu0 0.0
        %4365 = vmatpush.msra.mxu0 0.0
        %4366 = vmatpush.msra.mxu0 0.0
        %4367 = vmatpush.msra.mxu0 0.0
        %4368 = vmatpush.msra.mxu0 %v3977
        %4369 = vmatpush.msra.mxu0 %v3965
        %4370 = vmatpush.msra.mxu0 %v3964
        %4371 = vmatpush.msra.mxu0 %v3963
        %4372 = vmatpush.msra.mxu0 %v3962
        %4373 = vmatpush.msra.mxu0 %v3961
        %4374 = vmatpush.msra.mxu0 %v3960
        %4375 = vmatmul.f32.gmra.mxu0 %v4354
        %v4376 = vpop.f32.mrf.mxu0
        %v4377 = vadd.f32 0.0, %v4376
        %4378 = vmatmul.f32.gmra.mxu0 %v4357
        %v4379 = vpop.f32.mrf.mxu0
        %v4380 = vadd.f32 0.0, %v4379
        %4381 = vdwg.mxu0
        %v4382 = vld [vmem:[%s6 + $0x60] sm:$0xff]
        %v4383 = vld [vmem:[%s6 + $0x68] sm:$0xff]
        %v4385 = vsel %vm657, %v4377, 0
        %v4388 = vsel %vm657, %v4380, 0
        %4390 = vmatpush.msra.mxu0 0.0
        %4391 = vmatpush.msra.mxu0 0.0
        %4392 = vmatpush.msra.mxu0 0.0
        %4393 = vmatpush.msra.mxu0 0.0
        %4394 = vmatpush.msra.mxu0 0.0
        %4395 = vmatpush.msra.mxu0 0.0
        %4396 = vmatpush.msra.mxu0 0.0
        %4397 = vmatpush.msra.mxu0 0.0
        %4398 = vmatpush.msra.mxu0 0.0
        %4399 = vmatpush.msra.mxu0 0.0
        %4400 = vmatpush.msra.mxu0 0.0
        %4401 = vmatpush.msra.mxu0 0.0
        %4402 = vmatpush.msra.mxu0 0.0
        %4403 = vmatpush.msra.mxu0 0.0
        %4404 = vmatpush.msra.mxu0 %v4383
        %4405 = vmatpush.msra.mxu0 %v4382
        %4406 = vmatmul.f32.gmra.mxu0 %v4385
        %v4407 = vpop.f32.mrf.mxu0
        %v4408 = vadd.f32 0.0, %v4407
        %4409 = vmatmul.f32.gmra.mxu0 %v4388
        %v4410 = vpop.f32.mrf.mxu0
        %v4411 = vadd.f32 0.0, %v4410
        %4412 = vdwg.mxu0
        %v4413 = vadd.f32 %v4349, %v4408
        %v4414 = vadd.f32 %v4350, %v4411
        %v4415 = vld [vmem:[%s7] sm:$0x1]
        %v4417 = vperm.slane %v4415, 0
        %v4419 = vadd.f32 %v4413, %v4417
        %v4420 = vadd.f32 %v4414, %v4417
        %v4421 = vmax.f32 %v4419, 0.0
        %v4422 = vmax.f32 %v4420, 0.0
        %4425 = vrot.lane.b32.xlu0 %v4421, 24
        %v4426 = vpop.permute.xlu0 %4425
        %4427 = vrot.lane.b32.xlu0 %v4422, 24
        %v4428 = vpop.permute.xlu0 %4427
        %vm4431 = vcmask 720064
        %4432 = vst.msk [vmem:[#allocation4 + $0x1] sm:$0xff] %vm4431, %v4426
        %4433 = vst.msk [vmem:[#allocation4 + $0x9] sm:$0xff] %vm4431, %v4428
        %v4434 = vld [vmem:[#allocation4] sm:$0xff]
        %v4435 = vld [vmem:[#allocation4 + $0x8] sm:$0xff]
        %v4436 = vld [vmem:[%s8] sm:$0x1]
        %v4437 = vperm.slane %v4436, 0
        %v4438 = vmul.f32 %v4434, %v4437
        %v4439 = vmul.f32 %v4435, %v4437
        %v4440 = vadd.f32 %v4438, 0.0
        %v4441 = vadd.f32 %v4439, 0.0
        %v4442 = vld [vmem:[%s8 + $0x1] sm:$0x1]
        %v4443 = vperm.slane %v4442, 0
        %4445 = vrot.lane.b32.xlu0 %v4443, 8
        %v4446 = vpop.permute.xlu0 %4445
        %v4448 = vmul.f32 %v4434, %v4446
        %v4449 = vmul.f32 %v4435, %v4446
        %4452 = vrot.lane.b32.xlu0 %v4448, 120
        %v4453 = vpop.permute.xlu0 %4452
        %4454 = vrot.lane.b32.xlu0 %v4449, 120
        %v4455 = vpop.permute.xlu0 %4454
        %v4458 = vadd.f32 %v4440, %v4453
        %v4459 = vadd.f32 %v4441, %v4455
        %v4460 = vld [vmem:[%s8 + $0x2] sm:$0x1]
        %v4461 = vperm.slane %v4460, 0
        %4463 = vrot.lane.b32.xlu0 %v4461, 16
        %v4464 = vpop.permute.xlu0 %4463
        %v4466 = vmul.f32 %v4434, %v4464
        %v4467 = vmul.f32 %v4435, %v4464
        %4470 = vrot.lane.b32.xlu0 %v4466, 112
        %v4471 = vpop.permute.xlu0 %4470
        %4472 = vrot.lane.b32.xlu0 %v4467, 112
        %v4473 = vpop.permute.xlu0 %4472
        %v4476 = vadd.f32 %v4458, %v4471
        %v4477 = vadd.f32 %v4459, %v4473
        %v4478 = vld [vmem:[%s8 + $0x3] sm:$0x1]
        %v4479 = vperm.slane %v4478, 0
        %4481 = vrot.lane.b32.xlu0 %v4479, 24
        %v4482 = vpop.permute.xlu0 %4481
        %v4484 = vmul.f32 %v4434, %v4482
        %v4485 = vmul.f32 %v4435, %v4482
        %4488 = vrot.lane.b32.xlu0 %v4484, 104
        %v4489 = vpop.permute.xlu0 %4488
        %4490 = vrot.lane.b32.xlu0 %v4485, 104
        %v4491 = vpop.permute.xlu0 %4490
        %v4494 = vadd.f32 %v4476, %v4489
        %v4495 = vadd.f32 %v4477, %v4491
        %v4496 = vld [vmem:[%s8 + $0x4] sm:$0x1]
        %v4497 = vperm.slane %v4496, 0
        %4499 = vrot.lane.b32.xlu0 %v4497, 32
        %v4500 = vpop.permute.xlu0 %4499
        %v4502 = vmul.f32 %v4434, %v4500
        %v4503 = vmul.f32 %v4435, %v4500
        %4506 = vrot.lane.b32.xlu0 %v4502, 96
        %v4507 = vpop.permute.xlu0 %4506
        %4508 = vrot.lane.b32.xlu0 %v4503, 96
        %v4509 = vpop.permute.xlu0 %4508
        %v4512 = vadd.f32 %v4494, %v4507
        %v4513 = vadd.f32 %v4495, %v4509
        %v4514 = vld [vmem:[%s8 + $0x5] sm:$0x1]
        %v4515 = vperm.slane %v4514, 0
        %4517 = vrot.lane.b32.xlu0 %v4515, 40
        %v4518 = vpop.permute.xlu0 %4517
        %v4520 = vmul.f32 %v4434, %v4518
        %v4521 = vmul.f32 %v4435, %v4518
        %4524 = vrot.lane.b32.xlu0 %v4520, 88
        %v4525 = vpop.permute.xlu0 %4524
        %4526 = vrot.lane.b32.xlu0 %v4521, 88
        %v4527 = vpop.permute.xlu0 %4526
        %v4530 = vadd.f32 %v4512, %v4525
        %v4531 = vadd.f32 %v4513, %v4527
        %v4532 = vld [vmem:[%s8 + $0x6] sm:$0x1]
        %v4533 = vperm.slane %v4532, 0
        %4535 = vrot.lane.b32.xlu0 %v4533, 48
        %v4536 = vpop.permute.xlu0 %4535
        %v4538 = vmul.f32 %v4434, %v4536
        %v4539 = vmul.f32 %v4435, %v4536
        %4542 = vrot.lane.b32.xlu0 %v4538, 80
        %v4543 = vpop.permute.xlu0 %4542
        %4544 = vrot.lane.b32.xlu0 %v4539, 80
        %v4545 = vpop.permute.xlu0 %4544
        %v4548 = vadd.f32 %v4530, %v4543
        %v4549 = vadd.f32 %v4531, %v4545
        %v4550 = vld [vmem:[#allocation4 + $0x1] sm:$0xff]
        %v4551 = vld [vmem:[#allocation4 + $0x9] sm:$0xff]
        %v4552 = vld [vmem:[%s8 + $0x7] sm:$0x1]
        %v4553 = vperm.slane %v4552, 0
        %v4554 = vmul.f32 %v4550, %v4553
        %v4555 = vmul.f32 %v4551, %v4553
        %v4556 = vadd.f32 %v4548, %v4554
        %v4557 = vadd.f32 %v4549, %v4555
        %v4558 = vld [vmem:[%s8 + $0x8] sm:$0x1]
        %v4559 = vperm.slane %v4558, 0
        %4561 = vrot.lane.b32.xlu0 %v4559, 8
        %v4562 = vpop.permute.xlu0 %4561
        %v4564 = vmul.f32 %v4550, %v4562
        %v4565 = vmul.f32 %v4551, %v4562
        %4568 = vrot.lane.b32.xlu0 %v4564, 120
        %v4569 = vpop.permute.xlu0 %4568
        %4570 = vrot.lane.b32.xlu0 %v4565, 120
        %v4571 = vpop.permute.xlu0 %4570
        %v4574 = vadd.f32 %v4556, %v4569
        %v4575 = vadd.f32 %v4557, %v4571
        %v4576 = vld [vmem:[%s8 + $0x9] sm:$0x1]
        %v4577 = vperm.slane %v4576, 0
        %4579 = vrot.lane.b32.xlu0 %v4577, 16
        %v4580 = vpop.permute.xlu0 %4579
        %v4582 = vmul.f32 %v4550, %v4580
        %v4583 = vmul.f32 %v4551, %v4580
        %4586 = vrot.lane.b32.xlu0 %v4582, 112
        %v4587 = vpop.permute.xlu0 %4586
        %4588 = vrot.lane.b32.xlu0 %v4583, 112
        %v4589 = vpop.permute.xlu0 %4588
        %v4592 = vadd.f32 %v4574, %v4587
        %v4593 = vadd.f32 %v4575, %v4589
        %v4594 = vld [vmem:[%s8 + $0xa] sm:$0x1]
        %v4595 = vperm.slane %v4594, 0
        %4597 = vrot.lane.b32.xlu0 %v4595, 24
        %v4598 = vpop.permute.xlu0 %4597
        %v4600 = vmul.f32 %v4550, %v4598
        %v4601 = vmul.f32 %v4551, %v4598
        %4604 = vrot.lane.b32.xlu0 %v4600, 104
        %v4605 = vpop.permute.xlu0 %4604
        %4606 = vrot.lane.b32.xlu0 %v4601, 104
        %v4607 = vpop.permute.xlu0 %4606
        %v4610 = vadd.f32 %v4592, %v4605
        %v4611 = vadd.f32 %v4593, %v4607
        %v4612 = vld [vmem:[%s8 + $0xb] sm:$0x1]
        %v4613 = vperm.slane %v4612, 0
        %4615 = vrot.lane.b32.xlu0 %v4613, 32
        %v4616 = vpop.permute.xlu0 %4615
        %v4618 = vmul.f32 %v4550, %v4616
        %v4619 = vmul.f32 %v4551, %v4616
        %4622 = vrot.lane.b32.xlu0 %v4618, 96
        %v4623 = vpop.permute.xlu0 %4622
        %4624 = vrot.lane.b32.xlu0 %v4619, 96
        %v4625 = vpop.permute.xlu0 %4624
        %v4628 = vadd.f32 %v4610, %v4623
        %v4629 = vadd.f32 %v4611, %v4625
        %v4630 = vld [vmem:[%s8 + $0xc] sm:$0x1]
        %v4631 = vperm.slane %v4630, 0
        %4633 = vrot.lane.b32.xlu0 %v4631, 40
        %v4634 = vpop.permute.xlu0 %4633
        %v4636 = vmul.f32 %v4550, %v4634
        %v4637 = vmul.f32 %v4551, %v4634
        %4640 = vrot.lane.b32.xlu0 %v4636, 88
        %v4641 = vpop.permute.xlu0 %4640
        %4642 = vrot.lane.b32.xlu0 %v4637, 88
        %v4643 = vpop.permute.xlu0 %4642
        %v4646 = vadd.f32 %v4628, %v4641
        %v4647 = vadd.f32 %v4629, %v4643
        %v4648 = vld [vmem:[%s8 + $0xd] sm:$0x1]
        %v4649 = vperm.slane %v4648, 0
        %4651 = vrot.lane.b32.xlu0 %v4649, 48
        %v4652 = vpop.permute.xlu0 %4651
        %v4654 = vmul.f32 %v4550, %v4652
        %v4655 = vmul.f32 %v4551, %v4652
        %4658 = vrot.lane.b32.xlu0 %v4654, 80
        %v4659 = vpop.permute.xlu0 %4658
        %4660 = vrot.lane.b32.xlu0 %v4655, 80
        %v4661 = vpop.permute.xlu0 %4660
        %v4664 = vadd.f32 %v4646, %v4659
        %v4665 = vadd.f32 %v4647, %v4661
        %v4666 = vld [vmem:[#allocation4 + $0x2] sm:$0xff]
        %v4667 = vld [vmem:[#allocation4 + $0xa] sm:$0xff]
        %v4668 = vld [vmem:[%s8 + $0xe] sm:$0x1]
        %v4669 = vperm.slane %v4668, 0
        %v4670 = vmul.f32 %v4666, %v4669
        %v4671 = vmul.f32 %v4667, %v4669
        %v4672 = vadd.f32 %v4664, %v4670
        %v4673 = vadd.f32 %v4665, %v4671
        %v4674 = vld [vmem:[%s8 + $0xf] sm:$0x1]
        %v4675 = vperm.slane %v4674, 0
        %4677 = vrot.lane.b32.xlu0 %v4675, 8
        %v4678 = vpop.permute.xlu0 %4677
        %v4680 = vmul.f32 %v4666, %v4678
        %v4681 = vmul.f32 %v4667, %v4678
        %4684 = vrot.lane.b32.xlu0 %v4680, 120
        %v4685 = vpop.permute.xlu0 %4684
        %4686 = vrot.lane.b32.xlu0 %v4681, 120
        %v4687 = vpop.permute.xlu0 %4686
        %v4690 = vadd.f32 %v4672, %v4685
        %v4691 = vadd.f32 %v4673, %v4687
        %v4692 = vld [vmem:[%s8 + $0x10] sm:$0x1]
        %v4693 = vperm.slane %v4692, 0
        %4695 = vrot.lane.b32.xlu0 %v4693, 16
        %v4696 = vpop.permute.xlu0 %4695
        %v4698 = vmul.f32 %v4666, %v4696
        %v4699 = vmul.f32 %v4667, %v4696
        %4702 = vrot.lane.b32.xlu0 %v4698, 112
        %v4703 = vpop.permute.xlu0 %4702
        %4704 = vrot.lane.b32.xlu0 %v4699, 112
        %v4705 = vpop.permute.xlu0 %4704
        %v4708 = vadd.f32 %v4690, %v4703
        %v4709 = vadd.f32 %v4691, %v4705
        %v4710 = vld [vmem:[%s8 + $0x11] sm:$0x1]
        %v4711 = vperm.slane %v4710, 0
        %4713 = vrot.lane.b32.xlu0 %v4711, 24
        %v4714 = vpop.permute.xlu0 %4713
        %v4716 = vmul.f32 %v4666, %v4714
        %v4717 = vmul.f32 %v4667, %v4714
        %4720 = vrot.lane.b32.xlu0 %v4716, 104
        %v4721 = vpop.permute.xlu0 %4720
        %4722 = vrot.lane.b32.xlu0 %v4717, 104
        %v4723 = vpop.permute.xlu0 %4722
        %v4726 = vadd.f32 %v4708, %v4721
        %v4727 = vadd.f32 %v4709, %v4723
        %v4728 = vld [vmem:[%s8 + $0x12] sm:$0x1]
        %v4729 = vperm.slane %v4728, 0
        %4731 = vrot.lane.b32.xlu0 %v4729, 32
        %v4732 = vpop.permute.xlu0 %4731
        %v4734 = vmul.f32 %v4666, %v4732
        %v4735 = vmul.f32 %v4667, %v4732
        %4738 = vrot.lane.b32.xlu0 %v4734, 96
        %v4739 = vpop.permute.xlu0 %4738
        %4740 = vrot.lane.b32.xlu0 %v4735, 96
        %v4741 = vpop.permute.xlu0 %4740
        %v4744 = vadd.f32 %v4726, %v4739
        %v4745 = vadd.f32 %v4727, %v4741
        %v4746 = vld [vmem:[%s8 + $0x13] sm:$0x1]
        %v4747 = vperm.slane %v4746, 0
        %4749 = vrot.lane.b32.xlu0 %v4747, 40
        %v4750 = vpop.permute.xlu0 %4749
        %v4752 = vmul.f32 %v4666, %v4750
        %v4753 = vmul.f32 %v4667, %v4750
        %4756 = vrot.lane.b32.xlu0 %v4752, 88
        %v4757 = vpop.permute.xlu0 %4756
        %4758 = vrot.lane.b32.xlu0 %v4753, 88
        %v4759 = vpop.permute.xlu0 %4758
        %v4762 = vadd.f32 %v4744, %v4757
        %v4763 = vadd.f32 %v4745, %v4759
        %v4764 = vld [vmem:[%s8 + $0x14] sm:$0x1]
        %v4765 = vperm.slane %v4764, 0
        %4767 = vrot.lane.b32.xlu0 %v4765, 48
        %v4768 = vpop.permute.xlu0 %4767
        %v4770 = vmul.f32 %v4666, %v4768
        %v4771 = vmul.f32 %v4667, %v4768
        %4774 = vrot.lane.b32.xlu0 %v4770, 80
        %v4775 = vpop.permute.xlu0 %4774
        %4776 = vrot.lane.b32.xlu0 %v4771, 80
        %v4777 = vpop.permute.xlu0 %4776
        %v4780 = vadd.f32 %v4762, %v4775
        %v4781 = vadd.f32 %v4763, %v4777
        %s4782 = sld [smem:[#allocation9 + $0x1]]
        %v4783 = vstv %s4782
        %v4785 = vsel %vm3754, %v4780, 0
        %v4788 = vsel %vm3754, %v4781, 0
        %4790 = vmatpush.msra.mxu0 0.0
        %4791 = vmatpush.msra.mxu0 0.0
        %4792 = vmatpush.msra.mxu0 0.0
        %4793 = vmatpush.msra.mxu0 0.0
        %4794 = vmatpush.msra.mxu0 0.0
        %4795 = vmatpush.msra.mxu0 0.0
        %4796 = vmatpush.msra.mxu0 0.0
        %4797 = vmatpush.msra.mxu0 0.0
        %4798 = vmatpush.msra.mxu0 %v688
        %4799 = vmatpush.msra.mxu0 %v687
        %4800 = vmatpush.msra.mxu0 %v686
        %4801 = vmatpush.msra.mxu0 %v685
        %4802 = vmatpush.msra.mxu0 %v684
        %4803 = vmatpush.msra.mxu0 %v683
        %4804 = vmatpush.msra.mxu0 %v682
        %4805 = vmatpush.msra.mxu0 %v681
        %4806 = vmatmul.f32.gmra.mxu0 %v4785
        %v4807 = vpop.f32.mrf.mxu0
        %v4808 = vadd.f32 %v4783, %v4807
        %4809 = vmatmul.f32.gmra.mxu0 %v4788
        %v4810 = vpop.f32.mrf.mxu0
        %v4811 = vadd.f32 %v4783, %v4810
        %4812 = vdwg.mxu0
        %v4813 = vxor.u32 %v4808, 2147483648
        %v4814 = vxor.u32 %v4811, 2147483648
        %v4815 = vmul.f32 %v4813, 1.442695
        %v4816 = vpow.pop %v4815
        %v4817 = vmul.f32 %v4814, 1.442695
        %v4818 = vpow.pop %v4817
        %v4819 = vadd.f32 %v4816, 1.0
        %v4820 = vadd.f32 %v4818, 1.0
        %v4821 = vrcp.pop %v4819
        %v4822 = vmul.f32 %v4819, %v4821
        %v4823 = vsub.f32 1.0, %v4822
        %v4824 = vmul.f32 %v4821, %v4823
        %v4825 = vadd.f32 %v4821, %v4824
        %vm4826 = vweird.f32 %v4819
        %vm4827 = vweird.f32 %v4821
        %vm4828 = vmor %vm4826, %vm4827
        %v4829 = vsel %vm4828, %v4821, %v4825
        %v4830 = vand.u32 2147483647, %v4819
        %vm4831 = vcmp.eq.f32.partialorder %v4830, 8.507059e+37
        %v4832 = vand.u32 %v4819, 2147483648
        %v4833 = vor.u32 1.1754944e-38, %v4832
        %v4834 = vsel %vm4831, %v4833, %v4829
        %v4835 = vmul.f32 1.0, %v4834
        %v4836 = vrcp.pop %v4820
        %v4837 = vmul.f32 %v4820, %v4836
        %v4838 = vsub.f32 1.0, %v4837
        %v4839 = vmul.f32 %v4836, %v4838
        %v4840 = vadd.f32 %v4836, %v4839
        %vm4841 = vweird.f32 %v4820
        %vm4842 = vweird.f32 %v4836
        %vm4843 = vmor %vm4841, %vm4842
        %v4844 = vsel %vm4843, %v4836, %v4840
        %v4845 = vand.u32 2147483647, %v4820
        %vm4846 = vcmp.eq.f32.partialorder %v4845, 8.507059e+37
        %v4847 = vand.u32 %v4820, 2147483648
        %v4848 = vor.u32 1.1754944e-38, %v4847
        %v4849 = vsel %vm4846, %v4848, %v4844
        %v4850 = vmul.f32 1.0, %v4849
        %4851 = vst.msk [vmem:[%s642] sm:$0xff] %vm3922, %v4835
        %4852 = vst.msk [vmem:[%s642 + $0x8] sm:$0xff] %vm3922, %v4850
        %v4853 = vld [vmem:[%s632] sm:$0xff]
        %v4854 = vld [vmem:[%s632 + $0x8] sm:$0xff]
        %v4855 = vld [vmem:[%s632 + $0x10] sm:$0xff]
        %v4856 = vld [vmem:[%s632 + $0x18] sm:$0xff]
        %v4857 = vld [vmem:[%s632 + $0x20] sm:$0xff]
        %v4858 = vld [vmem:[%s632 + $0x28] sm:$0xff]
        %v4859 = vld [vmem:[%s632 + $0x30] sm:$0x3]
        %v4860 = vld [vmem:[%s9] sm:$0xff]
        %v4861 = vld [vmem:[%s9 + $0x8] sm:$0xff]
        %vm4862 = vcmask 408576
        %v4864 = vsel %vm4862, %v4860, 0
        %v4867 = vsel %vm4862, %v4861, 0
        %v4870 = vsel %vm1112, %v4859, 0
        %4872 = vmatpush.msra.mxu0 0.0
        %4873 = vmatpush.msra.mxu0 0.0
        %4874 = vmatpush.msra.mxu0 0.0
        %4875 = vmatpush.msra.mxu0 0.0
        %4876 = vmatpush.msra.mxu0 0.0
        %4877 = vmatpush.msra.mxu0 0.0
        %4878 = vmatpush.msra.mxu0 0.0
        %4879 = vmatpush.msra.mxu0 0.0
        %4880 = vmatpush.msra.mxu0 0.0
        %4881 = vmatpush.msra.mxu0 %v4870
        %4882 = vmatpush.msra.mxu0 %v4858
        %4883 = vmatpush.msra.mxu0 %v4857
        %4884 = vmatpush.msra.mxu0 %v4856
        %4885 = vmatpush.msra.mxu0 %v4855
        %4886 = vmatpush.msra.mxu0 %v4854
        %4887 = vmatpush.msra.mxu0 %v4853
        %4888 = vmatmul.f32.gmra.mxu0 %v4864
        %v4889 = vpop.f32.mrf.mxu0
        %v4890 = vadd.f32 0.0, %v4889
        %4891 = vmatmul.f32.gmra.mxu0 %v4867
        %v4892 = vpop.f32.mrf.mxu0
        %v4893 = vadd.f32 0.0, %v4892
        %4894 = vdwg.mxu0
        %v4895 = vld [vmem:[%s10] sm:$0xff]
        %v4896 = vld [vmem:[%s10 + $0x8] sm:$0xff]
        %v4897 = vld [vmem:[%s10 + $0x10] sm:$0xff]
        %v4898 = vld [vmem:[%s10 + $0x18] sm:$0xff]
        %v4899 = vld [vmem:[%s10 + $0x20] sm:$0xff]
        %v4900 = vld [vmem:[%s10 + $0x28] sm:$0xff]
        %v4901 = vld [vmem:[%s9 + $0x10] sm:$0xff]
        %v4902 = vld [vmem:[%s9 + $0x18] sm:$0xff]
        %v4904 = vsel %vm4862, %v4901, 0
        %v4907 = vsel %vm4862, %v4902, 0
        %4909 = vmatpush.msra.mxu0 0.0
        %4910 = vmatpush.msra.mxu0 0.0
        %4911 = vmatpush.msra.mxu0 0.0
        %4912 = vmatpush.msra.mxu0 0.0
        %4913 = vmatpush.msra.mxu0 0.0
        %4914 = vmatpush.msra.mxu0 0.0
        %4915 = vmatpush.msra.mxu0 0.0
        %4916 = vmatpush.msra.mxu0 0.0
        %4917 = vmatpush.msra.mxu0 0.0
        %4918 = vmatpush.msra.mxu0 %v4870
        %4919 = vmatpush.msra.mxu0 %v4858
        %4920 = vmatpush.msra.mxu0 %v4857
        %4921 = vmatpush.msra.mxu0 %v4856
        %4922 = vmatpush.msra.mxu0 %v4855
        %4923 = vmatpush.msra.mxu0 %v4854
        %4924 = vmatpush.msra.mxu0 %v4853
        %4925 = vmatmul.f32.gmra.mxu0 %v4904
        %v4926 = vpop.f32.mrf.mxu0
        %v4927 = vadd.f32 0.0, %v4926
        %4928 = vmatmul.f32.gmra.mxu0 %v4907
        %v4929 = vpop.f32.mrf.mxu0
        %v4930 = vadd.f32 0.0, %v4929
        %4931 = vdwg.mxu0
        %v4932 = vld [vmem:[%s10 + $0x30] sm:$0xff]
        %v4933 = vld [vmem:[%s10 + $0x38] sm:$0xff]
        %v4934 = vld [vmem:[%s10 + $0x40] sm:$0xff]
        %v4935 = vld [vmem:[%s10 + $0x48] sm:$0xff]
        %v4936 = vld [vmem:[%s10 + $0x50] sm:$0xff]
        %v4937 = vld [vmem:[%s10 + $0x58] sm:$0xff]
        %vm4938 = vcmask 392192
        %v4940 = vsel %vm4938, %v4927, 0
        %v4943 = vsel %vm4938, %v4930, 0
        %4945 = vmatpush.msra.mxu0 0.0
        %4946 = vmatpush.msra.mxu0 0.0
        %4947 = vmatpush.msra.mxu0 0.0
        %4948 = vmatpush.msra.mxu0 0.0
        %4949 = vmatpush.msra.mxu0 0.0
        %4950 = vmatpush.msra.mxu0 0.0
        %4951 = vmatpush.msra.mxu0 0.0
        %4952 = vmatpush.msra.mxu0 0.0
        %4953 = vmatpush.msra.mxu0 0.0
        %4954 = vmatpush.msra.mxu0 0.0
        %4955 = vmatpush.msra.mxu0 %v4937
        %4956 = vmatpush.msra.mxu0 %v4936
        %4957 = vmatpush.msra.mxu0 %v4935
        %4958 = vmatpush.msra.mxu0 %v4934
        %4959 = vmatpush.msra.mxu0 %v4933
        %4960 = vmatpush.msra.mxu0 %v4932
        %4961 = vmatmul.f32.gmra.mxu0 %v4940
        %v4962 = vpop.f32.mrf.mxu0
        %v4963 = vadd.f32 0.0, %v4962
        %4964 = vmatmul.f32.gmra.mxu0 %v4943
        %v4965 = vpop.f32.mrf.mxu0
        %v4966 = vadd.f32 0.0, %v4965
        %4967 = vdwg.mxu0
        %v4969 = vsel %vm4938, %v4890, 0
        %v4972 = vsel %vm4938, %v4893, 0
        %4974 = vmatpush.msra.mxu0 0.0
        %4975 = vmatpush.msra.mxu0 0.0
        %4976 = vmatpush.msra.mxu0 0.0
        %4977 = vmatpush.msra.mxu0 0.0
        %4978 = vmatpush.msra.mxu0 0.0
        %4979 = vmatpush.msra.mxu0 0.0
        %4980 = vmatpush.msra.mxu0 0.0
        %4981 = vmatpush.msra.mxu0 0.0
        %4982 = vmatpush.msra.mxu0 0.0
        %4983 = vmatpush.msra.mxu0 0.0
        %4984 = vmatpush.msra.mxu0 %v4900
        %4985 = vmatpush.msra.mxu0 %v4899
        %4986 = vmatpush.msra.mxu0 %v4898
        %4987 = vmatpush.msra.mxu0 %v4897
        %4988 = vmatpush.msra.mxu0 %v4896
        %4989 = vmatpush.msra.mxu0 %v4895
        %4990 = vmatmul.f32.gmra.mxu0 %v4969
        %v4991 = vpop.f32.mrf.mxu0
        %v4992 = vadd.f32 %v4963, %v4991
        %4993 = vmatmul.f32.gmra.mxu0 %v4972
        %v4994 = vpop.f32.mrf.mxu0
        %v4995 = vadd.f32 %v4966, %v4994
        %4996 = vdwg.mxu0
        %v4997 = vld [vmem:[%s9 + $0x20] sm:$0xff]
        %v4998 = vld [vmem:[%s9 + $0x28] sm:$0xff]
        %v5000 = vsel %vm4862, %v4997, 0
        %v5003 = vsel %vm4862, %v4998, 0
        %5005 = vmatpush.msra.mxu0 0.0
        %5006 = vmatpush.msra.mxu0 0.0
        %5007 = vmatpush.msra.mxu0 0.0
        %5008 = vmatpush.msra.mxu0 0.0
        %5009 = vmatpush.msra.mxu0 0.0
        %5010 = vmatpush.msra.mxu0 0.0
        %5011 = vmatpush.msra.mxu0 0.0
        %5012 = vmatpush.msra.mxu0 0.0
        %5013 = vmatpush.msra.mxu0 0.0
        %5014 = vmatpush.msra.mxu0 %v4870
        %5015 = vmatpush.msra.mxu0 %v4858
        %5016 = vmatpush.msra.mxu0 %v4857
        %5017 = vmatpush.msra.mxu0 %v4856
        %5018 = vmatpush.msra.mxu0 %v4855
        %5019 = vmatpush.msra.mxu0 %v4854
        %5020 = vmatpush.msra.mxu0 %v4853
        %5021 = vmatmul.f32.gmra.mxu0 %v5000
        %v5022 = vpop.f32.mrf.mxu0
        %v5023 = vadd.f32 0.0, %v5022
        %5024 = vmatmul.f32.gmra.mxu0 %v5003
        %v5025 = vpop.f32.mrf.mxu0
        %v5026 = vadd.f32 0.0, %v5025
        %5027 = vdwg.mxu0
        %v5028 = vld [vmem:[%s10 + $0x60] sm:$0xff]
        %v5029 = vld [vmem:[%s10 + $0x68] sm:$0xff]
        %v5030 = vld [vmem:[%s10 + $0x70] sm:$0xff]
        %v5031 = vld [vmem:[%s10 + $0x78] sm:$0xff]
        %v5032 = vld [vmem:[%s10 + $0x80] sm:$0xff]
        %v5033 = vld [vmem:[%s10 + $0x88] sm:$0xff]
        %v5035 = vsel %vm4938, %v5023, 0
        %v5038 = vsel %vm4938, %v5026, 0
        %5040 = vmatpush.msra.mxu0 0.0
        %5041 = vmatpush.msra.mxu0 0.0
        %5042 = vmatpush.msra.mxu0 0.0
        %5043 = vmatpush.msra.mxu0 0.0
        %5044 = vmatpush.msra.mxu0 0.0
        %5045 = vmatpush.msra.mxu0 0.0
        %5046 = vmatpush.msra.mxu0 0.0
        %5047 = vmatpush.msra.mxu0 0.0
        %5048 = vmatpush.msra.mxu0 0.0
        %5049 = vmatpush.msra.mxu0 0.0
        %5050 = vmatpush.msra.mxu0 %v5033
        %5051 = vmatpush.msra.mxu0 %v5032
        %5052 = vmatpush.msra.mxu0 %v5031
        %5053 = vmatpush.msra.mxu0 %v5030
        %5054 = vmatpush.msra.mxu0 %v5029
        %5055 = vmatpush.msra.mxu0 %v5028
        %5056 = vmatmul.f32.gmra.mxu0 %v5035
        %v5057 = vpop.f32.mrf.mxu0
        %v5058 = vadd.f32 0.0, %v5057
        %5059 = vmatmul.f32.gmra.mxu0 %v5038
        %v5060 = vpop.f32.mrf.mxu0
        %v5061 = vadd.f32 0.0, %v5060
        %5062 = vdwg.mxu0
        %v5063 = vadd.f32 %v4992, %v5058
        %v5064 = vadd.f32 %v4995, %v5061
        %v5065 = vld [vmem:[%s9 + $0x30] sm:$0xff]
        %v5066 = vld [vmem:[%s9 + $0x38] sm:$0xff]
        %v5068 = vsel %vm4862, %v5065, 0
        %v5071 = vsel %vm4862, %v5066, 0
        %5073 = vmatpush.msra.mxu0 0.0
        %5074 = vmatpush.msra.mxu0 0.0
        %5075 = vmatpush.msra.mxu0 0.0
        %5076 = vmatpush.msra.mxu0 0.0
        %5077 = vmatpush.msra.mxu0 0.0
        %5078 = vmatpush.msra.mxu0 0.0
        %5079 = vmatpush.msra.mxu0 0.0
        %5080 = vmatpush.msra.mxu0 0.0
        %5081 = vmatpush.msra.mxu0 0.0
        %5082 = vmatpush.msra.mxu0 %v4870
        %5083 = vmatpush.msra.mxu0 %v4858
        %5084 = vmatpush.msra.mxu0 %v4857
        %5085 = vmatpush.msra.mxu0 %v4856
        %5086 = vmatpush.msra.mxu0 %v4855
        %5087 = vmatpush.msra.mxu0 %v4854
        %5088 = vmatpush.msra.mxu0 %v4853
        %5089 = vmatmul.f32.gmra.mxu0 %v5068
        %v5090 = vpop.f32.mrf.mxu0
        %v5091 = vadd.f32 0.0, %v5090
        %5092 = vmatmul.f32.gmra.mxu0 %v5071
        %v5093 = vpop.f32.mrf.mxu0
        %v5094 = vadd.f32 0.0, %v5093
        %5095 = vdwg.mxu0
        %v5096 = vld [vmem:[%s10 + $0x90] sm:$0xff]
        %v5097 = vld [vmem:[%s10 + $0x98] sm:$0xff]
        %v5098 = vld [vmem:[%s10 + $0xa0] sm:$0xff]
        %v5099 = vld [vmem:[%s10 + $0xa8] sm:$0xff]
        %v5100 = vld [vmem:[%s10 + $0xb0] sm:$0xff]
        %v5101 = vld [vmem:[%s10 + $0xb8] sm:$0xff]
        %v5103 = vsel %vm4938, %v5091, 0
        %v5106 = vsel %vm4938, %v5094, 0
        %5108 = vmatpush.msra.mxu0 0.0
        %5109 = vmatpush.msra.mxu0 0.0
        %5110 = vmatpush.msra.mxu0 0.0
        %5111 = vmatpush.msra.mxu0 0.0
        %5112 = vmatpush.msra.mxu0 0.0
        %5113 = vmatpush.msra.mxu0 0.0
        %5114 = vmatpush.msra.mxu0 0.0
        %5115 = vmatpush.msra.mxu0 0.0
        %5116 = vmatpush.msra.mxu0 0.0
        %5117 = vmatpush.msra.mxu0 0.0
        %5118 = vmatpush.msra.mxu0 %v5101
        %5119 = vmatpush.msra.mxu0 %v5100
        %5120 = vmatpush.msra.mxu0 %v5099
        %5121 = vmatpush.msra.mxu0 %v5098
        %5122 = vmatpush.msra.mxu0 %v5097
        %5123 = vmatpush.msra.mxu0 %v5096
        %5124 = vmatmul.f32.gmra.mxu0 %v5103
        %v5125 = vpop.f32.mrf.mxu0
        %v5126 = vadd.f32 0.0, %v5125
        %5127 = vmatmul.f32.gmra.mxu0 %v5106
        %v5128 = vpop.f32.mrf.mxu0
        %v5129 = vadd.f32 0.0, %v5128
        %5130 = vdwg.mxu0
        %v5131 = vadd.f32 %v5063, %v5126
        %v5132 = vadd.f32 %v5064, %v5129
        %v5133 = vld [vmem:[%s9 + $0x40] sm:$0xff]
        %v5134 = vld [vmem:[%s9 + $0x48] sm:$0xff]
        %v5136 = vsel %vm4862, %v5133, 0
        %v5139 = vsel %vm4862, %v5134, 0
        %5141 = vmatpush.msra.mxu0 0.0
        %5142 = vmatpush.msra.mxu0 0.0
        %5143 = vmatpush.msra.mxu0 0.0
        %5144 = vmatpush.msra.mxu0 0.0
        %5145 = vmatpush.msra.mxu0 0.0
        %5146 = vmatpush.msra.mxu0 0.0
        %5147 = vmatpush.msra.mxu0 0.0
        %5148 = vmatpush.msra.mxu0 0.0
        %5149 = vmatpush.msra.mxu0 0.0
        %5150 = vmatpush.msra.mxu0 %v4870
        %5151 = vmatpush.msra.mxu0 %v4858
        %5152 = vmatpush.msra.mxu0 %v4857
        %5153 = vmatpush.msra.mxu0 %v4856
        %5154 = vmatpush.msra.mxu0 %v4855
        %5155 = vmatpush.msra.mxu0 %v4854
        %5156 = vmatpush.msra.mxu0 %v4853
        %5157 = vmatmul.f32.gmra.mxu0 %v5136
        %v5158 = vpop.f32.mrf.mxu0
        %v5159 = vadd.f32 0.0, %v5158
        %5160 = vmatmul.f32.gmra.mxu0 %v5139
        %v5161 = vpop.f32.mrf.mxu0
        %v5162 = vadd.f32 0.0, %v5161
        %5163 = vdwg.mxu0
        %v5164 = vld [vmem:[%s10 + $0xc0] sm:$0xff]
        %v5165 = vld [vmem:[%s10 + $0xc8] sm:$0xff]
        %v5166 = vld [vmem:[%s10 + $0xd0] sm:$0xff]
        %v5167 = vld [vmem:[%s10 + $0xd8] sm:$0xff]
        %v5168 = vld [vmem:[%s10 + $0xe0] sm:$0xff]
        %v5169 = vld [vmem:[%s10 + $0xe8] sm:$0xff]
        %v5171 = vsel %vm4938, %v5159, 0
        %v5174 = vsel %vm4938, %v5162, 0
        %5176 = vmatpush.msra.mxu0 0.0
        %5177 = vmatpush.msra.mxu0 0.0
        %5178 = vmatpush.msra.mxu0 0.0
        %5179 = vmatpush.msra.mxu0 0.0
        %5180 = vmatpush.msra.mxu0 0.0
        %5181 = vmatpush.msra.mxu0 0.0
        %5182 = vmatpush.msra.mxu0 0.0
        %5183 = vmatpush.msra.mxu0 0.0
        %5184 = vmatpush.msra.mxu0 0.0
        %5185 = vmatpush.msra.mxu0 0.0
        %5186 = vmatpush.msra.mxu0 %v5169
        %5187 = vmatpush.msra.mxu0 %v5168
        %5188 = vmatpush.msra.mxu0 %v5167
        %5189 = vmatpush.msra.mxu0 %v5166
        %5190 = vmatpush.msra.mxu0 %v5165
        %5191 = vmatpush.msra.mxu0 %v5164
        %5192 = vmatmul.f32.gmra.mxu0 %v5171
        %v5193 = vpop.f32.mrf.mxu0
        %v5194 = vadd.f32 0.0, %v5193
        %5195 = vmatmul.f32.gmra.mxu0 %v5174
        %v5196 = vpop.f32.mrf.mxu0
        %v5197 = vadd.f32 0.0, %v5196
        %5198 = vdwg.mxu0
        %v5199 = vadd.f32 %v5131, %v5194
        %v5200 = vadd.f32 %v5132, %v5197
        %v5201 = vld [vmem:[%s11] sm:$0x1]
        %v5203 = vperm.slane %v5201, 0
        %v5205 = vadd.f32 %v5199, %v5203
        %v5206 = vadd.f32 %v5200, %v5203
        %v5207 = vmax.f32 %v5205, 0.0
        %v5208 = vmax.f32 %v5206, 0.0
        %5211 = vrot.lane.b32.xlu0 %v5207, 8
        %v5212 = vpop.permute.xlu0 %5211
        %5213 = vrot.lane.b32.xlu0 %v5208, 8
        %v5214 = vpop.permute.xlu0 %5213
        %vm5217 = vcmask 588864
        %5218 = vst.msk [vmem:[#allocation5 + $0x1] sm:$0xff] %vm5217, %v5212
        %5219 = vst.msk [vmem:[#allocation5 + $0x9] sm:$0xff] %vm5217, %v5214
        %5222 = vrot.lane.b32.xlu0 %v4835, 1
        %v5223 = vpop.permute.xlu0 %5222
        %5224 = vrot.lane.b32.xlu0 %v4850, 1
        %v5225 = vpop.permute.xlu0 %5224
        %vm5228 = vcmask 72712
        %5229 = vst.msk [vmem:[#allocation6 + $0x1] sm:$0xff] %vm5228, %v5223
        %5230 = vst.msk [vmem:[#allocation6 + $0x9] sm:$0xff] %vm5228, %v5225
        %v5231 = vld [vmem:[#allocation5] sm:$0xff]
        %v5232 = vld [vmem:[#allocation5 + $0x8] sm:$0xff]
        %v5233 = vld [vmem:[%s12] sm:$0x1]
        %v5234 = vperm.slane %v5233, 0
        %v5235 = vmul.f32 %v5231, %v5234
        %v5236 = vmul.f32 %v5232, %v5234
        %v5237 = vadd.f32 %v5235, 0.0
        %v5238 = vadd.f32 %v5236, 0.0
        %v5239 = vld [vmem:[#allocation6] sm:$0xff]
        %v5240 = vld [vmem:[#allocation6 + $0x8] sm:$0xff]
        %s5241 = sld [smem:[#allocation7]]
        %v5242 = vstv %s5241
        %v5243 = vmul.f32 %v5239, %v5242
        %v5244 = vmul.f32 %v5240, %v5242
        %v5245 = vadd.f32 %v5243, 0.0
        %v5246 = vadd.f32 %v5244, 0.0
        %v5247 = vld [vmem:[%s12 + $0x1] sm:$0x1]
        %v5248 = vperm.slane %v5247, 0
        %5250 = vrot.lane.b32.xlu0 %v5248, 8
        %v5251 = vpop.permute.xlu0 %5250
        %v5253 = vmul.f32 %v5231, %v5251
        %v5254 = vmul.f32 %v5232, %v5251
        %5257 = vrot.lane.b32.xlu0 %v5253, 120
        %v5258 = vpop.permute.xlu0 %5257
        %5259 = vrot.lane.b32.xlu0 %v5254, 120
        %v5260 = vpop.permute.xlu0 %5259
        %v5263 = vadd.f32 %v5237, %v5258
        %v5264 = vadd.f32 %v5238, %v5260
        %s5265 = sld [smem:[#allocation7 + $0x1]]
        %v5266 = vstv %s5265
        %v5267 = vmul.f32 %v5239, %v5266
        %v5268 = vmul.f32 %v5240, %v5266
        %5271 = vrot.lane.b32.xlu0 %v5267, 127
        %v5272 = vpop.permute.xlu0 %5271
        %5273 = vrot.lane.b32.xlu0 %v5268, 127
        %v5274 = vpop.permute.xlu0 %5273
        %v5277 = vadd.f32 %v5245, %v5272
        %v5278 = vadd.f32 %v5246, %v5274
        %v5279 = vld [vmem:[%s12 + $0x2] sm:$0x1]
        %v5280 = vperm.slane %v5279, 0
        %5282 = vrot.lane.b32.xlu0 %v5280, 16
        %v5283 = vpop.permute.xlu0 %5282
        %v5285 = vmul.f32 %v5231, %v5283
        %v5286 = vmul.f32 %v5232, %v5283
        %5289 = vrot.lane.b32.xlu0 %v5285, 112
        %v5290 = vpop.permute.xlu0 %5289
        %5291 = vrot.lane.b32.xlu0 %v5286, 112
        %v5292 = vpop.permute.xlu0 %5291
        %v5295 = vadd.f32 %v5263, %v5290
        %v5296 = vadd.f32 %v5264, %v5292
        %s5297 = sld [smem:[#allocation7 + $0x2]]
        %v5298 = vstv %s5297
        %v5299 = vmul.f32 %v5239, %v5298
        %v5300 = vmul.f32 %v5240, %v5298
        %5303 = vrot.lane.b32.xlu0 %v5299, 126
        %v5304 = vpop.permute.xlu0 %5303
        %5305 = vrot.lane.b32.xlu0 %v5300, 126
        %v5306 = vpop.permute.xlu0 %5305
        %v5309 = vadd.f32 %v5277, %v5304
        %v5310 = vadd.f32 %v5278, %v5306
        %v5311 = vld [vmem:[#allocation5 + $0x1] sm:$0xff]
        %v5312 = vld [vmem:[#allocation5 + $0x9] sm:$0xff]
        %v5313 = vld [vmem:[%s12 + $0x3] sm:$0x1]
        %v5314 = vperm.slane %v5313, 0
        %v5315 = vmul.f32 %v5311, %v5314
        %v5316 = vmul.f32 %v5312, %v5314
        %v5317 = vadd.f32 %v5295, %v5315
        %v5318 = vadd.f32 %v5296, %v5316
        %v5319 = vld [vmem:[#allocation6 + $0x1] sm:$0xff]
        %v5320 = vld [vmem:[#allocation6 + $0x9] sm:$0xff]
        %s5321 = sld [smem:[#allocation7 + $0x3]]
        %v5322 = vstv %s5321
        %v5323 = vmul.f32 %v5319, %v5322
        %v5324 = vmul.f32 %v5320, %v5322
        %v5325 = vadd.f32 %v5309, %v5323
        %v5326 = vadd.f32 %v5310, %v5324
        %v5327 = vld [vmem:[%s12 + $0x4] sm:$0x1]
        %v5328 = vperm.slane %v5327, 0
        %5330 = vrot.lane.b32.xlu0 %v5328, 8
        %v5331 = vpop.permute.xlu0 %5330
        %v5333 = vmul.f32 %v5311, %v5331
        %v5334 = vmul.f32 %v5312, %v5331
        %5337 = vrot.lane.b32.xlu0 %v5333, 120
        %v5338 = vpop.permute.xlu0 %5337
        %5339 = vrot.lane.b32.xlu0 %v5334, 120
        %v5340 = vpop.permute.xlu0 %5339
        %v5343 = vadd.f32 %v5317, %v5338
        %v5344 = vadd.f32 %v5318, %v5340
        %s5345 = sld [smem:[#allocation7 + $0x4]]
        %v5346 = vstv %s5345
        %v5347 = vmul.f32 %v5319, %v5346
        %v5348 = vmul.f32 %v5320, %v5346
        %5351 = vrot.lane.b32.xlu0 %v5347, 127
        %v5352 = vpop.permute.xlu0 %5351
        %5353 = vrot.lane.b32.xlu0 %v5348, 127
        %v5354 = vpop.permute.xlu0 %5353
        %v5357 = vadd.f32 %v5325, %v5352
        %v5358 = vadd.f32 %v5326, %v5354
        %v5359 = vld [vmem:[%s12 + $0x5] sm:$0x1]
        %v5360 = vperm.slane %v5359, 0
        %5362 = vrot.lane.b32.xlu0 %v5360, 16
        %v5363 = vpop.permute.xlu0 %5362
        %v5365 = vmul.f32 %v5311, %v5363
        %v5366 = vmul.f32 %v5312, %v5363
        %5369 = vrot.lane.b32.xlu0 %v5365, 112
        %v5370 = vpop.permute.xlu0 %5369
        %5371 = vrot.lane.b32.xlu0 %v5366, 112
        %v5372 = vpop.permute.xlu0 %5371
        %v5375 = vadd.f32 %v5343, %v5370
        %v5376 = vadd.f32 %v5344, %v5372
        %s5377 = sld [smem:[#allocation7 + $0x5]]
        %v5378 = vstv %s5377
        %v5379 = vmul.f32 %v5319, %v5378
        %v5380 = vmul.f32 %v5320, %v5378
        %5383 = vrot.lane.b32.xlu0 %v5379, 126
        %v5384 = vpop.permute.xlu0 %5383
        %5385 = vrot.lane.b32.xlu0 %v5380, 126
        %v5386 = vpop.permute.xlu0 %5385
        %v5389 = vadd.f32 %v5357, %v5384
        %v5390 = vadd.f32 %v5358, %v5386
        %v5391 = vld [vmem:[#allocation5 + $0x2] sm:$0xff]
        %v5392 = vld [vmem:[#allocation5 + $0xa] sm:$0xff]
        %v5393 = vld [vmem:[%s12 + $0x6] sm:$0x1]
        %v5394 = vperm.slane %v5393, 0
        %v5395 = vmul.f32 %v5391, %v5394
        %v5396 = vmul.f32 %v5392, %v5394
        %v5397 = vadd.f32 %v5375, %v5395
        %v5398 = vadd.f32 %v5376, %v5396
        %v5399 = vld [vmem:[#allocation6 + $0x2] sm:$0xff]
        %v5400 = vld [vmem:[#allocation6 + $0xa] sm:$0xff]
        %s5401 = sld [smem:[#allocation7 + $0x6]]
        %v5402 = vstv %s5401
        %v5403 = vmul.f32 %v5399, %v5402
        %v5404 = vmul.f32 %v5400, %v5402
        %v5405 = vadd.f32 %v5389, %v5403
        %v5406 = vadd.f32 %v5390, %v5404
        %v5407 = vld [vmem:[%s12 + $0x7] sm:$0x1]
        %v5408 = vperm.slane %v5407, 0
        %5410 = vrot.lane.b32.xlu0 %v5408, 8
        %v5411 = vpop.permute.xlu0 %5410
        %v5413 = vmul.f32 %v5391, %v5411
        %v5414 = vmul.f32 %v5392, %v5411
        %5417 = vrot.lane.b32.xlu0 %v5413, 120
        %v5418 = vpop.permute.xlu0 %5417
        %5419 = vrot.lane.b32.xlu0 %v5414, 120
        %v5420 = vpop.permute.xlu0 %5419
        %v5423 = vadd.f32 %v5397, %v5418
        %v5424 = vadd.f32 %v5398, %v5420
        %s5425 = sld [smem:[#allocation7 + $0x7]]
        %v5426 = vstv %s5425
        %v5427 = vmul.f32 %v5399, %v5426
        %v5428 = vmul.f32 %v5400, %v5426
        %5431 = vrot.lane.b32.xlu0 %v5427, 127
        %v5432 = vpop.permute.xlu0 %5431
        %5433 = vrot.lane.b32.xlu0 %v5428, 127
        %v5434 = vpop.permute.xlu0 %5433
        %v5437 = vadd.f32 %v5405, %v5432
        %v5438 = vadd.f32 %v5406, %v5434
        %v5439 = vld [vmem:[%s12 + $0x8] sm:$0x1]
        %v5440 = vperm.slane %v5439, 0
        %5442 = vrot.lane.b32.xlu0 %v5440, 16
        %v5443 = vpop.permute.xlu0 %5442
        %v5445 = vmul.f32 %v5391, %v5443
        %v5446 = vmul.f32 %v5392, %v5443
        %5449 = vrot.lane.b32.xlu0 %v5445, 112
        %v5450 = vpop.permute.xlu0 %5449
        %5451 = vrot.lane.b32.xlu0 %v5446, 112
        %v5452 = vpop.permute.xlu0 %5451
        %v5455 = vadd.f32 %v5423, %v5450
        %v5456 = vadd.f32 %v5424, %v5452
        %s5457 = sld [smem:[#allocation7 + $0x8]]
        %v5458 = vstv %s5457
        %v5459 = vmul.f32 %v5399, %v5458
        %v5460 = vmul.f32 %v5400, %v5458
        %5463 = vrot.lane.b32.xlu0 %v5459, 126
        %v5464 = vpop.permute.xlu0 %5463
        %5465 = vrot.lane.b32.xlu0 %v5460, 126
        %v5466 = vpop.permute.xlu0 %5465
        %v5469 = vadd.f32 %v5437, %v5464
        %v5470 = vadd.f32 %v5438, %v5466
        %v5472 = vsel %vm3754, %v5455, 0
        %v5475 = vsel %vm3754, %v5456, 0
        %5477 = vmatpush.msra.mxu0 0.0
        %5478 = vmatpush.msra.mxu0 0.0
        %5479 = vmatpush.msra.mxu0 0.0
        %5480 = vmatpush.msra.mxu0 0.0
        %5481 = vmatpush.msra.mxu0 0.0
        %5482 = vmatpush.msra.mxu0 0.0
        %5483 = vmatpush.msra.mxu0 0.0
        %5484 = vmatpush.msra.mxu0 0.0
        %5485 = vmatpush.msra.mxu0 %v688
        %5486 = vmatpush.msra.mxu0 %v687
        %5487 = vmatpush.msra.mxu0 %v686
        %5488 = vmatpush.msra.mxu0 %v685
        %5489 = vmatpush.msra.mxu0 %v684
        %5490 = vmatpush.msra.mxu0 %v683
        %5491 = vmatpush.msra.mxu0 %v682
        %5492 = vmatpush.msra.mxu0 %v681
        %5493 = vmatmul.f32.gmra.mxu0 %v5472
        %v5494 = vpop.f32.mrf.mxu0
        %v5495 = vadd.f32 %v5469, %v5494
        %5496 = vmatmul.f32.gmra.mxu0 %v5475
        %v5497 = vpop.f32.mrf.mxu0
        %v5498 = vadd.f32 %v5470, %v5497
        %5499 = vdwg.mxu0
        %s5500 = sld [smem:[#allocation9 + $0x2]]
        %v5501 = vstv %s5500
        %v5502 = vadd.f32 %v5495, %v5501
        %v5503 = vadd.f32 %v5498, %v5501
        %v5504 = vxor.u32 %v5502, 2147483648
        %v5505 = vxor.u32 %v5503, 2147483648
        %v5506 = vmul.f32 %v5504, 1.442695
        %v5507 = vpow.pop %v5506
        %v5508 = vmul.f32 %v5505, 1.442695
        %v5509 = vpow.pop %v5508
        %v5510 = vadd.f32 %v5507, 1.0
        %v5511 = vadd.f32 %v5509, 1.0
        %v5512 = vrcp.pop %v5510
        %v5513 = vmul.f32 %v5510, %v5512
        %v5514 = vsub.f32 1.0, %v5513
        %v5515 = vmul.f32 %v5512, %v5514
        %v5516 = vadd.f32 %v5512, %v5515
        %vm5517 = vweird.f32 %v5510
        %vm5518 = vweird.f32 %v5512
        %vm5519 = vmor %vm5517, %vm5518
        %v5520 = vsel %vm5519, %v5512, %v5516
        %v5521 = vand.u32 2147483647, %v5510
        %vm5522 = vcmp.eq.f32.partialorder %v5521, 8.507059e+37
        %v5523 = vand.u32 %v5510, 2147483648
        %v5524 = vor.u32 1.1754944e-38, %v5523
        %v5525 = vsel %vm5522, %v5524, %v5520
        %v5526 = vmul.f32 1.0, %v5525
        %v5527 = vrcp.pop %v5511
        %v5528 = vmul.f32 %v5511, %v5527
        %v5529 = vsub.f32 1.0, %v5528
        %v5530 = vmul.f32 %v5527, %v5529
        %v5531 = vadd.f32 %v5527, %v5530
        %vm5532 = vweird.f32 %v5511
        %vm5533 = vweird.f32 %v5527
        %vm5534 = vmor %vm5532, %vm5533
        %v5535 = vsel %vm5534, %v5527, %v5531
        %v5536 = vand.u32 2147483647, %v5511
        %vm5537 = vcmp.eq.f32.partialorder %v5536, 8.507059e+37
        %v5538 = vand.u32 %v5511, 2147483648
        %v5539 = vor.u32 1.1754944e-38, %v5538
        %v5540 = vsel %vm5537, %v5539, %v5535
        %v5541 = vmul.f32 1.0, %v5540
        %5542 = vst.msk [vmem:[%s647] sm:$0xff] %vm3922, %v5526
        %5543 = vst.msk [vmem:[%s647 + $0x8] sm:$0xff] %vm3922, %v5541
        %p5544 = scmp.lt.s32.totalorder %s32, 1
        %s5545 = scalar_select %p5544, %s32, 1
        %s5546 = smul.addr %s5545, 6
        %s5547 = smul.addr %s5546, 8
        %s5548 = scalar_lea.vmem %s16, %s5547
        %p5549 = scmp.lt.s32.totalorder %s32, 1
        %s5550 = scalar_select %p5549, %s32, 1
        %s5551 = smul.addr %s5550, 2
        %s5552 = smul.addr %s5551, 8
        %s5553 = scalar_lea.vmem %s17, %s5552
        %p5554 = scmp.lt.s32.totalorder %s32, 1
        %s5555 = scalar_select %p5554, %s32, 1
        %s5556 = smul.addr %s5555, 2
        %s5557 = smul.addr %s5556, 8
        %s5558 = scalar_lea.vmem %s18, %s5557
        // Predicated region
        $region93: #{forward.3} parent=83 // pred_check
          %p5559 = pneg %p396
        $region94: #{forward.3} parent=83 // pred_check_branch
          %5561 = sbr.rel (%p5559) target = $region96
        $region95: #{forward.3} parent=83 // pred_region
          _
        $region96: #{forward.3} parent=83 // pred_fallthru
          _
        // Predicated region
        $region97: #{forward.3} parent=83 // pred_check
          %p5562 = pneg %p422
        $region98: #{forward.3} parent=83 // pred_check_branch
          %5564 = sbr.rel (%p5562) target = $region100
        $region99: #{forward.3} parent=83 // pred_region
          _
        $region100: #{forward.3} parent=83 // pred_fallthru
          _
        // Predicated region
        $region101: #{forward.3} parent=83 // pred_check
          %p5565 = pneg %p448
        $region102: #{forward.3} parent=83 // pred_check_branch
          %5567 = sbr.rel (%p5565) target = $region104
        $region103: #{forward.3} parent=83 // pred_region
          _
        $region104: #{forward.3} parent=83 // pred_fallthru
          _
      $region84: #{forward.3} parent=5 // pred_fallthru
        _
      %p5568 = scmp.le.s32.totalorder 2, %s27
      // Predicated region
      $region105: #{forward.3} parent=5 // pred_check
        %p5569 = pneg %p5568
      $region106: #{forward.3} parent=5 // pred_check_branch
        %5571 = sbr.rel (%p5569) target = $region108
      $region107: #{forward.3} parent=5 // pred_region
        %s5572 = ssub.s32 %s27, 2
        // Predicated region
        $region109: #{forward.3} parent=107 // pred_check
          %p5573 = pneg %p402
        $region110: #{forward.3} parent=107 // pred_check_branch
          %5575 = sbr.rel (%p5573) target = $region112
        $region111: #{forward.3} parent=107 // pred_region
          %p5576 = scmp.lt.s32.totalorder %s33, 1
          %s5577 = scalar_select %p5576, %s33, 1
          %s5578 = smul.addr %s5577, 6
          %s5579 = smul.addr %s5578, 8
          %s5580 = scalar_lea.vmem %s16, %s5579
        $region112: #{forward.3} parent=107 // pred_fallthru
          _
        // Predicated region
        $region113: #{forward.3} parent=107 // pred_check
          %p5581 = pneg %p428
        $region114: #{forward.3} parent=107 // pred_check_branch
          %5583 = sbr.rel (%p5581) target = $region116
        $region115: #{forward.3} parent=107 // pred_region
          %p5584 = scmp.lt.s32.totalorder %s33, 1
          %s5585 = scalar_select %p5584, %s33, 1
          %s5586 = smul.addr %s5585, 2
          %s5587 = smul.addr %s5586, 8
          %s5588 = scalar_lea.vmem %s17, %s5587
        $region116: #{forward.3} parent=107 // pred_fallthru
          _
        // Predicated region
        $region117: #{forward.3} parent=107 // pred_check
          %p5589 = pneg %p454
        $region118: #{forward.3} parent=107 // pred_check_branch
          %5591 = sbr.rel (%p5589) target = $region120
        $region119: #{forward.3} parent=107 // pred_region
          %p5592 = scmp.lt.s32.totalorder %s33, 1
          %s5593 = scalar_select %p5592, %s33, 1
          %s5594 = smul.addr %s5593, 2
          %s5595 = smul.addr %s5594, 8
          %s5596 = scalar_lea.vmem %s18, %s5595
        $region120: #{forward.3} parent=107 // pred_fallthru
          _
      $region108: #{forward.3} parent=5 // pred_fallthru
        _
    $region6: #{forward.3} parent=1 // loop_footer
      %s31 = sadd.s32 1, %s27
    $region7: #{forward.3} parent=1 // loop_footer_branch
      %26 = sbr.rel target = $region3
    $region8: #{forward.3} parent=1 // loop_exit
      _
    %5597 = vsyncpa [#allocation8], 1
    %s5598 = scalar_lea.sflag [#allocation8], 1
    %5599 = vsyncpa %s5598, 1
    %5600 = vsyncpa [#allocation10], 1

</llo_original>
